<compile_context>
chip_gen: v7x
topology: tpu7x:2x2x1
jax: 0.10.0
libtpu: 0.0.40
codegen_flags: <defaults>
</compile_context>

<pallas_src>
import functools

import numpy as np

import jax
import jax.numpy as jnp
from jax import lax
from jax.experimental import pallas as pl
from jax.experimental.pallas import tpu as pltpu


# ---------------------------------------------------------------------------
# Precomputed constants (numpy, once, outside the jitted forward)
# ---------------------------------------------------------------------------
def _dft_matrices(H, W):
    """Real/imag matmul equivalents of rfft2 / irfft2 (norm='backward')."""
    HW = H * W
    Wr = W // 2 + 1
    M = H * Wr
    eye_sp = np.eye(HW, dtype=np.float64).reshape(HW, H, W)
    F = np.fft.rfft2(eye_sp, axes=(1, 2)).reshape(HW, M)          # (HW, M) complex
    eye_fr = np.eye(M, dtype=np.complex128).reshape(M, H, Wr)
    Gr = np.fft.irfft2(eye_fr, s=(H, W), axes=(1, 2)).reshape(M, HW)
    Gi = np.fft.irfft2(1j * eye_fr, s=(H, W), axes=(1, 2)).reshape(M, HW)
    return (F.real.astype(np.float32), F.imag.astype(np.float32),
            Gr.astype(np.float32), Gi.astype(np.float32))


def _tap_masks(H, W):
    """(9, HW) 0/1 masks: validity of each 3x3 tap (zero padding) per lane."""
    HW = H * W
    lane = np.arange(HW)
    h_idx, w_idx = lane // W, lane % W
    masks = np.zeros((9, HW), np.float32)
    t = 0
    for kh in range(3):
        for kw in range(3):
            dy, dx = kh - 1, kw - 1
            valid = ((h_idx + dy >= 0) & (h_idx + dy < H)
                     & (w_idx + dx >= 0) & (w_idx + dx < W))
            masks[t] = valid.astype(np.float32)
            t += 1
    return masks


def prepare_params(params_list, H, W):
    """PyTorch-layout weights -> kernel-ready stacked layouts (done once)."""
    C = params_list[0]["b1"].shape[0]

    def conv_w(w):   # (Cout, Cin, 3, 3) -> (Cout, 9*Cin), tap-major columns
        return jnp.transpose(w, (0, 2, 3, 1)).reshape(w.shape[0], 9 * w.shape[1])

    Fr, Fi, Gr, Gi = _dft_matrices(H, W)
    return dict(
        Fr=jnp.asarray(Fr), Fi=jnp.asarray(Fi),
        Gr=jnp.asarray(Gr), Gi=jnp.asarray(Gi),
        masks=jnp.asarray(_tap_masks(H, W)),
        W1=jnp.stack([conv_w(p["w1"]) for p in params_list]),       # (R, C, 9C)
        B1=jnp.stack([p["b1"].reshape(C, 1) for p in params_list]), # (R, C, 1)
        W2=jnp.stack([conv_w(p["w2"]) for p in params_list]),
        B2=jnp.stack([p["b2"].reshape(C, 1) for p in params_list]),
        # global-stream conv1 input order is cat([imag, real]); conv2 is kept
        # whole and its output rows are split (real, imag) in-kernel.
        G1I=jnp.stack([p["g1"][:, :C] for p in params_list]),       # (R, 2C, C)
        G1R=jnp.stack([p["g1"][:, C:] for p in params_list]),       # (R, 2C, C)
        G2=jnp.stack([p["g2"] for p in params_list]),                # (R, 2C, 2C)
    )


# ---------------------------------------------------------------------------
# Single fused kernel: 5 x FFTResBLock, one image per grid step
#   x       : (C, HW)      channels on sublanes, flattened spatial on lanes
#   Fr/Fi   : (HW, M)      rfft2 as matmul (M = H * (W//2 + 1))
#   Gr/Gi   : (M, HW)      irfft2 as matmul
#   masks   : (9, HW)      3x3 boundary masks
#   W1/W2   : (R, C, 9C)   stacked-tap local conv weights; B1/B2: (R, C, 1)
#   G1I/G1R : (R, 2C, C)   freq 1x1-conv1 split cols; G2: (R, 2C, 2C)
# ---------------------------------------------------------------------------
def _eblock_kernel(x_ref, fr_ref, fi_ref, gr_ref, gi_ref, mask_ref,
                   w1_ref, b1_ref, w2_ref, b2_ref, g1i_ref, g1r_ref, g2_ref,
                   o_ref, *, num_res, C, H, W):
    HW = H * W
    x = x_ref[...]                                   # (C, HW) f32
    fr = fr_ref[...]
    fi = fi_ref[...]                                 # (HW, M)
    gr = gr_ref[...]
    gi = gi_ref[...]                                 # (M, HW)
    masks = mask_ref[...]                            # (9, HW)

    shifts = [(kh - 1) * W + (kw - 1) for kh in range(3) for kw in range(3)]

    def stacked_taps(inp):
        # out[:, p] needs in[:, p + s]; roll brings it to lane p, mask zeroes
        # the taps that fell outside the image (zero padding). Stacking the 9
        # taps gives a (9C, HW) operand -> one K=9C matmul instead of 9 K=C dots.
        parts = []
        for t, s in enumerate(shifts):
            if s == 0:
                parts.append(inp)
            else:
                parts.append(pltpu.roll(inp, shift=(-s) % HW, axis=1)
                             * masks[t:t + 1, :])
        return jnp.concatenate(parts, axis=0)        # (9C, HW)

    for r in range(num_res):                         # unrolled: 5 blocks
        # ---- global stream: DFT -> 1x1 conv -> ReLU -> 1x1 conv -> iDFT ----
        yr = jnp.dot(x, fr, preferred_element_type=jnp.float32)        # (C, M)
        yi = jnp.dot(x, fi, preferred_element_type=jnp.float32)        # (C, M)
        h = (jnp.dot(g1i_ref[r], yi, preferred_element_type=jnp.float32)
             + jnp.dot(g1r_ref[r], yr, preferred_element_type=jnp.float32))
        h = jnp.maximum(h, 0.0)                                         # (2C, M)
        z = jnp.dot(g2_ref[r], h, preferred_element_type=jnp.float32)   # (2C, M)
        glb = (jnp.dot(z[:C], gr, preferred_element_type=jnp.float32)
               + jnp.dot(z[C:], gi, preferred_element_type=jnp.float32))  # (C, HW)

        # ---- local stream: conv3x3+b+ReLU -> conv3x3+b (one matmul each) ----
        l1 = jnp.maximum(
            jnp.dot(w1_ref[r], stacked_taps(x),
                    preferred_element_type=jnp.float32) + b1_ref[r], 0.0)
        lcl = jnp.dot(w2_ref[r], stacked_taps(l1),
                      preferred_element_type=jnp.float32) + b2_ref[r]

        # ---- residual ----
        x = lcl + glb + x                            # stays in vregs/VMEM

    o_ref[...] = x.astype(o_ref.dtype)


def eblock_forward(x_nchw, p):
    """EBlock(channel, num_res, name='fft'); NCHW in / NCHW out like PyTorch."""
    N, C, H, W = x_nchw.shape
    HW = H * W
    M = p["Fr"].shape[1]
    num_res = p["W1"].shape[0]
    C2 = 2 * C
    x2 = x_nchw.astype(jnp.float32).reshape(N, C, HW)   # free reshape

    kern = functools.partial(_eblock_kernel, num_res=num_res, C=C, H=H, W=W)
    const2 = lambda n: (0, 0)
    const3 = lambda n: (0, 0, 0)
    out = pl.pallas_call(
        kern,
        out_shape=jax.ShapeDtypeStruct((N, C, HW), jnp.float32),
        grid=(N,),
        in_specs=[
            pl.BlockSpec((None, C, HW), lambda n: (n, 0, 0)),    # x (per image)
            pl.BlockSpec((HW, M), const2),                       # Fr  (VMEM resident)
            pl.BlockSpec((HW, M), const2),                       # Fi
            pl.BlockSpec((M, HW), const2),                       # Gr
            pl.BlockSpec((M, HW), const2),                       # Gi
            pl.BlockSpec((9, HW), const2),                       # masks
            pl.BlockSpec((num_res, C, 9 * C), const3),           # W1 local
            pl.BlockSpec((num_res, C, 1), const3),               # b1
            pl.BlockSpec((num_res, C, 9 * C), const3),           # W2 local
            pl.BlockSpec((num_res, C, 1), const3),               # b2
            pl.BlockSpec((num_res, C2, C), const3),              # g1 imag cols
            pl.BlockSpec((num_res, C2, C), const3),              # g1 real cols
            pl.BlockSpec((num_res, C2, C2), const3),             # g2
        ],
        out_specs=pl.BlockSpec((None, C, HW), lambda n: (n, 0, 0)),
        compiler_params=pltpu.CompilerParams(dimension_semantics=("parallel",)),
    )(x2, p["Fr"], p["Fi"], p["Gr"], p["Gi"], p["masks"],
      p["W1"], p["B1"], p["W2"], p["B2"], p["G1I"], p["G1R"], p["G2"])
    return out.reshape(N, C, H, W)


# ---------------------------------------------------------------------------
# Pure-JAX reference (matches the PyTorch forward) for correctness check
# ---------------------------------------------------------------------------
def _fft_res_block_ref(x, p):
    N, C, H, W = x.shape
    dn = ("NCHW", "OIHW", "NCHW")
    l = lax.conv_general_dilated(x, p["w1"], (1, 1), "SAME", dimension_numbers=dn)
    l = jnp.maximum(l + p["b1"].reshape(1, C, 1, 1), 0.0)
    l = lax.conv_general_dilated(l, p["w2"], (1, 1), "SAME", dimension_numbers=dn)
    l = l + p["b2"].reshape(1, C, 1, 1)
    y = jnp.fft.rfft2(x, axes=(2, 3))
    ycat = jnp.concatenate([jnp.imag(y), jnp.real(y)], axis=1)
    h = jnp.maximum(jnp.einsum("oc,nchw->nohw", p["g1"], ycat), 0.0)
    z = jnp.einsum("oc,nchw->nohw", p["g2"], h)
    glb = jnp.fft.irfft2(lax.complex(z[:, :C], z[:, C:]), s=(H, W), axes=(2, 3))
    return l + glb + x


def eblock_reference(x, params_list):
    out = x.astype(jnp.float32)
    for p in params_list:
        out = _fft_res_block_ref(out, p)
    return out


# ---------------------------------------------------------------------------
# Deterministic synthetic parameters (PyTorch-native shapes / init ranges)
# ---------------------------------------------------------------------------
def init_fft_res_block_params(key, C):
    ks = jax.random.split(key, 6)
    s3 = 1.0 / (9 * C) ** 0.5   # fan-in of 3x3 conv
    s1 = 1.0 / (2 * C) ** 0.5   # fan-in of 1x1 conv on 2C channels
    return dict(
        w1=jax.random.uniform(ks[0], (C, C, 3, 3), jnp.float32, -s3, s3),
        b1=jax.random.uniform(ks[1], (C,), jnp.float32, -s3, s3),
        w2=jax.random.uniform(ks[2], (C, C, 3, 3), jnp.float32, -s3, s3),
        b2=jax.random.uniform(ks[3], (C,), jnp.float32, -s3, s3),
        g1=jax.random.uniform(ks[4], (2 * C, 2 * C), jnp.float32, -s1, s1),
        g2=jax.random.uniform(ks[5], (2 * C, 2 * C), jnp.float32, -s1, s1),
    )


# ---------------------------------------------------------------------------
if __name__ == "__main__":
    key = jax.random.PRNGKey(0)
    xkey, pkey = jax.random.split(key)

    N, C, H, W = 2, 4, 16, 16
    num_res = 5
    x = jax.random.normal(xkey, (N, C, H, W), jnp.float32)   # NCHW, like PyTorch

    params = [init_fft_res_block_params(k, C) for k in jax.random.split(pkey, num_res)]
    prepped = prepare_params(params, H, W)    # layout work done once, outside jit

    fwd = jax.jit(eblock_forward)
    out = jax.block_until_ready(fwd(x, prepped))

    assert out.shape == (N, C, H, W), out.shape
    assert out.dtype == jnp.float32
    assert bool(jnp.all(jnp.isfinite(out)))

    ref = eblock_reference(x, params)
    err = float(jnp.max(jnp.abs(out - ref)))
    assert err < 5e-3, f"max abs err vs reference: {err}"

    print("KERNEL_OK")
</pallas_src>

<mosaic_0001>
module attributes {stable_mosaic.version = 11 : i64} {
  func.func @_eblock_kernel(%arg0: i32, %arg1: memref<1x4x256xf32, #tpu.memory_space<vmem>>, %arg2: memref<256x144xf32, #tpu.memory_space<vmem>>, %arg3: memref<256x144xf32, #tpu.memory_space<vmem>>, %arg4: memref<144x256xf32, #tpu.memory_space<vmem>>, %arg5: memref<144x256xf32, #tpu.memory_space<vmem>>, %arg6: memref<9x256xf32, #tpu.memory_space<vmem>>, %arg7: memref<5x4x36xf32, #tpu.memory_space<vmem>>, %arg8: memref<5x4x1xf32, #tpu.memory_space<vmem>>, %arg9: memref<5x4x36xf32, #tpu.memory_space<vmem>>, %arg10: memref<5x4x1xf32, #tpu.memory_space<vmem>>, %arg11: memref<5x8x4xf32, #tpu.memory_space<vmem>>, %arg12: memref<5x8x4xf32, #tpu.memory_space<vmem>>, %arg13: memref<5x8x8xf32, #tpu.memory_space<vmem>>, %arg14: memref<1x4x256xf32, #tpu.memory_space<vmem>>) attributes {dimension_semantics = [#tpu.dimension_semantics<parallel>], iteration_bounds = array<i64: 2>, scalar_prefetch = 0 : i64, scratch_operands = 0 : i64, tpu.core_type = #tpu.core_type<tc>, window_params = [{transform_indices = @transform_0, window_bounds = array<i64: 1, 4, 256>}, {pipeline_mode = #tpu.pipeline_mode<synchronous>, transform_indices = @transform_1, window_bounds = array<i64: 256, 144>}, {pipeline_mode = #tpu.pipeline_mode<synchronous>, transform_indices = @transform_2, window_bounds = array<i64: 256, 144>}, {pipeline_mode = #tpu.pipeline_mode<synchronous>, transform_indices = @transform_3, window_bounds = array<i64: 144, 256>}, {pipeline_mode = #tpu.pipeline_mode<synchronous>, transform_indices = @transform_4, window_bounds = array<i64: 144, 256>}, {pipeline_mode = #tpu.pipeline_mode<synchronous>, transform_indices = @transform_5, window_bounds = array<i64: 9, 256>}, {pipeline_mode = #tpu.pipeline_mode<synchronous>, transform_indices = @transform_6, window_bounds = array<i64: 5, 4, 36>}, {pipeline_mode = #tpu.pipeline_mode<synchronous>, transform_indices = @transform_7, window_bounds = array<i64: 5, 4, 1>}, {pipeline_mode = #tpu.pipeline_mode<synchronous>, transform_indices = @transform_8, window_bounds = array<i64: 5, 4, 36>}, {pipeline_mode = #tpu.pipeline_mode<synchronous>, transform_indices = @transform_9, window_bounds = array<i64: 5, 4, 1>}, {pipeline_mode = #tpu.pipeline_mode<synchronous>, transform_indices = @transform_10, window_bounds = array<i64: 5, 8, 4>}, {pipeline_mode = #tpu.pipeline_mode<synchronous>, transform_indices = @transform_11, window_bounds = array<i64: 5, 8, 4>}, {pipeline_mode = #tpu.pipeline_mode<synchronous>, transform_indices = @transform_12, window_bounds = array<i64: 5, 8, 8>}, {transform_indices = @transform_13, window_bounds = array<i64: 1, 4, 256>}]} {
    %c0 = arith.constant 0 : index
    %c0_0 = arith.constant 0 : index
    %c0_1 = arith.constant 0 : index
    %0 = vector.load %arg1[%c0, %c0_0, %c0_1] : memref<1x4x256xf32, #tpu.memory_space<vmem>>, vector<1x4x256xf32>
    %1 = vector.shape_cast %0 : vector<1x4x256xf32> to vector<4x256xf32>
    %c0_2 = arith.constant 0 : index
    %c0_3 = arith.constant 0 : index
    %2 = vector.load %arg2[%c0_2, %c0_3] : memref<256x144xf32, #tpu.memory_space<vmem>>, vector<256x144xf32>
    %c0_4 = arith.constant 0 : index
    %c0_5 = arith.constant 0 : index
    %3 = vector.load %arg3[%c0_4, %c0_5] : memref<256x144xf32, #tpu.memory_space<vmem>>, vector<256x144xf32>
    %c0_6 = arith.constant 0 : index
    %c0_7 = arith.constant 0 : index
    %4 = vector.load %arg4[%c0_6, %c0_7] : memref<144x256xf32, #tpu.memory_space<vmem>>, vector<144x256xf32>
    %c0_8 = arith.constant 0 : index
    %c0_9 = arith.constant 0 : index
    %5 = vector.load %arg5[%c0_8, %c0_9] : memref<144x256xf32, #tpu.memory_space<vmem>>, vector<144x256xf32>
    %c0_10 = arith.constant 0 : index
    %c0_11 = arith.constant 0 : index
    %6 = vector.load %arg6[%c0_10, %c0_11] : memref<9x256xf32, #tpu.memory_space<vmem>>, vector<9x256xf32>
    %cst = arith.constant dense<0.000000e+00> : vector<4x144xf32>
    %7 = tpu.matmul %1, %2, %cst {dimension_numbers = #tpu.dot_dimension_numbers<[1], [0], [0], [1], [0, 0, 1, 1], [], []>} : vector<4x256xf32>, vector<256x144xf32>, vector<4x144xf32> -> vector<4x144xf32>
    %cst_12 = arith.constant dense<0.000000e+00> : vector<4x144xf32>
    %8 = tpu.matmul %1, %3, %cst_12 {dimension_numbers = #tpu.dot_dimension_numbers<[1], [0], [0], [1], [0, 0, 1, 1], [], []>} : vector<4x256xf32>, vector<256x144xf32>, vector<4x144xf32> -> vector<4x144xf32>
    %c0_13 = arith.constant 0 : index
    %c0_14 = arith.constant 0 : index
    %c0_15 = arith.constant 0 : index
    %9 = vector.load %arg11[%c0_13, %c0_14, %c0_15] : memref<5x8x4xf32, #tpu.memory_space<vmem>>, vector<1x8x4xf32>
    %10 = vector.shape_cast %9 : vector<1x8x4xf32> to vector<8x4xf32>
    %cst_16 = arith.constant dense<0.000000e+00> : vector<8x144xf32>
    %11 = tpu.matmul %10, %8, %cst_16 {dimension_numbers = #tpu.dot_dimension_numbers<[1], [0], [0], [1], [0, 0, 1, 1], [], []>} : vector<8x4xf32>, vector<4x144xf32>, vector<8x144xf32> -> vector<8x144xf32>
    %c0_17 = arith.constant 0 : index
    %c0_18 = arith.constant 0 : index
    %c0_19 = arith.constant 0 : index
    %12 = vector.load %arg12[%c0_17, %c0_18, %c0_19] : memref<5x8x4xf32, #tpu.memory_space<vmem>>, vector<1x8x4xf32>
    %13 = vector.shape_cast %12 : vector<1x8x4xf32> to vector<8x4xf32>
    %cst_20 = arith.constant dense<0.000000e+00> : vector<8x144xf32>
    %14 = tpu.matmul %13, %7, %cst_20 {dimension_numbers = #tpu.dot_dimension_numbers<[1], [0], [0], [1], [0, 0, 1, 1], [], []>} : vector<8x4xf32>, vector<4x144xf32>, vector<8x144xf32> -> vector<8x144xf32>
    %15 = arith.addf %11, %14 : vector<8x144xf32>
    %cst_21 = arith.constant 0.000000e+00 : f32
    %16 = vector.broadcast %cst_21 : f32 to vector<8x144xf32>
    %17 = arith.maximumf %15, %16 : vector<8x144xf32>
    %c0_22 = arith.constant 0 : index
    %c0_23 = arith.constant 0 : index
    %c0_24 = arith.constant 0 : index
    %18 = vector.load %arg13[%c0_22, %c0_23, %c0_24] : memref<5x8x8xf32, #tpu.memory_space<vmem>>, vector<1x8x8xf32>
    %19 = vector.shape_cast %18 : vector<1x8x8xf32> to vector<8x8xf32>
    %cst_25 = arith.constant dense<0.000000e+00> : vector<8x144xf32>
    %20 = tpu.matmul %19, %17, %cst_25 {dimension_numbers = #tpu.dot_dimension_numbers<[1], [0], [0], [1], [0, 0, 1, 1], [], []>} : vector<8x8xf32>, vector<8x144xf32>, vector<8x144xf32> -> vector<8x144xf32>
    %21 = vector.extract_strided_slice %20 {offsets = [0, 0], sizes = [4, 144], strides = [1, 1]} : vector<8x144xf32> to vector<4x144xf32>
    %cst_26 = arith.constant dense<0.000000e+00> : vector<4x256xf32>
    %22 = tpu.matmul %21, %4, %cst_26 {dimension_numbers = #tpu.dot_dimension_numbers<[1], [0], [0], [1], [0, 0, 1, 1], [], []>} : vector<4x144xf32>, vector<144x256xf32>, vector<4x256xf32> -> vector<4x256xf32>
    %23 = vector.extract_strided_slice %20 {offsets = [4, 0], sizes = [4, 144], strides = [1, 1]} : vector<8x144xf32> to vector<4x144xf32>
    %cst_27 = arith.constant dense<0.000000e+00> : vector<4x256xf32>
    %24 = tpu.matmul %23, %5, %cst_27 {dimension_numbers = #tpu.dot_dimension_numbers<[1], [0], [0], [1], [0, 0, 1, 1], [], []>} : vector<4x144xf32>, vector<144x256xf32>, vector<4x256xf32> -> vector<4x256xf32>
    %25 = arith.addf %22, %24 : vector<4x256xf32>
    %c0_28 = arith.constant 0 : index
    %c0_29 = arith.constant 0 : index
    %c0_30 = arith.constant 0 : index
    %26 = vector.load %arg7[%c0_28, %c0_29, %c0_30] : memref<5x4x36xf32, #tpu.memory_space<vmem>>, vector<1x4x36xf32>
    %27 = vector.shape_cast %26 : vector<1x4x36xf32> to vector<4x36xf32>
    %c17_i32 = arith.constant 17 : i32
    %28 = tpu.dynamic_rotate %1 by %c17_i32 dim 1 : vector<4x256xf32>, i32 -> vector<4x256xf32>
    %29 = vector.extract_strided_slice %6 {offsets = [0, 0], sizes = [1, 256], strides = [1, 1]} : vector<9x256xf32> to vector<1x256xf32>
    %30 = vector.broadcast %29 : vector<1x256xf32> to vector<4x256xf32>
    %31 = arith.mulf %28, %30 : vector<4x256xf32>
    %c16_i32 = arith.constant 16 : i32
    %32 = tpu.dynamic_rotate %1 by %c16_i32 dim 1 : vector<4x256xf32>, i32 -> vector<4x256xf32>
    %33 = vector.extract_strided_slice %6 {offsets = [1, 0], sizes = [1, 256], strides = [1, 1]} : vector<9x256xf32> to vector<1x256xf32>
    %34 = vector.broadcast %33 : vector<1x256xf32> to vector<4x256xf32>
    %35 = arith.mulf %32, %34 : vector<4x256xf32>
    %c15_i32 = arith.constant 15 : i32
    %36 = tpu.dynamic_rotate %1 by %c15_i32 dim 1 : vector<4x256xf32>, i32 -> vector<4x256xf32>
    %37 = vector.extract_strided_slice %6 {offsets = [2, 0], sizes = [1, 256], strides = [1, 1]} : vector<9x256xf32> to vector<1x256xf32>
    %38 = vector.broadcast %37 : vector<1x256xf32> to vector<4x256xf32>
    %39 = arith.mulf %36, %38 : vector<4x256xf32>
    %c1_i32 = arith.constant 1 : i32
    %40 = tpu.dynamic_rotate %1 by %c1_i32 dim 1 : vector<4x256xf32>, i32 -> vector<4x256xf32>
    %41 = vector.extract_strided_slice %6 {offsets = [3, 0], sizes = [1, 256], strides = [1, 1]} : vector<9x256xf32> to vector<1x256xf32>
    %42 = vector.broadcast %41 : vector<1x256xf32> to vector<4x256xf32>
    %43 = arith.mulf %40, %42 : vector<4x256xf32>
    %c255_i32 = arith.constant 255 : i32
    %44 = tpu.dynamic_rotate %1 by %c255_i32 dim 1 : vector<4x256xf32>, i32 -> vector<4x256xf32>
    %45 = vector.extract_strided_slice %6 {offsets = [5, 0], sizes = [1, 256], strides = [1, 1]} : vector<9x256xf32> to vector<1x256xf32>
    %46 = vector.broadcast %45 : vector<1x256xf32> to vector<4x256xf32>
    %47 = arith.mulf %44, %46 : vector<4x256xf32>
    %c241_i32 = arith.constant 241 : i32
    %48 = tpu.dynamic_rotate %1 by %c241_i32 dim 1 : vector<4x256xf32>, i32 -> vector<4x256xf32>
    %49 = vector.extract_strided_slice %6 {offsets = [6, 0], sizes = [1, 256], strides = [1, 1]} : vector<9x256xf32> to vector<1x256xf32>
    %50 = vector.broadcast %49 : vector<1x256xf32> to vector<4x256xf32>
    %51 = arith.mulf %48, %50 : vector<4x256xf32>
    %c240_i32 = arith.constant 240 : i32
    %52 = tpu.dynamic_rotate %1 by %c240_i32 dim 1 : vector<4x256xf32>, i32 -> vector<4x256xf32>
    %53 = vector.extract_strided_slice %6 {offsets = [7, 0], sizes = [1, 256], strides = [1, 1]} : vector<9x256xf32> to vector<1x256xf32>
    %54 = vector.broadcast %53 : vector<1x256xf32> to vector<4x256xf32>
    %55 = arith.mulf %52, %54 : vector<4x256xf32>
    %c239_i32 = arith.constant 239 : i32
    %56 = tpu.dynamic_rotate %1 by %c239_i32 dim 1 : vector<4x256xf32>, i32 -> vector<4x256xf32>
    %57 = vector.extract_strided_slice %6 {offsets = [8, 0], sizes = [1, 256], strides = [1, 1]} : vector<9x256xf32> to vector<1x256xf32>
    %58 = vector.broadcast %57 : vector<1x256xf32> to vector<4x256xf32>
    %59 = arith.mulf %56, %58 : vector<4x256xf32>
    %60 = tpu.concatenate %31, %35, %39, %43, %1, %47, %51, %55, %59 in 0 : vector<4x256xf32>, vector<4x256xf32>, vector<4x256xf32>, vector<4x256xf32>, vector<4x256xf32>, vector<4x256xf32>, vector<4x256xf32>, vector<4x256xf32>, vector<4x256xf32> -> vector<36x256xf32>
    %cst_31 = arith.constant dense<0.000000e+00> : vector<4x256xf32>
    %61 = tpu.matmul %27, %60, %cst_31 {dimension_numbers = #tpu.dot_dimension_numbers<[1], [0], [0], [1], [0, 0, 1, 1], [], []>} : vector<4x36xf32>, vector<36x256xf32>, vector<4x256xf32> -> vector<4x256xf32>
    %c0_32 = arith.constant 0 : index
    %c0_33 = arith.constant 0 : index
    %c0_34 = arith.constant 0 : index
    %62 = vector.load %arg8[%c0_32, %c0_33, %c0_34] : memref<5x4x1xf32, #tpu.memory_space<vmem>>, vector<1x4x1xf32>
    %63 = vector.shape_cast %62 : vector<1x4x1xf32> to vector<4x1xf32>
    %64 = vector.broadcast %63 : vector<4x1xf32> to vector<4x256xf32>
    %65 = arith.addf %61, %64 : vector<4x256xf32>
    %cst_35 = arith.constant 0.000000e+00 : f32
    %66 = vector.broadcast %cst_35 : f32 to vector<4x256xf32>
    %67 = arith.maximumf %65, %66 : vector<4x256xf32>
    %c0_36 = arith.constant 0 : index
    %c0_37 = arith.constant 0 : index
    %c0_38 = arith.constant 0 : index
    %68 = vector.load %arg9[%c0_36, %c0_37, %c0_38] : memref<5x4x36xf32, #tpu.memory_space<vmem>>, vector<1x4x36xf32>
    %69 = vector.shape_cast %68 : vector<1x4x36xf32> to vector<4x36xf32>
    %c17_i32_39 = arith.constant 17 : i32
    %70 = tpu.dynamic_rotate %67 by %c17_i32_39 dim 1 : vector<4x256xf32>, i32 -> vector<4x256xf32>
    %71 = vector.extract_strided_slice %6 {offsets = [0, 0], sizes = [1, 256], strides = [1, 1]} : vector<9x256xf32> to vector<1x256xf32>
    %72 = vector.broadcast %71 : vector<1x256xf32> to vector<4x256xf32>
    %73 = arith.mulf %70, %72 : vector<4x256xf32>
    %c16_i32_40 = arith.constant 16 : i32
    %74 = tpu.dynamic_rotate %67 by %c16_i32_40 dim 1 : vector<4x256xf32>, i32 -> vector<4x256xf32>
    %75 = vector.extract_strided_slice %6 {offsets = [1, 0], sizes = [1, 256], strides = [1, 1]} : vector<9x256xf32> to vector<1x256xf32>
    %76 = vector.broadcast %75 : vector<1x256xf32> to vector<4x256xf32>
    %77 = arith.mulf %74, %76 : vector<4x256xf32>
    %c15_i32_41 = arith.constant 15 : i32
    %78 = tpu.dynamic_rotate %67 by %c15_i32_41 dim 1 : vector<4x256xf32>, i32 -> vector<4x256xf32>
    %79 = vector.extract_strided_slice %6 {offsets = [2, 0], sizes = [1, 256], strides = [1, 1]} : vector<9x256xf32> to vector<1x256xf32>
    %80 = vector.broadcast %79 : vector<1x256xf32> to vector<4x256xf32>
    %81 = arith.mulf %78, %80 : vector<4x256xf32>
    %c1_i32_42 = arith.constant 1 : i32
    %82 = tpu.dynamic_rotate %67 by %c1_i32_42 dim 1 : vector<4x256xf32>, i32 -> vector<4x256xf32>
    %83 = vector.extract_strided_slice %6 {offsets = [3, 0], sizes = [1, 256], strides = [1, 1]} : vector<9x256xf32> to vector<1x256xf32>
    %84 = vector.broadcast %83 : vector<1x256xf32> to vector<4x256xf32>
    %85 = arith.mulf %82, %84 : vector<4x256xf32>
    %c255_i32_43 = arith.constant 255 : i32
    %86 = tpu.dynamic_rotate %67 by %c255_i32_43 dim 1 : vector<4x256xf32>, i32 -> vector<4x256xf32>
    %87 = vector.extract_strided_slice %6 {offsets = [5, 0], sizes = [1, 256], strides = [1, 1]} : vector<9x256xf32> to vector<1x256xf32>
    %88 = vector.broadcast %87 : vector<1x256xf32> to vector<4x256xf32>
    %89 = arith.mulf %86, %88 : vector<4x256xf32>
    %c241_i32_44 = arith.constant 241 : i32
    %90 = tpu.dynamic_rotate %67 by %c241_i32_44 dim 1 : vector<4x256xf32>, i32 -> vector<4x256xf32>
    %91 = vector.extract_strided_slice %6 {offsets = [6, 0], sizes = [1, 256], strides = [1, 1]} : vector<9x256xf32> to vector<1x256xf32>
    %92 = vector.broadcast %91 : vector<1x256xf32> to vector<4x256xf32>
    %93 = arith.mulf %90, %92 : vector<4x256xf32>
    %c240_i32_45 = arith.constant 240 : i32
    %94 = tpu.dynamic_rotate %67 by %c240_i32_45 dim 1 : vector<4x256xf32>, i32 -> vector<4x256xf32>
    %95 = vector.extract_strided_slice %6 {offsets = [7, 0], sizes = [1, 256], strides = [1, 1]} : vector<9x256xf32> to vector<1x256xf32>
    %96 = vector.broadcast %95 : vector<1x256xf32> to vector<4x256xf32>
    %97 = arith.mulf %94, %96 : vector<4x256xf32>
    %c239_i32_46 = arith.constant 239 : i32
    %98 = tpu.dynamic_rotate %67 by %c239_i32_46 dim 1 : vector<4x256xf32>, i32 -> vector<4x256xf32>
    %99 = vector.extract_strided_slice %6 {offsets = [8, 0], sizes = [1, 256], strides = [1, 1]} : vector<9x256xf32> to vector<1x256xf32>
    %100 = vector.broadcast %99 : vector<1x256xf32> to vector<4x256xf32>
    %101 = arith.mulf %98, %100 : vector<4x256xf32>
    %102 = tpu.concatenate %73, %77, %81, %85, %67, %89, %93, %97, %101 in 0 : vector<4x256xf32>, vector<4x256xf32>, vector<4x256xf32>, vector<4x256xf32>, vector<4x256xf32>, vector<4x256xf32>, vector<4x256xf32>, vector<4x256xf32>, vector<4x256xf32> -> vector<36x256xf32>
    %cst_47 = arith.constant dense<0.000000e+00> : vector<4x256xf32>
    %103 = tpu.matmul %69, %102, %cst_47 {dimension_numbers = #tpu.dot_dimension_numbers<[1], [0], [0], [1], [0, 0, 1, 1], [], []>} : vector<4x36xf32>, vector<36x256xf32>, vector<4x256xf32> -> vector<4x256xf32>
    %c0_48 = arith.constant 0 : index
    %c0_49 = arith.constant 0 : index
    %c0_50 = arith.constant 0 : index
    %104 = vector.load %arg10[%c0_48, %c0_49, %c0_50] : memref<5x4x1xf32, #tpu.memory_space<vmem>>, vector<1x4x1xf32>
    %105 = vector.shape_cast %104 : vector<1x4x1xf32> to vector<4x1xf32>
    %106 = vector.broadcast %105 : vector<4x1xf32> to vector<4x256xf32>
    %107 = arith.addf %103, %106 : vector<4x256xf32>
    %108 = arith.addf %107, %25 : vector<4x256xf32>
    %109 = arith.addf %108, %1 : vector<4x256xf32>
    %cst_51 = arith.constant dense<0.000000e+00> : vector<4x144xf32>
    %110 = tpu.matmul %109, %2, %cst_51 {dimension_numbers = #tpu.dot_dimension_numbers<[1], [0], [0], [1], [0, 0, 1, 1], [], []>} : vector<4x256xf32>, vector<256x144xf32>, vector<4x144xf32> -> vector<4x144xf32>
    %cst_52 = arith.constant dense<0.000000e+00> : vector<4x144xf32>
    %111 = tpu.matmul %109, %3, %cst_52 {dimension_numbers = #tpu.dot_dimension_numbers<[1], [0], [0], [1], [0, 0, 1, 1], [], []>} : vector<4x256xf32>, vector<256x144xf32>, vector<4x144xf32> -> vector<4x144xf32>
    %c1 = arith.constant 1 : index
    %c0_53 = arith.constant 0 : index
    %c0_54 = arith.constant 0 : index
    %112 = vector.load %arg11[%c1, %c0_53, %c0_54] : memref<5x8x4xf32, #tpu.memory_space<vmem>>, vector<1x8x4xf32>
    %113 = vector.shape_cast %112 : vector<1x8x4xf32> to vector<8x4xf32>
    %cst_55 = arith.constant dense<0.000000e+00> : vector<8x144xf32>
    %114 = tpu.matmul %113, %111, %cst_55 {dimension_numbers = #tpu.dot_dimension_numbers<[1], [0], [0], [1], [0, 0, 1, 1], [], []>} : vector<8x4xf32>, vector<4x144xf32>, vector<8x144xf32> -> vector<8x144xf32>
    %c1_56 = arith.constant 1 : index
    %c0_57 = arith.constant 0 : index
    %c0_58 = arith.constant 0 : index
    %115 = vector.load %arg12[%c1_56, %c0_57, %c0_58] : memref<5x8x4xf32, #tpu.memory_space<vmem>>, vector<1x8x4xf32>
    %116 = vector.shape_cast %115 : vector<1x8x4xf32> to vector<8x4xf32>
    %cst_59 = arith.constant dense<0.000000e+00> : vector<8x144xf32>
    %117 = tpu.matmul %116, %110, %cst_59 {dimension_numbers = #tpu.dot_dimension_numbers<[1], [0], [0], [1], [0, 0, 1, 1], [], []>} : vector<8x4xf32>, vector<4x144xf32>, vector<8x144xf32> -> vector<8x144xf32>
    %118 = arith.addf %114, %117 : vector<8x144xf32>
    %cst_60 = arith.constant 0.000000e+00 : f32
    %119 = vector.broadcast %cst_60 : f32 to vector<8x144xf32>
    %120 = arith.maximumf %118, %119 : vector<8x144xf32>
    %c1_61 = arith.constant 1 : index
    %c0_62 = arith.constant 0 : index
    %c0_63 = arith.constant 0 : index
    %121 = vector.load %arg13[%c1_61, %c0_62, %c0_63] : memref<5x8x8xf32, #tpu.memory_space<vmem>>, vector<1x8x8xf32>
    %122 = vector.shape_cast %121 : vector<1x8x8xf32> to vector<8x8xf32>
    %cst_64 = arith.constant dense<0.000000e+00> : vector<8x144xf32>
    %123 = tpu.matmul %122, %120, %cst_64 {dimension_numbers = #tpu.dot_dimension_numbers<[1], [0], [0], [1], [0, 0, 1, 1], [], []>} : vector<8x8xf32>, vector<8x144xf32>, vector<8x144xf32> -> vector<8x144xf32>
    %124 = vector.extract_strided_slice %123 {offsets = [0, 0], sizes = [4, 144], strides = [1, 1]} : vector<8x144xf32> to vector<4x144xf32>
    %cst_65 = arith.constant dense<0.000000e+00> : vector<4x256xf32>
    %125 = tpu.matmul %124, %4, %cst_65 {dimension_numbers = #tpu.dot_dimension_numbers<[1], [0], [0], [1], [0, 0, 1, 1], [], []>} : vector<4x144xf32>, vector<144x256xf32>, vector<4x256xf32> -> vector<4x256xf32>
    %126 = vector.extract_strided_slice %123 {offsets = [4, 0], sizes = [4, 144], strides = [1, 1]} : vector<8x144xf32> to vector<4x144xf32>
    %cst_66 = arith.constant dense<0.000000e+00> : vector<4x256xf32>
    %127 = tpu.matmul %126, %5, %cst_66 {dimension_numbers = #tpu.dot_dimension_numbers<[1], [0], [0], [1], [0, 0, 1, 1], [], []>} : vector<4x144xf32>, vector<144x256xf32>, vector<4x256xf32> -> vector<4x256xf32>
    %128 = arith.addf %125, %127 : vector<4x256xf32>
    %c1_67 = arith.constant 1 : index
    %c0_68 = arith.constant 0 : index
    %c0_69 = arith.constant 0 : index
    %129 = vector.load %arg7[%c1_67, %c0_68, %c0_69] : memref<5x4x36xf32, #tpu.memory_space<vmem>>, vector<1x4x36xf32>
    %130 = vector.shape_cast %129 : vector<1x4x36xf32> to vector<4x36xf32>
    %c17_i32_70 = arith.constant 17 : i32
    %131 = tpu.dynamic_rotate %109 by %c17_i32_70 dim 1 : vector<4x256xf32>, i32 -> vector<4x256xf32>
    %132 = vector.extract_strided_slice %6 {offsets = [0, 0], sizes = [1, 256], strides = [1, 1]} : vector<9x256xf32> to vector<1x256xf32>
    %133 = vector.broadcast %132 : vector<1x256xf32> to vector<4x256xf32>
    %134 = arith.mulf %131, %133 : vector<4x256xf32>
    %c16_i32_71 = arith.constant 16 : i32
    %135 = tpu.dynamic_rotate %109 by %c16_i32_71 dim 1 : vector<4x256xf32>, i32 -> vector<4x256xf32>
    %136 = vector.extract_strided_slice %6 {offsets = [1, 0], sizes = [1, 256], strides = [1, 1]} : vector<9x256xf32> to vector<1x256xf32>
    %137 = vector.broadcast %136 : vector<1x256xf32> to vector<4x256xf32>
    %138 = arith.mulf %135, %137 : vector<4x256xf32>
    %c15_i32_72 = arith.constant 15 : i32
    %139 = tpu.dynamic_rotate %109 by %c15_i32_72 dim 1 : vector<4x256xf32>, i32 -> vector<4x256xf32>
    %140 = vector.extract_strided_slice %6 {offsets = [2, 0], sizes = [1, 256], strides = [1, 1]} : vector<9x256xf32> to vector<1x256xf32>
    %141 = vector.broadcast %140 : vector<1x256xf32> to vector<4x256xf32>
    %142 = arith.mulf %139, %141 : vector<4x256xf32>
    %c1_i32_73 = arith.constant 1 : i32
    %143 = tpu.dynamic_rotate %109 by %c1_i32_73 dim 1 : vector<4x256xf32>, i32 -> vector<4x256xf32>
    %144 = vector.extract_strided_slice %6 {offsets = [3, 0], sizes = [1, 256], strides = [1, 1]} : vector<9x256xf32> to vector<1x256xf32>
    %145 = vector.broadcast %144 : vector<1x256xf32> to vector<4x256xf32>
    %146 = arith.mulf %143, %145 : vector<4x256xf32>
    %c255_i32_74 = arith.constant 255 : i32
    %147 = tpu.dynamic_rotate %109 by %c255_i32_74 dim 1 : vector<4x256xf32>, i32 -> vector<4x256xf32>
    %148 = vector.extract_strided_slice %6 {offsets = [5, 0], sizes = [1, 256], strides = [1, 1]} : vector<9x256xf32> to vector<1x256xf32>
    %149 = vector.broadcast %148 : vector<1x256xf32> to vector<4x256xf32>
    %150 = arith.mulf %147, %149 : vector<4x256xf32>
    %c241_i32_75 = arith.constant 241 : i32
    %151 = tpu.dynamic_rotate %109 by %c241_i32_75 dim 1 : vector<4x256xf32>, i32 -> vector<4x256xf32>
    %152 = vector.extract_strided_slice %6 {offsets = [6, 0], sizes = [1, 256], strides = [1, 1]} : vector<9x256xf32> to vector<1x256xf32>
    %153 = vector.broadcast %152 : vector<1x256xf32> to vector<4x256xf32>
    %154 = arith.mulf %151, %153 : vector<4x256xf32>
    %c240_i32_76 = arith.constant 240 : i32
    %155 = tpu.dynamic_rotate %109 by %c240_i32_76 dim 1 : vector<4x256xf32>, i32 -> vector<4x256xf32>
    %156 = vector.extract_strided_slice %6 {offsets = [7, 0], sizes = [1, 256], strides = [1, 1]} : vector<9x256xf32> to vector<1x256xf32>
    %157 = vector.broadcast %156 : vector<1x256xf32> to vector<4x256xf32>
    %158 = arith.mulf %155, %157 : vector<4x256xf32>
    %c239_i32_77 = arith.constant 239 : i32
    %159 = tpu.dynamic_rotate %109 by %c239_i32_77 dim 1 : vector<4x256xf32>, i32 -> vector<4x256xf32>
    %160 = vector.extract_strided_slice %6 {offsets = [8, 0], sizes = [1, 256], strides = [1, 1]} : vector<9x256xf32> to vector<1x256xf32>
    %161 = vector.broadcast %160 : vector<1x256xf32> to vector<4x256xf32>
    %162 = arith.mulf %159, %161 : vector<4x256xf32>
    %163 = tpu.concatenate %134, %138, %142, %146, %109, %150, %154, %158, %162 in 0 : vector<4x256xf32>, vector<4x256xf32>, vector<4x256xf32>, vector<4x256xf32>, vector<4x256xf32>, vector<4x256xf32>, vector<4x256xf32>, vector<4x256xf32>, vector<4x256xf32> -> vector<36x256xf32>
    %cst_78 = arith.constant dense<0.000000e+00> : vector<4x256xf32>
    %164 = tpu.matmul %130, %163, %cst_78 {dimension_numbers = #tpu.dot_dimension_numbers<[1], [0], [0], [1], [0, 0, 1, 1], [], []>} : vector<4x36xf32>, vector<36x256xf32>, vector<4x256xf32> -> vector<4x256xf32>
    %c1_79 = arith.constant 1 : index
    %c0_80 = arith.constant 0 : index
    %c0_81 = arith.constant 0 : index
    %165 = vector.load %arg8[%c1_79, %c0_80, %c0_81] : memref<5x4x1xf32, #tpu.memory_space<vmem>>, vector<1x4x1xf32>
    %166 = vector.shape_cast %165 : vector<1x4x1xf32> to vector<4x1xf32>
    %167 = vector.broadcast %166 : vector<4x1xf32> to vector<4x256xf32>
    %168 = arith.addf %164, %167 : vector<4x256xf32>
    %cst_82 = arith.constant 0.000000e+00 : f32
    %169 = vector.broadcast %cst_82 : f32 to vector<4x256xf32>
    %170 = arith.maximumf %168, %169 : vector<4x256xf32>
    %c1_83 = arith.constant 1 : index
    %c0_84 = arith.constant 0 : index
    %c0_85 = arith.constant 0 : index
    %171 = vector.load %arg9[%c1_83, %c0_84, %c0_85] : memref<5x4x36xf32, #tpu.memory_space<vmem>>, vector<1x4x36xf32>
    %172 = vector.shape_cast %171 : vector<1x4x36xf32> to vector<4x36xf32>
    %c17_i32_86 = arith.constant 17 : i32
    %173 = tpu.dynamic_rotate %170 by %c17_i32_86 dim 1 : vector<4x256xf32>, i32 -> vector<4x256xf32>
    %174 = vector.extract_strided_slice %6 {offsets = [0, 0], sizes = [1, 256], strides = [1, 1]} : vector<9x256xf32> to vector<1x256xf32>
    %175 = vector.broadcast %174 : vector<1x256xf32> to vector<4x256xf32>
    %176 = arith.mulf %173, %175 : vector<4x256xf32>
    %c16_i32_87 = arith.constant 16 : i32
    %177 = tpu.dynamic_rotate %170 by %c16_i32_87 dim 1 : vector<4x256xf32>, i32 -> vector<4x256xf32>
    %178 = vector.extract_strided_slice %6 {offsets = [1, 0], sizes = [1, 256], strides = [1, 1]} : vector<9x256xf32> to vector<1x256xf32>
    %179 = vector.broadcast %178 : vector<1x256xf32> to vector<4x256xf32>
    %180 = arith.mulf %177, %179 : vector<4x256xf32>
    %c15_i32_88 = arith.constant 15 : i32
    %181 = tpu.dynamic_rotate %170 by %c15_i32_88 dim 1 : vector<4x256xf32>, i32 -> vector<4x256xf32>
    %182 = vector.extract_strided_slice %6 {offsets = [2, 0], sizes = [1, 256], strides = [1, 1]} : vector<9x256xf32> to vector<1x256xf32>
    %183 = vector.broadcast %182 : vector<1x256xf32> to vector<4x256xf32>
    %184 = arith.mulf %181, %183 : vector<4x256xf32>
    %c1_i32_89 = arith.constant 1 : i32
    %185 = tpu.dynamic_rotate %170 by %c1_i32_89 dim 1 : vector<4x256xf32>, i32 -> vector<4x256xf32>
    %186 = vector.extract_strided_slice %6 {offsets = [3, 0], sizes = [1, 256], strides = [1, 1]} : vector<9x256xf32> to vector<1x256xf32>
    %187 = vector.broadcast %186 : vector<1x256xf32> to vector<4x256xf32>
    %188 = arith.mulf %185, %187 : vector<4x256xf32>
    %c255_i32_90 = arith.constant 255 : i32
    %189 = tpu.dynamic_rotate %170 by %c255_i32_90 dim 1 : vector<4x256xf32>, i32 -> vector<4x256xf32>
    %190 = vector.extract_strided_slice %6 {offsets = [5, 0], sizes = [1, 256], strides = [1, 1]} : vector<9x256xf32> to vector<1x256xf32>
    %191 = vector.broadcast %190 : vector<1x256xf32> to vector<4x256xf32>
    %192 = arith.mulf %189, %191 : vector<4x256xf32>
    %c241_i32_91 = arith.constant 241 : i32
    %193 = tpu.dynamic_rotate %170 by %c241_i32_91 dim 1 : vector<4x256xf32>, i32 -> vector<4x256xf32>
    %194 = vector.extract_strided_slice %6 {offsets = [6, 0], sizes = [1, 256], strides = [1, 1]} : vector<9x256xf32> to vector<1x256xf32>
    %195 = vector.broadcast %194 : vector<1x256xf32> to vector<4x256xf32>
    %196 = arith.mulf %193, %195 : vector<4x256xf32>
    %c240_i32_92 = arith.constant 240 : i32
    %197 = tpu.dynamic_rotate %170 by %c240_i32_92 dim 1 : vector<4x256xf32>, i32 -> vector<4x256xf32>
    %198 = vector.extract_strided_slice %6 {offsets = [7, 0], sizes = [1, 256], strides = [1, 1]} : vector<9x256xf32> to vector<1x256xf32>
    %199 = vector.broadcast %198 : vector<1x256xf32> to vector<4x256xf32>
    %200 = arith.mulf %197, %199 : vector<4x256xf32>
    %c239_i32_93 = arith.constant 239 : i32
    %201 = tpu.dynamic_rotate %170 by %c239_i32_93 dim 1 : vector<4x256xf32>, i32 -> vector<4x256xf32>
    %202 = vector.extract_strided_slice %6 {offsets = [8, 0], sizes = [1, 256], strides = [1, 1]} : vector<9x256xf32> to vector<1x256xf32>
    %203 = vector.broadcast %202 : vector<1x256xf32> to vector<4x256xf32>
    %204 = arith.mulf %201, %203 : vector<4x256xf32>
    %205 = tpu.concatenate %176, %180, %184, %188, %170, %192, %196, %200, %204 in 0 : vector<4x256xf32>, vector<4x256xf32>, vector<4x256xf32>, vector<4x256xf32>, vector<4x256xf32>, vector<4x256xf32>, vector<4x256xf32>, vector<4x256xf32>, vector<4x256xf32> -> vector<36x256xf32>
    %cst_94 = arith.constant dense<0.000000e+00> : vector<4x256xf32>
    %206 = tpu.matmul %172, %205, %cst_94 {dimension_numbers = #tpu.dot_dimension_numbers<[1], [0], [0], [1], [0, 0, 1, 1], [], []>} : vector<4x36xf32>, vector<36x256xf32>, vector<4x256xf32> -> vector<4x256xf32>
    %c1_95 = arith.constant 1 : index
    %c0_96 = arith.constant 0 : index
    %c0_97 = arith.constant 0 : index
    %207 = vector.load %arg10[%c1_95, %c0_96, %c0_97] : memref<5x4x1xf32, #tpu.memory_space<vmem>>, vector<1x4x1xf32>
    %208 = vector.shape_cast %207 : vector<1x4x1xf32> to vector<4x1xf32>
    %209 = vector.broadcast %208 : vector<4x1xf32> to vector<4x256xf32>
    %210 = arith.addf %206, %209 : vector<4x256xf32>
    %211 = arith.addf %210, %128 : vector<4x256xf32>
    %212 = arith.addf %211, %109 : vector<4x256xf32>
    %cst_98 = arith.constant dense<0.000000e+00> : vector<4x144xf32>
    %213 = tpu.matmul %212, %2, %cst_98 {dimension_numbers = #tpu.dot_dimension_numbers<[1], [0], [0], [1], [0, 0, 1, 1], [], []>} : vector<4x256xf32>, vector<256x144xf32>, vector<4x144xf32> -> vector<4x144xf32>
    %cst_99 = arith.constant dense<0.000000e+00> : vector<4x144xf32>
    %214 = tpu.matmul %212, %3, %cst_99 {dimension_numbers = #tpu.dot_dimension_numbers<[1], [0], [0], [1], [0, 0, 1, 1], [], []>} : vector<4x256xf32>, vector<256x144xf32>, vector<4x144xf32> -> vector<4x144xf32>
    %c2 = arith.constant 2 : index
    %c0_100 = arith.constant 0 : index
    %c0_101 = arith.constant 0 : index
    %215 = vector.load %arg11[%c2, %c0_100, %c0_101] : memref<5x8x4xf32, #tpu.memory_space<vmem>>, vector<1x8x4xf32>
    %216 = vector.shape_cast %215 : vector<1x8x4xf32> to vector<8x4xf32>
    %cst_102 = arith.constant dense<0.000000e+00> : vector<8x144xf32>
    %217 = tpu.matmul %216, %214, %cst_102 {dimension_numbers = #tpu.dot_dimension_numbers<[1], [0], [0], [1], [0, 0, 1, 1], [], []>} : vector<8x4xf32>, vector<4x144xf32>, vector<8x144xf32> -> vector<8x144xf32>
    %c2_103 = arith.constant 2 : index
    %c0_104 = arith.constant 0 : index
    %c0_105 = arith.constant 0 : index
    %218 = vector.load %arg12[%c2_103, %c0_104, %c0_105] : memref<5x8x4xf32, #tpu.memory_space<vmem>>, vector<1x8x4xf32>
    %219 = vector.shape_cast %218 : vector<1x8x4xf32> to vector<8x4xf32>
    %cst_106 = arith.constant dense<0.000000e+00> : vector<8x144xf32>
    %220 = tpu.matmul %219, %213, %cst_106 {dimension_numbers = #tpu.dot_dimension_numbers<[1], [0], [0], [1], [0, 0, 1, 1], [], []>} : vector<8x4xf32>, vector<4x144xf32>, vector<8x144xf32> -> vector<8x144xf32>
    %221 = arith.addf %217, %220 : vector<8x144xf32>
    %cst_107 = arith.constant 0.000000e+00 : f32
    %222 = vector.broadcast %cst_107 : f32 to vector<8x144xf32>
    %223 = arith.maximumf %221, %222 : vector<8x144xf32>
    %c2_108 = arith.constant 2 : index
    %c0_109 = arith.constant 0 : index
    %c0_110 = arith.constant 0 : index
    %224 = vector.load %arg13[%c2_108, %c0_109, %c0_110] : memref<5x8x8xf32, #tpu.memory_space<vmem>>, vector<1x8x8xf32>
    %225 = vector.shape_cast %224 : vector<1x8x8xf32> to vector<8x8xf32>
    %cst_111 = arith.constant dense<0.000000e+00> : vector<8x144xf32>
    %226 = tpu.matmul %225, %223, %cst_111 {dimension_numbers = #tpu.dot_dimension_numbers<[1], [0], [0], [1], [0, 0, 1, 1], [], []>} : vector<8x8xf32>, vector<8x144xf32>, vector<8x144xf32> -> vector<8x144xf32>
    %227 = vector.extract_strided_slice %226 {offsets = [0, 0], sizes = [4, 144], strides = [1, 1]} : vector<8x144xf32> to vector<4x144xf32>
    %cst_112 = arith.constant dense<0.000000e+00> : vector<4x256xf32>
    %228 = tpu.matmul %227, %4, %cst_112 {dimension_numbers = #tpu.dot_dimension_numbers<[1], [0], [0], [1], [0, 0, 1, 1], [], []>} : vector<4x144xf32>, vector<144x256xf32>, vector<4x256xf32> -> vector<4x256xf32>
    %229 = vector.extract_strided_slice %226 {offsets = [4, 0], sizes = [4, 144], strides = [1, 1]} : vector<8x144xf32> to vector<4x144xf32>
    %cst_113 = arith.constant dense<0.000000e+00> : vector<4x256xf32>
    %230 = tpu.matmul %229, %5, %cst_113 {dimension_numbers = #tpu.dot_dimension_numbers<[1], [0], [0], [1], [0, 0, 1, 1], [], []>} : vector<4x144xf32>, vector<144x256xf32>, vector<4x256xf32> -> vector<4x256xf32>
    %231 = arith.addf %228, %230 : vector<4x256xf32>
    %c2_114 = arith.constant 2 : index
    %c0_115 = arith.constant 0 : index
    %c0_116 = arith.constant 0 : index
    %232 = vector.load %arg7[%c2_114, %c0_115, %c0_116] : memref<5x4x36xf32, #tpu.memory_space<vmem>>, vector<1x4x36xf32>
    %233 = vector.shape_cast %232 : vector<1x4x36xf32> to vector<4x36xf32>
    %c17_i32_117 = arith.constant 17 : i32
    %234 = tpu.dynamic_rotate %212 by %c17_i32_117 dim 1 : vector<4x256xf32>, i32 -> vector<4x256xf32>
    %235 = vector.extract_strided_slice %6 {offsets = [0, 0], sizes = [1, 256], strides = [1, 1]} : vector<9x256xf32> to vector<1x256xf32>
    %236 = vector.broadcast %235 : vector<1x256xf32> to vector<4x256xf32>
    %237 = arith.mulf %234, %236 : vector<4x256xf32>
    %c16_i32_118 = arith.constant 16 : i32
    %238 = tpu.dynamic_rotate %212 by %c16_i32_118 dim 1 : vector<4x256xf32>, i32 -> vector<4x256xf32>
    %239 = vector.extract_strided_slice %6 {offsets = [1, 0], sizes = [1, 256], strides = [1, 1]} : vector<9x256xf32> to vector<1x256xf32>
    %240 = vector.broadcast %239 : vector<1x256xf32> to vector<4x256xf32>
    %241 = arith.mulf %238, %240 : vector<4x256xf32>
    %c15_i32_119 = arith.constant 15 : i32
    %242 = tpu.dynamic_rotate %212 by %c15_i32_119 dim 1 : vector<4x256xf32>, i32 -> vector<4x256xf32>
    %243 = vector.extract_strided_slice %6 {offsets = [2, 0], sizes = [1, 256], strides = [1, 1]} : vector<9x256xf32> to vector<1x256xf32>
    %244 = vector.broadcast %243 : vector<1x256xf32> to vector<4x256xf32>
    %245 = arith.mulf %242, %244 : vector<4x256xf32>
    %c1_i32_120 = arith.constant 1 : i32
    %246 = tpu.dynamic_rotate %212 by %c1_i32_120 dim 1 : vector<4x256xf32>, i32 -> vector<4x256xf32>
    %247 = vector.extract_strided_slice %6 {offsets = [3, 0], sizes = [1, 256], strides = [1, 1]} : vector<9x256xf32> to vector<1x256xf32>
    %248 = vector.broadcast %247 : vector<1x256xf32> to vector<4x256xf32>
    %249 = arith.mulf %246, %248 : vector<4x256xf32>
    %c255_i32_121 = arith.constant 255 : i32
    %250 = tpu.dynamic_rotate %212 by %c255_i32_121 dim 1 : vector<4x256xf32>, i32 -> vector<4x256xf32>
    %251 = vector.extract_strided_slice %6 {offsets = [5, 0], sizes = [1, 256], strides = [1, 1]} : vector<9x256xf32> to vector<1x256xf32>
    %252 = vector.broadcast %251 : vector<1x256xf32> to vector<4x256xf32>
    %253 = arith.mulf %250, %252 : vector<4x256xf32>
    %c241_i32_122 = arith.constant 241 : i32
    %254 = tpu.dynamic_rotate %212 by %c241_i32_122 dim 1 : vector<4x256xf32>, i32 -> vector<4x256xf32>
    %255 = vector.extract_strided_slice %6 {offsets = [6, 0], sizes = [1, 256], strides = [1, 1]} : vector<9x256xf32> to vector<1x256xf32>
    %256 = vector.broadcast %255 : vector<1x256xf32> to vector<4x256xf32>
    %257 = arith.mulf %254, %256 : vector<4x256xf32>
    %c240_i32_123 = arith.constant 240 : i32
    %258 = tpu.dynamic_rotate %212 by %c240_i32_123 dim 1 : vector<4x256xf32>, i32 -> vector<4x256xf32>
    %259 = vector.extract_strided_slice %6 {offsets = [7, 0], sizes = [1, 256], strides = [1, 1]} : vector<9x256xf32> to vector<1x256xf32>
    %260 = vector.broadcast %259 : vector<1x256xf32> to vector<4x256xf32>
    %261 = arith.mulf %258, %260 : vector<4x256xf32>
    %c239_i32_124 = arith.constant 239 : i32
    %262 = tpu.dynamic_rotate %212 by %c239_i32_124 dim 1 : vector<4x256xf32>, i32 -> vector<4x256xf32>
    %263 = vector.extract_strided_slice %6 {offsets = [8, 0], sizes = [1, 256], strides = [1, 1]} : vector<9x256xf32> to vector<1x256xf32>
    %264 = vector.broadcast %263 : vector<1x256xf32> to vector<4x256xf32>
    %265 = arith.mulf %262, %264 : vector<4x256xf32>
    %266 = tpu.concatenate %237, %241, %245, %249, %212, %253, %257, %261, %265 in 0 : vector<4x256xf32>, vector<4x256xf32>, vector<4x256xf32>, vector<4x256xf32>, vector<4x256xf32>, vector<4x256xf32>, vector<4x256xf32>, vector<4x256xf32>, vector<4x256xf32> -> vector<36x256xf32>
    %cst_125 = arith.constant dense<0.000000e+00> : vector<4x256xf32>
    %267 = tpu.matmul %233, %266, %cst_125 {dimension_numbers = #tpu.dot_dimension_numbers<[1], [0], [0], [1], [0, 0, 1, 1], [], []>} : vector<4x36xf32>, vector<36x256xf32>, vector<4x256xf32> -> vector<4x256xf32>
    %c2_126 = arith.constant 2 : index
    %c0_127 = arith.constant 0 : index
    %c0_128 = arith.constant 0 : index
    %268 = vector.load %arg8[%c2_126, %c0_127, %c0_128] : memref<5x4x1xf32, #tpu.memory_space<vmem>>, vector<1x4x1xf32>
    %269 = vector.shape_cast %268 : vector<1x4x1xf32> to vector<4x1xf32>
    %270 = vector.broadcast %269 : vector<4x1xf32> to vector<4x256xf32>
    %271 = arith.addf %267, %270 : vector<4x256xf32>
    %cst_129 = arith.constant 0.000000e+00 : f32
    %272 = vector.broadcast %cst_129 : f32 to vector<4x256xf32>
    %273 = arith.maximumf %271, %272 : vector<4x256xf32>
    %c2_130 = arith.constant 2 : index
    %c0_131 = arith.constant 0 : index
    %c0_132 = arith.constant 0 : index
    %274 = vector.load %arg9[%c2_130, %c0_131, %c0_132] : memref<5x4x36xf32, #tpu.memory_space<vmem>>, vector<1x4x36xf32>
    %275 = vector.shape_cast %274 : vector<1x4x36xf32> to vector<4x36xf32>
    %c17_i32_133 = arith.constant 17 : i32
    %276 = tpu.dynamic_rotate %273 by %c17_i32_133 dim 1 : vector<4x256xf32>, i32 -> vector<4x256xf32>
    %277 = vector.extract_strided_slice %6 {offsets = [0, 0], sizes = [1, 256], strides = [1, 1]} : vector<9x256xf32> to vector<1x256xf32>
    %278 = vector.broadcast %277 : vector<1x256xf32> to vector<4x256xf32>
    %279 = arith.mulf %276, %278 : vector<4x256xf32>
    %c16_i32_134 = arith.constant 16 : i32
    %280 = tpu.dynamic_rotate %273 by %c16_i32_134 dim 1 : vector<4x256xf32>, i32 -> vector<4x256xf32>
    %281 = vector.extract_strided_slice %6 {offsets = [1, 0], sizes = [1, 256], strides = [1, 1]} : vector<9x256xf32> to vector<1x256xf32>
    %282 = vector.broadcast %281 : vector<1x256xf32> to vector<4x256xf32>
    %283 = arith.mulf %280, %282 : vector<4x256xf32>
    %c15_i32_135 = arith.constant 15 : i32
    %284 = tpu.dynamic_rotate %273 by %c15_i32_135 dim 1 : vector<4x256xf32>, i32 -> vector<4x256xf32>
    %285 = vector.extract_strided_slice %6 {offsets = [2, 0], sizes = [1, 256], strides = [1, 1]} : vector<9x256xf32> to vector<1x256xf32>
    %286 = vector.broadcast %285 : vector<1x256xf32> to vector<4x256xf32>
    %287 = arith.mulf %284, %286 : vector<4x256xf32>
    %c1_i32_136 = arith.constant 1 : i32
    %288 = tpu.dynamic_rotate %273 by %c1_i32_136 dim 1 : vector<4x256xf32>, i32 -> vector<4x256xf32>
    %289 = vector.extract_strided_slice %6 {offsets = [3, 0], sizes = [1, 256], strides = [1, 1]} : vector<9x256xf32> to vector<1x256xf32>
    %290 = vector.broadcast %289 : vector<1x256xf32> to vector<4x256xf32>
    %291 = arith.mulf %288, %290 : vector<4x256xf32>
    %c255_i32_137 = arith.constant 255 : i32
    %292 = tpu.dynamic_rotate %273 by %c255_i32_137 dim 1 : vector<4x256xf32>, i32 -> vector<4x256xf32>
    %293 = vector.extract_strided_slice %6 {offsets = [5, 0], sizes = [1, 256], strides = [1, 1]} : vector<9x256xf32> to vector<1x256xf32>
    %294 = vector.broadcast %293 : vector<1x256xf32> to vector<4x256xf32>
    %295 = arith.mulf %292, %294 : vector<4x256xf32>
    %c241_i32_138 = arith.constant 241 : i32
    %296 = tpu.dynamic_rotate %273 by %c241_i32_138 dim 1 : vector<4x256xf32>, i32 -> vector<4x256xf32>
    %297 = vector.extract_strided_slice %6 {offsets = [6, 0], sizes = [1, 256], strides = [1, 1]} : vector<9x256xf32> to vector<1x256xf32>
    %298 = vector.broadcast %297 : vector<1x256xf32> to vector<4x256xf32>
    %299 = arith.mulf %296, %298 : vector<4x256xf32>
    %c240_i32_139 = arith.constant 240 : i32
    %300 = tpu.dynamic_rotate %273 by %c240_i32_139 dim 1 : vector<4x256xf32>, i32 -> vector<4x256xf32>
    %301 = vector.extract_strided_slice %6 {offsets = [7, 0], sizes = [1, 256], strides = [1, 1]} : vector<9x256xf32> to vector<1x256xf32>
    %302 = vector.broadcast %301 : vector<1x256xf32> to vector<4x256xf32>
    %303 = arith.mulf %300, %302 : vector<4x256xf32>
    %c239_i32_140 = arith.constant 239 : i32
    %304 = tpu.dynamic_rotate %273 by %c239_i32_140 dim 1 : vector<4x256xf32>, i32 -> vector<4x256xf32>
    %305 = vector.extract_strided_slice %6 {offsets = [8, 0], sizes = [1, 256], strides = [1, 1]} : vector<9x256xf32> to vector<1x256xf32>
    %306 = vector.broadcast %305 : vector<1x256xf32> to vector<4x256xf32>
    %307 = arith.mulf %304, %306 : vector<4x256xf32>
    %308 = tpu.concatenate %279, %283, %287, %291, %273, %295, %299, %303, %307 in 0 : vector<4x256xf32>, vector<4x256xf32>, vector<4x256xf32>, vector<4x256xf32>, vector<4x256xf32>, vector<4x256xf32>, vector<4x256xf32>, vector<4x256xf32>, vector<4x256xf32> -> vector<36x256xf32>
    %cst_141 = arith.constant dense<0.000000e+00> : vector<4x256xf32>
    %309 = tpu.matmul %275, %308, %cst_141 {dimension_numbers = #tpu.dot_dimension_numbers<[1], [0], [0], [1], [0, 0, 1, 1], [], []>} : vector<4x36xf32>, vector<36x256xf32>, vector<4x256xf32> -> vector<4x256xf32>
    %c2_142 = arith.constant 2 : index
    %c0_143 = arith.constant 0 : index
    %c0_144 = arith.constant 0 : index
    %310 = vector.load %arg10[%c2_142, %c0_143, %c0_144] : memref<5x4x1xf32, #tpu.memory_space<vmem>>, vector<1x4x1xf32>
    %311 = vector.shape_cast %310 : vector<1x4x1xf32> to vector<4x1xf32>
    %312 = vector.broadcast %311 : vector<4x1xf32> to vector<4x256xf32>
    %313 = arith.addf %309, %312 : vector<4x256xf32>
    %314 = arith.addf %313, %231 : vector<4x256xf32>
    %315 = arith.addf %314, %212 : vector<4x256xf32>
    %cst_145 = arith.constant dense<0.000000e+00> : vector<4x144xf32>
    %316 = tpu.matmul %315, %2, %cst_145 {dimension_numbers = #tpu.dot_dimension_numbers<[1], [0], [0], [1], [0, 0, 1, 1], [], []>} : vector<4x256xf32>, vector<256x144xf32>, vector<4x144xf32> -> vector<4x144xf32>
    %cst_146 = arith.constant dense<0.000000e+00> : vector<4x144xf32>
    %317 = tpu.matmul %315, %3, %cst_146 {dimension_numbers = #tpu.dot_dimension_numbers<[1], [0], [0], [1], [0, 0, 1, 1], [], []>} : vector<4x256xf32>, vector<256x144xf32>, vector<4x144xf32> -> vector<4x144xf32>
    %c3 = arith.constant 3 : index
    %c0_147 = arith.constant 0 : index
    %c0_148 = arith.constant 0 : index
    %318 = vector.load %arg11[%c3, %c0_147, %c0_148] : memref<5x8x4xf32, #tpu.memory_space<vmem>>, vector<1x8x4xf32>
    %319 = vector.shape_cast %318 : vector<1x8x4xf32> to vector<8x4xf32>
    %cst_149 = arith.constant dense<0.000000e+00> : vector<8x144xf32>
    %320 = tpu.matmul %319, %317, %cst_149 {dimension_numbers = #tpu.dot_dimension_numbers<[1], [0], [0], [1], [0, 0, 1, 1], [], []>} : vector<8x4xf32>, vector<4x144xf32>, vector<8x144xf32> -> vector<8x144xf32>
    %c3_150 = arith.constant 3 : index
    %c0_151 = arith.constant 0 : index
    %c0_152 = arith.constant 0 : index
    %321 = vector.load %arg12[%c3_150, %c0_151, %c0_152] : memref<5x8x4xf32, #tpu.memory_space<vmem>>, vector<1x8x4xf32>
    %322 = vector.shape_cast %321 : vector<1x8x4xf32> to vector<8x4xf32>
    %cst_153 = arith.constant dense<0.000000e+00> : vector<8x144xf32>
    %323 = tpu.matmul %322, %316, %cst_153 {dimension_numbers = #tpu.dot_dimension_numbers<[1], [0], [0], [1], [0, 0, 1, 1], [], []>} : vector<8x4xf32>, vector<4x144xf32>, vector<8x144xf32> -> vector<8x144xf32>
    %324 = arith.addf %320, %323 : vector<8x144xf32>
    %cst_154 = arith.constant 0.000000e+00 : f32
    %325 = vector.broadcast %cst_154 : f32 to vector<8x144xf32>
    %326 = arith.maximumf %324, %325 : vector<8x144xf32>
    %c3_155 = arith.constant 3 : index
    %c0_156 = arith.constant 0 : index
    %c0_157 = arith.constant 0 : index
    %327 = vector.load %arg13[%c3_155, %c0_156, %c0_157] : memref<5x8x8xf32, #tpu.memory_space<vmem>>, vector<1x8x8xf32>
    %328 = vector.shape_cast %327 : vector<1x8x8xf32> to vector<8x8xf32>
    %cst_158 = arith.constant dense<0.000000e+00> : vector<8x144xf32>
    %329 = tpu.matmul %328, %326, %cst_158 {dimension_numbers = #tpu.dot_dimension_numbers<[1], [0], [0], [1], [0, 0, 1, 1], [], []>} : vector<8x8xf32>, vector<8x144xf32>, vector<8x144xf32> -> vector<8x144xf32>
    %330 = vector.extract_strided_slice %329 {offsets = [0, 0], sizes = [4, 144], strides = [1, 1]} : vector<8x144xf32> to vector<4x144xf32>
    %cst_159 = arith.constant dense<0.000000e+00> : vector<4x256xf32>
    %331 = tpu.matmul %330, %4, %cst_159 {dimension_numbers = #tpu.dot_dimension_numbers<[1], [0], [0], [1], [0, 0, 1, 1], [], []>} : vector<4x144xf32>, vector<144x256xf32>, vector<4x256xf32> -> vector<4x256xf32>
    %332 = vector.extract_strided_slice %329 {offsets = [4, 0], sizes = [4, 144], strides = [1, 1]} : vector<8x144xf32> to vector<4x144xf32>
    %cst_160 = arith.constant dense<0.000000e+00> : vector<4x256xf32>
    %333 = tpu.matmul %332, %5, %cst_160 {dimension_numbers = #tpu.dot_dimension_numbers<[1], [0], [0], [1], [0, 0, 1, 1], [], []>} : vector<4x144xf32>, vector<144x256xf32>, vector<4x256xf32> -> vector<4x256xf32>
    %334 = arith.addf %331, %333 : vector<4x256xf32>
    %c3_161 = arith.constant 3 : index
    %c0_162 = arith.constant 0 : index
    %c0_163 = arith.constant 0 : index
    %335 = vector.load %arg7[%c3_161, %c0_162, %c0_163] : memref<5x4x36xf32, #tpu.memory_space<vmem>>, vector<1x4x36xf32>
    %336 = vector.shape_cast %335 : vector<1x4x36xf32> to vector<4x36xf32>
    %c17_i32_164 = arith.constant 17 : i32
    %337 = tpu.dynamic_rotate %315 by %c17_i32_164 dim 1 : vector<4x256xf32>, i32 -> vector<4x256xf32>
    %338 = vector.extract_strided_slice %6 {offsets = [0, 0], sizes = [1, 256], strides = [1, 1]} : vector<9x256xf32> to vector<1x256xf32>
    %339 = vector.broadcast %338 : vector<1x256xf32> to vector<4x256xf32>
    %340 = arith.mulf %337, %339 : vector<4x256xf32>
    %c16_i32_165 = arith.constant 16 : i32
    %341 = tpu.dynamic_rotate %315 by %c16_i32_165 dim 1 : vector<4x256xf32>, i32 -> vector<4x256xf32>
    %342 = vector.extract_strided_slice %6 {offsets = [1, 0], sizes = [1, 256], strides = [1, 1]} : vector<9x256xf32> to vector<1x256xf32>
    %343 = vector.broadcast %342 : vector<1x256xf32> to vector<4x256xf32>
    %344 = arith.mulf %341, %343 : vector<4x256xf32>
    %c15_i32_166 = arith.constant 15 : i32
    %345 = tpu.dynamic_rotate %315 by %c15_i32_166 dim 1 : vector<4x256xf32>, i32 -> vector<4x256xf32>
    %346 = vector.extract_strided_slice %6 {offsets = [2, 0], sizes = [1, 256], strides = [1, 1]} : vector<9x256xf32> to vector<1x256xf32>
    %347 = vector.broadcast %346 : vector<1x256xf32> to vector<4x256xf32>
    %348 = arith.mulf %345, %347 : vector<4x256xf32>
    %c1_i32_167 = arith.constant 1 : i32
    %349 = tpu.dynamic_rotate %315 by %c1_i32_167 dim 1 : vector<4x256xf32>, i32 -> vector<4x256xf32>
    %350 = vector.extract_strided_slice %6 {offsets = [3, 0], sizes = [1, 256], strides = [1, 1]} : vector<9x256xf32> to vector<1x256xf32>
    %351 = vector.broadcast %350 : vector<1x256xf32> to vector<4x256xf32>
    %352 = arith.mulf %349, %351 : vector<4x256xf32>
    %c255_i32_168 = arith.constant 255 : i32
    %353 = tpu.dynamic_rotate %315 by %c255_i32_168 dim 1 : vector<4x256xf32>, i32 -> vector<4x256xf32>
    %354 = vector.extract_strided_slice %6 {offsets = [5, 0], sizes = [1, 256], strides = [1, 1]} : vector<9x256xf32> to vector<1x256xf32>
    %355 = vector.broadcast %354 : vector<1x256xf32> to vector<4x256xf32>
    %356 = arith.mulf %353, %355 : vector<4x256xf32>
    %c241_i32_169 = arith.constant 241 : i32
    %357 = tpu.dynamic_rotate %315 by %c241_i32_169 dim 1 : vector<4x256xf32>, i32 -> vector<4x256xf32>
    %358 = vector.extract_strided_slice %6 {offsets = [6, 0], sizes = [1, 256], strides = [1, 1]} : vector<9x256xf32> to vector<1x256xf32>
    %359 = vector.broadcast %358 : vector<1x256xf32> to vector<4x256xf32>
    %360 = arith.mulf %357, %359 : vector<4x256xf32>
    %c240_i32_170 = arith.constant 240 : i32
    %361 = tpu.dynamic_rotate %315 by %c240_i32_170 dim 1 : vector<4x256xf32>, i32 -> vector<4x256xf32>
    %362 = vector.extract_strided_slice %6 {offsets = [7, 0], sizes = [1, 256], strides = [1, 1]} : vector<9x256xf32> to vector<1x256xf32>
    %363 = vector.broadcast %362 : vector<1x256xf32> to vector<4x256xf32>
    %364 = arith.mulf %361, %363 : vector<4x256xf32>
    %c239_i32_171 = arith.constant 239 : i32
    %365 = tpu.dynamic_rotate %315 by %c239_i32_171 dim 1 : vector<4x256xf32>, i32 -> vector<4x256xf32>
    %366 = vector.extract_strided_slice %6 {offsets = [8, 0], sizes = [1, 256], strides = [1, 1]} : vector<9x256xf32> to vector<1x256xf32>
    %367 = vector.broadcast %366 : vector<1x256xf32> to vector<4x256xf32>
    %368 = arith.mulf %365, %367 : vector<4x256xf32>
    %369 = tpu.concatenate %340, %344, %348, %352, %315, %356, %360, %364, %368 in 0 : vector<4x256xf32>, vector<4x256xf32>, vector<4x256xf32>, vector<4x256xf32>, vector<4x256xf32>, vector<4x256xf32>, vector<4x256xf32>, vector<4x256xf32>, vector<4x256xf32> -> vector<36x256xf32>
    %cst_172 = arith.constant dense<0.000000e+00> : vector<4x256xf32>
    %370 = tpu.matmul %336, %369, %cst_172 {dimension_numbers = #tpu.dot_dimension_numbers<[1], [0], [0], [1], [0, 0, 1, 1], [], []>} : vector<4x36xf32>, vector<36x256xf32>, vector<4x256xf32> -> vector<4x256xf32>
    %c3_173 = arith.constant 3 : index
    %c0_174 = arith.constant 0 : index
    %c0_175 = arith.constant 0 : index
    %371 = vector.load %arg8[%c3_173, %c0_174, %c0_175] : memref<5x4x1xf32, #tpu.memory_space<vmem>>, vector<1x4x1xf32>
    %372 = vector.shape_cast %371 : vector<1x4x1xf32> to vector<4x1xf32>
    %373 = vector.broadcast %372 : vector<4x1xf32> to vector<4x256xf32>
    %374 = arith.addf %370, %373 : vector<4x256xf32>
    %cst_176 = arith.constant 0.000000e+00 : f32
    %375 = vector.broadcast %cst_176 : f32 to vector<4x256xf32>
    %376 = arith.maximumf %374, %375 : vector<4x256xf32>
    %c3_177 = arith.constant 3 : index
    %c0_178 = arith.constant 0 : index
    %c0_179 = arith.constant 0 : index
    %377 = vector.load %arg9[%c3_177, %c0_178, %c0_179] : memref<5x4x36xf32, #tpu.memory_space<vmem>>, vector<1x4x36xf32>
    %378 = vector.shape_cast %377 : vector<1x4x36xf32> to vector<4x36xf32>
    %c17_i32_180 = arith.constant 17 : i32
    %379 = tpu.dynamic_rotate %376 by %c17_i32_180 dim 1 : vector<4x256xf32>, i32 -> vector<4x256xf32>
    %380 = vector.extract_strided_slice %6 {offsets = [0, 0], sizes = [1, 256], strides = [1, 1]} : vector<9x256xf32> to vector<1x256xf32>
    %381 = vector.broadcast %380 : vector<1x256xf32> to vector<4x256xf32>
    %382 = arith.mulf %379, %381 : vector<4x256xf32>
    %c16_i32_181 = arith.constant 16 : i32
    %383 = tpu.dynamic_rotate %376 by %c16_i32_181 dim 1 : vector<4x256xf32>, i32 -> vector<4x256xf32>
    %384 = vector.extract_strided_slice %6 {offsets = [1, 0], sizes = [1, 256], strides = [1, 1]} : vector<9x256xf32> to vector<1x256xf32>
    %385 = vector.broadcast %384 : vector<1x256xf32> to vector<4x256xf32>
    %386 = arith.mulf %383, %385 : vector<4x256xf32>
    %c15_i32_182 = arith.constant 15 : i32
    %387 = tpu.dynamic_rotate %376 by %c15_i32_182 dim 1 : vector<4x256xf32>, i32 -> vector<4x256xf32>
    %388 = vector.extract_strided_slice %6 {offsets = [2, 0], sizes = [1, 256], strides = [1, 1]} : vector<9x256xf32> to vector<1x256xf32>
    %389 = vector.broadcast %388 : vector<1x256xf32> to vector<4x256xf32>
    %390 = arith.mulf %387, %389 : vector<4x256xf32>
    %c1_i32_183 = arith.constant 1 : i32
    %391 = tpu.dynamic_rotate %376 by %c1_i32_183 dim 1 : vector<4x256xf32>, i32 -> vector<4x256xf32>
    %392 = vector.extract_strided_slice %6 {offsets = [3, 0], sizes = [1, 256], strides = [1, 1]} : vector<9x256xf32> to vector<1x256xf32>
    %393 = vector.broadcast %392 : vector<1x256xf32> to vector<4x256xf32>
    %394 = arith.mulf %391, %393 : vector<4x256xf32>
    %c255_i32_184 = arith.constant 255 : i32
    %395 = tpu.dynamic_rotate %376 by %c255_i32_184 dim 1 : vector<4x256xf32>, i32 -> vector<4x256xf32>
    %396 = vector.extract_strided_slice %6 {offsets = [5, 0], sizes = [1, 256], strides = [1, 1]} : vector<9x256xf32> to vector<1x256xf32>
    %397 = vector.broadcast %396 : vector<1x256xf32> to vector<4x256xf32>
    %398 = arith.mulf %395, %397 : vector<4x256xf32>
    %c241_i32_185 = arith.constant 241 : i32
    %399 = tpu.dynamic_rotate %376 by %c241_i32_185 dim 1 : vector<4x256xf32>, i32 -> vector<4x256xf32>
    %400 = vector.extract_strided_slice %6 {offsets = [6, 0], sizes = [1, 256], strides = [1, 1]} : vector<9x256xf32> to vector<1x256xf32>
    %401 = vector.broadcast %400 : vector<1x256xf32> to vector<4x256xf32>
    %402 = arith.mulf %399, %401 : vector<4x256xf32>
    %c240_i32_186 = arith.constant 240 : i32
    %403 = tpu.dynamic_rotate %376 by %c240_i32_186 dim 1 : vector<4x256xf32>, i32 -> vector<4x256xf32>
    %404 = vector.extract_strided_slice %6 {offsets = [7, 0], sizes = [1, 256], strides = [1, 1]} : vector<9x256xf32> to vector<1x256xf32>
    %405 = vector.broadcast %404 : vector<1x256xf32> to vector<4x256xf32>
    %406 = arith.mulf %403, %405 : vector<4x256xf32>
    %c239_i32_187 = arith.constant 239 : i32
    %407 = tpu.dynamic_rotate %376 by %c239_i32_187 dim 1 : vector<4x256xf32>, i32 -> vector<4x256xf32>
    %408 = vector.extract_strided_slice %6 {offsets = [8, 0], sizes = [1, 256], strides = [1, 1]} : vector<9x256xf32> to vector<1x256xf32>
    %409 = vector.broadcast %408 : vector<1x256xf32> to vector<4x256xf32>
    %410 = arith.mulf %407, %409 : vector<4x256xf32>
    %411 = tpu.concatenate %382, %386, %390, %394, %376, %398, %402, %406, %410 in 0 : vector<4x256xf32>, vector<4x256xf32>, vector<4x256xf32>, vector<4x256xf32>, vector<4x256xf32>, vector<4x256xf32>, vector<4x256xf32>, vector<4x256xf32>, vector<4x256xf32> -> vector<36x256xf32>
    %cst_188 = arith.constant dense<0.000000e+00> : vector<4x256xf32>
    %412 = tpu.matmul %378, %411, %cst_188 {dimension_numbers = #tpu.dot_dimension_numbers<[1], [0], [0], [1], [0, 0, 1, 1], [], []>} : vector<4x36xf32>, vector<36x256xf32>, vector<4x256xf32> -> vector<4x256xf32>
    %c3_189 = arith.constant 3 : index
    %c0_190 = arith.constant 0 : index
    %c0_191 = arith.constant 0 : index
    %413 = vector.load %arg10[%c3_189, %c0_190, %c0_191] : memref<5x4x1xf32, #tpu.memory_space<vmem>>, vector<1x4x1xf32>
    %414 = vector.shape_cast %413 : vector<1x4x1xf32> to vector<4x1xf32>
    %415 = vector.broadcast %414 : vector<4x1xf32> to vector<4x256xf32>
    %416 = arith.addf %412, %415 : vector<4x256xf32>
    %417 = arith.addf %416, %334 : vector<4x256xf32>
    %418 = arith.addf %417, %315 : vector<4x256xf32>
    %cst_192 = arith.constant dense<0.000000e+00> : vector<4x144xf32>
    %419 = tpu.matmul %418, %2, %cst_192 {dimension_numbers = #tpu.dot_dimension_numbers<[1], [0], [0], [1], [0, 0, 1, 1], [], []>} : vector<4x256xf32>, vector<256x144xf32>, vector<4x144xf32> -> vector<4x144xf32>
    %cst_193 = arith.constant dense<0.000000e+00> : vector<4x144xf32>
    %420 = tpu.matmul %418, %3, %cst_193 {dimension_numbers = #tpu.dot_dimension_numbers<[1], [0], [0], [1], [0, 0, 1, 1], [], []>} : vector<4x256xf32>, vector<256x144xf32>, vector<4x144xf32> -> vector<4x144xf32>
    %c4 = arith.constant 4 : index
    %c0_194 = arith.constant 0 : index
    %c0_195 = arith.constant 0 : index
    %421 = vector.load %arg11[%c4, %c0_194, %c0_195] : memref<5x8x4xf32, #tpu.memory_space<vmem>>, vector<1x8x4xf32>
    %422 = vector.shape_cast %421 : vector<1x8x4xf32> to vector<8x4xf32>
    %cst_196 = arith.constant dense<0.000000e+00> : vector<8x144xf32>
    %423 = tpu.matmul %422, %420, %cst_196 {dimension_numbers = #tpu.dot_dimension_numbers<[1], [0], [0], [1], [0, 0, 1, 1], [], []>} : vector<8x4xf32>, vector<4x144xf32>, vector<8x144xf32> -> vector<8x144xf32>
    %c4_197 = arith.constant 4 : index
    %c0_198 = arith.constant 0 : index
    %c0_199 = arith.constant 0 : index
    %424 = vector.load %arg12[%c4_197, %c0_198, %c0_199] : memref<5x8x4xf32, #tpu.memory_space<vmem>>, vector<1x8x4xf32>
    %425 = vector.shape_cast %424 : vector<1x8x4xf32> to vector<8x4xf32>
    %cst_200 = arith.constant dense<0.000000e+00> : vector<8x144xf32>
    %426 = tpu.matmul %425, %419, %cst_200 {dimension_numbers = #tpu.dot_dimension_numbers<[1], [0], [0], [1], [0, 0, 1, 1], [], []>} : vector<8x4xf32>, vector<4x144xf32>, vector<8x144xf32> -> vector<8x144xf32>
    %427 = arith.addf %423, %426 : vector<8x144xf32>
    %cst_201 = arith.constant 0.000000e+00 : f32
    %428 = vector.broadcast %cst_201 : f32 to vector<8x144xf32>
    %429 = arith.maximumf %427, %428 : vector<8x144xf32>
    %c4_202 = arith.constant 4 : index
    %c0_203 = arith.constant 0 : index
    %c0_204 = arith.constant 0 : index
    %430 = vector.load %arg13[%c4_202, %c0_203, %c0_204] : memref<5x8x8xf32, #tpu.memory_space<vmem>>, vector<1x8x8xf32>
    %431 = vector.shape_cast %430 : vector<1x8x8xf32> to vector<8x8xf32>
    %cst_205 = arith.constant dense<0.000000e+00> : vector<8x144xf32>
    %432 = tpu.matmul %431, %429, %cst_205 {dimension_numbers = #tpu.dot_dimension_numbers<[1], [0], [0], [1], [0, 0, 1, 1], [], []>} : vector<8x8xf32>, vector<8x144xf32>, vector<8x144xf32> -> vector<8x144xf32>
    %433 = vector.extract_strided_slice %432 {offsets = [0, 0], sizes = [4, 144], strides = [1, 1]} : vector<8x144xf32> to vector<4x144xf32>
    %cst_206 = arith.constant dense<0.000000e+00> : vector<4x256xf32>
    %434 = tpu.matmul %433, %4, %cst_206 {dimension_numbers = #tpu.dot_dimension_numbers<[1], [0], [0], [1], [0, 0, 1, 1], [], []>} : vector<4x144xf32>, vector<144x256xf32>, vector<4x256xf32> -> vector<4x256xf32>
    %435 = vector.extract_strided_slice %432 {offsets = [4, 0], sizes = [4, 144], strides = [1, 1]} : vector<8x144xf32> to vector<4x144xf32>
    %cst_207 = arith.constant dense<0.000000e+00> : vector<4x256xf32>
    %436 = tpu.matmul %435, %5, %cst_207 {dimension_numbers = #tpu.dot_dimension_numbers<[1], [0], [0], [1], [0, 0, 1, 1], [], []>} : vector<4x144xf32>, vector<144x256xf32>, vector<4x256xf32> -> vector<4x256xf32>
    %437 = arith.addf %434, %436 : vector<4x256xf32>
    %c4_208 = arith.constant 4 : index
    %c0_209 = arith.constant 0 : index
    %c0_210 = arith.constant 0 : index
    %438 = vector.load %arg7[%c4_208, %c0_209, %c0_210] : memref<5x4x36xf32, #tpu.memory_space<vmem>>, vector<1x4x36xf32>
    %439 = vector.shape_cast %438 : vector<1x4x36xf32> to vector<4x36xf32>
    %c17_i32_211 = arith.constant 17 : i32
    %440 = tpu.dynamic_rotate %418 by %c17_i32_211 dim 1 : vector<4x256xf32>, i32 -> vector<4x256xf32>
    %441 = vector.extract_strided_slice %6 {offsets = [0, 0], sizes = [1, 256], strides = [1, 1]} : vector<9x256xf32> to vector<1x256xf32>
    %442 = vector.broadcast %441 : vector<1x256xf32> to vector<4x256xf32>
    %443 = arith.mulf %440, %442 : vector<4x256xf32>
    %c16_i32_212 = arith.constant 16 : i32
    %444 = tpu.dynamic_rotate %418 by %c16_i32_212 dim 1 : vector<4x256xf32>, i32 -> vector<4x256xf32>
    %445 = vector.extract_strided_slice %6 {offsets = [1, 0], sizes = [1, 256], strides = [1, 1]} : vector<9x256xf32> to vector<1x256xf32>
    %446 = vector.broadcast %445 : vector<1x256xf32> to vector<4x256xf32>
    %447 = arith.mulf %444, %446 : vector<4x256xf32>
    %c15_i32_213 = arith.constant 15 : i32
    %448 = tpu.dynamic_rotate %418 by %c15_i32_213 dim 1 : vector<4x256xf32>, i32 -> vector<4x256xf32>
    %449 = vector.extract_strided_slice %6 {offsets = [2, 0], sizes = [1, 256], strides = [1, 1]} : vector<9x256xf32> to vector<1x256xf32>
    %450 = vector.broadcast %449 : vector<1x256xf32> to vector<4x256xf32>
    %451 = arith.mulf %448, %450 : vector<4x256xf32>
    %c1_i32_214 = arith.constant 1 : i32
    %452 = tpu.dynamic_rotate %418 by %c1_i32_214 dim 1 : vector<4x256xf32>, i32 -> vector<4x256xf32>
    %453 = vector.extract_strided_slice %6 {offsets = [3, 0], sizes = [1, 256], strides = [1, 1]} : vector<9x256xf32> to vector<1x256xf32>
    %454 = vector.broadcast %453 : vector<1x256xf32> to vector<4x256xf32>
    %455 = arith.mulf %452, %454 : vector<4x256xf32>
    %c255_i32_215 = arith.constant 255 : i32
    %456 = tpu.dynamic_rotate %418 by %c255_i32_215 dim 1 : vector<4x256xf32>, i32 -> vector<4x256xf32>
    %457 = vector.extract_strided_slice %6 {offsets = [5, 0], sizes = [1, 256], strides = [1, 1]} : vector<9x256xf32> to vector<1x256xf32>
    %458 = vector.broadcast %457 : vector<1x256xf32> to vector<4x256xf32>
    %459 = arith.mulf %456, %458 : vector<4x256xf32>
    %c241_i32_216 = arith.constant 241 : i32
    %460 = tpu.dynamic_rotate %418 by %c241_i32_216 dim 1 : vector<4x256xf32>, i32 -> vector<4x256xf32>
    %461 = vector.extract_strided_slice %6 {offsets = [6, 0], sizes = [1, 256], strides = [1, 1]} : vector<9x256xf32> to vector<1x256xf32>
    %462 = vector.broadcast %461 : vector<1x256xf32> to vector<4x256xf32>
    %463 = arith.mulf %460, %462 : vector<4x256xf32>
    %c240_i32_217 = arith.constant 240 : i32
    %464 = tpu.dynamic_rotate %418 by %c240_i32_217 dim 1 : vector<4x256xf32>, i32 -> vector<4x256xf32>
    %465 = vector.extract_strided_slice %6 {offsets = [7, 0], sizes = [1, 256], strides = [1, 1]} : vector<9x256xf32> to vector<1x256xf32>
    %466 = vector.broadcast %465 : vector<1x256xf32> to vector<4x256xf32>
    %467 = arith.mulf %464, %466 : vector<4x256xf32>
    %c239_i32_218 = arith.constant 239 : i32
    %468 = tpu.dynamic_rotate %418 by %c239_i32_218 dim 1 : vector<4x256xf32>, i32 -> vector<4x256xf32>
    %469 = vector.extract_strided_slice %6 {offsets = [8, 0], sizes = [1, 256], strides = [1, 1]} : vector<9x256xf32> to vector<1x256xf32>
    %470 = vector.broadcast %469 : vector<1x256xf32> to vector<4x256xf32>
    %471 = arith.mulf %468, %470 : vector<4x256xf32>
    %472 = tpu.concatenate %443, %447, %451, %455, %418, %459, %463, %467, %471 in 0 : vector<4x256xf32>, vector<4x256xf32>, vector<4x256xf32>, vector<4x256xf32>, vector<4x256xf32>, vector<4x256xf32>, vector<4x256xf32>, vector<4x256xf32>, vector<4x256xf32> -> vector<36x256xf32>
    %cst_219 = arith.constant dense<0.000000e+00> : vector<4x256xf32>
    %473 = tpu.matmul %439, %472, %cst_219 {dimension_numbers = #tpu.dot_dimension_numbers<[1], [0], [0], [1], [0, 0, 1, 1], [], []>} : vector<4x36xf32>, vector<36x256xf32>, vector<4x256xf32> -> vector<4x256xf32>
    %c4_220 = arith.constant 4 : index
    %c0_221 = arith.constant 0 : index
    %c0_222 = arith.constant 0 : index
    %474 = vector.load %arg8[%c4_220, %c0_221, %c0_222] : memref<5x4x1xf32, #tpu.memory_space<vmem>>, vector<1x4x1xf32>
    %475 = vector.shape_cast %474 : vector<1x4x1xf32> to vector<4x1xf32>
    %476 = vector.broadcast %475 : vector<4x1xf32> to vector<4x256xf32>
    %477 = arith.addf %473, %476 : vector<4x256xf32>
    %cst_223 = arith.constant 0.000000e+00 : f32
    %478 = vector.broadcast %cst_223 : f32 to vector<4x256xf32>
    %479 = arith.maximumf %477, %478 : vector<4x256xf32>
    %c4_224 = arith.constant 4 : index
    %c0_225 = arith.constant 0 : index
    %c0_226 = arith.constant 0 : index
    %480 = vector.load %arg9[%c4_224, %c0_225, %c0_226] : memref<5x4x36xf32, #tpu.memory_space<vmem>>, vector<1x4x36xf32>
    %481 = vector.shape_cast %480 : vector<1x4x36xf32> to vector<4x36xf32>
    %c17_i32_227 = arith.constant 17 : i32
    %482 = tpu.dynamic_rotate %479 by %c17_i32_227 dim 1 : vector<4x256xf32>, i32 -> vector<4x256xf32>
    %483 = vector.extract_strided_slice %6 {offsets = [0, 0], sizes = [1, 256], strides = [1, 1]} : vector<9x256xf32> to vector<1x256xf32>
    %484 = vector.broadcast %483 : vector<1x256xf32> to vector<4x256xf32>
    %485 = arith.mulf %482, %484 : vector<4x256xf32>
    %c16_i32_228 = arith.constant 16 : i32
    %486 = tpu.dynamic_rotate %479 by %c16_i32_228 dim 1 : vector<4x256xf32>, i32 -> vector<4x256xf32>
    %487 = vector.extract_strided_slice %6 {offsets = [1, 0], sizes = [1, 256], strides = [1, 1]} : vector<9x256xf32> to vector<1x256xf32>
    %488 = vector.broadcast %487 : vector<1x256xf32> to vector<4x256xf32>
    %489 = arith.mulf %486, %488 : vector<4x256xf32>
    %c15_i32_229 = arith.constant 15 : i32
    %490 = tpu.dynamic_rotate %479 by %c15_i32_229 dim 1 : vector<4x256xf32>, i32 -> vector<4x256xf32>
    %491 = vector.extract_strided_slice %6 {offsets = [2, 0], sizes = [1, 256], strides = [1, 1]} : vector<9x256xf32> to vector<1x256xf32>
    %492 = vector.broadcast %491 : vector<1x256xf32> to vector<4x256xf32>
    %493 = arith.mulf %490, %492 : vector<4x256xf32>
    %c1_i32_230 = arith.constant 1 : i32
    %494 = tpu.dynamic_rotate %479 by %c1_i32_230 dim 1 : vector<4x256xf32>, i32 -> vector<4x256xf32>
    %495 = vector.extract_strided_slice %6 {offsets = [3, 0], sizes = [1, 256], strides = [1, 1]} : vector<9x256xf32> to vector<1x256xf32>
    %496 = vector.broadcast %495 : vector<1x256xf32> to vector<4x256xf32>
    %497 = arith.mulf %494, %496 : vector<4x256xf32>
    %c255_i32_231 = arith.constant 255 : i32
    %498 = tpu.dynamic_rotate %479 by %c255_i32_231 dim 1 : vector<4x256xf32>, i32 -> vector<4x256xf32>
    %499 = vector.extract_strided_slice %6 {offsets = [5, 0], sizes = [1, 256], strides = [1, 1]} : vector<9x256xf32> to vector<1x256xf32>
    %500 = vector.broadcast %499 : vector<1x256xf32> to vector<4x256xf32>
    %501 = arith.mulf %498, %500 : vector<4x256xf32>
    %c241_i32_232 = arith.constant 241 : i32
    %502 = tpu.dynamic_rotate %479 by %c241_i32_232 dim 1 : vector<4x256xf32>, i32 -> vector<4x256xf32>
    %503 = vector.extract_strided_slice %6 {offsets = [6, 0], sizes = [1, 256], strides = [1, 1]} : vector<9x256xf32> to vector<1x256xf32>
    %504 = vector.broadcast %503 : vector<1x256xf32> to vector<4x256xf32>
    %505 = arith.mulf %502, %504 : vector<4x256xf32>
    %c240_i32_233 = arith.constant 240 : i32
    %506 = tpu.dynamic_rotate %479 by %c240_i32_233 dim 1 : vector<4x256xf32>, i32 -> vector<4x256xf32>
    %507 = vector.extract_strided_slice %6 {offsets = [7, 0], sizes = [1, 256], strides = [1, 1]} : vector<9x256xf32> to vector<1x256xf32>
    %508 = vector.broadcast %507 : vector<1x256xf32> to vector<4x256xf32>
    %509 = arith.mulf %506, %508 : vector<4x256xf32>
    %c239_i32_234 = arith.constant 239 : i32
    %510 = tpu.dynamic_rotate %479 by %c239_i32_234 dim 1 : vector<4x256xf32>, i32 -> vector<4x256xf32>
    %511 = vector.extract_strided_slice %6 {offsets = [8, 0], sizes = [1, 256], strides = [1, 1]} : vector<9x256xf32> to vector<1x256xf32>
    %512 = vector.broadcast %511 : vector<1x256xf32> to vector<4x256xf32>
    %513 = arith.mulf %510, %512 : vector<4x256xf32>
    %514 = tpu.concatenate %485, %489, %493, %497, %479, %501, %505, %509, %513 in 0 : vector<4x256xf32>, vector<4x256xf32>, vector<4x256xf32>, vector<4x256xf32>, vector<4x256xf32>, vector<4x256xf32>, vector<4x256xf32>, vector<4x256xf32>, vector<4x256xf32> -> vector<36x256xf32>
    %cst_235 = arith.constant dense<0.000000e+00> : vector<4x256xf32>
    %515 = tpu.matmul %481, %514, %cst_235 {dimension_numbers = #tpu.dot_dimension_numbers<[1], [0], [0], [1], [0, 0, 1, 1], [], []>} : vector<4x36xf32>, vector<36x256xf32>, vector<4x256xf32> -> vector<4x256xf32>
    %c4_236 = arith.constant 4 : index
    %c0_237 = arith.constant 0 : index
    %c0_238 = arith.constant 0 : index
    %516 = vector.load %arg10[%c4_236, %c0_237, %c0_238] : memref<5x4x1xf32, #tpu.memory_space<vmem>>, vector<1x4x1xf32>
    %517 = vector.shape_cast %516 : vector<1x4x1xf32> to vector<4x1xf32>
    %518 = vector.broadcast %517 : vector<4x1xf32> to vector<4x256xf32>
    %519 = arith.addf %515, %518 : vector<4x256xf32>
    %520 = arith.addf %519, %437 : vector<4x256xf32>
    %521 = arith.addf %520, %418 : vector<4x256xf32>
    %c0_239 = arith.constant 0 : index
    %c0_240 = arith.constant 0 : index
    %c0_241 = arith.constant 0 : index
    %522 = vector.load %arg14[%c0_239, %c0_240, %c0_241] : memref<1x4x256xf32, #tpu.memory_space<vmem>>, vector<1x4x256xf32>
    %523 = vector.shape_cast %522 : vector<1x4x256xf32> to vector<4x256xf32>
    %524 = vector.shape_cast %521 : vector<4x256xf32> to vector<1x4x256xf32>
    tpu.vector_store %arg14[%c0_239, %c0_240, %c0_241], %524 {strides = array<i32>} : memref<1x4x256xf32, #tpu.memory_space<vmem>>, vector<1x4x256xf32>,
    return
  }
  func.func @transform_0(%arg0: i32) -> (i32, i32, i32) {
    %c0_i32 = arith.constant 0 : i32
    %c0_i32_0 = arith.constant 0 : i32
    %c0_i32_1 = arith.constant 0 : i32
    return %arg0, %c0_i32, %c0_i32_0 : i32, i32, i32
  }
  func.func @transform_1(%arg0: i32) -> (i32, i32) {
    %c0_i32 = arith.constant 0 : i32
    %c0_i32_0 = arith.constant 0 : i32
    %c0_i32_1 = arith.constant 0 : i32
    return %c0_i32, %c0_i32_0 : i32, i32
  }
  func.func @transform_2(%arg0: i32) -> (i32, i32) {
    %c0_i32 = arith.constant 0 : i32
    %c0_i32_0 = arith.constant 0 : i32
    %c0_i32_1 = arith.constant 0 : i32
    return %c0_i32, %c0_i32_0 : i32, i32
  }
  func.func @transform_3(%arg0: i32) -> (i32, i32) {
    %c0_i32 = arith.constant 0 : i32
    %c0_i32_0 = arith.constant 0 : i32
    %c0_i32_1 = arith.constant 0 : i32
    return %c0_i32, %c0_i32_0 : i32, i32
  }
  func.func @transform_4(%arg0: i32) -> (i32, i32) {
    %c0_i32 = arith.constant 0 : i32
    %c0_i32_0 = arith.constant 0 : i32
    %c0_i32_1 = arith.constant 0 : i32
    return %c0_i32, %c0_i32_0 : i32, i32
  }
  func.func @transform_5(%arg0: i32) -> (i32, i32) {
    %c0_i32 = arith.constant 0 : i32
    %c0_i32_0 = arith.constant 0 : i32
    %c0_i32_1 = arith.constant 0 : i32
    return %c0_i32, %c0_i32_0 : i32, i32
  }
  func.func @transform_6(%arg0: i32) -> (i32, i32, i32) {
    %c0_i32 = arith.constant 0 : i32
    %c0_i32_0 = arith.constant 0 : i32
    %c0_i32_1 = arith.constant 0 : i32
    %c0_i32_2 = arith.constant 0 : i32
    return %c0_i32, %c0_i32_0, %c0_i32_1 : i32, i32, i32
  }
  func.func @transform_7(%arg0: i32) -> (i32, i32, i32) {
    %c0_i32 = arith.constant 0 : i32
    %c0_i32_0 = arith.constant 0 : i32
    %c0_i32_1 = arith.constant 0 : i32
    %c0_i32_2 = arith.constant 0 : i32
    return %c0_i32, %c0_i32_0, %c0_i32_1 : i32, i32, i32
  }
  func.func @transform_8(%arg0: i32) -> (i32, i32, i32) {
    %c0_i32 = arith.constant 0 : i32
    %c0_i32_0 = arith.constant 0 : i32
    %c0_i32_1 = arith.constant 0 : i32
    %c0_i32_2 = arith.constant 0 : i32
    return %c0_i32, %c0_i32_0, %c0_i32_1 : i32, i32, i32
  }
  func.func @transform_9(%arg0: i32) -> (i32, i32, i32) {
    %c0_i32 = arith.constant 0 : i32
    %c0_i32_0 = arith.constant 0 : i32
    %c0_i32_1 = arith.constant 0 : i32
    %c0_i32_2 = arith.constant 0 : i32
    return %c0_i32, %c0_i32_0, %c0_i32_1 : i32, i32, i32
  }
  func.func @transform_10(%arg0: i32) -> (i32, i32, i32) {
    %c0_i32 = arith.constant 0 : i32
    %c0_i32_0 = arith.constant 0 : i32
    %c0_i32_1 = arith.constant 0 : i32
    %c0_i32_2 = arith.constant 0 : i32
    return %c0_i32, %c0_i32_0, %c0_i32_1 : i32, i32, i32
  }
  func.func @transform_11(%arg0: i32) -> (i32, i32, i32) {
    %c0_i32 = arith.constant 0 : i32
    %c0_i32_0 = arith.constant 0 : i32
    %c0_i32_1 = arith.constant 0 : i32
    %c0_i32_2 = arith.constant 0 : i32
    return %c0_i32, %c0_i32_0, %c0_i32_1 : i32, i32, i32
  }
  func.func @transform_12(%arg0: i32) -> (i32, i32, i32) {
    %c0_i32 = arith.constant 0 : i32
    %c0_i32_0 = arith.constant 0 : i32
    %c0_i32_1 = arith.constant 0 : i32
    %c0_i32_2 = arith.constant 0 : i32
    return %c0_i32, %c0_i32_0, %c0_i32_1 : i32, i32, i32
  }
  func.func @transform_13(%arg0: i32) -> (i32, i32, i32) {
    %c0_i32 = arith.constant 0 : i32
    %c0_i32_0 = arith.constant 0 : i32
    %c0_i32_1 = arith.constant 0 : i32
    return %arg0, %c0_i32, %c0_i32_0 : i32, i32, i32
  }
}

</mosaic_0001>

<llo_original>
// kernel: eblock_forward.1
$region0: #{eblock_forward.1}
  #allocation0 [shape = 'u32[]', space=smem, size = 0x4, offset = 0x4, fixed_abs, tag = 'smem constant byte address 0x4 - core index']
  #allocation1 [shape = 'u32[144,128]{1,0:T(1,128)}', space=vmem, size = 0x12000, scoped, tag = 'internal scratch']
  %s0 = inlined_call_operand.vmem [shape: f32[2,4,256], index: 0, kind: input, shape index: {}]
  %s1 = inlined_call_operand.vmem [shape: f32[256,144], index: 1, kind: input, shape index: {}]
  %s2 = inlined_call_operand.vmem [shape: f32[256,144], index: 2, kind: input, shape index: {}]
  %s3 = inlined_call_operand.vmem [shape: f32[144,256], index: 3, kind: input, shape index: {}]
  %s4 = inlined_call_operand.vmem [shape: f32[144,256], index: 4, kind: input, shape index: {}]
  %s5 = inlined_call_operand.vmem [shape: f32[9,256], index: 5, kind: input, shape index: {}]
  %s6 = inlined_call_operand.vmem [shape: f32[5,4,36], index: 6, kind: input, shape index: {}]
  %s7 = inlined_call_operand.vmem [shape: f32[5,4,1], index: 7, kind: input, shape index: {}]
  %s8 = inlined_call_operand.vmem [shape: f32[5,4,36], index: 8, kind: input, shape index: {}]
  %s9 = inlined_call_operand.vmem [shape: f32[5,4,1], index: 9, kind: input, shape index: {}]
  %s10 = inlined_call_operand.vmem [shape: f32[5,8,4], index: 10, kind: input, shape index: {}]
  %s11 = inlined_call_operand.vmem [shape: f32[5,8,4], index: 11, kind: input, shape index: {}]
  %s12 = inlined_call_operand.vmem [shape: f32[5,8,8], index: 12, kind: input, shape index: {}]
  %s13 = inlined_call_operand.vmem [shape: f32[2,4,256], index: 13, kind: output, shape index: {}]
  %s14 = sld [smem:[#allocation0]]
  $region85: #{eblock_forward.1} parent=0
    _
  %s16 = ssub.s32 1, %s14
  %s17 = scalar_select 0, %s16, %s14
  loop: start=0, step=1, limit=4
  $region2: #{eblock_forward.1} parent=0 // loop_pre_header
    _
  $region3: #{eblock_forward.1} parent=0 // loop_header
    %s19 = sphi 0, %s23
    %p20 = scmp.ge.s32.totalorder %s19, 4
    %s29 = sphi 0, %s31
    %s32 = sphi 0, %s29
    %s33 = sphi 0, %s32
    %s49 = sphi 0, %s33
    %s53 = sphi 0, %s53
    %s55 = sphi 0, %s53
    %s56 = sphi 0, %s55
    %s70 = sphi 0, %s56
    %s74 = sphi 0, %s74
    %s76 = sphi 0, %s74
    %s77 = sphi 0, %s76
    %s91 = sphi 0, %s77
    %s95 = sphi 0, %s95
    %s97 = sphi 0, %s95
    %s98 = sphi 0, %s97
    %s112 = sphi 0, %s98
    %s116 = sphi 0, %s116
    %s118 = sphi 0, %s116
    %s119 = sphi 0, %s118
    %s133 = sphi 0, %s119
    %s137 = sphi 0, %s137
    %s139 = sphi 0, %s137
    %s140 = sphi 0, %s139
    %s154 = sphi 0, %s140
    %s158 = sphi 0, %s158
    %s160 = sphi 0, %s158
    %s161 = sphi 0, %s160
    %s175 = sphi 0, %s161
    %s179 = sphi 0, %s179
    %s181 = sphi 0, %s179
    %s182 = sphi 0, %s181
    %s196 = sphi 0, %s182
    %s200 = sphi 0, %s200
    %s202 = sphi 0, %s200
    %s203 = sphi 0, %s202
    %s217 = sphi 0, %s203
    %s221 = sphi 0, %s221
    %s223 = sphi 0, %s221
    %s224 = sphi 0, %s223
    %s238 = sphi 0, %s224
    %s242 = sphi 0, %s242
    %s244 = sphi 0, %s242
    %s245 = sphi 0, %s244
    %s259 = sphi 0, %s245
    %s263 = sphi 0, %s263
    %s265 = sphi 0, %s263
    %s266 = sphi 0, %s265
    %s280 = sphi 0, %s266
    %s284 = sphi 0, %s284
    %s286 = sphi 0, %s284
    %s287 = sphi 0, %s286
    %s301 = sphi 0, %s287
    %s307 = sphi 0, %s309
    %s310 = sphi 0, %s307
    %s311 = sphi 0, %s310
    %s327 = sphi 0, %s311
  $region4: #{eblock_forward.1} parent=0 // loop_header_branch
    %22 = sbr.rel (%p20) target = $region8
  $region5: #{eblock_forward.1} parent=0 // loop_body
    %s24 = ssub.s32 %s19, 1
    %s25 = ssub.s32 %s19, 2
    %s26 = sadd.s32 %s19, 1
    %s27 = ssub.s32 %s19, %s26
    %p28 = scmp.eq.s32.totalorder %s27, 0
    %s30 = sadd.s32 %s29, 1
    %s31 = scalar_select %p28, %s29, %s30
    %p34 = pneg %p28
    %p35 = scmp.eq.s32.totalorder %s19, 1
    %p36 = por %p34, %p35
    %p37 = scmp.ne.s32.totalorder %s29, %s32
    %p38 = scmp.eq.s32.totalorder %s19, 0
    %p39 = por %p37, %p38
    %p40 = scmp.ne.s32.totalorder %s29, %s32
    %p41 = scmp.eq.s32.totalorder %s24, 1
    %p42 = por %p40, %p41
    %p43 = scmp.ne.s32.totalorder %s32, %s33
    %p44 = scmp.eq.s32.totalorder %s24, 0
    %p45 = por %p43, %p44
    %p46 = scmp.ne.s32.totalorder %s32, %s33
    %p47 = scmp.eq.s32.totalorder %s25, 1
    %p48 = por %p46, %p47
    %p50 = scmp.ne.s32.totalorder %s33, %s49
    %p51 = scmp.eq.s32.totalorder %s25, 0
    %p52 = por %p50, %p51
    %s54 = sadd.s32 %s53, 1
    %p57 = scmp.eq.s32.totalorder %s19, 1
    %p58 = scmp.ne.s32.totalorder %s53, %s55
    %p59 = scmp.eq.s32.totalorder %s19, 0
    %p60 = por %p58, %p59
    %p61 = scmp.ne.s32.totalorder %s53, %s55
    %p62 = scmp.eq.s32.totalorder %s24, 1
    %p63 = por %p61, %p62
    %p64 = scmp.ne.s32.totalorder %s55, %s56
    %p65 = scmp.eq.s32.totalorder %s24, 0
    %p66 = por %p64, %p65
    %p67 = scmp.ne.s32.totalorder %s55, %s56
    %p68 = scmp.eq.s32.totalorder %s25, 1
    %p69 = por %p67, %p68
    %p71 = scmp.ne.s32.totalorder %s56, %s70
    %p72 = scmp.eq.s32.totalorder %s25, 0
    %p73 = por %p71, %p72
    %s75 = sadd.s32 %s74, 1
    %p78 = scmp.eq.s32.totalorder %s19, 1
    %p79 = scmp.ne.s32.totalorder %s74, %s76
    %p80 = scmp.eq.s32.totalorder %s19, 0
    %p81 = por %p79, %p80
    %p82 = scmp.ne.s32.totalorder %s74, %s76
    %p83 = scmp.eq.s32.totalorder %s24, 1
    %p84 = por %p82, %p83
    %p85 = scmp.ne.s32.totalorder %s76, %s77
    %p86 = scmp.eq.s32.totalorder %s24, 0
    %p87 = por %p85, %p86
    %p88 = scmp.ne.s32.totalorder %s76, %s77
    %p89 = scmp.eq.s32.totalorder %s25, 1
    %p90 = por %p88, %p89
    %p92 = scmp.ne.s32.totalorder %s77, %s91
    %p93 = scmp.eq.s32.totalorder %s25, 0
    %p94 = por %p92, %p93
    %s96 = sadd.s32 %s95, 1
    %p99 = scmp.eq.s32.totalorder %s19, 1
    %p100 = scmp.ne.s32.totalorder %s95, %s97
    %p101 = scmp.eq.s32.totalorder %s19, 0
    %p102 = por %p100, %p101
    %p103 = scmp.ne.s32.totalorder %s95, %s97
    %p104 = scmp.eq.s32.totalorder %s24, 1
    %p105 = por %p103, %p104
    %p106 = scmp.ne.s32.totalorder %s97, %s98
    %p107 = scmp.eq.s32.totalorder %s24, 0
    %p108 = por %p106, %p107
    %p109 = scmp.ne.s32.totalorder %s97, %s98
    %p110 = scmp.eq.s32.totalorder %s25, 1
    %p111 = por %p109, %p110
    %p113 = scmp.ne.s32.totalorder %s98, %s112
    %p114 = scmp.eq.s32.totalorder %s25, 0
    %p115 = por %p113, %p114
    %s117 = sadd.s32 %s116, 1
    %p120 = scmp.eq.s32.totalorder %s19, 1
    %p121 = scmp.ne.s32.totalorder %s116, %s118
    %p122 = scmp.eq.s32.totalorder %s19, 0
    %p123 = por %p121, %p122
    %p124 = scmp.ne.s32.totalorder %s116, %s118
    %p125 = scmp.eq.s32.totalorder %s24, 1
    %p126 = por %p124, %p125
    %p127 = scmp.ne.s32.totalorder %s118, %s119
    %p128 = scmp.eq.s32.totalorder %s24, 0
    %p129 = por %p127, %p128
    %p130 = scmp.ne.s32.totalorder %s118, %s119
    %p131 = scmp.eq.s32.totalorder %s25, 1
    %p132 = por %p130, %p131
    %p134 = scmp.ne.s32.totalorder %s119, %s133
    %p135 = scmp.eq.s32.totalorder %s25, 0
    %p136 = por %p134, %p135
    %s138 = sadd.s32 %s137, 1
    %p141 = scmp.eq.s32.totalorder %s19, 1
    %p142 = scmp.ne.s32.totalorder %s137, %s139
    %p143 = scmp.eq.s32.totalorder %s19, 0
    %p144 = por %p142, %p143
    %p145 = scmp.ne.s32.totalorder %s137, %s139
    %p146 = scmp.eq.s32.totalorder %s24, 1
    %p147 = por %p145, %p146
    %p148 = scmp.ne.s32.totalorder %s139, %s140
    %p149 = scmp.eq.s32.totalorder %s24, 0
    %p150 = por %p148, %p149
    %p151 = scmp.ne.s32.totalorder %s139, %s140
    %p152 = scmp.eq.s32.totalorder %s25, 1
    %p153 = por %p151, %p152
    %p155 = scmp.ne.s32.totalorder %s140, %s154
    %p156 = scmp.eq.s32.totalorder %s25, 0
    %p157 = por %p155, %p156
    %s159 = sadd.s32 %s158, 1
    %p162 = scmp.eq.s32.totalorder %s19, 1
    %p163 = scmp.ne.s32.totalorder %s158, %s160
    %p164 = scmp.eq.s32.totalorder %s19, 0
    %p165 = por %p163, %p164
    %p166 = scmp.ne.s32.totalorder %s158, %s160
    %p167 = scmp.eq.s32.totalorder %s24, 1
    %p168 = por %p166, %p167
    %p169 = scmp.ne.s32.totalorder %s160, %s161
    %p170 = scmp.eq.s32.totalorder %s24, 0
    %p171 = por %p169, %p170
    %p172 = scmp.ne.s32.totalorder %s160, %s161
    %p173 = scmp.eq.s32.totalorder %s25, 1
    %p174 = por %p172, %p173
    %p176 = scmp.ne.s32.totalorder %s161, %s175
    %p177 = scmp.eq.s32.totalorder %s25, 0
    %p178 = por %p176, %p177
    %s180 = sadd.s32 %s179, 1
    %p183 = scmp.eq.s32.totalorder %s19, 1
    %p184 = scmp.ne.s32.totalorder %s179, %s181
    %p185 = scmp.eq.s32.totalorder %s19, 0
    %p186 = por %p184, %p185
    %p187 = scmp.ne.s32.totalorder %s179, %s181
    %p188 = scmp.eq.s32.totalorder %s24, 1
    %p189 = por %p187, %p188
    %p190 = scmp.ne.s32.totalorder %s181, %s182
    %p191 = scmp.eq.s32.totalorder %s24, 0
    %p192 = por %p190, %p191
    %p193 = scmp.ne.s32.totalorder %s181, %s182
    %p194 = scmp.eq.s32.totalorder %s25, 1
    %p195 = por %p193, %p194
    %p197 = scmp.ne.s32.totalorder %s182, %s196
    %p198 = scmp.eq.s32.totalorder %s25, 0
    %p199 = por %p197, %p198
    %s201 = sadd.s32 %s200, 1
    %p204 = scmp.eq.s32.totalorder %s19, 1
    %p205 = scmp.ne.s32.totalorder %s200, %s202
    %p206 = scmp.eq.s32.totalorder %s19, 0
    %p207 = por %p205, %p206
    %p208 = scmp.ne.s32.totalorder %s200, %s202
    %p209 = scmp.eq.s32.totalorder %s24, 1
    %p210 = por %p208, %p209
    %p211 = scmp.ne.s32.totalorder %s202, %s203
    %p212 = scmp.eq.s32.totalorder %s24, 0
    %p213 = por %p211, %p212
    %p214 = scmp.ne.s32.totalorder %s202, %s203
    %p215 = scmp.eq.s32.totalorder %s25, 1
    %p216 = por %p214, %p215
    %p218 = scmp.ne.s32.totalorder %s203, %s217
    %p219 = scmp.eq.s32.totalorder %s25, 0
    %p220 = por %p218, %p219
    %s222 = sadd.s32 %s221, 1
    %p225 = scmp.eq.s32.totalorder %s19, 1
    %p226 = scmp.ne.s32.totalorder %s221, %s223
    %p227 = scmp.eq.s32.totalorder %s19, 0
    %p228 = por %p226, %p227
    %p229 = scmp.ne.s32.totalorder %s221, %s223
    %p230 = scmp.eq.s32.totalorder %s24, 1
    %p231 = por %p229, %p230
    %p232 = scmp.ne.s32.totalorder %s223, %s224
    %p233 = scmp.eq.s32.totalorder %s24, 0
    %p234 = por %p232, %p233
    %p235 = scmp.ne.s32.totalorder %s223, %s224
    %p236 = scmp.eq.s32.totalorder %s25, 1
    %p237 = por %p235, %p236
    %p239 = scmp.ne.s32.totalorder %s224, %s238
    %p240 = scmp.eq.s32.totalorder %s25, 0
    %p241 = por %p239, %p240
    %s243 = sadd.s32 %s242, 1
    %p246 = scmp.eq.s32.totalorder %s19, 1
    %p247 = scmp.ne.s32.totalorder %s242, %s244
    %p248 = scmp.eq.s32.totalorder %s19, 0
    %p249 = por %p247, %p248
    %p250 = scmp.ne.s32.totalorder %s242, %s244
    %p251 = scmp.eq.s32.totalorder %s24, 1
    %p252 = por %p250, %p251
    %p253 = scmp.ne.s32.totalorder %s244, %s245
    %p254 = scmp.eq.s32.totalorder %s24, 0
    %p255 = por %p253, %p254
    %p256 = scmp.ne.s32.totalorder %s244, %s245
    %p257 = scmp.eq.s32.totalorder %s25, 1
    %p258 = por %p256, %p257
    %p260 = scmp.ne.s32.totalorder %s245, %s259
    %p261 = scmp.eq.s32.totalorder %s25, 0
    %p262 = por %p260, %p261
    %s264 = sadd.s32 %s263, 1
    %p267 = scmp.eq.s32.totalorder %s19, 1
    %p268 = scmp.ne.s32.totalorder %s263, %s265
    %p269 = scmp.eq.s32.totalorder %s19, 0
    %p270 = por %p268, %p269
    %p271 = scmp.ne.s32.totalorder %s263, %s265
    %p272 = scmp.eq.s32.totalorder %s24, 1
    %p273 = por %p271, %p272
    %p274 = scmp.ne.s32.totalorder %s265, %s266
    %p275 = scmp.eq.s32.totalorder %s24, 0
    %p276 = por %p274, %p275
    %p277 = scmp.ne.s32.totalorder %s265, %s266
    %p278 = scmp.eq.s32.totalorder %s25, 1
    %p279 = por %p277, %p278
    %p281 = scmp.ne.s32.totalorder %s266, %s280
    %p282 = scmp.eq.s32.totalorder %s25, 0
    %p283 = por %p281, %p282
    %s285 = sadd.s32 %s284, 1
    %p288 = scmp.eq.s32.totalorder %s19, 1
    %p289 = scmp.ne.s32.totalorder %s284, %s286
    %p290 = scmp.eq.s32.totalorder %s19, 0
    %p291 = por %p289, %p290
    %p292 = scmp.ne.s32.totalorder %s284, %s286
    %p293 = scmp.eq.s32.totalorder %s24, 1
    %p294 = por %p292, %p293
    %p295 = scmp.ne.s32.totalorder %s286, %s287
    %p296 = scmp.eq.s32.totalorder %s24, 0
    %p297 = por %p295, %p296
    %p298 = scmp.ne.s32.totalorder %s286, %s287
    %p299 = scmp.eq.s32.totalorder %s25, 1
    %p300 = por %p298, %p299
    %p302 = scmp.ne.s32.totalorder %s287, %s301
    %p303 = scmp.eq.s32.totalorder %s25, 0
    %p304 = por %p302, %p303
    %s305 = ssub.s32 %s19, %s26
    %p306 = scmp.eq.s32.totalorder %s305, 0
    %s308 = sadd.s32 %s307, 1
    %s309 = scalar_select %p306, %s307, %s308
    %p312 = pneg %p306
    %p313 = scmp.eq.s32.totalorder %s19, 1
    %p314 = por %p312, %p313
    %p315 = scmp.ne.s32.totalorder %s307, %s310
    %p316 = scmp.eq.s32.totalorder %s19, 0
    %p317 = por %p315, %p316
    %p318 = scmp.ne.s32.totalorder %s307, %s310
    %p319 = scmp.eq.s32.totalorder %s24, 1
    %p320 = por %p318, %p319
    %p321 = scmp.ne.s32.totalorder %s310, %s311
    %p322 = scmp.eq.s32.totalorder %s24, 0
    %p323 = por %p321, %p322
    %p324 = scmp.ne.s32.totalorder %s310, %s311
    %p325 = scmp.eq.s32.totalorder %s25, 1
    %p326 = por %p324, %p325
    %p328 = scmp.ne.s32.totalorder %s311, %s327
    %p329 = scmp.eq.s32.totalorder %s25, 0
    %p330 = por %p328, %p329
    %p331 = scmp.le.s32.totalorder 1, %s19
    %p332 = scmp.lt.s32.totalorder %s19, 3
    %p333 = pnand %p331, %p332
    %p334 = pneg %p333
    // Predicated region
    $region9: #{eblock_forward.1} parent=5 // pred_check
      _
    $region10: #{eblock_forward.1} parent=5 // pred_check_branch
      %336 = sbr.rel (%p333) target = $region12
    $region11: #{eblock_forward.1} parent=5 // pred_region
      %s337 = ssub.s32 %s19, 1
      // Predicated region
      $region13: #{eblock_forward.1} parent=11 // pred_check
        %p338 = pneg %p66
      $region14: #{eblock_forward.1} parent=11 // pred_check_branch
        %340 = sbr.rel (%p338) target = $region16
      $region15: #{eblock_forward.1} parent=11 // pred_region
        _
      $region16: #{eblock_forward.1} parent=11 // pred_fallthru
        _
      // Predicated region
      $region17: #{eblock_forward.1} parent=11 // pred_check
        %p341 = pneg %p87
      $region18: #{eblock_forward.1} parent=11 // pred_check_branch
        %343 = sbr.rel (%p341) target = $region20
      $region19: #{eblock_forward.1} parent=11 // pred_region
        _
      $region20: #{eblock_forward.1} parent=11 // pred_fallthru
        _
      // Predicated region
      $region21: #{eblock_forward.1} parent=11 // pred_check
        %p344 = pneg %p108
      $region22: #{eblock_forward.1} parent=11 // pred_check_branch
        %346 = sbr.rel (%p344) target = $region24
      $region23: #{eblock_forward.1} parent=11 // pred_region
        _
      $region24: #{eblock_forward.1} parent=11 // pred_fallthru
        _
      // Predicated region
      $region25: #{eblock_forward.1} parent=11 // pred_check
        %p347 = pneg %p129
      $region26: #{eblock_forward.1} parent=11 // pred_check_branch
        %349 = sbr.rel (%p347) target = $region28
      $region27: #{eblock_forward.1} parent=11 // pred_region
        _
      $region28: #{eblock_forward.1} parent=11 // pred_fallthru
        _
      // Predicated region
      $region29: #{eblock_forward.1} parent=11 // pred_check
        %p350 = pneg %p150
      $region30: #{eblock_forward.1} parent=11 // pred_check_branch
        %352 = sbr.rel (%p350) target = $region32
      $region31: #{eblock_forward.1} parent=11 // pred_region
        _
      $region32: #{eblock_forward.1} parent=11 // pred_fallthru
        _
      // Predicated region
      $region33: #{eblock_forward.1} parent=11 // pred_check
        %p353 = pneg %p171
      $region34: #{eblock_forward.1} parent=11 // pred_check_branch
        %355 = sbr.rel (%p353) target = $region36
      $region35: #{eblock_forward.1} parent=11 // pred_region
        _
      $region36: #{eblock_forward.1} parent=11 // pred_fallthru
        _
      // Predicated region
      $region37: #{eblock_forward.1} parent=11 // pred_check
        %p356 = pneg %p192
      $region38: #{eblock_forward.1} parent=11 // pred_check_branch
        %358 = sbr.rel (%p356) target = $region40
      $region39: #{eblock_forward.1} parent=11 // pred_region
        _
      $region40: #{eblock_forward.1} parent=11 // pred_fallthru
        _
      // Predicated region
      $region41: #{eblock_forward.1} parent=11 // pred_check
        %p359 = pneg %p213
      $region42: #{eblock_forward.1} parent=11 // pred_check_branch
        %361 = sbr.rel (%p359) target = $region44
      $region43: #{eblock_forward.1} parent=11 // pred_region
        _
      $region44: #{eblock_forward.1} parent=11 // pred_fallthru
        _
      // Predicated region
      $region45: #{eblock_forward.1} parent=11 // pred_check
        %p362 = pneg %p234
      $region46: #{eblock_forward.1} parent=11 // pred_check_branch
        %364 = sbr.rel (%p362) target = $region48
      $region47: #{eblock_forward.1} parent=11 // pred_region
        _
      $region48: #{eblock_forward.1} parent=11 // pred_fallthru
        _
      // Predicated region
      $region49: #{eblock_forward.1} parent=11 // pred_check
        %p365 = pneg %p255
      $region50: #{eblock_forward.1} parent=11 // pred_check_branch
        %367 = sbr.rel (%p365) target = $region52
      $region51: #{eblock_forward.1} parent=11 // pred_region
        _
      $region52: #{eblock_forward.1} parent=11 // pred_fallthru
        _
      // Predicated region
      $region53: #{eblock_forward.1} parent=11 // pred_check
        %p368 = pneg %p276
      $region54: #{eblock_forward.1} parent=11 // pred_check_branch
        %370 = sbr.rel (%p368) target = $region56
      $region55: #{eblock_forward.1} parent=11 // pred_region
        _
      $region56: #{eblock_forward.1} parent=11 // pred_fallthru
        _
      // Predicated region
      $region57: #{eblock_forward.1} parent=11 // pred_check
        %p371 = pneg %p297
      $region58: #{eblock_forward.1} parent=11 // pred_check_branch
        %373 = sbr.rel (%p371) target = $region60
      $region59: #{eblock_forward.1} parent=11 // pred_region
        _
      $region60: #{eblock_forward.1} parent=11 // pred_fallthru
        _
    $region12: #{eblock_forward.1} parent=5 // pred_fallthru
      _
    %p374 = scmp.lt.s32.totalorder %s19, 2
    // Predicated region
    $region61: #{eblock_forward.1} parent=5 // pred_check
      %p375 = pneg %p374
    $region62: #{eblock_forward.1} parent=5 // pred_check_branch
      %377 = sbr.rel (%p375) target = $region64
    $region63: #{eblock_forward.1} parent=5 // pred_region
      // Predicated region
      $region65: #{eblock_forward.1} parent=63 // pred_check
        %p378 = pneg %p39
      $region66: #{eblock_forward.1} parent=63 // pred_check_branch
        %380 = sbr.rel (%p378) target = $region68
      $region67: #{eblock_forward.1} parent=63 // pred_region
        %p381 = scmp.lt.s32.totalorder %s19, 1
        %s382 = scalar_select %p381, %s19, 1
        %s383 = smul.addr %s382, 2
        %s384 = smul.addr %s383, 4
        %s385 = scalar_lea.vmem %s0, %s384
      $region68: #{eblock_forward.1} parent=63 // pred_fallthru
        _
    $region64: #{eblock_forward.1} parent=5 // pred_fallthru
      _
    %p386 = scmp.le.s32.totalorder 1, %s19
    %p387 = scmp.lt.s32.totalorder %s19, 3
    %p388 = pnand %p386, %p387
    %p389 = pneg %p388
    // Predicated region
    $region69: #{eblock_forward.1} parent=5 // pred_check
      _
    $region70: #{eblock_forward.1} parent=5 // pred_check_branch
      %391 = sbr.rel (%p388) target = $region72
    $region71: #{eblock_forward.1} parent=5 // pred_region
      %s392 = ssub.s32 %s19, 1
      %p393 = scmp.lt.s32.totalorder %s24, 1
      %s394 = scalar_select %p393, %s24, 1
      %s395 = smul.addr %s394, 2
      %s396 = smul.addr %s395, 4
      %s397 = scalar_lea.vmem %s0, %s396
      %p398 = pneg %p45
      %p399 = pneg %p42
      %p400 = pneg %p66
      %p401 = pneg %p63
      %p402 = pneg %p87
      %p403 = pneg %p84
      %p404 = pneg %p108
      %p405 = pneg %p105
      %p406 = pneg %p129
      %p407 = pneg %p126
      %p408 = pneg %p150
      %p409 = pneg %p147
      %p410 = pneg %p171
      %p411 = pneg %p168
      %p412 = pneg %p192
      %p413 = pneg %p189
      %p414 = pneg %p213
      %p415 = pneg %p210
      %p416 = pneg %p234
      %p417 = pneg %p231
      %p418 = pneg %p255
      %p419 = pneg %p252
      %p420 = pneg %p276
      %p421 = pneg %p273
      %p422 = pneg %p297
      %p423 = pneg %p294
      %p424 = pneg %p323
      %p425 = pneg %p320
      %p426 = scmp.lt.s32.totalorder %s24, 1
      %s427 = scalar_select %p426, %s24, 1
      %s428 = smul.addr %s427, 2
      %s429 = smul.addr %s428, 4
      %s430 = scalar_lea.vmem %s13, %s429
      %p431 = scmp.lt.s32.totalorder %s24, 1
      %s432 = scalar_select %p431, %s24, 1
      %s433 = smul.addr %s432, 2
      %s434 = smul.addr %s433, 4
      %s435 = scalar_lea.vmem %s0, %s434
      %p436 = scmp.lt.s32.totalorder %s24, 1
      %s437 = scalar_select %p436, %s24, 1
      %s438 = smul.addr %s437, 2
      %s439 = smul.addr %s438, 4
      %s440 = scalar_lea.vmem %s13, %s439
      %v441 = vld [vmem:[%s435] sm:$0xff]
      %v442 = vld [vmem:[%s1] sm:$0xff]
      %v443 = vld [vmem:[%s1 + $0x8] sm:$0xff]
      %v444 = vld [vmem:[%s1 + $0x10] sm:$0xff]
      %v445 = vld [vmem:[%s1 + $0x18] sm:$0xff]
      %v446 = vld [vmem:[%s1 + $0x20] sm:$0xff]
      %v447 = vld [vmem:[%s1 + $0x28] sm:$0xff]
      %v448 = vld [vmem:[%s1 + $0x30] sm:$0xff]
      %v449 = vld [vmem:[%s1 + $0x38] sm:$0xff]
      %v450 = vld [vmem:[%s1 + $0x40] sm:$0xff]
      %v451 = vld [vmem:[%s1 + $0x48] sm:$0xff]
      %v452 = vld [vmem:[%s1 + $0x50] sm:$0xff]
      %v453 = vld [vmem:[%s1 + $0x58] sm:$0xff]
      %v454 = vld [vmem:[%s1 + $0x60] sm:$0xff]
      %v455 = vld [vmem:[%s1 + $0x68] sm:$0xff]
      %v456 = vld [vmem:[%s1 + $0x70] sm:$0xff]
      %v457 = vld [vmem:[%s1 + $0x78] sm:$0xff]
      %v458 = vld [vmem:[%s1 + $0x80] sm:$0xff]
      %v459 = vld [vmem:[%s1 + $0x88] sm:$0xff]
      %v460 = vld [vmem:[%s1 + $0x90] sm:$0xff]
      %v461 = vld [vmem:[%s1 + $0x98] sm:$0xff]
      %v462 = vld [vmem:[%s1 + $0xa0] sm:$0xff]
      %v463 = vld [vmem:[%s1 + $0xa8] sm:$0xff]
      %v464 = vld [vmem:[%s1 + $0xb0] sm:$0xff]
      %v465 = vld [vmem:[%s1 + $0xb8] sm:$0xff]
      %v466 = vld [vmem:[%s1 + $0xc0] sm:$0xff]
      %v467 = vld [vmem:[%s1 + $0xc8] sm:$0xff]
      %v468 = vld [vmem:[%s1 + $0xd0] sm:$0xff]
      %v469 = vld [vmem:[%s1 + $0xd8] sm:$0xff]
      %v470 = vld [vmem:[%s1 + $0xe0] sm:$0xff]
      %v471 = vld [vmem:[%s1 + $0xe8] sm:$0xff]
      %v472 = vld [vmem:[%s1 + $0xf0] sm:$0xff]
      %v473 = vld [vmem:[%s1 + $0xf8] sm:$0xff]
      %v474 = vld [vmem:[%s1 + $0x100] sm:$0xff]
      %v475 = vld [vmem:[%s1 + $0x108] sm:$0xff]
      %v476 = vld [vmem:[%s1 + $0x110] sm:$0xff]
      %v477 = vld [vmem:[%s1 + $0x118] sm:$0xff]
      %v478 = vld [vmem:[%s1 + $0x120] sm:$0xff]
      %v479 = vld [vmem:[%s1 + $0x128] sm:$0xff]
      %v480 = vld [vmem:[%s1 + $0x130] sm:$0xff]
      %v481 = vld [vmem:[%s1 + $0x138] sm:$0xff]
      %v482 = vld [vmem:[%s1 + $0x140] sm:$0xff]
      %v483 = vld [vmem:[%s1 + $0x148] sm:$0xff]
      %v484 = vld [vmem:[%s1 + $0x150] sm:$0xff]
      %v485 = vld [vmem:[%s1 + $0x158] sm:$0xff]
      %v486 = vld [vmem:[%s1 + $0x160] sm:$0xff]
      %v487 = vld [vmem:[%s1 + $0x168] sm:$0xff]
      %v488 = vld [vmem:[%s1 + $0x170] sm:$0xff]
      %v489 = vld [vmem:[%s1 + $0x178] sm:$0xff]
      %v490 = vld [vmem:[%s1 + $0x180] sm:$0xff]
      %v491 = vld [vmem:[%s1 + $0x188] sm:$0xff]
      %v492 = vld [vmem:[%s1 + $0x190] sm:$0xff]
      %v493 = vld [vmem:[%s1 + $0x198] sm:$0xff]
      %v494 = vld [vmem:[%s1 + $0x1a0] sm:$0xff]
      %v495 = vld [vmem:[%s1 + $0x1a8] sm:$0xff]
      %v496 = vld [vmem:[%s1 + $0x1b0] sm:$0xff]
      %v497 = vld [vmem:[%s1 + $0x1b8] sm:$0xff]
      %v498 = vld [vmem:[%s1 + $0x1c0] sm:$0xff]
      %v499 = vld [vmem:[%s1 + $0x1c8] sm:$0xff]
      %v500 = vld [vmem:[%s1 + $0x1d0] sm:$0xff]
      %v501 = vld [vmem:[%s1 + $0x1d8] sm:$0xff]
      %v502 = vld [vmem:[%s1 + $0x1e0] sm:$0xff]
      %v503 = vld [vmem:[%s1 + $0x1e8] sm:$0xff]
      %v504 = vld [vmem:[%s1 + $0x1f0] sm:$0xff]
      %v505 = vld [vmem:[%s1 + $0x1f8] sm:$0xff]
      %v506 = vld [vmem:[%s2] sm:$0xff]
      %v507 = vld [vmem:[%s2 + $0x8] sm:$0xff]
      %v508 = vld [vmem:[%s2 + $0x10] sm:$0xff]
      %v509 = vld [vmem:[%s2 + $0x18] sm:$0xff]
      %v510 = vld [vmem:[%s2 + $0x20] sm:$0xff]
      %v511 = vld [vmem:[%s2 + $0x28] sm:$0xff]
      %v512 = vld [vmem:[%s2 + $0x30] sm:$0xff]
      %v513 = vld [vmem:[%s2 + $0x38] sm:$0xff]
      %v514 = vld [vmem:[%s2 + $0x40] sm:$0xff]
      %v515 = vld [vmem:[%s2 + $0x48] sm:$0xff]
      %v516 = vld [vmem:[%s2 + $0x50] sm:$0xff]
      %v517 = vld [vmem:[%s2 + $0x58] sm:$0xff]
      %v518 = vld [vmem:[%s2 + $0x60] sm:$0xff]
      %v519 = vld [vmem:[%s2 + $0x68] sm:$0xff]
      %v520 = vld [vmem:[%s2 + $0x70] sm:$0xff]
      %v521 = vld [vmem:[%s2 + $0x78] sm:$0xff]
      %v522 = vld [vmem:[%s2 + $0x80] sm:$0xff]
      %v523 = vld [vmem:[%s2 + $0x88] sm:$0xff]
      %v524 = vld [vmem:[%s2 + $0x90] sm:$0xff]
      %v525 = vld [vmem:[%s2 + $0x98] sm:$0xff]
      %v526 = vld [vmem:[%s2 + $0xa0] sm:$0xff]
      %v527 = vld [vmem:[%s2 + $0xa8] sm:$0xff]
      %v528 = vld [vmem:[%s2 + $0xb0] sm:$0xff]
      %v529 = vld [vmem:[%s2 + $0xb8] sm:$0xff]
      %v530 = vld [vmem:[%s2 + $0xc0] sm:$0xff]
      %v531 = vld [vmem:[%s2 + $0xc8] sm:$0xff]
      %v532 = vld [vmem:[%s2 + $0xd0] sm:$0xff]
      %v533 = vld [vmem:[%s2 + $0xd8] sm:$0xff]
      %v534 = vld [vmem:[%s2 + $0xe0] sm:$0xff]
      %v535 = vld [vmem:[%s2 + $0xe8] sm:$0xff]
      %v536 = vld [vmem:[%s2 + $0xf0] sm:$0xff]
      %v537 = vld [vmem:[%s2 + $0xf8] sm:$0xff]
      %v538 = vld [vmem:[%s2 + $0x100] sm:$0xff]
      %v539 = vld [vmem:[%s2 + $0x108] sm:$0xff]
      %v540 = vld [vmem:[%s2 + $0x110] sm:$0xff]
      %v541 = vld [vmem:[%s2 + $0x118] sm:$0xff]
      %v542 = vld [vmem:[%s2 + $0x120] sm:$0xff]
      %v543 = vld [vmem:[%s2 + $0x128] sm:$0xff]
      %v544 = vld [vmem:[%s2 + $0x130] sm:$0xff]
      %v545 = vld [vmem:[%s2 + $0x138] sm:$0xff]
      %v546 = vld [vmem:[%s2 + $0x140] sm:$0xff]
      %v547 = vld [vmem:[%s2 + $0x148] sm:$0xff]
      %v548 = vld [vmem:[%s2 + $0x150] sm:$0xff]
      %v549 = vld [vmem:[%s2 + $0x158] sm:$0xff]
      %v550 = vld [vmem:[%s2 + $0x160] sm:$0xff]
      %v551 = vld [vmem:[%s2 + $0x168] sm:$0xff]
      %v552 = vld [vmem:[%s2 + $0x170] sm:$0xff]
      %v553 = vld [vmem:[%s2 + $0x178] sm:$0xff]
      %v554 = vld [vmem:[%s2 + $0x180] sm:$0xff]
      %v555 = vld [vmem:[%s2 + $0x188] sm:$0xff]
      %v556 = vld [vmem:[%s2 + $0x190] sm:$0xff]
      %v557 = vld [vmem:[%s2 + $0x198] sm:$0xff]
      %v558 = vld [vmem:[%s2 + $0x1a0] sm:$0xff]
      %v559 = vld [vmem:[%s2 + $0x1a8] sm:$0xff]
      %v560 = vld [vmem:[%s2 + $0x1b0] sm:$0xff]
      %v561 = vld [vmem:[%s2 + $0x1b8] sm:$0xff]
      %v562 = vld [vmem:[%s2 + $0x1c0] sm:$0xff]
      %v563 = vld [vmem:[%s2 + $0x1c8] sm:$0xff]
      %v564 = vld [vmem:[%s2 + $0x1d0] sm:$0xff]
      %v565 = vld [vmem:[%s2 + $0x1d8] sm:$0xff]
      %v566 = vld [vmem:[%s2 + $0x1e0] sm:$0xff]
      %v567 = vld [vmem:[%s2 + $0x1e8] sm:$0xff]
      %v568 = vld [vmem:[%s2 + $0x1f0] sm:$0xff]
      %v569 = vld [vmem:[%s2 + $0x1f8] sm:$0xff]
      %v570 = vld [vmem:[%s3] sm:$0xff]
      %v571 = vld [vmem:[%s3 + $0x8] sm:$0xff]
      %v572 = vld [vmem:[%s3 + $0x10] sm:$0xff]
      %v573 = vld [vmem:[%s3 + $0x18] sm:$0xff]
      %v574 = vld [vmem:[%s3 + $0x20] sm:$0xff]
      %v575 = vld [vmem:[%s3 + $0x28] sm:$0xff]
      %v576 = vld [vmem:[%s3 + $0x30] sm:$0xff]
      %v577 = vld [vmem:[%s3 + $0x38] sm:$0xff]
      %v578 = vld [vmem:[%s3 + $0x40] sm:$0xff]
      %v579 = vld [vmem:[%s3 + $0x48] sm:$0xff]
      %v580 = vld [vmem:[%s3 + $0x50] sm:$0xff]
      %v581 = vld [vmem:[%s3 + $0x58] sm:$0xff]
      %v582 = vld [vmem:[%s3 + $0x60] sm:$0xff]
      %v583 = vld [vmem:[%s3 + $0x68] sm:$0xff]
      %v584 = vld [vmem:[%s3 + $0x70] sm:$0xff]
      %v585 = vld [vmem:[%s3 + $0x78] sm:$0xff]
      %v586 = vld [vmem:[%s3 + $0x80] sm:$0xff]
      %v587 = vld [vmem:[%s3 + $0x88] sm:$0xff]
      %v588 = vld [vmem:[%s3 + $0x90] sm:$0xff]
      %v589 = vld [vmem:[%s3 + $0x98] sm:$0xff]
      %v590 = vld [vmem:[%s3 + $0xa0] sm:$0xff]
      %v591 = vld [vmem:[%s3 + $0xa8] sm:$0xff]
      %v592 = vld [vmem:[%s3 + $0xb0] sm:$0xff]
      %v593 = vld [vmem:[%s3 + $0xb8] sm:$0xff]
      %v594 = vld [vmem:[%s3 + $0xc0] sm:$0xff]
      %v595 = vld [vmem:[%s3 + $0xc8] sm:$0xff]
      %v596 = vld [vmem:[%s3 + $0xd0] sm:$0xff]
      %v597 = vld [vmem:[%s3 + $0xd8] sm:$0xff]
      %v598 = vld [vmem:[%s3 + $0xe0] sm:$0xff]
      %v599 = vld [vmem:[%s3 + $0xe8] sm:$0xff]
      %v600 = vld [vmem:[%s3 + $0xf0] sm:$0xff]
      %v601 = vld [vmem:[%s3 + $0xf8] sm:$0xff]
      %v602 = vld [vmem:[%s3 + $0x100] sm:$0xff]
      %v603 = vld [vmem:[%s3 + $0x108] sm:$0xff]
      %v604 = vld [vmem:[%s3 + $0x110] sm:$0xff]
      %v605 = vld [vmem:[%s3 + $0x118] sm:$0xff]
      %v606 = vld [vmem:[%s4] sm:$0xff]
      %v607 = vld [vmem:[%s4 + $0x8] sm:$0xff]
      %v608 = vld [vmem:[%s4 + $0x10] sm:$0xff]
      %v609 = vld [vmem:[%s4 + $0x18] sm:$0xff]
      %v610 = vld [vmem:[%s4 + $0x20] sm:$0xff]
      %v611 = vld [vmem:[%s4 + $0x28] sm:$0xff]
      %v612 = vld [vmem:[%s4 + $0x30] sm:$0xff]
      %v613 = vld [vmem:[%s4 + $0x38] sm:$0xff]
      %v614 = vld [vmem:[%s4 + $0x40] sm:$0xff]
      %v615 = vld [vmem:[%s4 + $0x48] sm:$0xff]
      %v616 = vld [vmem:[%s4 + $0x50] sm:$0xff]
      %v617 = vld [vmem:[%s4 + $0x58] sm:$0xff]
      %v618 = vld [vmem:[%s4 + $0x60] sm:$0xff]
      %v619 = vld [vmem:[%s4 + $0x68] sm:$0xff]
      %v620 = vld [vmem:[%s4 + $0x70] sm:$0xff]
      %v621 = vld [vmem:[%s4 + $0x78] sm:$0xff]
      %v622 = vld [vmem:[%s4 + $0x80] sm:$0xff]
      %v623 = vld [vmem:[%s4 + $0x88] sm:$0xff]
      %v624 = vld [vmem:[%s4 + $0x90] sm:$0xff]
      %v625 = vld [vmem:[%s4 + $0x98] sm:$0xff]
      %v626 = vld [vmem:[%s4 + $0xa0] sm:$0xff]
      %v627 = vld [vmem:[%s4 + $0xa8] sm:$0xff]
      %v628 = vld [vmem:[%s4 + $0xb0] sm:$0xff]
      %v629 = vld [vmem:[%s4 + $0xb8] sm:$0xff]
      %v630 = vld [vmem:[%s4 + $0xc0] sm:$0xff]
      %v631 = vld [vmem:[%s4 + $0xc8] sm:$0xff]
      %v632 = vld [vmem:[%s4 + $0xd0] sm:$0xff]
      %v633 = vld [vmem:[%s4 + $0xd8] sm:$0xff]
      %v634 = vld [vmem:[%s4 + $0xe0] sm:$0xff]
      %v635 = vld [vmem:[%s4 + $0xe8] sm:$0xff]
      %v636 = vld [vmem:[%s4 + $0xf0] sm:$0xff]
      %v637 = vld [vmem:[%s4 + $0xf8] sm:$0xff]
      %v638 = vld [vmem:[%s4 + $0x100] sm:$0xff]
      %v639 = vld [vmem:[%s4 + $0x108] sm:$0xff]
      %v640 = vld [vmem:[%s4 + $0x110] sm:$0xff]
      %v641 = vld [vmem:[%s4 + $0x118] sm:$0xff]
      %v642 = vld [vmem:[%s5] sm:$0xff]
      %v643 = vld [vmem:[%s5 + $0x8] sm:$0xff]
      %v644 = vld [vmem:[%s5 + $0x10] sm:$0x1]
      %v645 = vld [vmem:[%s5 + $0x18] sm:$0x1]
      %v647 = vcombine.high %v441, %v441
      %649 = vmatprep.subr.mxu0 %v443
      %650 = vmatpush1.msra.mxu0 %v442
      %651 = vmatprep.subr.mxu0 %v445
      %652 = vmatpush1.msra.mxu0 %v444
      %653 = vmatprep.subr.mxu0 %v447
      %654 = vmatpush1.msra.mxu0 %v446
      %655 = vmatprep.subr.mxu0 %v449
      %656 = vmatpush1.msra.mxu0 %v448
      %657 = vmatprep.subr.mxu0 %v451
      %658 = vmatpush1.msra.mxu0 %v450
      %659 = vmatprep.subr.mxu0 %v453
      %660 = vmatpush1.msra.mxu0 %v452
      %661 = vmatprep.subr.mxu0 %v455
      %662 = vmatpush1.msra.mxu0 %v454
      %663 = vmatprep.subr.mxu0 %v457
      %664 = vmatpush1.msra.mxu0 %v456
      %665 = vmatprep.subr.mxu0 %v459
      %666 = vmatpush1.msra.mxu0 %v458
      %667 = vmatprep.subr.mxu0 %v461
      %668 = vmatpush1.msra.mxu0 %v460
      %669 = vmatprep.subr.mxu0 %v463
      %670 = vmatpush1.msra.mxu0 %v462
      %671 = vmatprep.subr.mxu0 %v465
      %672 = vmatpush1.msra.mxu0 %v464
      %673 = vmatprep.subr.mxu0 %v467
      %674 = vmatpush1.msra.mxu0 %v466
      %675 = vmatprep.subr.mxu0 %v469
      %676 = vmatpush1.msra.mxu0 %v468
      %677 = vmatprep.subr.mxu0 %v471
      %678 = vmatpush1.msra.mxu0 %v470
      %679 = vmatprep.subr.mxu0 %v473
      %680 = vmatpush1.msra.mxu0 %v472
      %681 = vmatprep.subr.mxu0 %v475
      %682 = vmatpush1.msra.mxu0 %v474
      %683 = vmatprep.subr.mxu0 %v477
      %684 = vmatpush1.msra.mxu0 %v476
      %685 = vmatprep.subr.mxu0 %v479
      %686 = vmatpush1.msra.mxu0 %v478
      %687 = vmatprep.subr.mxu0 %v481
      %688 = vmatpush1.msra.mxu0 %v480
      %689 = vmatprep.subr.mxu0 %v483
      %690 = vmatpush1.msra.mxu0 %v482
      %691 = vmatprep.subr.mxu0 %v485
      %692 = vmatpush1.msra.mxu0 %v484
      %693 = vmatprep.subr.mxu0 %v487
      %694 = vmatpush1.msra.mxu0 %v486
      %695 = vmatprep.subr.mxu0 %v489
      %696 = vmatpush1.msra.mxu0 %v488
      %697 = vmatprep.subr.mxu0 %v491
      %698 = vmatpush1.msra.mxu0 %v490
      %699 = vmatprep.subr.mxu0 %v493
      %700 = vmatpush1.msra.mxu0 %v492
      %701 = vmatprep.subr.mxu0 %v495
      %702 = vmatpush1.msra.mxu0 %v494
      %703 = vmatprep.subr.mxu0 %v497
      %704 = vmatpush1.msra.mxu0 %v496
      %705 = vmatprep.subr.mxu0 %v499
      %706 = vmatpush1.msra.mxu0 %v498
      %707 = vmatprep.subr.mxu0 %v501
      %708 = vmatpush1.msra.mxu0 %v500
      %709 = vmatprep.subr.mxu0 %v503
      %710 = vmatpush1.msra.mxu0 %v502
      %711 = vmatprep.subr.mxu0 %v505
      %712 = vmatpush1.msra.mxu0 %v504
      %713 = vmatprep.mubr.f32.mxu0 %v647
      %714 = vmatmul.mubr.f32.gmra.mrb[0].mxu0 %v441
      %v715 = vpop.f32.mrb[0].mxu0
      %v716 = vadd.f32 0.0, %v715
      %v717 = vpop.f32.mrb[0].mxu0
      %v718 = vadd.f32 0.0, %v717
      %719 = vdwg.mxu0
      %720 = vmatprep.subr.mxu0 %v507
      %721 = vmatpush1.msra.mxu0 %v506
      %722 = vmatprep.subr.mxu0 %v509
      %723 = vmatpush1.msra.mxu0 %v508
      %724 = vmatprep.subr.mxu0 %v511
      %725 = vmatpush1.msra.mxu0 %v510
      %726 = vmatprep.subr.mxu0 %v513
      %727 = vmatpush1.msra.mxu0 %v512
      %728 = vmatprep.subr.mxu0 %v515
      %729 = vmatpush1.msra.mxu0 %v514
      %730 = vmatprep.subr.mxu0 %v517
      %731 = vmatpush1.msra.mxu0 %v516
      %732 = vmatprep.subr.mxu0 %v519
      %733 = vmatpush1.msra.mxu0 %v518
      %734 = vmatprep.subr.mxu0 %v521
      %735 = vmatpush1.msra.mxu0 %v520
      %736 = vmatprep.subr.mxu0 %v523
      %737 = vmatpush1.msra.mxu0 %v522
      %738 = vmatprep.subr.mxu0 %v525
      %739 = vmatpush1.msra.mxu0 %v524
      %740 = vmatprep.subr.mxu0 %v527
      %741 = vmatpush1.msra.mxu0 %v526
      %742 = vmatprep.subr.mxu0 %v529
      %743 = vmatpush1.msra.mxu0 %v528
      %744 = vmatprep.subr.mxu0 %v531
      %745 = vmatpush1.msra.mxu0 %v530
      %746 = vmatprep.subr.mxu0 %v533
      %747 = vmatpush1.msra.mxu0 %v532
      %748 = vmatprep.subr.mxu0 %v535
      %749 = vmatpush1.msra.mxu0 %v534
      %750 = vmatprep.subr.mxu0 %v537
      %751 = vmatpush1.msra.mxu0 %v536
      %752 = vmatprep.subr.mxu0 %v539
      %753 = vmatpush1.msra.mxu0 %v538
      %754 = vmatprep.subr.mxu0 %v541
      %755 = vmatpush1.msra.mxu0 %v540
      %756 = vmatprep.subr.mxu0 %v543
      %757 = vmatpush1.msra.mxu0 %v542
      %758 = vmatprep.subr.mxu0 %v545
      %759 = vmatpush1.msra.mxu0 %v544
      %760 = vmatprep.subr.mxu0 %v547
      %761 = vmatpush1.msra.mxu0 %v546
      %762 = vmatprep.subr.mxu0 %v549
      %763 = vmatpush1.msra.mxu0 %v548
      %764 = vmatprep.subr.mxu0 %v551
      %765 = vmatpush1.msra.mxu0 %v550
      %766 = vmatprep.subr.mxu0 %v553
      %767 = vmatpush1.msra.mxu0 %v552
      %768 = vmatprep.subr.mxu0 %v555
      %769 = vmatpush1.msra.mxu0 %v554
      %770 = vmatprep.subr.mxu0 %v557
      %771 = vmatpush1.msra.mxu0 %v556
      %772 = vmatprep.subr.mxu0 %v559
      %773 = vmatpush1.msra.mxu0 %v558
      %774 = vmatprep.subr.mxu0 %v561
      %775 = vmatpush1.msra.mxu0 %v560
      %776 = vmatprep.subr.mxu0 %v563
      %777 = vmatpush1.msra.mxu0 %v562
      %778 = vmatprep.subr.mxu0 %v565
      %779 = vmatpush1.msra.mxu0 %v564
      %780 = vmatprep.subr.mxu0 %v567
      %781 = vmatpush1.msra.mxu0 %v566
      %782 = vmatprep.subr.mxu0 %v569
      %783 = vmatpush1.msra.mxu0 %v568
      %784 = vmatprep.mubr.f32.mxu0 %v647
      %785 = vmatmul.mubr.f32.gmra.mrb[0].mxu0 %v441
      %v786 = vpop.f32.mrb[0].mxu0
      %v787 = vadd.f32 0.0, %v786
      %v788 = vpop.f32.mrb[0].mxu0
      %v789 = vadd.f32 0.0, %v788
      %790 = vdwg.mxu0
      %v791 = vld [vmem:[%s10] sm:$0xff]
      %v792 = vld [vmem:[%s11] sm:$0xff]
      %vm793 = vcmask 31744
      %v795 = vsel %vm793, %v792, 0
      %vm797 = vcmask 1043456
      %v799 = vsel %vm797, %v716, 0
      %v802 = vsel %vm797, %v718, 0
      %804 = vmatprep.subr.mxu0 %v802
      %805 = vmatpush1.msra.mxu0 %v799
      %806 = vmatprep.subr.mxu0 0.0
      %807 = vmatpush1.msra.mxu0 0.0
      %808 = vmatprep.subr.mxu0 0.0
      %809 = vmatpush1.msra.mxu0 0.0
      %810 = vmatprep.subr.mxu0 0.0
      %811 = vmatpush1.msra.mxu0 0.0
      %812 = vmatprep.subr.mxu0 0.0
      %813 = vmatpush1.msra.mxu0 0.0
      %814 = vmatprep.subr.mxu0 0.0
      %815 = vmatpush1.msra.mxu0 0.0
      %816 = vmatprep.subr.mxu0 0.0
      %817 = vmatpush1.msra.mxu0 0.0
      %818 = vmatprep.subr.mxu0 0.0
      %819 = vmatpush1.msra.mxu0 0.0
      %820 = vmatprep.subr.mxu0 0.0
      %821 = vmatpush1.msra.mxu0 0.0
      %822 = vmatprep.subr.mxu0 0.0
      %823 = vmatpush1.msra.mxu0 0.0
      %824 = vmatprep.subr.mxu0 0.0
      %825 = vmatpush1.msra.mxu0 0.0
      %826 = vmatprep.subr.mxu0 0.0
      %827 = vmatpush1.msra.mxu0 0.0
      %828 = vmatprep.subr.mxu0 0.0
      %829 = vmatpush1.msra.mxu0 0.0
      %830 = vmatprep.subr.mxu0 0.0
      %831 = vmatpush1.msra.mxu0 0.0
      %832 = vmatprep.subr.mxu0 0.0
      %833 = vmatpush1.msra.mxu0 0.0
      %834 = vmatprep.subr.mxu0 0.0
      %835 = vmatpush1.msra.mxu0 0.0
      %836 = vmatprep.subr.mxu0 0.0
      %837 = vmatpush1.msra.mxu0 0.0
      %838 = vmatprep.subr.mxu0 0.0
      %839 = vmatpush1.msra.mxu0 0.0
      %840 = vmatprep.subr.mxu0 0.0
      %841 = vmatpush1.msra.mxu0 0.0
      %842 = vmatprep.subr.mxu0 0.0
      %843 = vmatpush1.msra.mxu0 0.0
      %844 = vmatprep.subr.mxu0 0.0
      %845 = vmatpush1.msra.mxu0 0.0
      %846 = vmatprep.subr.mxu0 0.0
      %847 = vmatpush1.msra.mxu0 0.0
      %848 = vmatprep.subr.mxu0 0.0
      %849 = vmatpush1.msra.mxu0 0.0
      %850 = vmatprep.subr.mxu0 0.0
      %851 = vmatpush1.msra.mxu0 0.0
      %852 = vmatprep.subr.mxu0 0.0
      %853 = vmatpush1.msra.mxu0 0.0
      %854 = vmatprep.subr.mxu0 0.0
      %855 = vmatpush1.msra.mxu0 0.0
      %856 = vmatprep.subr.mxu0 0.0
      %857 = vmatpush1.msra.mxu0 0.0
      %858 = vmatprep.subr.mxu0 0.0
      %859 = vmatpush1.msra.mxu0 0.0
      %860 = vmatprep.subr.mxu0 0.0
      %861 = vmatpush1.msra.mxu0 0.0
      %862 = vmatprep.subr.mxu0 0.0
      %863 = vmatpush1.msra.mxu0 0.0
      %864 = vmatprep.subr.mxu0 0.0
      %865 = vmatpush1.msra.mxu0 0.0
      %866 = vmatprep.subr.mxu0 0.0
      %867 = vmatpush1.msra.mxu0 0.0
      %868 = vmatprep.mubr.f32.mxu0 0.0
      %869 = vmatmul.mubr.f32.gmra.mrb[0].mxu0 %v795
      %v870 = vpop.f32.mrb[0].mxu0
      %v871 = vadd.f32 0.0, %v870
      %v872 = vpop.f32.mrb[0].mxu0
      %v873 = vadd.f32 0.0, %v872
      %874 = vdwg.mxu0
      %v876 = vsel %vm793, %v791, 0
      %v879 = vsel %vm797, %v787, 0
      %v882 = vsel %vm797, %v789, 0
      %884 = vmatprep.subr.mxu0 %v882
      %885 = vmatpush1.msra.mxu0 %v879
      %886 = vmatprep.subr.mxu0 0.0
      %887 = vmatpush1.msra.mxu0 0.0
      %888 = vmatprep.subr.mxu0 0.0
      %889 = vmatpush1.msra.mxu0 0.0
      %890 = vmatprep.subr.mxu0 0.0
      %891 = vmatpush1.msra.mxu0 0.0
      %892 = vmatprep.subr.mxu0 0.0
      %893 = vmatpush1.msra.mxu0 0.0
      %894 = vmatprep.subr.mxu0 0.0
      %895 = vmatpush1.msra.mxu0 0.0
      %896 = vmatprep.subr.mxu0 0.0
      %897 = vmatpush1.msra.mxu0 0.0
      %898 = vmatprep.subr.mxu0 0.0
      %899 = vmatpush1.msra.mxu0 0.0
      %900 = vmatprep.subr.mxu0 0.0
      %901 = vmatpush1.msra.mxu0 0.0
      %902 = vmatprep.subr.mxu0 0.0
      %903 = vmatpush1.msra.mxu0 0.0
      %904 = vmatprep.subr.mxu0 0.0
      %905 = vmatpush1.msra.mxu0 0.0
      %906 = vmatprep.subr.mxu0 0.0
      %907 = vmatpush1.msra.mxu0 0.0
      %908 = vmatprep.subr.mxu0 0.0
      %909 = vmatpush1.msra.mxu0 0.0
      %910 = vmatprep.subr.mxu0 0.0
      %911 = vmatpush1.msra.mxu0 0.0
      %912 = vmatprep.subr.mxu0 0.0
      %913 = vmatpush1.msra.mxu0 0.0
      %914 = vmatprep.subr.mxu0 0.0
      %915 = vmatpush1.msra.mxu0 0.0
      %916 = vmatprep.subr.mxu0 0.0
      %917 = vmatpush1.msra.mxu0 0.0
      %918 = vmatprep.subr.mxu0 0.0
      %919 = vmatpush1.msra.mxu0 0.0
      %920 = vmatprep.subr.mxu0 0.0
      %921 = vmatpush1.msra.mxu0 0.0
      %922 = vmatprep.subr.mxu0 0.0
      %923 = vmatpush1.msra.mxu0 0.0
      %924 = vmatprep.subr.mxu0 0.0
      %925 = vmatpush1.msra.mxu0 0.0
      %926 = vmatprep.subr.mxu0 0.0
      %927 = vmatpush1.msra.mxu0 0.0
      %928 = vmatprep.subr.mxu0 0.0
      %929 = vmatpush1.msra.mxu0 0.0
      %930 = vmatprep.subr.mxu0 0.0
      %931 = vmatpush1.msra.mxu0 0.0
      %932 = vmatprep.subr.mxu0 0.0
      %933 = vmatpush1.msra.mxu0 0.0
      %934 = vmatprep.subr.mxu0 0.0
      %935 = vmatpush1.msra.mxu0 0.0
      %936 = vmatprep.subr.mxu0 0.0
      %937 = vmatpush1.msra.mxu0 0.0
      %938 = vmatprep.subr.mxu0 0.0
      %939 = vmatpush1.msra.mxu0 0.0
      %940 = vmatprep.subr.mxu0 0.0
      %941 = vmatpush1.msra.mxu0 0.0
      %942 = vmatprep.subr.mxu0 0.0
      %943 = vmatpush1.msra.mxu0 0.0
      %944 = vmatprep.subr.mxu0 0.0
      %945 = vmatpush1.msra.mxu0 0.0
      %946 = vmatprep.subr.mxu0 0.0
      %947 = vmatpush1.msra.mxu0 0.0
      %948 = vmatprep.mubr.f32.mxu0 0.0
      %949 = vmatmul.mubr.f32.gmra.mrb[0].mxu0 %v876
      %v950 = vpop.f32.mrb[0].mxu0
      %v951 = vadd.f32 %v871, %v950
      %v952 = vpop.f32.mrb[0].mxu0
      %v953 = vadd.f32 %v873, %v952
      %954 = vdwg.mxu0
      %v955 = vmax.f32 %v951, 0.0
      %v956 = vmax.f32 %v953, 0.0
      %v957 = vld [vmem:[%s12] sm:$0xff]
      %vm958 = vcmask 64512
      %v960 = vsel %vm958, %v957, 0
      %962 = vmatprep.subr.mxu0 %v956
      %963 = vmatpush1.msra.mxu0 %v955
      %964 = vmatprep.subr.mxu0 0.0
      %965 = vmatpush1.msra.mxu0 0.0
      %966 = vmatprep.subr.mxu0 0.0
      %967 = vmatpush1.msra.mxu0 0.0
      %968 = vmatprep.subr.mxu0 0.0
      %969 = vmatpush1.msra.mxu0 0.0
      %970 = vmatprep.subr.mxu0 0.0
      %971 = vmatpush1.msra.mxu0 0.0
      %972 = vmatprep.subr.mxu0 0.0
      %973 = vmatpush1.msra.mxu0 0.0
      %974 = vmatprep.subr.mxu0 0.0
      %975 = vmatpush1.msra.mxu0 0.0
      %976 = vmatprep.subr.mxu0 0.0
      %977 = vmatpush1.msra.mxu0 0.0
      %978 = vmatprep.subr.mxu0 0.0
      %979 = vmatpush1.msra.mxu0 0.0
      %980 = vmatprep.subr.mxu0 0.0
      %981 = vmatpush1.msra.mxu0 0.0
      %982 = vmatprep.subr.mxu0 0.0
      %983 = vmatpush1.msra.mxu0 0.0
      %984 = vmatprep.subr.mxu0 0.0
      %985 = vmatpush1.msra.mxu0 0.0
      %986 = vmatprep.subr.mxu0 0.0
      %987 = vmatpush1.msra.mxu0 0.0
      %988 = vmatprep.subr.mxu0 0.0
      %989 = vmatpush1.msra.mxu0 0.0
      %990 = vmatprep.subr.mxu0 0.0
      %991 = vmatpush1.msra.mxu0 0.0
      %992 = vmatprep.subr.mxu0 0.0
      %993 = vmatpush1.msra.mxu0 0.0
      %994 = vmatprep.subr.mxu0 0.0
      %995 = vmatpush1.msra.mxu0 0.0
      %996 = vmatprep.subr.mxu0 0.0
      %997 = vmatpush1.msra.mxu0 0.0
      %998 = vmatprep.subr.mxu0 0.0
      %999 = vmatpush1.msra.mxu0 0.0
      %1000 = vmatprep.subr.mxu0 0.0
      %1001 = vmatpush1.msra.mxu0 0.0
      %1002 = vmatprep.subr.mxu0 0.0
      %1003 = vmatpush1.msra.mxu0 0.0
      %1004 = vmatprep.subr.mxu0 0.0
      %1005 = vmatpush1.msra.mxu0 0.0
      %1006 = vmatprep.subr.mxu0 0.0
      %1007 = vmatpush1.msra.mxu0 0.0
      %1008 = vmatprep.subr.mxu0 0.0
      %1009 = vmatpush1.msra.mxu0 0.0
      %1010 = vmatprep.subr.mxu0 0.0
      %1011 = vmatpush1.msra.mxu0 0.0
      %1012 = vmatprep.subr.mxu0 0.0
      %1013 = vmatpush1.msra.mxu0 0.0
      %1014 = vmatprep.subr.mxu0 0.0
      %1015 = vmatpush1.msra.mxu0 0.0
      %1016 = vmatprep.subr.mxu0 0.0
      %1017 = vmatpush1.msra.mxu0 0.0
      %1018 = vmatprep.subr.mxu0 0.0
      %1019 = vmatpush1.msra.mxu0 0.0
      %1020 = vmatprep.subr.mxu0 0.0
      %1021 = vmatpush1.msra.mxu0 0.0
      %1022 = vmatprep.subr.mxu0 0.0
      %1023 = vmatpush1.msra.mxu0 0.0
      %1024 = vmatprep.subr.mxu0 0.0
      %1025 = vmatpush1.msra.mxu0 0.0
      %1026 = vmatprep.mubr.f32.mxu0 0.0
      %1027 = vmatmul.mubr.f32.gmra.mrb[0].mxu0 %v960
      %v1028 = vpop.f32.mrb[0].mxu0
      %v1029 = vadd.f32 0.0, %v1028
      %v1030 = vpop.f32.mrb[0].mxu0
      %v1031 = vadd.f32 0.0, %v1030
      %1032 = vdwg.mxu0
      %v1035 = vrot.slane %v1029, 4
      %v1036 = vrot.slane %v1031, 4
      %vm1038 = vcmask 130048
      %v1039 = vsel %vm1038, %v1036, 0
      %1041 = vmatprep.subr.mxu0 %v607
      %1042 = vmatpush1.msra.mxu0 %v606
      %1043 = vmatprep.subr.mxu0 %v609
      %1044 = vmatpush1.msra.mxu0 %v608
      %1045 = vmatprep.subr.mxu0 %v611
      %1046 = vmatpush1.msra.mxu0 %v610
      %1047 = vmatprep.subr.mxu0 %v613
      %1048 = vmatpush1.msra.mxu0 %v612
      %1049 = vmatprep.subr.mxu0 %v615
      %1050 = vmatpush1.msra.mxu0 %v614
      %1051 = vmatprep.subr.mxu0 %v617
      %1052 = vmatpush1.msra.mxu0 %v616
      %1053 = vmatprep.subr.mxu0 %v619
      %1054 = vmatpush1.msra.mxu0 %v618
      %1055 = vmatprep.subr.mxu0 %v621
      %1056 = vmatpush1.msra.mxu0 %v620
      %1057 = vmatprep.subr.mxu0 %v623
      %1058 = vmatpush1.msra.mxu0 %v622
      %1059 = vmatprep.subr.mxu0 %v625
      %1060 = vmatpush1.msra.mxu0 %v624
      %1061 = vmatprep.subr.mxu0 %v627
      %1062 = vmatpush1.msra.mxu0 %v626
      %1063 = vmatprep.subr.mxu0 %v629
      %1064 = vmatpush1.msra.mxu0 %v628
      %1065 = vmatprep.subr.mxu0 %v631
      %1066 = vmatpush1.msra.mxu0 %v630
      %1067 = vmatprep.subr.mxu0 %v633
      %1068 = vmatpush1.msra.mxu0 %v632
      %1069 = vmatprep.subr.mxu0 %v635
      %1070 = vmatpush1.msra.mxu0 %v634
      %1071 = vmatprep.subr.mxu0 %v637
      %1072 = vmatpush1.msra.mxu0 %v636
      %1073 = vmatprep.subr.mxu0 %v639
      %1074 = vmatpush1.msra.mxu0 %v638
      %1075 = vmatprep.subr.mxu0 %v641
      %1076 = vmatpush1.msra.mxu0 %v640
      %1077 = vmatprep.subr.mxu0 0.0
      %1078 = vmatpush1.msra.mxu0 0.0
      %1079 = vmatprep.subr.mxu0 0.0
      %1080 = vmatpush1.msra.mxu0 0.0
      %1081 = vmatprep.subr.mxu0 0.0
      %1082 = vmatpush1.msra.mxu0 0.0
      %1083 = vmatprep.subr.mxu0 0.0
      %1084 = vmatpush1.msra.mxu0 0.0
      %1085 = vmatprep.subr.mxu0 0.0
      %1086 = vmatpush1.msra.mxu0 0.0
      %1087 = vmatprep.subr.mxu0 0.0
      %1088 = vmatpush1.msra.mxu0 0.0
      %1089 = vmatprep.subr.mxu0 0.0
      %1090 = vmatpush1.msra.mxu0 0.0
      %1091 = vmatprep.subr.mxu0 0.0
      %1092 = vmatpush1.msra.mxu0 0.0
      %1093 = vmatprep.subr.mxu0 0.0
      %1094 = vmatpush1.msra.mxu0 0.0
      %1095 = vmatprep.subr.mxu0 0.0
      %1096 = vmatpush1.msra.mxu0 0.0
      %1097 = vmatprep.subr.mxu0 0.0
      %1098 = vmatpush1.msra.mxu0 0.0
      %1099 = vmatprep.subr.mxu0 0.0
      %1100 = vmatpush1.msra.mxu0 0.0
      %1101 = vmatprep.subr.mxu0 0.0
      %1102 = vmatpush1.msra.mxu0 0.0
      %1103 = vmatprep.subr.mxu0 0.0
      %1104 = vmatpush1.msra.mxu0 0.0
      %1105 = vmatprep.mubr.f32.mxu0 %v1039
      %1106 = vmatmul.mubr.f32.gmra.mrb[0].mxu0 %v1035
      %v1107 = vpop.f32.mrb[0].mxu0
      %v1108 = vadd.f32 0.0, %v1107
      %v1109 = vpop.f32.mrb[0].mxu0
      %v1110 = vadd.f32 0.0, %v1109
      %1111 = vdwg.mxu0
      %v1112 = vsel %vm1038, %v1031, 0
      %1114 = vmatprep.subr.mxu0 %v571
      %1115 = vmatpush1.msra.mxu0 %v570
      %1116 = vmatprep.subr.mxu0 %v573
      %1117 = vmatpush1.msra.mxu0 %v572
      %1118 = vmatprep.subr.mxu0 %v575
      %1119 = vmatpush1.msra.mxu0 %v574
      %1120 = vmatprep.subr.mxu0 %v577
      %1121 = vmatpush1.msra.mxu0 %v576
      %1122 = vmatprep.subr.mxu0 %v579
      %1123 = vmatpush1.msra.mxu0 %v578
      %1124 = vmatprep.subr.mxu0 %v581
      %1125 = vmatpush1.msra.mxu0 %v580
      %1126 = vmatprep.subr.mxu0 %v583
      %1127 = vmatpush1.msra.mxu0 %v582
      %1128 = vmatprep.subr.mxu0 %v585
      %1129 = vmatpush1.msra.mxu0 %v584
      %1130 = vmatprep.subr.mxu0 %v587
      %1131 = vmatpush1.msra.mxu0 %v586
      %1132 = vmatprep.subr.mxu0 %v589
      %1133 = vmatpush1.msra.mxu0 %v588
      %1134 = vmatprep.subr.mxu0 %v591
      %1135 = vmatpush1.msra.mxu0 %v590
      %1136 = vmatprep.subr.mxu0 %v593
      %1137 = vmatpush1.msra.mxu0 %v592
      %1138 = vmatprep.subr.mxu0 %v595
      %1139 = vmatpush1.msra.mxu0 %v594
      %1140 = vmatprep.subr.mxu0 %v597
      %1141 = vmatpush1.msra.mxu0 %v596
      %1142 = vmatprep.subr.mxu0 %v599
      %1143 = vmatpush1.msra.mxu0 %v598
      %1144 = vmatprep.subr.mxu0 %v601
      %1145 = vmatpush1.msra.mxu0 %v600
      %1146 = vmatprep.subr.mxu0 %v603
      %1147 = vmatpush1.msra.mxu0 %v602
      %1148 = vmatprep.subr.mxu0 %v605
      %1149 = vmatpush1.msra.mxu0 %v604
      %1150 = vmatprep.subr.mxu0 0.0
      %1151 = vmatpush1.msra.mxu0 0.0
      %1152 = vmatprep.subr.mxu0 0.0
      %1153 = vmatpush1.msra.mxu0 0.0
      %1154 = vmatprep.subr.mxu0 0.0
      %1155 = vmatpush1.msra.mxu0 0.0
      %1156 = vmatprep.subr.mxu0 0.0
      %1157 = vmatpush1.msra.mxu0 0.0
      %1158 = vmatprep.subr.mxu0 0.0
      %1159 = vmatpush1.msra.mxu0 0.0
      %1160 = vmatprep.subr.mxu0 0.0
      %1161 = vmatpush1.msra.mxu0 0.0
      %1162 = vmatprep.subr.mxu0 0.0
      %1163 = vmatpush1.msra.mxu0 0.0
      %1164 = vmatprep.subr.mxu0 0.0
      %1165 = vmatpush1.msra.mxu0 0.0
      %1166 = vmatprep.subr.mxu0 0.0
      %1167 = vmatpush1.msra.mxu0 0.0
      %1168 = vmatprep.subr.mxu0 0.0
      %1169 = vmatpush1.msra.mxu0 0.0
      %1170 = vmatprep.subr.mxu0 0.0
      %1171 = vmatpush1.msra.mxu0 0.0
      %1172 = vmatprep.subr.mxu0 0.0
      %1173 = vmatpush1.msra.mxu0 0.0
      %1174 = vmatprep.subr.mxu0 0.0
      %1175 = vmatpush1.msra.mxu0 0.0
      %1176 = vmatprep.subr.mxu0 0.0
      %1177 = vmatpush1.msra.mxu0 0.0
      %1178 = vmatprep.mubr.f32.mxu0 %v1112
      %1179 = vmatmul.mubr.f32.gmra.mrb[0].mxu0 %v1029
      %v1180 = vpop.f32.mrb[0].mxu0
      %v1181 = vadd.f32 %v1108, %v1180
      %v1182 = vpop.f32.mrb[0].mxu0
      %v1183 = vadd.f32 %v1110, %v1182
      %1184 = vdwg.mxu0
      %v1185 = vld [vmem:[%s6] sm:$0xf]
      %1186 = vrot.lane.b32.xlu0 %v441, 17
      %v1187 = vpop.permute.xlu0 %1186
      %1188 = vrot.lane.b32.xlu0 %v647, 17
      %v1189 = vpop.permute.xlu0 %1188
      %v1190 = vlaneseq
      %v1191 = vand.u32 %v1190, 127
      %vm1192 = vcmp.lt.s32.totalorder %v1191, 17
      %v1193 = vsel %vm1192, %v1187, %v1189
      %v1194 = vsel %vm1192, %v1189, %v1187
      %v1195 = vlaneseq
      %v1196 = vshrl.u32 %v1195, 7
      %v1197 = vsub.s32 0, %v1196
      %v1198 = vrot.slane %v642, %v1197
      %v1199 = vlaneseq
      %v1200 = vshrl.u32 %v1199, 7
      %v1201 = vsub.s32 0, %v1200
      %v1202 = vrot.slane %v643, %v1201
      %v1203 = vmul.f32 %v1194, %v1198
      %v1204 = vmul.f32 %v1193, %v1202
      %1205 = vrot.lane.b32.xlu0 %v441, 16
      %v1206 = vpop.permute.xlu0 %1205
      %1207 = vrot.lane.b32.xlu0 %v647, 16
      %v1208 = vpop.permute.xlu0 %1207
      %vm1209 = vcmp.lt.s32.totalorder %v1191, 16
      %v1210 = vsel %vm1209, %v1206, %v1208
      %v1211 = vsel %vm1209, %v1208, %v1206
      %v1212 = vlaneseq
      %v1213 = vshrl.u32 %v1212, 7
      %v1214 = vsub.s32 1, %v1213
      %v1215 = vrot.slane %v642, %v1214
      %v1216 = vlaneseq
      %v1217 = vshrl.u32 %v1216, 7
      %v1218 = vsub.s32 1, %v1217
      %v1219 = vrot.slane %v643, %v1218
      %v1220 = vmul.f32 %v1211, %v1215
      %v1221 = vmul.f32 %v1210, %v1219
      %1222 = vrot.lane.b32.xlu0 %v441, 15
      %v1223 = vpop.permute.xlu0 %1222
      %1224 = vrot.lane.b32.xlu0 %v647, 15
      %v1225 = vpop.permute.xlu0 %1224
      %vm1226 = vcmp.lt.s32.totalorder %v1191, 15
      %v1227 = vsel %vm1226, %v1223, %v1225
      %v1228 = vsel %vm1226, %v1225, %v1223
      %v1229 = vlaneseq
      %v1230 = vshrl.u32 %v1229, 7
      %v1231 = vsub.s32 2, %v1230
      %v1232 = vrot.slane %v642, %v1231
      %v1233 = vlaneseq
      %v1234 = vshrl.u32 %v1233, 7
      %v1235 = vsub.s32 2, %v1234
      %v1236 = vrot.slane %v643, %v1235
      %v1237 = vmul.f32 %v1228, %v1232
      %v1238 = vmul.f32 %v1227, %v1236
      %1239 = vrot.lane.b32.xlu0 %v441, 1
      %v1240 = vpop.permute.xlu0 %1239
      %1241 = vrot.lane.b32.xlu0 %v647, 1
      %v1242 = vpop.permute.xlu0 %1241
      %vm1243 = vcmp.lt.s32.totalorder %v1191, 1
      %v1244 = vsel %vm1243, %v1240, %v1242
      %v1245 = vsel %vm1243, %v1242, %v1240
      %v1246 = vlaneseq
      %v1247 = vshrl.u32 %v1246, 7
      %v1248 = vsub.s32 3, %v1247
      %v1249 = vrot.slane %v642, %v1248
      %v1250 = vlaneseq
      %v1251 = vshrl.u32 %v1250, 7
      %v1252 = vsub.s32 3, %v1251
      %v1253 = vrot.slane %v643, %v1252
      %v1254 = vmul.f32 %v1245, %v1249
      %v1255 = vmul.f32 %v1244, %v1253
      %1256 = vrot.lane.b32.xlu0 %v441, 127
      %v1257 = vpop.permute.xlu0 %1256
      %1258 = vrot.lane.b32.xlu0 %v647, 127
      %v1259 = vpop.permute.xlu0 %1258
      %vm1260 = vcmp.lt.s32.totalorder %v1191, 127
      %v1261 = vsel %vm1260, %v1257, %v1259
      %v1262 = vsel %vm1260, %v1259, %v1257
      %v1263 = vlaneseq
      %v1264 = vshrl.u32 %v1263, 7
      %v1265 = vsub.s32 5, %v1264
      %v1266 = vrot.slane %v642, %v1265
      %v1267 = vlaneseq
      %v1268 = vshrl.u32 %v1267, 7
      %v1269 = vsub.s32 5, %v1268
      %v1270 = vrot.slane %v643, %v1269
      %v1271 = vmul.f32 %v1261, %v1266
      %v1272 = vmul.f32 %v1262, %v1270
      %1273 = vrot.lane.b32.xlu0 %v441, 113
      %v1274 = vpop.permute.xlu0 %1273
      %1275 = vrot.lane.b32.xlu0 %v647, 113
      %v1276 = vpop.permute.xlu0 %1275
      %vm1277 = vcmp.lt.s32.totalorder %v1191, 113
      %v1278 = vsel %vm1277, %v1274, %v1276
      %v1279 = vsel %vm1277, %v1276, %v1274
      %v1280 = vlaneseq
      %v1281 = vshrl.u32 %v1280, 7
      %v1282 = vsub.s32 6, %v1281
      %v1283 = vrot.slane %v642, %v1282
      %v1284 = vlaneseq
      %v1285 = vshrl.u32 %v1284, 7
      %v1286 = vsub.s32 6, %v1285
      %v1287 = vrot.slane %v643, %v1286
      %v1288 = vmul.f32 %v1278, %v1283
      %v1289 = vmul.f32 %v1279, %v1287
      %1290 = vrot.lane.b32.xlu0 %v441, 112
      %v1291 = vpop.permute.xlu0 %1290
      %1292 = vrot.lane.b32.xlu0 %v647, 112
      %v1293 = vpop.permute.xlu0 %1292
      %vm1294 = vcmp.lt.s32.totalorder %v1191, 112
      %v1295 = vsel %vm1294, %v1291, %v1293
      %v1296 = vsel %vm1294, %v1293, %v1291
      %v1297 = vlaneseq
      %v1298 = vshrl.u32 %v1297, 7
      %v1299 = vsub.s32 7, %v1298
      %v1300 = vrot.slane %v642, %v1299
      %v1301 = vlaneseq
      %v1302 = vshrl.u32 %v1301, 7
      %v1303 = vsub.s32 7, %v1302
      %v1304 = vrot.slane %v643, %v1303
      %v1305 = vmul.f32 %v1295, %v1300
      %v1306 = vmul.f32 %v1296, %v1304
      %1307 = vrot.lane.b32.xlu0 %v441, 111
      %v1308 = vpop.permute.xlu0 %1307
      %1309 = vrot.lane.b32.xlu0 %v647, 111
      %v1310 = vpop.permute.xlu0 %1309
      %vm1311 = vcmp.lt.s32.totalorder %v1191, 111
      %v1312 = vsel %vm1311, %v1308, %v1310
      %v1313 = vsel %vm1311, %v1310, %v1308
      %v1314 = vlaneseq
      %v1315 = vshrl.u32 %v1314, 7
      %v1316 = vsub.s32 0, %v1315
      %v1317 = vrot.slane %v644, %v1316
      %v1318 = vlaneseq
      %v1319 = vshrl.u32 %v1318, 7
      %v1320 = vsub.s32 0, %v1319
      %v1321 = vrot.slane %v645, %v1320
      %v1322 = vmul.f32 %v1312, %v1317
      %v1323 = vmul.f32 %v1313, %v1321
      %v1326 = vrot.slane %v1220, 4
      %v1327 = vrot.slane %v1221, 4
      %v1332 = vrot.slane %v1254, 4
      %v1333 = vrot.slane %v1255, 4
      %v1338 = vrot.slane %v1271, 4
      %v1339 = vrot.slane %v1272, 4
      %v1344 = vrot.slane %v1305, 4
      %v1345 = vrot.slane %v1306, 4
      %v1348 = vsel %vm797, %v1203, %v1326
      %v1349 = vsel %vm797, %v1204, %v1327
      %v1350 = vsel %vm797, %v1237, %v1332
      %v1351 = vsel %vm797, %v1238, %v1333
      %v1352 = vsel %vm797, %v441, %v1338
      %v1353 = vsel %vm797, %v647, %v1339
      %v1354 = vsel %vm797, %v1288, %v1344
      %v1355 = vsel %vm797, %v1289, %v1345
      %v1356 = vld [vmem:[%s7] sm:$0xf]
      %1358 = vset.pattern.permute.xlu0 0
      %1359 = vperm.xlu0 %1358, %v1356
      %v1360 = vpop.permute.xlu0 %1359
      %vm1362 = vcmask 293888
      %v1364 = vsel %vm1362, %v1185, 0
      %v1367 = vsel %vm797, %v1322, 0
      %v1370 = vsel %vm797, %v1323, 0
      %1372 = vmatprep.subr.mxu0 %v1349
      %1373 = vmatpush1.msra.mxu0 %v1348
      %1374 = vmatprep.subr.mxu0 %v1351
      %1375 = vmatpush1.msra.mxu0 %v1350
      %1376 = vmatprep.subr.mxu0 %v1353
      %1377 = vmatpush1.msra.mxu0 %v1352
      %1378 = vmatprep.subr.mxu0 %v1355
      %1379 = vmatpush1.msra.mxu0 %v1354
      %1380 = vmatprep.subr.mxu0 %v1370
      %1381 = vmatpush1.msra.mxu0 %v1367
      %1382 = vmatprep.subr.mxu0 0.0
      %1383 = vmatpush1.msra.mxu0 0.0
      %1384 = vmatprep.subr.mxu0 0.0
      %1385 = vmatpush1.msra.mxu0 0.0
      %1386 = vmatprep.subr.mxu0 0.0
      %1387 = vmatpush1.msra.mxu0 0.0
      %1388 = vmatprep.subr.mxu0 0.0
      %1389 = vmatpush1.msra.mxu0 0.0
      %1390 = vmatprep.subr.mxu0 0.0
      %1391 = vmatpush1.msra.mxu0 0.0
      %1392 = vmatprep.subr.mxu0 0.0
      %1393 = vmatpush1.msra.mxu0 0.0
      %1394 = vmatprep.subr.mxu0 0.0
      %1395 = vmatpush1.msra.mxu0 0.0
      %1396 = vmatprep.subr.mxu0 0.0
      %1397 = vmatpush1.msra.mxu0 0.0
      %1398 = vmatprep.subr.mxu0 0.0
      %1399 = vmatpush1.msra.mxu0 0.0
      %1400 = vmatprep.subr.mxu0 0.0
      %1401 = vmatpush1.msra.mxu0 0.0
      %1402 = vmatprep.subr.mxu0 0.0
      %1403 = vmatpush1.msra.mxu0 0.0
      %1404 = vmatprep.subr.mxu0 0.0
      %1405 = vmatpush1.msra.mxu0 0.0
      %1406 = vmatprep.subr.mxu0 0.0
      %1407 = vmatpush1.msra.mxu0 0.0
      %1408 = vmatprep.subr.mxu0 0.0
      %1409 = vmatpush1.msra.mxu0 0.0
      %1410 = vmatprep.subr.mxu0 0.0
      %1411 = vmatpush1.msra.mxu0 0.0
      %1412 = vmatprep.subr.mxu0 0.0
      %1413 = vmatpush1.msra.mxu0 0.0
      %1414 = vmatprep.subr.mxu0 0.0
      %1415 = vmatpush1.msra.mxu0 0.0
      %1416 = vmatprep.subr.mxu0 0.0
      %1417 = vmatpush1.msra.mxu0 0.0
      %1418 = vmatprep.subr.mxu0 0.0
      %1419 = vmatpush1.msra.mxu0 0.0
      %1420 = vmatprep.subr.mxu0 0.0
      %1421 = vmatpush1.msra.mxu0 0.0
      %1422 = vmatprep.subr.mxu0 0.0
      %1423 = vmatpush1.msra.mxu0 0.0
      %1424 = vmatprep.subr.mxu0 0.0
      %1425 = vmatpush1.msra.mxu0 0.0
      %1426 = vmatprep.subr.mxu0 0.0
      %1427 = vmatpush1.msra.mxu0 0.0
      %1428 = vmatprep.subr.mxu0 0.0
      %1429 = vmatpush1.msra.mxu0 0.0
      %1430 = vmatprep.subr.mxu0 0.0
      %1431 = vmatpush1.msra.mxu0 0.0
      %1432 = vmatprep.subr.mxu0 0.0
      %1433 = vmatpush1.msra.mxu0 0.0
      %1434 = vmatprep.subr.mxu0 0.0
      %1435 = vmatpush1.msra.mxu0 0.0
      %1436 = vmatprep.mubr.f32.mxu0 0.0
      %1437 = vmatmul.mubr.f32.gmra.mrb[0].mxu0 %v1364
      %v1438 = vpop.f32.mrb[0].mxu0
      %v1439 = vadd.f32 %v1360, %v1438
      %v1440 = vpop.f32.mrb[0].mxu0
      %v1441 = vadd.f32 %v1360, %v1440
      %1442 = vdwg.mxu0
      %v1443 = vmax.f32 %v1439, 0.0
      %v1444 = vmax.f32 %v1441, 0.0
      %v1445 = vld [vmem:[%s8] sm:$0xf]
      %1446 = vrot.lane.b32.xlu0 %v1443, 17
      %v1447 = vpop.permute.xlu0 %1446
      %1448 = vrot.lane.b32.xlu0 %v1444, 17
      %v1449 = vpop.permute.xlu0 %1448
      %v1450 = vsel %vm1192, %v1447, %v1449
      %v1451 = vsel %vm1192, %v1449, %v1447
      %v1452 = vmul.f32 %v1451, %v1198
      %v1453 = vmul.f32 %v1450, %v1202
      %1454 = vrot.lane.b32.xlu0 %v1443, 16
      %v1455 = vpop.permute.xlu0 %1454
      %1456 = vrot.lane.b32.xlu0 %v1444, 16
      %v1457 = vpop.permute.xlu0 %1456
      %v1458 = vsel %vm1209, %v1455, %v1457
      %v1459 = vsel %vm1209, %v1457, %v1455
      %v1460 = vmul.f32 %v1459, %v1215
      %v1461 = vmul.f32 %v1458, %v1219
      %1462 = vrot.lane.b32.xlu0 %v1443, 15
      %v1463 = vpop.permute.xlu0 %1462
      %1464 = vrot.lane.b32.xlu0 %v1444, 15
      %v1465 = vpop.permute.xlu0 %1464
      %v1466 = vsel %vm1226, %v1463, %v1465
      %v1467 = vsel %vm1226, %v1465, %v1463
      %v1468 = vmul.f32 %v1467, %v1232
      %v1469 = vmul.f32 %v1466, %v1236
      %1470 = vrot.lane.b32.xlu0 %v1443, 1
      %v1471 = vpop.permute.xlu0 %1470
      %1472 = vrot.lane.b32.xlu0 %v1444, 1
      %v1473 = vpop.permute.xlu0 %1472
      %v1474 = vsel %vm1243, %v1471, %v1473
      %v1475 = vsel %vm1243, %v1473, %v1471
      %v1476 = vmul.f32 %v1475, %v1249
      %v1477 = vmul.f32 %v1474, %v1253
      %1478 = vrot.lane.b32.xlu0 %v1443, 127
      %v1479 = vpop.permute.xlu0 %1478
      %1480 = vrot.lane.b32.xlu0 %v1444, 127
      %v1481 = vpop.permute.xlu0 %1480
      %v1482 = vsel %vm1260, %v1479, %v1481
      %v1483 = vsel %vm1260, %v1481, %v1479
      %v1484 = vmul.f32 %v1482, %v1266
      %v1485 = vmul.f32 %v1483, %v1270
      %1486 = vrot.lane.b32.xlu0 %v1443, 113
      %v1487 = vpop.permute.xlu0 %1486
      %1488 = vrot.lane.b32.xlu0 %v1444, 113
      %v1489 = vpop.permute.xlu0 %1488
      %v1490 = vsel %vm1277, %v1487, %v1489
      %v1491 = vsel %vm1277, %v1489, %v1487
      %v1492 = vmul.f32 %v1490, %v1283
      %v1493 = vmul.f32 %v1491, %v1287
      %1494 = vrot.lane.b32.xlu0 %v1443, 112
      %v1495 = vpop.permute.xlu0 %1494
      %1496 = vrot.lane.b32.xlu0 %v1444, 112
      %v1497 = vpop.permute.xlu0 %1496
      %v1498 = vsel %vm1294, %v1495, %v1497
      %v1499 = vsel %vm1294, %v1497, %v1495
      %v1500 = vmul.f32 %v1498, %v1300
      %v1501 = vmul.f32 %v1499, %v1304
      %1502 = vrot.lane.b32.xlu0 %v1443, 111
      %v1503 = vpop.permute.xlu0 %1502
      %1504 = vrot.lane.b32.xlu0 %v1444, 111
      %v1505 = vpop.permute.xlu0 %1504
      %v1506 = vsel %vm1311, %v1503, %v1505
      %v1507 = vsel %vm1311, %v1505, %v1503
      %v1508 = vmul.f32 %v1506, %v1317
      %v1509 = vmul.f32 %v1507, %v1321
      %v1512 = vrot.slane %v1460, 4
      %v1513 = vrot.slane %v1461, 4
      %v1518 = vrot.slane %v1476, 4
      %v1519 = vrot.slane %v1477, 4
      %v1524 = vrot.slane %v1484, 4
      %v1525 = vrot.slane %v1485, 4
      %v1530 = vrot.slane %v1500, 4
      %v1531 = vrot.slane %v1501, 4
      %v1534 = vsel %vm797, %v1452, %v1512
      %v1535 = vsel %vm797, %v1453, %v1513
      %v1536 = vsel %vm797, %v1468, %v1518
      %v1537 = vsel %vm797, %v1469, %v1519
      %v1538 = vsel %vm797, %v1443, %v1524
      %v1539 = vsel %vm797, %v1444, %v1525
      %v1540 = vsel %vm797, %v1492, %v1530
      %v1541 = vsel %vm797, %v1493, %v1531
      %v1542 = vld [vmem:[%s9] sm:$0xf]
      %1544 = vset.pattern.permute.xlu0 0
      %1545 = vperm.xlu0 %1544, %v1542
      %v1546 = vpop.permute.xlu0 %1545
      %v1549 = vsel %vm1362, %v1445, 0
      %v1552 = vsel %vm797, %v1508, 0
      %v1555 = vsel %vm797, %v1509, 0
      %1557 = vmatprep.subr.mxu0 %v1535
      %1558 = vmatpush1.msra.mxu0 %v1534
      %1559 = vmatprep.subr.mxu0 %v1537
      %1560 = vmatpush1.msra.mxu0 %v1536
      %1561 = vmatprep.subr.mxu0 %v1539
      %1562 = vmatpush1.msra.mxu0 %v1538
      %1563 = vmatprep.subr.mxu0 %v1541
      %1564 = vmatpush1.msra.mxu0 %v1540
      %1565 = vmatprep.subr.mxu0 %v1555
      %1566 = vmatpush1.msra.mxu0 %v1552
      %1567 = vmatprep.subr.mxu0 0.0
      %1568 = vmatpush1.msra.mxu0 0.0
      %1569 = vmatprep.subr.mxu0 0.0
      %1570 = vmatpush1.msra.mxu0 0.0
      %1571 = vmatprep.subr.mxu0 0.0
      %1572 = vmatpush1.msra.mxu0 0.0
      %1573 = vmatprep.subr.mxu0 0.0
      %1574 = vmatpush1.msra.mxu0 0.0
      %1575 = vmatprep.subr.mxu0 0.0
      %1576 = vmatpush1.msra.mxu0 0.0
      %1577 = vmatprep.subr.mxu0 0.0
      %1578 = vmatpush1.msra.mxu0 0.0
      %1579 = vmatprep.subr.mxu0 0.0
      %1580 = vmatpush1.msra.mxu0 0.0
      %1581 = vmatprep.subr.mxu0 0.0
      %1582 = vmatpush1.msra.mxu0 0.0
      %1583 = vmatprep.subr.mxu0 0.0
      %1584 = vmatpush1.msra.mxu0 0.0
      %1585 = vmatprep.subr.mxu0 0.0
      %1586 = vmatpush1.msra.mxu0 0.0
      %1587 = vmatprep.subr.mxu0 0.0
      %1588 = vmatpush1.msra.mxu0 0.0
      %1589 = vmatprep.subr.mxu0 0.0
      %1590 = vmatpush1.msra.mxu0 0.0
      %1591 = vmatprep.subr.mxu0 0.0
      %1592 = vmatpush1.msra.mxu0 0.0
      %1593 = vmatprep.subr.mxu0 0.0
      %1594 = vmatpush1.msra.mxu0 0.0
      %1595 = vmatprep.subr.mxu0 0.0
      %1596 = vmatpush1.msra.mxu0 0.0
      %1597 = vmatprep.subr.mxu0 0.0
      %1598 = vmatpush1.msra.mxu0 0.0
      %1599 = vmatprep.subr.mxu0 0.0
      %1600 = vmatpush1.msra.mxu0 0.0
      %1601 = vmatprep.subr.mxu0 0.0
      %1602 = vmatpush1.msra.mxu0 0.0
      %1603 = vmatprep.subr.mxu0 0.0
      %1604 = vmatpush1.msra.mxu0 0.0
      %1605 = vmatprep.subr.mxu0 0.0
      %1606 = vmatpush1.msra.mxu0 0.0
      %1607 = vmatprep.subr.mxu0 0.0
      %1608 = vmatpush1.msra.mxu0 0.0
      %1609 = vmatprep.subr.mxu0 0.0
      %1610 = vmatpush1.msra.mxu0 0.0
      %1611 = vmatprep.subr.mxu0 0.0
      %1612 = vmatpush1.msra.mxu0 0.0
      %1613 = vmatprep.subr.mxu0 0.0
      %1614 = vmatpush1.msra.mxu0 0.0
      %1615 = vmatprep.subr.mxu0 0.0
      %1616 = vmatpush1.msra.mxu0 0.0
      %1617 = vmatprep.subr.mxu0 0.0
      %1618 = vmatpush1.msra.mxu0 0.0
      %1619 = vmatprep.subr.mxu0 0.0
      %1620 = vmatpush1.msra.mxu0 0.0
      %1621 = vmatprep.mubr.f32.mxu0 0.0
      %1622 = vmatmul.mubr.f32.gmra.mrb[0].mxu0 %v1549
      %v1623 = vpop.f32.mrb[0].mxu0
      %v1624 = vadd.f32 %v1546, %v1623
      %v1625 = vpop.f32.mrb[0].mxu0
      %v1626 = vadd.f32 %v1546, %v1625
      %1627 = vdwg.mxu0
      %v1628 = vadd.f32 %v1624, %v1181
      %v1629 = vadd.f32 %v1626, %v1183
      %v1630 = vadd.f32 %v1628, %v441
      %v1631 = vadd.f32 %v1629, %v647
      %1632 = vmatprep.subr.mxu0 %v443
      %1633 = vmatpush1.msra.mxu0 %v442
      %1634 = vmatprep.subr.mxu0 %v445
      %1635 = vmatpush1.msra.mxu0 %v444
      %1636 = vmatprep.subr.mxu0 %v447
      %1637 = vmatpush1.msra.mxu0 %v446
      %1638 = vmatprep.subr.mxu0 %v449
      %1639 = vmatpush1.msra.mxu0 %v448
      %1640 = vmatprep.subr.mxu0 %v451
      %1641 = vmatpush1.msra.mxu0 %v450
      %1642 = vmatprep.subr.mxu0 %v453
      %1643 = vmatpush1.msra.mxu0 %v452
      %1644 = vmatprep.subr.mxu0 %v455
      %1645 = vmatpush1.msra.mxu0 %v454
      %1646 = vmatprep.subr.mxu0 %v457
      %1647 = vmatpush1.msra.mxu0 %v456
      %1648 = vmatprep.subr.mxu0 %v459
      %1649 = vmatpush1.msra.mxu0 %v458
      %1650 = vmatprep.subr.mxu0 %v461
      %1651 = vmatpush1.msra.mxu0 %v460
      %1652 = vmatprep.subr.mxu0 %v463
      %1653 = vmatpush1.msra.mxu0 %v462
      %1654 = vmatprep.subr.mxu0 %v465
      %1655 = vmatpush1.msra.mxu0 %v464
      %1656 = vmatprep.subr.mxu0 %v467
      %1657 = vmatpush1.msra.mxu0 %v466
      %1658 = vmatprep.subr.mxu0 %v469
      %1659 = vmatpush1.msra.mxu0 %v468
      %1660 = vmatprep.subr.mxu0 %v471
      %1661 = vmatpush1.msra.mxu0 %v470
      %1662 = vmatprep.subr.mxu0 %v473
      %1663 = vmatpush1.msra.mxu0 %v472
      %1664 = vmatprep.subr.mxu0 %v475
      %1665 = vmatpush1.msra.mxu0 %v474
      %1666 = vmatprep.subr.mxu0 %v477
      %1667 = vmatpush1.msra.mxu0 %v476
      %1668 = vmatprep.subr.mxu0 %v479
      %1669 = vmatpush1.msra.mxu0 %v478
      %1670 = vmatprep.subr.mxu0 %v481
      %1671 = vmatpush1.msra.mxu0 %v480
      %1672 = vmatprep.subr.mxu0 %v483
      %1673 = vmatpush1.msra.mxu0 %v482
      %1674 = vmatprep.subr.mxu0 %v485
      %1675 = vmatpush1.msra.mxu0 %v484
      %1676 = vmatprep.subr.mxu0 %v487
      %1677 = vmatpush1.msra.mxu0 %v486
      %1678 = vmatprep.subr.mxu0 %v489
      %1679 = vmatpush1.msra.mxu0 %v488
      %1680 = vmatprep.subr.mxu0 %v491
      %1681 = vmatpush1.msra.mxu0 %v490
      %1682 = vmatprep.subr.mxu0 %v493
      %1683 = vmatpush1.msra.mxu0 %v492
      %1684 = vmatprep.subr.mxu0 %v495
      %1685 = vmatpush1.msra.mxu0 %v494
      %1686 = vmatprep.subr.mxu0 %v497
      %1687 = vmatpush1.msra.mxu0 %v496
      %1688 = vmatprep.subr.mxu0 %v499
      %1689 = vmatpush1.msra.mxu0 %v498
      %1690 = vmatprep.subr.mxu0 %v501
      %1691 = vmatpush1.msra.mxu0 %v500
      %1692 = vmatprep.subr.mxu0 %v503
      %1693 = vmatpush1.msra.mxu0 %v502
      %1694 = vmatprep.subr.mxu0 %v505
      %1695 = vmatpush1.msra.mxu0 %v504
      %1696 = vmatprep.mubr.f32.mxu0 %v1631
      %1697 = vmatmul.mubr.f32.gmra.mrb[0].mxu0 %v1630
      %v1698 = vpop.f32.mrb[0].mxu0
      %v1699 = vadd.f32 0.0, %v1698
      %v1700 = vpop.f32.mrb[0].mxu0
      %v1701 = vadd.f32 0.0, %v1700
      %1702 = vdwg.mxu0
      %1703 = vmatprep.subr.mxu0 %v507
      %1704 = vmatpush1.msra.mxu0 %v506
      %1705 = vmatprep.subr.mxu0 %v509
      %1706 = vmatpush1.msra.mxu0 %v508
      %1707 = vmatprep.subr.mxu0 %v511
      %1708 = vmatpush1.msra.mxu0 %v510
      %1709 = vmatprep.subr.mxu0 %v513
      %1710 = vmatpush1.msra.mxu0 %v512
      %1711 = vmatprep.subr.mxu0 %v515
      %1712 = vmatpush1.msra.mxu0 %v514
      %1713 = vmatprep.subr.mxu0 %v517
      %1714 = vmatpush1.msra.mxu0 %v516
      %1715 = vmatprep.subr.mxu0 %v519
      %1716 = vmatpush1.msra.mxu0 %v518
      %1717 = vmatprep.subr.mxu0 %v521
      %1718 = vmatpush1.msra.mxu0 %v520
      %1719 = vmatprep.subr.mxu0 %v523
      %1720 = vmatpush1.msra.mxu0 %v522
      %1721 = vmatprep.subr.mxu0 %v525
      %1722 = vmatpush1.msra.mxu0 %v524
      %1723 = vmatprep.subr.mxu0 %v527
      %1724 = vmatpush1.msra.mxu0 %v526
      %1725 = vmatprep.subr.mxu0 %v529
      %1726 = vmatpush1.msra.mxu0 %v528
      %1727 = vmatprep.subr.mxu0 %v531
      %1728 = vmatpush1.msra.mxu0 %v530
      %1729 = vmatprep.subr.mxu0 %v533
      %1730 = vmatpush1.msra.mxu0 %v532
      %1731 = vmatprep.subr.mxu0 %v535
      %1732 = vmatpush1.msra.mxu0 %v534
      %1733 = vmatprep.subr.mxu0 %v537
      %1734 = vmatpush1.msra.mxu0 %v536
      %1735 = vmatprep.subr.mxu0 %v539
      %1736 = vmatpush1.msra.mxu0 %v538
      %1737 = vmatprep.subr.mxu0 %v541
      %1738 = vmatpush1.msra.mxu0 %v540
      %1739 = vmatprep.subr.mxu0 %v543
      %1740 = vmatpush1.msra.mxu0 %v542
      %1741 = vmatprep.subr.mxu0 %v545
      %1742 = vmatpush1.msra.mxu0 %v544
      %1743 = vmatprep.subr.mxu0 %v547
      %1744 = vmatpush1.msra.mxu0 %v546
      %1745 = vmatprep.subr.mxu0 %v549
      %1746 = vmatpush1.msra.mxu0 %v548
      %1747 = vmatprep.subr.mxu0 %v551
      %1748 = vmatpush1.msra.mxu0 %v550
      %1749 = vmatprep.subr.mxu0 %v553
      %1750 = vmatpush1.msra.mxu0 %v552
      %1751 = vmatprep.subr.mxu0 %v555
      %1752 = vmatpush1.msra.mxu0 %v554
      %1753 = vmatprep.subr.mxu0 %v557
      %1754 = vmatpush1.msra.mxu0 %v556
      %1755 = vmatprep.subr.mxu0 %v559
      %1756 = vmatpush1.msra.mxu0 %v558
      %1757 = vmatprep.subr.mxu0 %v561
      %1758 = vmatpush1.msra.mxu0 %v560
      %1759 = vmatprep.subr.mxu0 %v563
      %1760 = vmatpush1.msra.mxu0 %v562
      %1761 = vmatprep.subr.mxu0 %v565
      %1762 = vmatpush1.msra.mxu0 %v564
      %1763 = vmatprep.subr.mxu0 %v567
      %1764 = vmatpush1.msra.mxu0 %v566
      %1765 = vmatprep.subr.mxu0 %v569
      %1766 = vmatpush1.msra.mxu0 %v568
      %1767 = vmatprep.mubr.f32.mxu0 %v1631
      %1768 = vmatmul.mubr.f32.gmra.mrb[0].mxu0 %v1630
      %v1769 = vpop.f32.mrb[0].mxu0
      %v1770 = vadd.f32 0.0, %v1769
      %v1771 = vpop.f32.mrb[0].mxu0
      %v1772 = vadd.f32 0.0, %v1771
      %1773 = vdwg.mxu0
      %s1774 = scalar_lea.vmem %s10, 8
      %v1775 = vld [vmem:[%s1774] sm:$0xff]
      %s1776 = scalar_lea.vmem %s11, 8
      %v1777 = vld [vmem:[%s1776] sm:$0xff]
      %v1779 = vsel %vm793, %v1777, 0
      %v1782 = vsel %vm797, %v1699, 0
      %v1785 = vsel %vm797, %v1701, 0
      %1787 = vmatprep.subr.mxu0 %v1785
      %1788 = vmatpush1.msra.mxu0 %v1782
      %1789 = vmatprep.subr.mxu0 0.0
      %1790 = vmatpush1.msra.mxu0 0.0
      %1791 = vmatprep.subr.mxu0 0.0
      %1792 = vmatpush1.msra.mxu0 0.0
      %1793 = vmatprep.subr.mxu0 0.0
      %1794 = vmatpush1.msra.mxu0 0.0
      %1795 = vmatprep.subr.mxu0 0.0
      %1796 = vmatpush1.msra.mxu0 0.0
      %1797 = vmatprep.subr.mxu0 0.0
      %1798 = vmatpush1.msra.mxu0 0.0
      %1799 = vmatprep.subr.mxu0 0.0
      %1800 = vmatpush1.msra.mxu0 0.0
      %1801 = vmatprep.subr.mxu0 0.0
      %1802 = vmatpush1.msra.mxu0 0.0
      %1803 = vmatprep.subr.mxu0 0.0
      %1804 = vmatpush1.msra.mxu0 0.0
      %1805 = vmatprep.subr.mxu0 0.0
      %1806 = vmatpush1.msra.mxu0 0.0
      %1807 = vmatprep.subr.mxu0 0.0
      %1808 = vmatpush1.msra.mxu0 0.0
      %1809 = vmatprep.subr.mxu0 0.0
      %1810 = vmatpush1.msra.mxu0 0.0
      %1811 = vmatprep.subr.mxu0 0.0
      %1812 = vmatpush1.msra.mxu0 0.0
      %1813 = vmatprep.subr.mxu0 0.0
      %1814 = vmatpush1.msra.mxu0 0.0
      %1815 = vmatprep.subr.mxu0 0.0
      %1816 = vmatpush1.msra.mxu0 0.0
      %1817 = vmatprep.subr.mxu0 0.0
      %1818 = vmatpush1.msra.mxu0 0.0
      %1819 = vmatprep.subr.mxu0 0.0
      %1820 = vmatpush1.msra.mxu0 0.0
      %1821 = vmatprep.subr.mxu0 0.0
      %1822 = vmatpush1.msra.mxu0 0.0
      %1823 = vmatprep.subr.mxu0 0.0
      %1824 = vmatpush1.msra.mxu0 0.0
      %1825 = vmatprep.subr.mxu0 0.0
      %1826 = vmatpush1.msra.mxu0 0.0
      %1827 = vmatprep.subr.mxu0 0.0
      %1828 = vmatpush1.msra.mxu0 0.0
      %1829 = vmatprep.subr.mxu0 0.0
      %1830 = vmatpush1.msra.mxu0 0.0
      %1831 = vmatprep.subr.mxu0 0.0
      %1832 = vmatpush1.msra.mxu0 0.0
      %1833 = vmatprep.subr.mxu0 0.0
      %1834 = vmatpush1.msra.mxu0 0.0
      %1835 = vmatprep.subr.mxu0 0.0
      %1836 = vmatpush1.msra.mxu0 0.0
      %1837 = vmatprep.subr.mxu0 0.0
      %1838 = vmatpush1.msra.mxu0 0.0
      %1839 = vmatprep.subr.mxu0 0.0
      %1840 = vmatpush1.msra.mxu0 0.0
      %1841 = vmatprep.subr.mxu0 0.0
      %1842 = vmatpush1.msra.mxu0 0.0
      %1843 = vmatprep.subr.mxu0 0.0
      %1844 = vmatpush1.msra.mxu0 0.0
      %1845 = vmatprep.subr.mxu0 0.0
      %1846 = vmatpush1.msra.mxu0 0.0
      %1847 = vmatprep.subr.mxu0 0.0
      %1848 = vmatpush1.msra.mxu0 0.0
      %1849 = vmatprep.subr.mxu0 0.0
      %1850 = vmatpush1.msra.mxu0 0.0
      %1851 = vmatprep.mubr.f32.mxu0 0.0
      %1852 = vmatmul.mubr.f32.gmra.mrb[0].mxu0 %v1779
      %v1853 = vpop.f32.mrb[0].mxu0
      %v1854 = vadd.f32 0.0, %v1853
      %v1855 = vpop.f32.mrb[0].mxu0
      %v1856 = vadd.f32 0.0, %v1855
      %1857 = vdwg.mxu0
      %v1859 = vsel %vm793, %v1775, 0
      %v1862 = vsel %vm797, %v1770, 0
      %v1865 = vsel %vm797, %v1772, 0
      %1867 = vmatprep.subr.mxu0 %v1865
      %1868 = vmatpush1.msra.mxu0 %v1862
      %1869 = vmatprep.subr.mxu0 0.0
      %1870 = vmatpush1.msra.mxu0 0.0
      %1871 = vmatprep.subr.mxu0 0.0
      %1872 = vmatpush1.msra.mxu0 0.0
      %1873 = vmatprep.subr.mxu0 0.0
      %1874 = vmatpush1.msra.mxu0 0.0
      %1875 = vmatprep.subr.mxu0 0.0
      %1876 = vmatpush1.msra.mxu0 0.0
      %1877 = vmatprep.subr.mxu0 0.0
      %1878 = vmatpush1.msra.mxu0 0.0
      %1879 = vmatprep.subr.mxu0 0.0
      %1880 = vmatpush1.msra.mxu0 0.0
      %1881 = vmatprep.subr.mxu0 0.0
      %1882 = vmatpush1.msra.mxu0 0.0
      %1883 = vmatprep.subr.mxu0 0.0
      %1884 = vmatpush1.msra.mxu0 0.0
      %1885 = vmatprep.subr.mxu0 0.0
      %1886 = vmatpush1.msra.mxu0 0.0
      %1887 = vmatprep.subr.mxu0 0.0
      %1888 = vmatpush1.msra.mxu0 0.0
      %1889 = vmatprep.subr.mxu0 0.0
      %1890 = vmatpush1.msra.mxu0 0.0
      %1891 = vmatprep.subr.mxu0 0.0
      %1892 = vmatpush1.msra.mxu0 0.0
      %1893 = vmatprep.subr.mxu0 0.0
      %1894 = vmatpush1.msra.mxu0 0.0
      %1895 = vmatprep.subr.mxu0 0.0
      %1896 = vmatpush1.msra.mxu0 0.0
      %1897 = vmatprep.subr.mxu0 0.0
      %1898 = vmatpush1.msra.mxu0 0.0
      %1899 = vmatprep.subr.mxu0 0.0
      %1900 = vmatpush1.msra.mxu0 0.0
      %1901 = vmatprep.subr.mxu0 0.0
      %1902 = vmatpush1.msra.mxu0 0.0
      %1903 = vmatprep.subr.mxu0 0.0
      %1904 = vmatpush1.msra.mxu0 0.0
      %1905 = vmatprep.subr.mxu0 0.0
      %1906 = vmatpush1.msra.mxu0 0.0
      %1907 = vmatprep.subr.mxu0 0.0
      %1908 = vmatpush1.msra.mxu0 0.0
      %1909 = vmatprep.subr.mxu0 0.0
      %1910 = vmatpush1.msra.mxu0 0.0
      %1911 = vmatprep.subr.mxu0 0.0
      %1912 = vmatpush1.msra.mxu0 0.0
      %1913 = vmatprep.subr.mxu0 0.0
      %1914 = vmatpush1.msra.mxu0 0.0
      %1915 = vmatprep.subr.mxu0 0.0
      %1916 = vmatpush1.msra.mxu0 0.0
      %1917 = vmatprep.subr.mxu0 0.0
      %1918 = vmatpush1.msra.mxu0 0.0
      %1919 = vmatprep.subr.mxu0 0.0
      %1920 = vmatpush1.msra.mxu0 0.0
      %1921 = vmatprep.subr.mxu0 0.0
      %1922 = vmatpush1.msra.mxu0 0.0
      %1923 = vmatprep.subr.mxu0 0.0
      %1924 = vmatpush1.msra.mxu0 0.0
      %1925 = vmatprep.subr.mxu0 0.0
      %1926 = vmatpush1.msra.mxu0 0.0
      %1927 = vmatprep.subr.mxu0 0.0
      %1928 = vmatpush1.msra.mxu0 0.0
      %1929 = vmatprep.subr.mxu0 0.0
      %1930 = vmatpush1.msra.mxu0 0.0
      %1931 = vmatprep.mubr.f32.mxu0 0.0
      %1932 = vmatmul.mubr.f32.gmra.mrb[0].mxu0 %v1859
      %v1933 = vpop.f32.mrb[0].mxu0
      %v1934 = vadd.f32 %v1854, %v1933
      %v1935 = vpop.f32.mrb[0].mxu0
      %v1936 = vadd.f32 %v1856, %v1935
      %1937 = vdwg.mxu0
      %v1938 = vmax.f32 %v1934, 0.0
      %v1939 = vmax.f32 %v1936, 0.0
      %s1940 = scalar_lea.vmem %s12, 8
      %v1941 = vld [vmem:[%s1940] sm:$0xff]
      %v1943 = vsel %vm958, %v1941, 0
      %1945 = vmatprep.subr.mxu0 %v1939
      %1946 = vmatpush1.msra.mxu0 %v1938
      %1947 = vmatprep.subr.mxu0 0.0
      %1948 = vmatpush1.msra.mxu0 0.0
      %1949 = vmatprep.subr.mxu0 0.0
      %1950 = vmatpush1.msra.mxu0 0.0
      %1951 = vmatprep.subr.mxu0 0.0
      %1952 = vmatpush1.msra.mxu0 0.0
      %1953 = vmatprep.subr.mxu0 0.0
      %1954 = vmatpush1.msra.mxu0 0.0
      %1955 = vmatprep.subr.mxu0 0.0
      %1956 = vmatpush1.msra.mxu0 0.0
      %1957 = vmatprep.subr.mxu0 0.0
      %1958 = vmatpush1.msra.mxu0 0.0
      %1959 = vmatprep.subr.mxu0 0.0
      %1960 = vmatpush1.msra.mxu0 0.0
      %1961 = vmatprep.subr.mxu0 0.0
      %1962 = vmatpush1.msra.mxu0 0.0
      %1963 = vmatprep.subr.mxu0 0.0
      %1964 = vmatpush1.msra.mxu0 0.0
      %1965 = vmatprep.subr.mxu0 0.0
      %1966 = vmatpush1.msra.mxu0 0.0
      %1967 = vmatprep.subr.mxu0 0.0
      %1968 = vmatpush1.msra.mxu0 0.0
      %1969 = vmatprep.subr.mxu0 0.0
      %1970 = vmatpush1.msra.mxu0 0.0
      %1971 = vmatprep.subr.mxu0 0.0
      %1972 = vmatpush1.msra.mxu0 0.0
      %1973 = vmatprep.subr.mxu0 0.0
      %1974 = vmatpush1.msra.mxu0 0.0
      %1975 = vmatprep.subr.mxu0 0.0
      %1976 = vmatpush1.msra.mxu0 0.0
      %1977 = vmatprep.subr.mxu0 0.0
      %1978 = vmatpush1.msra.mxu0 0.0
      %1979 = vmatprep.subr.mxu0 0.0
      %1980 = vmatpush1.msra.mxu0 0.0
      %1981 = vmatprep.subr.mxu0 0.0
      %1982 = vmatpush1.msra.mxu0 0.0
      %1983 = vmatprep.subr.mxu0 0.0
      %1984 = vmatpush1.msra.mxu0 0.0
      %1985 = vmatprep.subr.mxu0 0.0
      %1986 = vmatpush1.msra.mxu0 0.0
      %1987 = vmatprep.subr.mxu0 0.0
      %1988 = vmatpush1.msra.mxu0 0.0
      %1989 = vmatprep.subr.mxu0 0.0
      %1990 = vmatpush1.msra.mxu0 0.0
      %1991 = vmatprep.subr.mxu0 0.0
      %1992 = vmatpush1.msra.mxu0 0.0
      %1993 = vmatprep.subr.mxu0 0.0
      %1994 = vmatpush1.msra.mxu0 0.0
      %1995 = vmatprep.subr.mxu0 0.0
      %1996 = vmatpush1.msra.mxu0 0.0
      %1997 = vmatprep.subr.mxu0 0.0
      %1998 = vmatpush1.msra.mxu0 0.0
      %1999 = vmatprep.subr.mxu0 0.0
      %2000 = vmatpush1.msra.mxu0 0.0
      %2001 = vmatprep.subr.mxu0 0.0
      %2002 = vmatpush1.msra.mxu0 0.0
      %2003 = vmatprep.subr.mxu0 0.0
      %2004 = vmatpush1.msra.mxu0 0.0
      %2005 = vmatprep.subr.mxu0 0.0
      %2006 = vmatpush1.msra.mxu0 0.0
      %2007 = vmatprep.subr.mxu0 0.0
      %2008 = vmatpush1.msra.mxu0 0.0
      %2009 = vmatprep.mubr.f32.mxu0 0.0
      %2010 = vmatmul.mubr.f32.gmra.mrb[0].mxu0 %v1943
      %v2011 = vpop.f32.mrb[0].mxu0
      %v2012 = vadd.f32 0.0, %v2011
      %v2013 = vpop.f32.mrb[0].mxu0
      %v2014 = vadd.f32 0.0, %v2013
      %2015 = vdwg.mxu0
      %v2018 = vrot.slane %v2012, 4
      %v2019 = vrot.slane %v2014, 4
      %v2021 = vsel %vm1038, %v2019, 0
      %2023 = vmatprep.subr.mxu0 %v607
      %2024 = vmatpush1.msra.mxu0 %v606
      %2025 = vmatprep.subr.mxu0 %v609
      %2026 = vmatpush1.msra.mxu0 %v608
      %2027 = vmatprep.subr.mxu0 %v611
      %2028 = vmatpush1.msra.mxu0 %v610
      %2029 = vmatprep.subr.mxu0 %v613
      %2030 = vmatpush1.msra.mxu0 %v612
      %2031 = vmatprep.subr.mxu0 %v615
      %2032 = vmatpush1.msra.mxu0 %v614
      %2033 = vmatprep.subr.mxu0 %v617
      %2034 = vmatpush1.msra.mxu0 %v616
      %2035 = vmatprep.subr.mxu0 %v619
      %2036 = vmatpush1.msra.mxu0 %v618
      %2037 = vmatprep.subr.mxu0 %v621
      %2038 = vmatpush1.msra.mxu0 %v620
      %2039 = vmatprep.subr.mxu0 %v623
      %2040 = vmatpush1.msra.mxu0 %v622
      %2041 = vmatprep.subr.mxu0 %v625
      %2042 = vmatpush1.msra.mxu0 %v624
      %2043 = vmatprep.subr.mxu0 %v627
      %2044 = vmatpush1.msra.mxu0 %v626
      %2045 = vmatprep.subr.mxu0 %v629
      %2046 = vmatpush1.msra.mxu0 %v628
      %2047 = vmatprep.subr.mxu0 %v631
      %2048 = vmatpush1.msra.mxu0 %v630
      %2049 = vmatprep.subr.mxu0 %v633
      %2050 = vmatpush1.msra.mxu0 %v632
      %2051 = vmatprep.subr.mxu0 %v635
      %2052 = vmatpush1.msra.mxu0 %v634
      %2053 = vmatprep.subr.mxu0 %v637
      %2054 = vmatpush1.msra.mxu0 %v636
      %2055 = vmatprep.subr.mxu0 %v639
      %2056 = vmatpush1.msra.mxu0 %v638
      %2057 = vmatprep.subr.mxu0 %v641
      %2058 = vmatpush1.msra.mxu0 %v640
      %2059 = vmatprep.subr.mxu0 0.0
      %2060 = vmatpush1.msra.mxu0 0.0
      %2061 = vmatprep.subr.mxu0 0.0
      %2062 = vmatpush1.msra.mxu0 0.0
      %2063 = vmatprep.subr.mxu0 0.0
      %2064 = vmatpush1.msra.mxu0 0.0
      %2065 = vmatprep.subr.mxu0 0.0
      %2066 = vmatpush1.msra.mxu0 0.0
      %2067 = vmatprep.subr.mxu0 0.0
      %2068 = vmatpush1.msra.mxu0 0.0
      %2069 = vmatprep.subr.mxu0 0.0
      %2070 = vmatpush1.msra.mxu0 0.0
      %2071 = vmatprep.subr.mxu0 0.0
      %2072 = vmatpush1.msra.mxu0 0.0
      %2073 = vmatprep.subr.mxu0 0.0
      %2074 = vmatpush1.msra.mxu0 0.0
      %2075 = vmatprep.subr.mxu0 0.0
      %2076 = vmatpush1.msra.mxu0 0.0
      %2077 = vmatprep.subr.mxu0 0.0
      %2078 = vmatpush1.msra.mxu0 0.0
      %2079 = vmatprep.subr.mxu0 0.0
      %2080 = vmatpush1.msra.mxu0 0.0
      %2081 = vmatprep.subr.mxu0 0.0
      %2082 = vmatpush1.msra.mxu0 0.0
      %2083 = vmatprep.subr.mxu0 0.0
      %2084 = vmatpush1.msra.mxu0 0.0
      %2085 = vmatprep.subr.mxu0 0.0
      %2086 = vmatpush1.msra.mxu0 0.0
      %2087 = vmatprep.mubr.f32.mxu0 %v2021
      %2088 = vmatmul.mubr.f32.gmra.mrb[0].mxu0 %v2018
      %v2089 = vpop.f32.mrb[0].mxu0
      %v2090 = vadd.f32 0.0, %v2089
      %v2091 = vpop.f32.mrb[0].mxu0
      %v2092 = vadd.f32 0.0, %v2091
      %2093 = vdwg.mxu0
      %v2094 = vsel %vm1038, %v2014, 0
      %2096 = vmatprep.subr.mxu0 %v571
      %2097 = vmatpush1.msra.mxu0 %v570
      %2098 = vmatprep.subr.mxu0 %v573
      %2099 = vmatpush1.msra.mxu0 %v572
      %2100 = vmatprep.subr.mxu0 %v575
      %2101 = vmatpush1.msra.mxu0 %v574
      %2102 = vmatprep.subr.mxu0 %v577
      %2103 = vmatpush1.msra.mxu0 %v576
      %2104 = vmatprep.subr.mxu0 %v579
      %2105 = vmatpush1.msra.mxu0 %v578
      %2106 = vmatprep.subr.mxu0 %v581
      %2107 = vmatpush1.msra.mxu0 %v580
      %2108 = vmatprep.subr.mxu0 %v583
      %2109 = vmatpush1.msra.mxu0 %v582
      %2110 = vmatprep.subr.mxu0 %v585
      %2111 = vmatpush1.msra.mxu0 %v584
      %2112 = vmatprep.subr.mxu0 %v587
      %2113 = vmatpush1.msra.mxu0 %v586
      %2114 = vmatprep.subr.mxu0 %v589
      %2115 = vmatpush1.msra.mxu0 %v588
      %2116 = vmatprep.subr.mxu0 %v591
      %2117 = vmatpush1.msra.mxu0 %v590
      %2118 = vmatprep.subr.mxu0 %v593
      %2119 = vmatpush1.msra.mxu0 %v592
      %2120 = vmatprep.subr.mxu0 %v595
      %2121 = vmatpush1.msra.mxu0 %v594
      %2122 = vmatprep.subr.mxu0 %v597
      %2123 = vmatpush1.msra.mxu0 %v596
      %2124 = vmatprep.subr.mxu0 %v599
      %2125 = vmatpush1.msra.mxu0 %v598
      %2126 = vmatprep.subr.mxu0 %v601
      %2127 = vmatpush1.msra.mxu0 %v600
      %2128 = vmatprep.subr.mxu0 %v603
      %2129 = vmatpush1.msra.mxu0 %v602
      %2130 = vmatprep.subr.mxu0 %v605
      %2131 = vmatpush1.msra.mxu0 %v604
      %2132 = vmatprep.subr.mxu0 0.0
      %2133 = vmatpush1.msra.mxu0 0.0
      %2134 = vmatprep.subr.mxu0 0.0
      %2135 = vmatpush1.msra.mxu0 0.0
      %2136 = vmatprep.subr.mxu0 0.0
      %2137 = vmatpush1.msra.mxu0 0.0
      %2138 = vmatprep.subr.mxu0 0.0
      %2139 = vmatpush1.msra.mxu0 0.0
      %2140 = vmatprep.subr.mxu0 0.0
      %2141 = vmatpush1.msra.mxu0 0.0
      %2142 = vmatprep.subr.mxu0 0.0
      %2143 = vmatpush1.msra.mxu0 0.0
      %2144 = vmatprep.subr.mxu0 0.0
      %2145 = vmatpush1.msra.mxu0 0.0
      %2146 = vmatprep.subr.mxu0 0.0
      %2147 = vmatpush1.msra.mxu0 0.0
      %2148 = vmatprep.subr.mxu0 0.0
      %2149 = vmatpush1.msra.mxu0 0.0
      %2150 = vmatprep.subr.mxu0 0.0
      %2151 = vmatpush1.msra.mxu0 0.0
      %2152 = vmatprep.subr.mxu0 0.0
      %2153 = vmatpush1.msra.mxu0 0.0
      %2154 = vmatprep.subr.mxu0 0.0
      %2155 = vmatpush1.msra.mxu0 0.0
      %2156 = vmatprep.subr.mxu0 0.0
      %2157 = vmatpush1.msra.mxu0 0.0
      %2158 = vmatprep.subr.mxu0 0.0
      %2159 = vmatpush1.msra.mxu0 0.0
      %2160 = vmatprep.mubr.f32.mxu0 %v2094
      %2161 = vmatmul.mubr.f32.gmra.mrb[0].mxu0 %v2012
      %v2162 = vpop.f32.mrb[0].mxu0
      %v2163 = vadd.f32 %v2090, %v2162
      %v2164 = vpop.f32.mrb[0].mxu0
      %v2165 = vadd.f32 %v2092, %v2164
      %2166 = vdwg.mxu0
      %s2167 = scalar_lea.vmem %s6, 4
      %v2168 = vld [vmem:[%s2167] sm:$0xf]
      %2169 = vrot.lane.b32.xlu0 %v1630, 17
      %v2170 = vpop.permute.xlu0 %2169
      %2171 = vrot.lane.b32.xlu0 %v1631, 17
      %v2172 = vpop.permute.xlu0 %2171
      %v2173 = vsel %vm1192, %v2170, %v2172
      %v2174 = vsel %vm1192, %v2172, %v2170
      %v2175 = vmul.f32 %v2174, %v1198
      %v2176 = vmul.f32 %v2173, %v1202
      %2177 = vrot.lane.b32.xlu0 %v1630, 16
      %v2178 = vpop.permute.xlu0 %2177
      %2179 = vrot.lane.b32.xlu0 %v1631, 16
      %v2180 = vpop.permute.xlu0 %2179
      %v2181 = vsel %vm1209, %v2178, %v2180
      %v2182 = vsel %vm1209, %v2180, %v2178
      %v2183 = vmul.f32 %v2182, %v1215
      %v2184 = vmul.f32 %v2181, %v1219
      %2185 = vrot.lane.b32.xlu0 %v1630, 15
      %v2186 = vpop.permute.xlu0 %2185
      %2187 = vrot.lane.b32.xlu0 %v1631, 15
      %v2188 = vpop.permute.xlu0 %2187
      %v2189 = vsel %vm1226, %v2186, %v2188
      %v2190 = vsel %vm1226, %v2188, %v2186
      %v2191 = vmul.f32 %v2190, %v1232
      %v2192 = vmul.f32 %v2189, %v1236
      %2193 = vrot.lane.b32.xlu0 %v1630, 1
      %v2194 = vpop.permute.xlu0 %2193
      %2195 = vrot.lane.b32.xlu0 %v1631, 1
      %v2196 = vpop.permute.xlu0 %2195
      %v2197 = vsel %vm1243, %v2194, %v2196
      %v2198 = vsel %vm1243, %v2196, %v2194
      %v2199 = vmul.f32 %v2198, %v1249
      %v2200 = vmul.f32 %v2197, %v1253
      %2201 = vrot.lane.b32.xlu0 %v1630, 127
      %v2202 = vpop.permute.xlu0 %2201
      %2203 = vrot.lane.b32.xlu0 %v1631, 127
      %v2204 = vpop.permute.xlu0 %2203
      %v2205 = vsel %vm1260, %v2202, %v2204
      %v2206 = vsel %vm1260, %v2204, %v2202
      %v2207 = vmul.f32 %v2205, %v1266
      %v2208 = vmul.f32 %v2206, %v1270
      %2209 = vrot.lane.b32.xlu0 %v1630, 113
      %v2210 = vpop.permute.xlu0 %2209
      %2211 = vrot.lane.b32.xlu0 %v1631, 113
      %v2212 = vpop.permute.xlu0 %2211
      %v2213 = vsel %vm1277, %v2210, %v2212
      %v2214 = vsel %vm1277, %v2212, %v2210
      %v2215 = vmul.f32 %v2213, %v1283
      %v2216 = vmul.f32 %v2214, %v1287
      %2217 = vrot.lane.b32.xlu0 %v1630, 112
      %v2218 = vpop.permute.xlu0 %2217
      %2219 = vrot.lane.b32.xlu0 %v1631, 112
      %v2220 = vpop.permute.xlu0 %2219
      %v2221 = vsel %vm1294, %v2218, %v2220
      %v2222 = vsel %vm1294, %v2220, %v2218
      %v2223 = vmul.f32 %v2221, %v1300
      %v2224 = vmul.f32 %v2222, %v1304
      %2225 = vrot.lane.b32.xlu0 %v1630, 111
      %v2226 = vpop.permute.xlu0 %2225
      %2227 = vrot.lane.b32.xlu0 %v1631, 111
      %v2228 = vpop.permute.xlu0 %2227
      %v2229 = vsel %vm1311, %v2226, %v2228
      %v2230 = vsel %vm1311, %v2228, %v2226
      %v2231 = vmul.f32 %v2229, %v1317
      %v2232 = vmul.f32 %v2230, %v1321
      %v2235 = vrot.slane %v2183, 4
      %v2236 = vrot.slane %v2184, 4
      %v2241 = vrot.slane %v2199, 4
      %v2242 = vrot.slane %v2200, 4
      %v2247 = vrot.slane %v2207, 4
      %v2248 = vrot.slane %v2208, 4
      %v2253 = vrot.slane %v2223, 4
      %v2254 = vrot.slane %v2224, 4
      %v2257 = vsel %vm797, %v2175, %v2235
      %v2258 = vsel %vm797, %v2176, %v2236
      %v2259 = vsel %vm797, %v2191, %v2241
      %v2260 = vsel %vm797, %v2192, %v2242
      %v2261 = vsel %vm797, %v1630, %v2247
      %v2262 = vsel %vm797, %v1631, %v2248
      %v2263 = vsel %vm797, %v2215, %v2253
      %v2264 = vsel %vm797, %v2216, %v2254
      %s2265 = scalar_lea.vmem %s7, 4
      %v2266 = vld [vmem:[%s2265] sm:$0xf]
      %2268 = vset.pattern.permute.xlu0 0
      %2269 = vperm.xlu0 %2268, %v2266
      %v2270 = vpop.permute.xlu0 %2269
      %v2273 = vsel %vm1362, %v2168, 0
      %v2276 = vsel %vm797, %v2231, 0
      %v2279 = vsel %vm797, %v2232, 0
      %2281 = vmatprep.subr.mxu0 %v2258
      %2282 = vmatpush1.msra.mxu0 %v2257
      %2283 = vmatprep.subr.mxu0 %v2260
      %2284 = vmatpush1.msra.mxu0 %v2259
      %2285 = vmatprep.subr.mxu0 %v2262
      %2286 = vmatpush1.msra.mxu0 %v2261
      %2287 = vmatprep.subr.mxu0 %v2264
      %2288 = vmatpush1.msra.mxu0 %v2263
      %2289 = vmatprep.subr.mxu0 %v2279
      %2290 = vmatpush1.msra.mxu0 %v2276
      %2291 = vmatprep.subr.mxu0 0.0
      %2292 = vmatpush1.msra.mxu0 0.0
      %2293 = vmatprep.subr.mxu0 0.0
      %2294 = vmatpush1.msra.mxu0 0.0
      %2295 = vmatprep.subr.mxu0 0.0
      %2296 = vmatpush1.msra.mxu0 0.0
      %2297 = vmatprep.subr.mxu0 0.0
      %2298 = vmatpush1.msra.mxu0 0.0
      %2299 = vmatprep.subr.mxu0 0.0
      %2300 = vmatpush1.msra.mxu0 0.0
      %2301 = vmatprep.subr.mxu0 0.0
      %2302 = vmatpush1.msra.mxu0 0.0
      %2303 = vmatprep.subr.mxu0 0.0
      %2304 = vmatpush1.msra.mxu0 0.0
      %2305 = vmatprep.subr.mxu0 0.0
      %2306 = vmatpush1.msra.mxu0 0.0
      %2307 = vmatprep.subr.mxu0 0.0
      %2308 = vmatpush1.msra.mxu0 0.0
      %2309 = vmatprep.subr.mxu0 0.0
      %2310 = vmatpush1.msra.mxu0 0.0
      %2311 = vmatprep.subr.mxu0 0.0
      %2312 = vmatpush1.msra.mxu0 0.0
      %2313 = vmatprep.subr.mxu0 0.0
      %2314 = vmatpush1.msra.mxu0 0.0
      %2315 = vmatprep.subr.mxu0 0.0
      %2316 = vmatpush1.msra.mxu0 0.0
      %2317 = vmatprep.subr.mxu0 0.0
      %2318 = vmatpush1.msra.mxu0 0.0
      %2319 = vmatprep.subr.mxu0 0.0
      %2320 = vmatpush1.msra.mxu0 0.0
      %2321 = vmatprep.subr.mxu0 0.0
      %2322 = vmatpush1.msra.mxu0 0.0
      %2323 = vmatprep.subr.mxu0 0.0
      %2324 = vmatpush1.msra.mxu0 0.0
      %2325 = vmatprep.subr.mxu0 0.0
      %2326 = vmatpush1.msra.mxu0 0.0
      %2327 = vmatprep.subr.mxu0 0.0
      %2328 = vmatpush1.msra.mxu0 0.0
      %2329 = vmatprep.subr.mxu0 0.0
      %2330 = vmatpush1.msra.mxu0 0.0
      %2331 = vmatprep.subr.mxu0 0.0
      %2332 = vmatpush1.msra.mxu0 0.0
      %2333 = vmatprep.subr.mxu0 0.0
      %2334 = vmatpush1.msra.mxu0 0.0
      %2335 = vmatprep.subr.mxu0 0.0
      %2336 = vmatpush1.msra.mxu0 0.0
      %2337 = vmatprep.subr.mxu0 0.0
      %2338 = vmatpush1.msra.mxu0 0.0
      %2339 = vmatprep.subr.mxu0 0.0
      %2340 = vmatpush1.msra.mxu0 0.0
      %2341 = vmatprep.subr.mxu0 0.0
      %2342 = vmatpush1.msra.mxu0 0.0
      %2343 = vmatprep.subr.mxu0 0.0
      %2344 = vmatpush1.msra.mxu0 0.0
      %2345 = vmatprep.mubr.f32.mxu0 0.0
      %2346 = vmatmul.mubr.f32.gmra.mrb[0].mxu0 %v2273
      %v2347 = vpop.f32.mrb[0].mxu0
      %v2348 = vadd.f32 %v2270, %v2347
      %v2349 = vpop.f32.mrb[0].mxu0
      %v2350 = vadd.f32 %v2270, %v2349
      %2351 = vdwg.mxu0
      %v2352 = vmax.f32 %v2348, 0.0
      %v2353 = vmax.f32 %v2350, 0.0
      %s2354 = scalar_lea.vmem %s8, 4
      %v2355 = vld [vmem:[%s2354] sm:$0xf]
      %2356 = vrot.lane.b32.xlu0 %v2352, 17
      %v2357 = vpop.permute.xlu0 %2356
      %2358 = vrot.lane.b32.xlu0 %v2353, 17
      %v2359 = vpop.permute.xlu0 %2358
      %v2360 = vsel %vm1192, %v2357, %v2359
      %v2361 = vsel %vm1192, %v2359, %v2357
      %v2362 = vmul.f32 %v2361, %v1198
      %v2363 = vmul.f32 %v2360, %v1202
      %2364 = vrot.lane.b32.xlu0 %v2352, 16
      %v2365 = vpop.permute.xlu0 %2364
      %2366 = vrot.lane.b32.xlu0 %v2353, 16
      %v2367 = vpop.permute.xlu0 %2366
      %v2368 = vsel %vm1209, %v2365, %v2367
      %v2369 = vsel %vm1209, %v2367, %v2365
      %v2370 = vmul.f32 %v2369, %v1215
      %v2371 = vmul.f32 %v2368, %v1219
      %2372 = vrot.lane.b32.xlu0 %v2352, 15
      %v2373 = vpop.permute.xlu0 %2372
      %2374 = vrot.lane.b32.xlu0 %v2353, 15
      %v2375 = vpop.permute.xlu0 %2374
      %v2376 = vsel %vm1226, %v2373, %v2375
      %v2377 = vsel %vm1226, %v2375, %v2373
      %v2378 = vmul.f32 %v2377, %v1232
      %v2379 = vmul.f32 %v2376, %v1236
      %2380 = vrot.lane.b32.xlu0 %v2352, 1
      %v2381 = vpop.permute.xlu0 %2380
      %2382 = vrot.lane.b32.xlu0 %v2353, 1
      %v2383 = vpop.permute.xlu0 %2382
      %v2384 = vsel %vm1243, %v2381, %v2383
      %v2385 = vsel %vm1243, %v2383, %v2381
      %v2386 = vmul.f32 %v2385, %v1249
      %v2387 = vmul.f32 %v2384, %v1253
      %2388 = vrot.lane.b32.xlu0 %v2352, 127
      %v2389 = vpop.permute.xlu0 %2388
      %2390 = vrot.lane.b32.xlu0 %v2353, 127
      %v2391 = vpop.permute.xlu0 %2390
      %v2392 = vsel %vm1260, %v2389, %v2391
      %v2393 = vsel %vm1260, %v2391, %v2389
      %v2394 = vmul.f32 %v2392, %v1266
      %v2395 = vmul.f32 %v2393, %v1270
      %2396 = vrot.lane.b32.xlu0 %v2352, 113
      %v2397 = vpop.permute.xlu0 %2396
      %2398 = vrot.lane.b32.xlu0 %v2353, 113
      %v2399 = vpop.permute.xlu0 %2398
      %v2400 = vsel %vm1277, %v2397, %v2399
      %v2401 = vsel %vm1277, %v2399, %v2397
      %v2402 = vmul.f32 %v2400, %v1283
      %v2403 = vmul.f32 %v2401, %v1287
      %2404 = vrot.lane.b32.xlu0 %v2352, 112
      %v2405 = vpop.permute.xlu0 %2404
      %2406 = vrot.lane.b32.xlu0 %v2353, 112
      %v2407 = vpop.permute.xlu0 %2406
      %v2408 = vsel %vm1294, %v2405, %v2407
      %v2409 = vsel %vm1294, %v2407, %v2405
      %v2410 = vmul.f32 %v2408, %v1300
      %v2411 = vmul.f32 %v2409, %v1304
      %2412 = vrot.lane.b32.xlu0 %v2352, 111
      %v2413 = vpop.permute.xlu0 %2412
      %2414 = vrot.lane.b32.xlu0 %v2353, 111
      %v2415 = vpop.permute.xlu0 %2414
      %v2416 = vsel %vm1311, %v2413, %v2415
      %v2417 = vsel %vm1311, %v2415, %v2413
      %v2418 = vmul.f32 %v2416, %v1317
      %v2419 = vmul.f32 %v2417, %v1321
      %v2422 = vrot.slane %v2370, 4
      %v2423 = vrot.slane %v2371, 4
      %v2428 = vrot.slane %v2386, 4
      %v2429 = vrot.slane %v2387, 4
      %v2434 = vrot.slane %v2394, 4
      %v2435 = vrot.slane %v2395, 4
      %v2440 = vrot.slane %v2410, 4
      %v2441 = vrot.slane %v2411, 4
      %v2444 = vsel %vm797, %v2362, %v2422
      %v2445 = vsel %vm797, %v2363, %v2423
      %v2446 = vsel %vm797, %v2378, %v2428
      %v2447 = vsel %vm797, %v2379, %v2429
      %v2448 = vsel %vm797, %v2352, %v2434
      %v2449 = vsel %vm797, %v2353, %v2435
      %v2450 = vsel %vm797, %v2402, %v2440
      %v2451 = vsel %vm797, %v2403, %v2441
      %s2452 = scalar_lea.vmem %s9, 4
      %v2453 = vld [vmem:[%s2452] sm:$0xf]
      %2455 = vset.pattern.permute.xlu0 0
      %2456 = vperm.xlu0 %2455, %v2453
      %v2457 = vpop.permute.xlu0 %2456
      %v2460 = vsel %vm1362, %v2355, 0
      %v2463 = vsel %vm797, %v2418, 0
      %v2466 = vsel %vm797, %v2419, 0
      %2468 = vmatprep.subr.mxu0 %v2445
      %2469 = vmatpush1.msra.mxu0 %v2444
      %2470 = vmatprep.subr.mxu0 %v2447
      %2471 = vmatpush1.msra.mxu0 %v2446
      %2472 = vmatprep.subr.mxu0 %v2449
      %2473 = vmatpush1.msra.mxu0 %v2448
      %2474 = vmatprep.subr.mxu0 %v2451
      %2475 = vmatpush1.msra.mxu0 %v2450
      %2476 = vmatprep.subr.mxu0 %v2466
      %2477 = vmatpush1.msra.mxu0 %v2463
      %2478 = vmatprep.subr.mxu0 0.0
      %2479 = vmatpush1.msra.mxu0 0.0
      %2480 = vmatprep.subr.mxu0 0.0
      %2481 = vmatpush1.msra.mxu0 0.0
      %2482 = vmatprep.subr.mxu0 0.0
      %2483 = vmatpush1.msra.mxu0 0.0
      %2484 = vmatprep.subr.mxu0 0.0
      %2485 = vmatpush1.msra.mxu0 0.0
      %2486 = vmatprep.subr.mxu0 0.0
      %2487 = vmatpush1.msra.mxu0 0.0
      %2488 = vmatprep.subr.mxu0 0.0
      %2489 = vmatpush1.msra.mxu0 0.0
      %2490 = vmatprep.subr.mxu0 0.0
      %2491 = vmatpush1.msra.mxu0 0.0
      %2492 = vmatprep.subr.mxu0 0.0
      %2493 = vmatpush1.msra.mxu0 0.0
      %2494 = vmatprep.subr.mxu0 0.0
      %2495 = vmatpush1.msra.mxu0 0.0
      %2496 = vmatprep.subr.mxu0 0.0
      %2497 = vmatpush1.msra.mxu0 0.0
      %2498 = vmatprep.subr.mxu0 0.0
      %2499 = vmatpush1.msra.mxu0 0.0
      %2500 = vmatprep.subr.mxu0 0.0
      %2501 = vmatpush1.msra.mxu0 0.0
      %2502 = vmatprep.subr.mxu0 0.0
      %2503 = vmatpush1.msra.mxu0 0.0
      %2504 = vmatprep.subr.mxu0 0.0
      %2505 = vmatpush1.msra.mxu0 0.0
      %2506 = vmatprep.subr.mxu0 0.0
      %2507 = vmatpush1.msra.mxu0 0.0
      %2508 = vmatprep.subr.mxu0 0.0
      %2509 = vmatpush1.msra.mxu0 0.0
      %2510 = vmatprep.subr.mxu0 0.0
      %2511 = vmatpush1.msra.mxu0 0.0
      %2512 = vmatprep.subr.mxu0 0.0
      %2513 = vmatpush1.msra.mxu0 0.0
      %2514 = vmatprep.subr.mxu0 0.0
      %2515 = vmatpush1.msra.mxu0 0.0
      %2516 = vmatprep.subr.mxu0 0.0
      %2517 = vmatpush1.msra.mxu0 0.0
      %2518 = vmatprep.subr.mxu0 0.0
      %2519 = vmatpush1.msra.mxu0 0.0
      %2520 = vmatprep.subr.mxu0 0.0
      %2521 = vmatpush1.msra.mxu0 0.0
      %2522 = vmatprep.subr.mxu0 0.0
      %2523 = vmatpush1.msra.mxu0 0.0
      %2524 = vmatprep.subr.mxu0 0.0
      %2525 = vmatpush1.msra.mxu0 0.0
      %2526 = vmatprep.subr.mxu0 0.0
      %2527 = vmatpush1.msra.mxu0 0.0
      %2528 = vmatprep.subr.mxu0 0.0
      %2529 = vmatpush1.msra.mxu0 0.0
      %2530 = vmatprep.subr.mxu0 0.0
      %2531 = vmatpush1.msra.mxu0 0.0
      %2532 = vmatprep.mubr.f32.mxu0 0.0
      %2533 = vmatmul.mubr.f32.gmra.mrb[0].mxu0 %v2460
      %v2534 = vpop.f32.mrb[0].mxu0
      %v2535 = vadd.f32 %v2457, %v2534
      %v2536 = vpop.f32.mrb[0].mxu0
      %v2537 = vadd.f32 %v2457, %v2536
      %2538 = vdwg.mxu0
      %v2539 = vadd.f32 %v2535, %v2163
      %v2540 = vadd.f32 %v2537, %v2165
      %v2541 = vadd.f32 %v2539, %v1630
      %v2542 = vadd.f32 %v2540, %v1631
      %2543 = vmatprep.subr.mxu0 %v443
      %2544 = vmatpush1.msra.mxu0 %v442
      %2545 = vmatprep.subr.mxu0 %v445
      %2546 = vmatpush1.msra.mxu0 %v444
      %2547 = vmatprep.subr.mxu0 %v447
      %2548 = vmatpush1.msra.mxu0 %v446
      %2549 = vmatprep.subr.mxu0 %v449
      %2550 = vmatpush1.msra.mxu0 %v448
      %2551 = vmatprep.subr.mxu0 %v451
      %2552 = vmatpush1.msra.mxu0 %v450
      %2553 = vmatprep.subr.mxu0 %v453
      %2554 = vmatpush1.msra.mxu0 %v452
      %2555 = vmatprep.subr.mxu0 %v455
      %2556 = vmatpush1.msra.mxu0 %v454
      %2557 = vmatprep.subr.mxu0 %v457
      %2558 = vmatpush1.msra.mxu0 %v456
      %2559 = vmatprep.subr.mxu0 %v459
      %2560 = vmatpush1.msra.mxu0 %v458
      %2561 = vmatprep.subr.mxu0 %v461
      %2562 = vmatpush1.msra.mxu0 %v460
      %2563 = vmatprep.subr.mxu0 %v463
      %2564 = vmatpush1.msra.mxu0 %v462
      %2565 = vmatprep.subr.mxu0 %v465
      %2566 = vmatpush1.msra.mxu0 %v464
      %2567 = vmatprep.subr.mxu0 %v467
      %2568 = vmatpush1.msra.mxu0 %v466
      %2569 = vmatprep.subr.mxu0 %v469
      %2570 = vmatpush1.msra.mxu0 %v468
      %2571 = vmatprep.subr.mxu0 %v471
      %2572 = vmatpush1.msra.mxu0 %v470
      %2573 = vmatprep.subr.mxu0 %v473
      %2574 = vmatpush1.msra.mxu0 %v472
      %2575 = vmatprep.subr.mxu0 %v475
      %2576 = vmatpush1.msra.mxu0 %v474
      %2577 = vmatprep.subr.mxu0 %v477
      %2578 = vmatpush1.msra.mxu0 %v476
      %2579 = vmatprep.subr.mxu0 %v479
      %2580 = vmatpush1.msra.mxu0 %v478
      %2581 = vmatprep.subr.mxu0 %v481
      %2582 = vmatpush1.msra.mxu0 %v480
      %2583 = vmatprep.subr.mxu0 %v483
      %2584 = vmatpush1.msra.mxu0 %v482
      %2585 = vmatprep.subr.mxu0 %v485
      %2586 = vmatpush1.msra.mxu0 %v484
      %2587 = vmatprep.subr.mxu0 %v487
      %2588 = vmatpush1.msra.mxu0 %v486
      %2589 = vmatprep.subr.mxu0 %v489
      %2590 = vmatpush1.msra.mxu0 %v488
      %2591 = vmatprep.subr.mxu0 %v491
      %2592 = vmatpush1.msra.mxu0 %v490
      %2593 = vmatprep.subr.mxu0 %v493
      %2594 = vmatpush1.msra.mxu0 %v492
      %2595 = vmatprep.subr.mxu0 %v495
      %2596 = vmatpush1.msra.mxu0 %v494
      %2597 = vmatprep.subr.mxu0 %v497
      %2598 = vmatpush1.msra.mxu0 %v496
      %2599 = vmatprep.subr.mxu0 %v499
      %2600 = vmatpush1.msra.mxu0 %v498
      %2601 = vmatprep.subr.mxu0 %v501
      %2602 = vmatpush1.msra.mxu0 %v500
      %2603 = vmatprep.subr.mxu0 %v503
      %2604 = vmatpush1.msra.mxu0 %v502
      %2605 = vmatprep.subr.mxu0 %v505
      %2606 = vmatpush1.msra.mxu0 %v504
      %2607 = vmatprep.mubr.f32.mxu0 %v2542
      %2608 = vmatmul.mubr.f32.gmra.mrb[0].mxu0 %v2541
      %v2609 = vpop.f32.mrb[0].mxu0
      %v2610 = vadd.f32 0.0, %v2609
      %v2611 = vpop.f32.mrb[0].mxu0
      %v2612 = vadd.f32 0.0, %v2611
      %2613 = vdwg.mxu0
      %2614 = vmatprep.subr.mxu0 %v507
      %2615 = vmatpush1.msra.mxu0 %v506
      %2616 = vmatprep.subr.mxu0 %v509
      %2617 = vmatpush1.msra.mxu0 %v508
      %2618 = vmatprep.subr.mxu0 %v511
      %2619 = vmatpush1.msra.mxu0 %v510
      %2620 = vmatprep.subr.mxu0 %v513
      %2621 = vmatpush1.msra.mxu0 %v512
      %2622 = vmatprep.subr.mxu0 %v515
      %2623 = vmatpush1.msra.mxu0 %v514
      %2624 = vmatprep.subr.mxu0 %v517
      %2625 = vmatpush1.msra.mxu0 %v516
      %2626 = vmatprep.subr.mxu0 %v519
      %2627 = vmatpush1.msra.mxu0 %v518
      %2628 = vmatprep.subr.mxu0 %v521
      %2629 = vmatpush1.msra.mxu0 %v520
      %2630 = vmatprep.subr.mxu0 %v523
      %2631 = vmatpush1.msra.mxu0 %v522
      %2632 = vmatprep.subr.mxu0 %v525
      %2633 = vmatpush1.msra.mxu0 %v524
      %2634 = vmatprep.subr.mxu0 %v527
      %2635 = vmatpush1.msra.mxu0 %v526
      %2636 = vmatprep.subr.mxu0 %v529
      %2637 = vmatpush1.msra.mxu0 %v528
      %2638 = vmatprep.subr.mxu0 %v531
      %2639 = vmatpush1.msra.mxu0 %v530
      %2640 = vmatprep.subr.mxu0 %v533
      %2641 = vmatpush1.msra.mxu0 %v532
      %2642 = vmatprep.subr.mxu0 %v535
      %2643 = vmatpush1.msra.mxu0 %v534
      %2644 = vmatprep.subr.mxu0 %v537
      %2645 = vmatpush1.msra.mxu0 %v536
      %2646 = vmatprep.subr.mxu0 %v539
      %2647 = vmatpush1.msra.mxu0 %v538
      %2648 = vmatprep.subr.mxu0 %v541
      %2649 = vmatpush1.msra.mxu0 %v540
      %2650 = vmatprep.subr.mxu0 %v543
      %2651 = vmatpush1.msra.mxu0 %v542
      %2652 = vmatprep.subr.mxu0 %v545
      %2653 = vmatpush1.msra.mxu0 %v544
      %2654 = vmatprep.subr.mxu0 %v547
      %2655 = vmatpush1.msra.mxu0 %v546
      %2656 = vmatprep.subr.mxu0 %v549
      %2657 = vmatpush1.msra.mxu0 %v548
      %2658 = vmatprep.subr.mxu0 %v551
      %2659 = vmatpush1.msra.mxu0 %v550
      %2660 = vmatprep.subr.mxu0 %v553
      %2661 = vmatpush1.msra.mxu0 %v552
      %2662 = vmatprep.subr.mxu0 %v555
      %2663 = vmatpush1.msra.mxu0 %v554
      %2664 = vmatprep.subr.mxu0 %v557
      %2665 = vmatpush1.msra.mxu0 %v556
      %2666 = vmatprep.subr.mxu0 %v559
      %2667 = vmatpush1.msra.mxu0 %v558
      %2668 = vmatprep.subr.mxu0 %v561
      %2669 = vmatpush1.msra.mxu0 %v560
      %2670 = vmatprep.subr.mxu0 %v563
      %2671 = vmatpush1.msra.mxu0 %v562
      %2672 = vmatprep.subr.mxu0 %v565
      %2673 = vmatpush1.msra.mxu0 %v564
      %2674 = vmatprep.subr.mxu0 %v567
      %2675 = vmatpush1.msra.mxu0 %v566
      %2676 = vmatprep.subr.mxu0 %v569
      %2677 = vmatpush1.msra.mxu0 %v568
      %2678 = vmatprep.mubr.f32.mxu0 %v2542
      %2679 = vmatmul.mubr.f32.gmra.mrb[0].mxu0 %v2541
      %v2680 = vpop.f32.mrb[0].mxu0
      %v2681 = vadd.f32 0.0, %v2680
      %v2682 = vpop.f32.mrb[0].mxu0
      %v2683 = vadd.f32 0.0, %v2682
      %2684 = vdwg.mxu0
      %s2685 = scalar_lea.vmem %s10, 16
      %v2686 = vld [vmem:[%s2685] sm:$0xff]
      %s2687 = scalar_lea.vmem %s11, 16
      %v2688 = vld [vmem:[%s2687] sm:$0xff]
      %v2690 = vsel %vm793, %v2688, 0
      %v2693 = vsel %vm797, %v2610, 0
      %v2696 = vsel %vm797, %v2612, 0
      %2698 = vmatprep.subr.mxu0 %v2696
      %2699 = vmatpush1.msra.mxu0 %v2693
      %2700 = vmatprep.subr.mxu0 0.0
      %2701 = vmatpush1.msra.mxu0 0.0
      %2702 = vmatprep.subr.mxu0 0.0
      %2703 = vmatpush1.msra.mxu0 0.0
      %2704 = vmatprep.subr.mxu0 0.0
      %2705 = vmatpush1.msra.mxu0 0.0
      %2706 = vmatprep.subr.mxu0 0.0
      %2707 = vmatpush1.msra.mxu0 0.0
      %2708 = vmatprep.subr.mxu0 0.0
      %2709 = vmatpush1.msra.mxu0 0.0
      %2710 = vmatprep.subr.mxu0 0.0
      %2711 = vmatpush1.msra.mxu0 0.0
      %2712 = vmatprep.subr.mxu0 0.0
      %2713 = vmatpush1.msra.mxu0 0.0
      %2714 = vmatprep.subr.mxu0 0.0
      %2715 = vmatpush1.msra.mxu0 0.0
      %2716 = vmatprep.subr.mxu0 0.0
      %2717 = vmatpush1.msra.mxu0 0.0
      %2718 = vmatprep.subr.mxu0 0.0
      %2719 = vmatpush1.msra.mxu0 0.0
      %2720 = vmatprep.subr.mxu0 0.0
      %2721 = vmatpush1.msra.mxu0 0.0
      %2722 = vmatprep.subr.mxu0 0.0
      %2723 = vmatpush1.msra.mxu0 0.0
      %2724 = vmatprep.subr.mxu0 0.0
      %2725 = vmatpush1.msra.mxu0 0.0
      %2726 = vmatprep.subr.mxu0 0.0
      %2727 = vmatpush1.msra.mxu0 0.0
      %2728 = vmatprep.subr.mxu0 0.0
      %2729 = vmatpush1.msra.mxu0 0.0
      %2730 = vmatprep.subr.mxu0 0.0
      %2731 = vmatpush1.msra.mxu0 0.0
      %2732 = vmatprep.subr.mxu0 0.0
      %2733 = vmatpush1.msra.mxu0 0.0
      %2734 = vmatprep.subr.mxu0 0.0
      %2735 = vmatpush1.msra.mxu0 0.0
      %2736 = vmatprep.subr.mxu0 0.0
      %2737 = vmatpush1.msra.mxu0 0.0
      %2738 = vmatprep.subr.mxu0 0.0
      %2739 = vmatpush1.msra.mxu0 0.0
      %2740 = vmatprep.subr.mxu0 0.0
      %2741 = vmatpush1.msra.mxu0 0.0
      %2742 = vmatprep.subr.mxu0 0.0
      %2743 = vmatpush1.msra.mxu0 0.0
      %2744 = vmatprep.subr.mxu0 0.0
      %2745 = vmatpush1.msra.mxu0 0.0
      %2746 = vmatprep.subr.mxu0 0.0
      %2747 = vmatpush1.msra.mxu0 0.0
      %2748 = vmatprep.subr.mxu0 0.0
      %2749 = vmatpush1.msra.mxu0 0.0
      %2750 = vmatprep.subr.mxu0 0.0
      %2751 = vmatpush1.msra.mxu0 0.0
      %2752 = vmatprep.subr.mxu0 0.0
      %2753 = vmatpush1.msra.mxu0 0.0
      %2754 = vmatprep.subr.mxu0 0.0
      %2755 = vmatpush1.msra.mxu0 0.0
      %2756 = vmatprep.subr.mxu0 0.0
      %2757 = vmatpush1.msra.mxu0 0.0
      %2758 = vmatprep.subr.mxu0 0.0
      %2759 = vmatpush1.msra.mxu0 0.0
      %2760 = vmatprep.subr.mxu0 0.0
      %2761 = vmatpush1.msra.mxu0 0.0
      %2762 = vmatprep.mubr.f32.mxu0 0.0
      %2763 = vmatmul.mubr.f32.gmra.mrb[0].mxu0 %v2690
      %v2764 = vpop.f32.mrb[0].mxu0
      %v2765 = vadd.f32 0.0, %v2764
      %v2766 = vpop.f32.mrb[0].mxu0
      %v2767 = vadd.f32 0.0, %v2766
      %2768 = vdwg.mxu0
      %v2770 = vsel %vm793, %v2686, 0
      %v2773 = vsel %vm797, %v2681, 0
      %v2776 = vsel %vm797, %v2683, 0
      %2778 = vmatprep.subr.mxu0 %v2776
      %2779 = vmatpush1.msra.mxu0 %v2773
      %2780 = vmatprep.subr.mxu0 0.0
      %2781 = vmatpush1.msra.mxu0 0.0
      %2782 = vmatprep.subr.mxu0 0.0
      %2783 = vmatpush1.msra.mxu0 0.0
      %2784 = vmatprep.subr.mxu0 0.0
      %2785 = vmatpush1.msra.mxu0 0.0
      %2786 = vmatprep.subr.mxu0 0.0
      %2787 = vmatpush1.msra.mxu0 0.0
      %2788 = vmatprep.subr.mxu0 0.0
      %2789 = vmatpush1.msra.mxu0 0.0
      %2790 = vmatprep.subr.mxu0 0.0
      %2791 = vmatpush1.msra.mxu0 0.0
      %2792 = vmatprep.subr.mxu0 0.0
      %2793 = vmatpush1.msra.mxu0 0.0
      %2794 = vmatprep.subr.mxu0 0.0
      %2795 = vmatpush1.msra.mxu0 0.0
      %2796 = vmatprep.subr.mxu0 0.0
      %2797 = vmatpush1.msra.mxu0 0.0
      %2798 = vmatprep.subr.mxu0 0.0
      %2799 = vmatpush1.msra.mxu0 0.0
      %2800 = vmatprep.subr.mxu0 0.0
      %2801 = vmatpush1.msra.mxu0 0.0
      %2802 = vmatprep.subr.mxu0 0.0
      %2803 = vmatpush1.msra.mxu0 0.0
      %2804 = vmatprep.subr.mxu0 0.0
      %2805 = vmatpush1.msra.mxu0 0.0
      %2806 = vmatprep.subr.mxu0 0.0
      %2807 = vmatpush1.msra.mxu0 0.0
      %2808 = vmatprep.subr.mxu0 0.0
      %2809 = vmatpush1.msra.mxu0 0.0
      %2810 = vmatprep.subr.mxu0 0.0
      %2811 = vmatpush1.msra.mxu0 0.0
      %2812 = vmatprep.subr.mxu0 0.0
      %2813 = vmatpush1.msra.mxu0 0.0
      %2814 = vmatprep.subr.mxu0 0.0
      %2815 = vmatpush1.msra.mxu0 0.0
      %2816 = vmatprep.subr.mxu0 0.0
      %2817 = vmatpush1.msra.mxu0 0.0
      %2818 = vmatprep.subr.mxu0 0.0
      %2819 = vmatpush1.msra.mxu0 0.0
      %2820 = vmatprep.subr.mxu0 0.0
      %2821 = vmatpush1.msra.mxu0 0.0
      %2822 = vmatprep.subr.mxu0 0.0
      %2823 = vmatpush1.msra.mxu0 0.0
      %2824 = vmatprep.subr.mxu0 0.0
      %2825 = vmatpush1.msra.mxu0 0.0
      %2826 = vmatprep.subr.mxu0 0.0
      %2827 = vmatpush1.msra.mxu0 0.0
      %2828 = vmatprep.subr.mxu0 0.0
      %2829 = vmatpush1.msra.mxu0 0.0
      %2830 = vmatprep.subr.mxu0 0.0
      %2831 = vmatpush1.msra.mxu0 0.0
      %2832 = vmatprep.subr.mxu0 0.0
      %2833 = vmatpush1.msra.mxu0 0.0
      %2834 = vmatprep.subr.mxu0 0.0
      %2835 = vmatpush1.msra.mxu0 0.0
      %2836 = vmatprep.subr.mxu0 0.0
      %2837 = vmatpush1.msra.mxu0 0.0
      %2838 = vmatprep.subr.mxu0 0.0
      %2839 = vmatpush1.msra.mxu0 0.0
      %2840 = vmatprep.subr.mxu0 0.0
      %2841 = vmatpush1.msra.mxu0 0.0
      %2842 = vmatprep.mubr.f32.mxu0 0.0
      %2843 = vmatmul.mubr.f32.gmra.mrb[0].mxu0 %v2770
      %v2844 = vpop.f32.mrb[0].mxu0
      %v2845 = vadd.f32 %v2765, %v2844
      %v2846 = vpop.f32.mrb[0].mxu0
      %v2847 = vadd.f32 %v2767, %v2846
      %2848 = vdwg.mxu0
      %v2849 = vmax.f32 %v2845, 0.0
      %v2850 = vmax.f32 %v2847, 0.0
      %s2851 = scalar_lea.vmem %s12, 16
      %v2852 = vld [vmem:[%s2851] sm:$0xff]
      %v2854 = vsel %vm958, %v2852, 0
      %2856 = vmatprep.subr.mxu0 %v2850
      %2857 = vmatpush1.msra.mxu0 %v2849
      %2858 = vmatprep.subr.mxu0 0.0
      %2859 = vmatpush1.msra.mxu0 0.0
      %2860 = vmatprep.subr.mxu0 0.0
      %2861 = vmatpush1.msra.mxu0 0.0
      %2862 = vmatprep.subr.mxu0 0.0
      %2863 = vmatpush1.msra.mxu0 0.0
      %2864 = vmatprep.subr.mxu0 0.0
      %2865 = vmatpush1.msra.mxu0 0.0
      %2866 = vmatprep.subr.mxu0 0.0
      %2867 = vmatpush1.msra.mxu0 0.0
      %2868 = vmatprep.subr.mxu0 0.0
      %2869 = vmatpush1.msra.mxu0 0.0
      %2870 = vmatprep.subr.mxu0 0.0
      %2871 = vmatpush1.msra.mxu0 0.0
      %2872 = vmatprep.subr.mxu0 0.0
      %2873 = vmatpush1.msra.mxu0 0.0
      %2874 = vmatprep.subr.mxu0 0.0
      %2875 = vmatpush1.msra.mxu0 0.0
      %2876 = vmatprep.subr.mxu0 0.0
      %2877 = vmatpush1.msra.mxu0 0.0
      %2878 = vmatprep.subr.mxu0 0.0
      %2879 = vmatpush1.msra.mxu0 0.0
      %2880 = vmatprep.subr.mxu0 0.0
      %2881 = vmatpush1.msra.mxu0 0.0
      %2882 = vmatprep.subr.mxu0 0.0
      %2883 = vmatpush1.msra.mxu0 0.0
      %2884 = vmatprep.subr.mxu0 0.0
      %2885 = vmatpush1.msra.mxu0 0.0
      %2886 = vmatprep.subr.mxu0 0.0
      %2887 = vmatpush1.msra.mxu0 0.0
      %2888 = vmatprep.subr.mxu0 0.0
      %2889 = vmatpush1.msra.mxu0 0.0
      %2890 = vmatprep.subr.mxu0 0.0
      %2891 = vmatpush1.msra.mxu0 0.0
      %2892 = vmatprep.subr.mxu0 0.0
      %2893 = vmatpush1.msra.mxu0 0.0
      %2894 = vmatprep.subr.mxu0 0.0
      %2895 = vmatpush1.msra.mxu0 0.0
      %2896 = vmatprep.subr.mxu0 0.0
      %2897 = vmatpush1.msra.mxu0 0.0
      %2898 = vmatprep.subr.mxu0 0.0
      %2899 = vmatpush1.msra.mxu0 0.0
      %2900 = vmatprep.subr.mxu0 0.0
      %2901 = vmatpush1.msra.mxu0 0.0
      %2902 = vmatprep.subr.mxu0 0.0
      %2903 = vmatpush1.msra.mxu0 0.0
      %2904 = vmatprep.subr.mxu0 0.0
      %2905 = vmatpush1.msra.mxu0 0.0
      %2906 = vmatprep.subr.mxu0 0.0
      %2907 = vmatpush1.msra.mxu0 0.0
      %2908 = vmatprep.subr.mxu0 0.0
      %2909 = vmatpush1.msra.mxu0 0.0
      %2910 = vmatprep.subr.mxu0 0.0
      %2911 = vmatpush1.msra.mxu0 0.0
      %2912 = vmatprep.subr.mxu0 0.0
      %2913 = vmatpush1.msra.mxu0 0.0
      %2914 = vmatprep.subr.mxu0 0.0
      %2915 = vmatpush1.msra.mxu0 0.0
      %2916 = vmatprep.subr.mxu0 0.0
      %2917 = vmatpush1.msra.mxu0 0.0
      %2918 = vmatprep.subr.mxu0 0.0
      %2919 = vmatpush1.msra.mxu0 0.0
      %2920 = vmatprep.mubr.f32.mxu0 0.0
      %2921 = vmatmul.mubr.f32.gmra.mrb[0].mxu0 %v2854
      %v2922 = vpop.f32.mrb[0].mxu0
      %v2923 = vadd.f32 0.0, %v2922
      %v2924 = vpop.f32.mrb[0].mxu0
      %v2925 = vadd.f32 0.0, %v2924
      %2926 = vdwg.mxu0
      %v2929 = vrot.slane %v2923, 4
      %v2930 = vrot.slane %v2925, 4
      %v2932 = vsel %vm1038, %v2930, 0
      %2934 = vmatprep.subr.mxu0 %v607
      %2935 = vmatpush1.msra.mxu0 %v606
      %2936 = vmatprep.subr.mxu0 %v609
      %2937 = vmatpush1.msra.mxu0 %v608
      %2938 = vmatprep.subr.mxu0 %v611
      %2939 = vmatpush1.msra.mxu0 %v610
      %2940 = vmatprep.subr.mxu0 %v613
      %2941 = vmatpush1.msra.mxu0 %v612
      %2942 = vmatprep.subr.mxu0 %v615
      %2943 = vmatpush1.msra.mxu0 %v614
      %2944 = vmatprep.subr.mxu0 %v617
      %2945 = vmatpush1.msra.mxu0 %v616
      %2946 = vmatprep.subr.mxu0 %v619
      %2947 = vmatpush1.msra.mxu0 %v618
      %2948 = vmatprep.subr.mxu0 %v621
      %2949 = vmatpush1.msra.mxu0 %v620
      %2950 = vmatprep.subr.mxu0 %v623
      %2951 = vmatpush1.msra.mxu0 %v622
      %2952 = vmatprep.subr.mxu0 %v625
      %2953 = vmatpush1.msra.mxu0 %v624
      %2954 = vmatprep.subr.mxu0 %v627
      %2955 = vmatpush1.msra.mxu0 %v626
      %2956 = vmatprep.subr.mxu0 %v629
      %2957 = vmatpush1.msra.mxu0 %v628
      %2958 = vmatprep.subr.mxu0 %v631
      %2959 = vmatpush1.msra.mxu0 %v630
      %2960 = vmatprep.subr.mxu0 %v633
      %2961 = vmatpush1.msra.mxu0 %v632
      %2962 = vmatprep.subr.mxu0 %v635
      %2963 = vmatpush1.msra.mxu0 %v634
      %2964 = vmatprep.subr.mxu0 %v637
      %2965 = vmatpush1.msra.mxu0 %v636
      %2966 = vmatprep.subr.mxu0 %v639
      %2967 = vmatpush1.msra.mxu0 %v638
      %2968 = vmatprep.subr.mxu0 %v641
      %2969 = vmatpush1.msra.mxu0 %v640
      %2970 = vmatprep.subr.mxu0 0.0
      %2971 = vmatpush1.msra.mxu0 0.0
      %2972 = vmatprep.subr.mxu0 0.0
      %2973 = vmatpush1.msra.mxu0 0.0
      %2974 = vmatprep.subr.mxu0 0.0
      %2975 = vmatpush1.msra.mxu0 0.0
      %2976 = vmatprep.subr.mxu0 0.0
      %2977 = vmatpush1.msra.mxu0 0.0
      %2978 = vmatprep.subr.mxu0 0.0
      %2979 = vmatpush1.msra.mxu0 0.0
      %2980 = vmatprep.subr.mxu0 0.0
      %2981 = vmatpush1.msra.mxu0 0.0
      %2982 = vmatprep.subr.mxu0 0.0
      %2983 = vmatpush1.msra.mxu0 0.0
      %2984 = vmatprep.subr.mxu0 0.0
      %2985 = vmatpush1.msra.mxu0 0.0
      %2986 = vmatprep.subr.mxu0 0.0
      %2987 = vmatpush1.msra.mxu0 0.0
      %2988 = vmatprep.subr.mxu0 0.0
      %2989 = vmatpush1.msra.mxu0 0.0
      %2990 = vmatprep.subr.mxu0 0.0
      %2991 = vmatpush1.msra.mxu0 0.0
      %2992 = vmatprep.subr.mxu0 0.0
      %2993 = vmatpush1.msra.mxu0 0.0
      %2994 = vmatprep.subr.mxu0 0.0
      %2995 = vmatpush1.msra.mxu0 0.0
      %2996 = vmatprep.subr.mxu0 0.0
      %2997 = vmatpush1.msra.mxu0 0.0
      %2998 = vmatprep.mubr.f32.mxu0 %v2932
      %2999 = vmatmul.mubr.f32.gmra.mrb[0].mxu0 %v2929
      %v3000 = vpop.f32.mrb[0].mxu0
      %v3001 = vadd.f32 0.0, %v3000
      %v3002 = vpop.f32.mrb[0].mxu0
      %v3003 = vadd.f32 0.0, %v3002
      %3004 = vdwg.mxu0
      %v3005 = vsel %vm1038, %v2925, 0
      %3007 = vmatprep.subr.mxu0 %v571
      %3008 = vmatpush1.msra.mxu0 %v570
      %3009 = vmatprep.subr.mxu0 %v573
      %3010 = vmatpush1.msra.mxu0 %v572
      %3011 = vmatprep.subr.mxu0 %v575
      %3012 = vmatpush1.msra.mxu0 %v574
      %3013 = vmatprep.subr.mxu0 %v577
      %3014 = vmatpush1.msra.mxu0 %v576
      %3015 = vmatprep.subr.mxu0 %v579
      %3016 = vmatpush1.msra.mxu0 %v578
      %3017 = vmatprep.subr.mxu0 %v581
      %3018 = vmatpush1.msra.mxu0 %v580
      %3019 = vmatprep.subr.mxu0 %v583
      %3020 = vmatpush1.msra.mxu0 %v582
      %3021 = vmatprep.subr.mxu0 %v585
      %3022 = vmatpush1.msra.mxu0 %v584
      %3023 = vmatprep.subr.mxu0 %v587
      %3024 = vmatpush1.msra.mxu0 %v586
      %3025 = vmatprep.subr.mxu0 %v589
      %3026 = vmatpush1.msra.mxu0 %v588
      %3027 = vmatprep.subr.mxu0 %v591
      %3028 = vmatpush1.msra.mxu0 %v590
      %3029 = vmatprep.subr.mxu0 %v593
      %3030 = vmatpush1.msra.mxu0 %v592
      %3031 = vmatprep.subr.mxu0 %v595
      %3032 = vmatpush1.msra.mxu0 %v594
      %3033 = vmatprep.subr.mxu0 %v597
      %3034 = vmatpush1.msra.mxu0 %v596
      %3035 = vmatprep.subr.mxu0 %v599
      %3036 = vmatpush1.msra.mxu0 %v598
      %3037 = vmatprep.subr.mxu0 %v601
      %3038 = vmatpush1.msra.mxu0 %v600
      %3039 = vmatprep.subr.mxu0 %v603
      %3040 = vmatpush1.msra.mxu0 %v602
      %3041 = vmatprep.subr.mxu0 %v605
      %3042 = vmatpush1.msra.mxu0 %v604
      %3043 = vmatprep.subr.mxu0 0.0
      %3044 = vmatpush1.msra.mxu0 0.0
      %3045 = vmatprep.subr.mxu0 0.0
      %3046 = vmatpush1.msra.mxu0 0.0
      %3047 = vmatprep.subr.mxu0 0.0
      %3048 = vmatpush1.msra.mxu0 0.0
      %3049 = vmatprep.subr.mxu0 0.0
      %3050 = vmatpush1.msra.mxu0 0.0
      %3051 = vmatprep.subr.mxu0 0.0
      %3052 = vmatpush1.msra.mxu0 0.0
      %3053 = vmatprep.subr.mxu0 0.0
      %3054 = vmatpush1.msra.mxu0 0.0
      %3055 = vmatprep.subr.mxu0 0.0
      %3056 = vmatpush1.msra.mxu0 0.0
      %3057 = vmatprep.subr.mxu0 0.0
      %3058 = vmatpush1.msra.mxu0 0.0
      %3059 = vmatprep.subr.mxu0 0.0
      %3060 = vmatpush1.msra.mxu0 0.0
      %3061 = vmatprep.subr.mxu0 0.0
      %3062 = vmatpush1.msra.mxu0 0.0
      %3063 = vmatprep.subr.mxu0 0.0
      %3064 = vmatpush1.msra.mxu0 0.0
      %3065 = vmatprep.subr.mxu0 0.0
      %3066 = vmatpush1.msra.mxu0 0.0
      %3067 = vmatprep.subr.mxu0 0.0
      %3068 = vmatpush1.msra.mxu0 0.0
      %3069 = vmatprep.subr.mxu0 0.0
      %3070 = vmatpush1.msra.mxu0 0.0
      %3071 = vmatprep.mubr.f32.mxu0 %v3005
      %3072 = vmatmul.mubr.f32.gmra.mrb[0].mxu0 %v2923
      %v3073 = vpop.f32.mrb[0].mxu0
      %v3074 = vadd.f32 %v3001, %v3073
      %v3075 = vpop.f32.mrb[0].mxu0
      %v3076 = vadd.f32 %v3003, %v3075
      %3077 = vdwg.mxu0
      %s3078 = scalar_lea.vmem %s6, 8
      %v3079 = vld [vmem:[%s3078] sm:$0xf]
      %3080 = vrot.lane.b32.xlu0 %v2541, 17
      %v3081 = vpop.permute.xlu0 %3080
      %3082 = vrot.lane.b32.xlu0 %v2542, 17
      %v3083 = vpop.permute.xlu0 %3082
      %v3084 = vsel %vm1192, %v3081, %v3083
      %v3085 = vsel %vm1192, %v3083, %v3081
      %v3086 = vmul.f32 %v3085, %v1198
      %v3087 = vmul.f32 %v3084, %v1202
      %3088 = vrot.lane.b32.xlu0 %v2541, 16
      %v3089 = vpop.permute.xlu0 %3088
      %3090 = vrot.lane.b32.xlu0 %v2542, 16
      %v3091 = vpop.permute.xlu0 %3090
      %v3092 = vsel %vm1209, %v3089, %v3091
      %v3093 = vsel %vm1209, %v3091, %v3089
      %v3094 = vmul.f32 %v3093, %v1215
      %v3095 = vmul.f32 %v3092, %v1219
      %3096 = vrot.lane.b32.xlu0 %v2541, 15
      %v3097 = vpop.permute.xlu0 %3096
      %3098 = vrot.lane.b32.xlu0 %v2542, 15
      %v3099 = vpop.permute.xlu0 %3098
      %v3100 = vsel %vm1226, %v3097, %v3099
      %v3101 = vsel %vm1226, %v3099, %v3097
      %v3102 = vmul.f32 %v3101, %v1232
      %v3103 = vmul.f32 %v3100, %v1236
      %3104 = vrot.lane.b32.xlu0 %v2541, 1
      %v3105 = vpop.permute.xlu0 %3104
      %3106 = vrot.lane.b32.xlu0 %v2542, 1
      %v3107 = vpop.permute.xlu0 %3106
      %v3108 = vsel %vm1243, %v3105, %v3107
      %v3109 = vsel %vm1243, %v3107, %v3105
      %v3110 = vmul.f32 %v3109, %v1249
      %v3111 = vmul.f32 %v3108, %v1253
      %3112 = vrot.lane.b32.xlu0 %v2541, 127
      %v3113 = vpop.permute.xlu0 %3112
      %3114 = vrot.lane.b32.xlu0 %v2542, 127
      %v3115 = vpop.permute.xlu0 %3114
      %v3116 = vsel %vm1260, %v3113, %v3115
      %v3117 = vsel %vm1260, %v3115, %v3113
      %v3118 = vmul.f32 %v3116, %v1266
      %v3119 = vmul.f32 %v3117, %v1270
      %3120 = vrot.lane.b32.xlu0 %v2541, 113
      %v3121 = vpop.permute.xlu0 %3120
      %3122 = vrot.lane.b32.xlu0 %v2542, 113
      %v3123 = vpop.permute.xlu0 %3122
      %v3124 = vsel %vm1277, %v3121, %v3123
      %v3125 = vsel %vm1277, %v3123, %v3121
      %v3126 = vmul.f32 %v3124, %v1283
      %v3127 = vmul.f32 %v3125, %v1287
      %3128 = vrot.lane.b32.xlu0 %v2541, 112
      %v3129 = vpop.permute.xlu0 %3128
      %3130 = vrot.lane.b32.xlu0 %v2542, 112
      %v3131 = vpop.permute.xlu0 %3130
      %v3132 = vsel %vm1294, %v3129, %v3131
      %v3133 = vsel %vm1294, %v3131, %v3129
      %v3134 = vmul.f32 %v3132, %v1300
      %v3135 = vmul.f32 %v3133, %v1304
      %3136 = vrot.lane.b32.xlu0 %v2541, 111
      %v3137 = vpop.permute.xlu0 %3136
      %3138 = vrot.lane.b32.xlu0 %v2542, 111
      %v3139 = vpop.permute.xlu0 %3138
      %v3140 = vsel %vm1311, %v3137, %v3139
      %v3141 = vsel %vm1311, %v3139, %v3137
      %v3142 = vmul.f32 %v3140, %v1317
      %v3143 = vmul.f32 %v3141, %v1321
      %v3146 = vrot.slane %v3094, 4
      %v3147 = vrot.slane %v3095, 4
      %v3152 = vrot.slane %v3110, 4
      %v3153 = vrot.slane %v3111, 4
      %v3158 = vrot.slane %v3118, 4
      %v3159 = vrot.slane %v3119, 4
      %v3164 = vrot.slane %v3134, 4
      %v3165 = vrot.slane %v3135, 4
      %v3168 = vsel %vm797, %v3086, %v3146
      %v3169 = vsel %vm797, %v3087, %v3147
      %v3170 = vsel %vm797, %v3102, %v3152
      %v3171 = vsel %vm797, %v3103, %v3153
      %v3172 = vsel %vm797, %v2541, %v3158
      %v3173 = vsel %vm797, %v2542, %v3159
      %v3174 = vsel %vm797, %v3126, %v3164
      %v3175 = vsel %vm797, %v3127, %v3165
      %s3176 = scalar_lea.vmem %s7, 8
      %v3177 = vld [vmem:[%s3176] sm:$0xf]
      %3179 = vset.pattern.permute.xlu0 0
      %3180 = vperm.xlu0 %3179, %v3177
      %v3181 = vpop.permute.xlu0 %3180
      %v3184 = vsel %vm1362, %v3079, 0
      %v3187 = vsel %vm797, %v3142, 0
      %v3190 = vsel %vm797, %v3143, 0
      %3192 = vmatprep.subr.mxu0 %v3169
      %3193 = vmatpush1.msra.mxu0 %v3168
      %3194 = vmatprep.subr.mxu0 %v3171
      %3195 = vmatpush1.msra.mxu0 %v3170
      %3196 = vmatprep.subr.mxu0 %v3173
      %3197 = vmatpush1.msra.mxu0 %v3172
      %3198 = vmatprep.subr.mxu0 %v3175
      %3199 = vmatpush1.msra.mxu0 %v3174
      %3200 = vmatprep.subr.mxu0 %v3190
      %3201 = vmatpush1.msra.mxu0 %v3187
      %3202 = vmatprep.subr.mxu0 0.0
      %3203 = vmatpush1.msra.mxu0 0.0
      %3204 = vmatprep.subr.mxu0 0.0
      %3205 = vmatpush1.msra.mxu0 0.0
      %3206 = vmatprep.subr.mxu0 0.0
      %3207 = vmatpush1.msra.mxu0 0.0
      %3208 = vmatprep.subr.mxu0 0.0
      %3209 = vmatpush1.msra.mxu0 0.0
      %3210 = vmatprep.subr.mxu0 0.0
      %3211 = vmatpush1.msra.mxu0 0.0
      %3212 = vmatprep.subr.mxu0 0.0
      %3213 = vmatpush1.msra.mxu0 0.0
      %3214 = vmatprep.subr.mxu0 0.0
      %3215 = vmatpush1.msra.mxu0 0.0
      %3216 = vmatprep.subr.mxu0 0.0
      %3217 = vmatpush1.msra.mxu0 0.0
      %3218 = vmatprep.subr.mxu0 0.0
      %3219 = vmatpush1.msra.mxu0 0.0
      %3220 = vmatprep.subr.mxu0 0.0
      %3221 = vmatpush1.msra.mxu0 0.0
      %3222 = vmatprep.subr.mxu0 0.0
      %3223 = vmatpush1.msra.mxu0 0.0
      %3224 = vmatprep.subr.mxu0 0.0
      %3225 = vmatpush1.msra.mxu0 0.0
      %3226 = vmatprep.subr.mxu0 0.0
      %3227 = vmatpush1.msra.mxu0 0.0
      %3228 = vmatprep.subr.mxu0 0.0
      %3229 = vmatpush1.msra.mxu0 0.0
      %3230 = vmatprep.subr.mxu0 0.0
      %3231 = vmatpush1.msra.mxu0 0.0
      %3232 = vmatprep.subr.mxu0 0.0
      %3233 = vmatpush1.msra.mxu0 0.0
      %3234 = vmatprep.subr.mxu0 0.0
      %3235 = vmatpush1.msra.mxu0 0.0
      %3236 = vmatprep.subr.mxu0 0.0
      %3237 = vmatpush1.msra.mxu0 0.0
      %3238 = vmatprep.subr.mxu0 0.0
      %3239 = vmatpush1.msra.mxu0 0.0
      %3240 = vmatprep.subr.mxu0 0.0
      %3241 = vmatpush1.msra.mxu0 0.0
      %3242 = vmatprep.subr.mxu0 0.0
      %3243 = vmatpush1.msra.mxu0 0.0
      %3244 = vmatprep.subr.mxu0 0.0
      %3245 = vmatpush1.msra.mxu0 0.0
      %3246 = vmatprep.subr.mxu0 0.0
      %3247 = vmatpush1.msra.mxu0 0.0
      %3248 = vmatprep.subr.mxu0 0.0
      %3249 = vmatpush1.msra.mxu0 0.0
      %3250 = vmatprep.subr.mxu0 0.0
      %3251 = vmatpush1.msra.mxu0 0.0
      %3252 = vmatprep.subr.mxu0 0.0
      %3253 = vmatpush1.msra.mxu0 0.0
      %3254 = vmatprep.subr.mxu0 0.0
      %3255 = vmatpush1.msra.mxu0 0.0
      %3256 = vmatprep.mubr.f32.mxu0 0.0
      %3257 = vmatmul.mubr.f32.gmra.mrb[0].mxu0 %v3184
      %v3258 = vpop.f32.mrb[0].mxu0
      %v3259 = vadd.f32 %v3181, %v3258
      %v3260 = vpop.f32.mrb[0].mxu0
      %v3261 = vadd.f32 %v3181, %v3260
      %3262 = vdwg.mxu0
      %v3263 = vmax.f32 %v3259, 0.0
      %v3264 = vmax.f32 %v3261, 0.0
      %s3265 = scalar_lea.vmem %s8, 8
      %v3266 = vld [vmem:[%s3265] sm:$0xf]
      %3267 = vrot.lane.b32.xlu0 %v3263, 17
      %v3268 = vpop.permute.xlu0 %3267
      %3269 = vrot.lane.b32.xlu0 %v3264, 17
      %v3270 = vpop.permute.xlu0 %3269
      %v3271 = vsel %vm1192, %v3268, %v3270
      %v3272 = vsel %vm1192, %v3270, %v3268
      %v3273 = vmul.f32 %v3272, %v1198
      %v3274 = vmul.f32 %v3271, %v1202
      %3275 = vrot.lane.b32.xlu0 %v3263, 16
      %v3276 = vpop.permute.xlu0 %3275
      %3277 = vrot.lane.b32.xlu0 %v3264, 16
      %v3278 = vpop.permute.xlu0 %3277
      %v3279 = vsel %vm1209, %v3276, %v3278
      %v3280 = vsel %vm1209, %v3278, %v3276
      %v3281 = vmul.f32 %v3280, %v1215
      %v3282 = vmul.f32 %v3279, %v1219
      %3283 = vrot.lane.b32.xlu0 %v3263, 15
      %v3284 = vpop.permute.xlu0 %3283
      %3285 = vrot.lane.b32.xlu0 %v3264, 15
      %v3286 = vpop.permute.xlu0 %3285
      %v3287 = vsel %vm1226, %v3284, %v3286
      %v3288 = vsel %vm1226, %v3286, %v3284
      %v3289 = vmul.f32 %v3288, %v1232
      %v3290 = vmul.f32 %v3287, %v1236
      %3291 = vrot.lane.b32.xlu0 %v3263, 1
      %v3292 = vpop.permute.xlu0 %3291
      %3293 = vrot.lane.b32.xlu0 %v3264, 1
      %v3294 = vpop.permute.xlu0 %3293
      %v3295 = vsel %vm1243, %v3292, %v3294
      %v3296 = vsel %vm1243, %v3294, %v3292
      %v3297 = vmul.f32 %v3296, %v1249
      %v3298 = vmul.f32 %v3295, %v1253
      %3299 = vrot.lane.b32.xlu0 %v3263, 127
      %v3300 = vpop.permute.xlu0 %3299
      %3301 = vrot.lane.b32.xlu0 %v3264, 127
      %v3302 = vpop.permute.xlu0 %3301
      %v3303 = vsel %vm1260, %v3300, %v3302
      %v3304 = vsel %vm1260, %v3302, %v3300
      %v3305 = vmul.f32 %v3303, %v1266
      %v3306 = vmul.f32 %v3304, %v1270
      %3307 = vrot.lane.b32.xlu0 %v3263, 113
      %v3308 = vpop.permute.xlu0 %3307
      %3309 = vrot.lane.b32.xlu0 %v3264, 113
      %v3310 = vpop.permute.xlu0 %3309
      %v3311 = vsel %vm1277, %v3308, %v3310
      %v3312 = vsel %vm1277, %v3310, %v3308
      %v3313 = vmul.f32 %v3311, %v1283
      %v3314 = vmul.f32 %v3312, %v1287
      %3315 = vrot.lane.b32.xlu0 %v3263, 112
      %v3316 = vpop.permute.xlu0 %3315
      %3317 = vrot.lane.b32.xlu0 %v3264, 112
      %v3318 = vpop.permute.xlu0 %3317
      %v3319 = vsel %vm1294, %v3316, %v3318
      %v3320 = vsel %vm1294, %v3318, %v3316
      %v3321 = vmul.f32 %v3319, %v1300
      %v3322 = vmul.f32 %v3320, %v1304
      %3323 = vrot.lane.b32.xlu0 %v3263, 111
      %v3324 = vpop.permute.xlu0 %3323
      %3325 = vrot.lane.b32.xlu0 %v3264, 111
      %v3326 = vpop.permute.xlu0 %3325
      %v3327 = vsel %vm1311, %v3324, %v3326
      %v3328 = vsel %vm1311, %v3326, %v3324
      %v3329 = vmul.f32 %v3327, %v1317
      %v3330 = vmul.f32 %v3328, %v1321
      %v3333 = vrot.slane %v3281, 4
      %v3334 = vrot.slane %v3282, 4
      %v3339 = vrot.slane %v3297, 4
      %v3340 = vrot.slane %v3298, 4
      %v3345 = vrot.slane %v3305, 4
      %v3346 = vrot.slane %v3306, 4
      %v3351 = vrot.slane %v3321, 4
      %v3352 = vrot.slane %v3322, 4
      %v3355 = vsel %vm797, %v3273, %v3333
      %v3356 = vsel %vm797, %v3274, %v3334
      %v3357 = vsel %vm797, %v3289, %v3339
      %v3358 = vsel %vm797, %v3290, %v3340
      %v3359 = vsel %vm797, %v3263, %v3345
      %v3360 = vsel %vm797, %v3264, %v3346
      %v3361 = vsel %vm797, %v3313, %v3351
      %v3362 = vsel %vm797, %v3314, %v3352
      %s3363 = scalar_lea.vmem %s9, 8
      %v3364 = vld [vmem:[%s3363] sm:$0xf]
      %3366 = vset.pattern.permute.xlu0 0
      %3367 = vperm.xlu0 %3366, %v3364
      %v3368 = vpop.permute.xlu0 %3367
      %v3371 = vsel %vm1362, %v3266, 0
      %v3374 = vsel %vm797, %v3329, 0
      %v3377 = vsel %vm797, %v3330, 0
      %3379 = vmatprep.subr.mxu0 %v3356
      %3380 = vmatpush1.msra.mxu0 %v3355
      %3381 = vmatprep.subr.mxu0 %v3358
      %3382 = vmatpush1.msra.mxu0 %v3357
      %3383 = vmatprep.subr.mxu0 %v3360
      %3384 = vmatpush1.msra.mxu0 %v3359
      %3385 = vmatprep.subr.mxu0 %v3362
      %3386 = vmatpush1.msra.mxu0 %v3361
      %3387 = vmatprep.subr.mxu0 %v3377
      %3388 = vmatpush1.msra.mxu0 %v3374
      %3389 = vmatprep.subr.mxu0 0.0
      %3390 = vmatpush1.msra.mxu0 0.0
      %3391 = vmatprep.subr.mxu0 0.0
      %3392 = vmatpush1.msra.mxu0 0.0
      %3393 = vmatprep.subr.mxu0 0.0
      %3394 = vmatpush1.msra.mxu0 0.0
      %3395 = vmatprep.subr.mxu0 0.0
      %3396 = vmatpush1.msra.mxu0 0.0
      %3397 = vmatprep.subr.mxu0 0.0
      %3398 = vmatpush1.msra.mxu0 0.0
      %3399 = vmatprep.subr.mxu0 0.0
      %3400 = vmatpush1.msra.mxu0 0.0
      %3401 = vmatprep.subr.mxu0 0.0
      %3402 = vmatpush1.msra.mxu0 0.0
      %3403 = vmatprep.subr.mxu0 0.0
      %3404 = vmatpush1.msra.mxu0 0.0
      %3405 = vmatprep.subr.mxu0 0.0
      %3406 = vmatpush1.msra.mxu0 0.0
      %3407 = vmatprep.subr.mxu0 0.0
      %3408 = vmatpush1.msra.mxu0 0.0
      %3409 = vmatprep.subr.mxu0 0.0
      %3410 = vmatpush1.msra.mxu0 0.0
      %3411 = vmatprep.subr.mxu0 0.0
      %3412 = vmatpush1.msra.mxu0 0.0
      %3413 = vmatprep.subr.mxu0 0.0
      %3414 = vmatpush1.msra.mxu0 0.0
      %3415 = vmatprep.subr.mxu0 0.0
      %3416 = vmatpush1.msra.mxu0 0.0
      %3417 = vmatprep.subr.mxu0 0.0
      %3418 = vmatpush1.msra.mxu0 0.0
      %3419 = vmatprep.subr.mxu0 0.0
      %3420 = vmatpush1.msra.mxu0 0.0
      %3421 = vmatprep.subr.mxu0 0.0
      %3422 = vmatpush1.msra.mxu0 0.0
      %3423 = vmatprep.subr.mxu0 0.0
      %3424 = vmatpush1.msra.mxu0 0.0
      %3425 = vmatprep.subr.mxu0 0.0
      %3426 = vmatpush1.msra.mxu0 0.0
      %3427 = vmatprep.subr.mxu0 0.0
      %3428 = vmatpush1.msra.mxu0 0.0
      %3429 = vmatprep.subr.mxu0 0.0
      %3430 = vmatpush1.msra.mxu0 0.0
      %3431 = vmatprep.subr.mxu0 0.0
      %3432 = vmatpush1.msra.mxu0 0.0
      %3433 = vmatprep.subr.mxu0 0.0
      %3434 = vmatpush1.msra.mxu0 0.0
      %3435 = vmatprep.subr.mxu0 0.0
      %3436 = vmatpush1.msra.mxu0 0.0
      %3437 = vmatprep.subr.mxu0 0.0
      %3438 = vmatpush1.msra.mxu0 0.0
      %3439 = vmatprep.subr.mxu0 0.0
      %3440 = vmatpush1.msra.mxu0 0.0
      %3441 = vmatprep.subr.mxu0 0.0
      %3442 = vmatpush1.msra.mxu0 0.0
      %3443 = vmatprep.mubr.f32.mxu0 0.0
      %3444 = vmatmul.mubr.f32.gmra.mrb[0].mxu0 %v3371
      %v3445 = vpop.f32.mrb[0].mxu0
      %v3446 = vadd.f32 %v3368, %v3445
      %v3447 = vpop.f32.mrb[0].mxu0
      %v3448 = vadd.f32 %v3368, %v3447
      %3449 = vdwg.mxu0
      %v3450 = vadd.f32 %v3446, %v3074
      %v3451 = vadd.f32 %v3448, %v3076
      %v3452 = vadd.f32 %v3450, %v2541
      %v3453 = vadd.f32 %v3451, %v2542
      %3454 = vmatprep.subr.mxu0 %v443
      %3455 = vmatpush1.msra.mxu0 %v442
      %3456 = vmatprep.subr.mxu0 %v445
      %3457 = vmatpush1.msra.mxu0 %v444
      %3458 = vmatprep.subr.mxu0 %v447
      %3459 = vmatpush1.msra.mxu0 %v446
      %3460 = vmatprep.subr.mxu0 %v449
      %3461 = vmatpush1.msra.mxu0 %v448
      %3462 = vmatprep.subr.mxu0 %v451
      %3463 = vmatpush1.msra.mxu0 %v450
      %3464 = vmatprep.subr.mxu0 %v453
      %3465 = vmatpush1.msra.mxu0 %v452
      %3466 = vmatprep.subr.mxu0 %v455
      %3467 = vmatpush1.msra.mxu0 %v454
      %3468 = vmatprep.subr.mxu0 %v457
      %3469 = vmatpush1.msra.mxu0 %v456
      %3470 = vmatprep.subr.mxu0 %v459
      %3471 = vmatpush1.msra.mxu0 %v458
      %3472 = vmatprep.subr.mxu0 %v461
      %3473 = vmatpush1.msra.mxu0 %v460
      %3474 = vmatprep.subr.mxu0 %v463
      %3475 = vmatpush1.msra.mxu0 %v462
      %3476 = vmatprep.subr.mxu0 %v465
      %3477 = vmatpush1.msra.mxu0 %v464
      %3478 = vmatprep.subr.mxu0 %v467
      %3479 = vmatpush1.msra.mxu0 %v466
      %3480 = vmatprep.subr.mxu0 %v469
      %3481 = vmatpush1.msra.mxu0 %v468
      %3482 = vmatprep.subr.mxu0 %v471
      %3483 = vmatpush1.msra.mxu0 %v470
      %3484 = vmatprep.subr.mxu0 %v473
      %3485 = vmatpush1.msra.mxu0 %v472
      %3486 = vmatprep.subr.mxu0 %v475
      %3487 = vmatpush1.msra.mxu0 %v474
      %3488 = vmatprep.subr.mxu0 %v477
      %3489 = vmatpush1.msra.mxu0 %v476
      %3490 = vmatprep.subr.mxu0 %v479
      %3491 = vmatpush1.msra.mxu0 %v478
      %3492 = vmatprep.subr.mxu0 %v481
      %3493 = vmatpush1.msra.mxu0 %v480
      %3494 = vmatprep.subr.mxu0 %v483
      %3495 = vmatpush1.msra.mxu0 %v482
      %3496 = vmatprep.subr.mxu0 %v485
      %3497 = vmatpush1.msra.mxu0 %v484
      %3498 = vmatprep.subr.mxu0 %v487
      %3499 = vmatpush1.msra.mxu0 %v486
      %3500 = vmatprep.subr.mxu0 %v489
      %3501 = vmatpush1.msra.mxu0 %v488
      %3502 = vmatprep.subr.mxu0 %v491
      %3503 = vmatpush1.msra.mxu0 %v490
      %3504 = vmatprep.subr.mxu0 %v493
      %3505 = vmatpush1.msra.mxu0 %v492
      %3506 = vmatprep.subr.mxu0 %v495
      %3507 = vmatpush1.msra.mxu0 %v494
      %3508 = vmatprep.subr.mxu0 %v497
      %3509 = vmatpush1.msra.mxu0 %v496
      %3510 = vmatprep.subr.mxu0 %v499
      %3511 = vmatpush1.msra.mxu0 %v498
      %3512 = vmatprep.subr.mxu0 %v501
      %3513 = vmatpush1.msra.mxu0 %v500
      %3514 = vmatprep.subr.mxu0 %v503
      %3515 = vmatpush1.msra.mxu0 %v502
      %3516 = vmatprep.subr.mxu0 %v505
      %3517 = vmatpush1.msra.mxu0 %v504
      %3518 = vmatprep.mubr.f32.mxu0 %v3453
      %3519 = vmatmul.mubr.f32.gmra.mrb[0].mxu0 %v3452
      %v3520 = vpop.f32.mrb[0].mxu0
      %v3521 = vadd.f32 0.0, %v3520
      %v3522 = vpop.f32.mrb[0].mxu0
      %v3523 = vadd.f32 0.0, %v3522
      %3524 = vdwg.mxu0
      %3525 = vmatprep.subr.mxu0 %v507
      %3526 = vmatpush1.msra.mxu0 %v506
      %3527 = vmatprep.subr.mxu0 %v509
      %3528 = vmatpush1.msra.mxu0 %v508
      %3529 = vmatprep.subr.mxu0 %v511
      %3530 = vmatpush1.msra.mxu0 %v510
      %3531 = vmatprep.subr.mxu0 %v513
      %3532 = vmatpush1.msra.mxu0 %v512
      %3533 = vmatprep.subr.mxu0 %v515
      %3534 = vmatpush1.msra.mxu0 %v514
      %3535 = vmatprep.subr.mxu0 %v517
      %3536 = vmatpush1.msra.mxu0 %v516
      %3537 = vmatprep.subr.mxu0 %v519
      %3538 = vmatpush1.msra.mxu0 %v518
      %3539 = vmatprep.subr.mxu0 %v521
      %3540 = vmatpush1.msra.mxu0 %v520
      %3541 = vmatprep.subr.mxu0 %v523
      %3542 = vmatpush1.msra.mxu0 %v522
      %3543 = vmatprep.subr.mxu0 %v525
      %3544 = vmatpush1.msra.mxu0 %v524
      %3545 = vmatprep.subr.mxu0 %v527
      %3546 = vmatpush1.msra.mxu0 %v526
      %3547 = vmatprep.subr.mxu0 %v529
      %3548 = vmatpush1.msra.mxu0 %v528
      %3549 = vmatprep.subr.mxu0 %v531
      %3550 = vmatpush1.msra.mxu0 %v530
      %3551 = vmatprep.subr.mxu0 %v533
      %3552 = vmatpush1.msra.mxu0 %v532
      %3553 = vmatprep.subr.mxu0 %v535
      %3554 = vmatpush1.msra.mxu0 %v534
      %3555 = vmatprep.subr.mxu0 %v537
      %3556 = vmatpush1.msra.mxu0 %v536
      %3557 = vmatprep.subr.mxu0 %v539
      %3558 = vmatpush1.msra.mxu0 %v538
      %3559 = vmatprep.subr.mxu0 %v541
      %3560 = vmatpush1.msra.mxu0 %v540
      %3561 = vmatprep.subr.mxu0 %v543
      %3562 = vmatpush1.msra.mxu0 %v542
      %3563 = vmatprep.subr.mxu0 %v545
      %3564 = vmatpush1.msra.mxu0 %v544
      %3565 = vmatprep.subr.mxu0 %v547
      %3566 = vmatpush1.msra.mxu0 %v546
      %3567 = vmatprep.subr.mxu0 %v549
      %3568 = vmatpush1.msra.mxu0 %v548
      %3569 = vmatprep.subr.mxu0 %v551
      %3570 = vmatpush1.msra.mxu0 %v550
      %3571 = vmatprep.subr.mxu0 %v553
      %3572 = vmatpush1.msra.mxu0 %v552
      %3573 = vmatprep.subr.mxu0 %v555
      %3574 = vmatpush1.msra.mxu0 %v554
      %3575 = vmatprep.subr.mxu0 %v557
      %3576 = vmatpush1.msra.mxu0 %v556
      %3577 = vmatprep.subr.mxu0 %v559
      %3578 = vmatpush1.msra.mxu0 %v558
      %3579 = vmatprep.subr.mxu0 %v561
      %3580 = vmatpush1.msra.mxu0 %v560
      %3581 = vmatprep.subr.mxu0 %v563
      %3582 = vmatpush1.msra.mxu0 %v562
      %3583 = vmatprep.subr.mxu0 %v565
      %3584 = vmatpush1.msra.mxu0 %v564
      %3585 = vmatprep.subr.mxu0 %v567
      %3586 = vmatpush1.msra.mxu0 %v566
      %3587 = vmatprep.subr.mxu0 %v569
      %3588 = vmatpush1.msra.mxu0 %v568
      %3589 = vmatprep.mubr.f32.mxu0 %v3453
      %3590 = vmatmul.mubr.f32.gmra.mrb[0].mxu0 %v3452
      %v3591 = vpop.f32.mrb[0].mxu0
      %v3592 = vadd.f32 0.0, %v3591
      %v3593 = vpop.f32.mrb[0].mxu0
      %v3594 = vadd.f32 0.0, %v3593
      %3595 = vdwg.mxu0
      %s3596 = scalar_lea.vmem %s10, 24
      %v3597 = vld [vmem:[%s3596] sm:$0xff]
      %s3598 = scalar_lea.vmem %s11, 24
      %v3599 = vld [vmem:[%s3598] sm:$0xff]
      %v3601 = vsel %vm793, %v3599, 0
      %v3604 = vsel %vm797, %v3521, 0
      %v3607 = vsel %vm797, %v3523, 0
      %3609 = vmatprep.subr.mxu0 %v3607
      %3610 = vmatpush1.msra.mxu0 %v3604
      %3611 = vmatprep.subr.mxu0 0.0
      %3612 = vmatpush1.msra.mxu0 0.0
      %3613 = vmatprep.subr.mxu0 0.0
      %3614 = vmatpush1.msra.mxu0 0.0
      %3615 = vmatprep.subr.mxu0 0.0
      %3616 = vmatpush1.msra.mxu0 0.0
      %3617 = vmatprep.subr.mxu0 0.0
      %3618 = vmatpush1.msra.mxu0 0.0
      %3619 = vmatprep.subr.mxu0 0.0
      %3620 = vmatpush1.msra.mxu0 0.0
      %3621 = vmatprep.subr.mxu0 0.0
      %3622 = vmatpush1.msra.mxu0 0.0
      %3623 = vmatprep.subr.mxu0 0.0
      %3624 = vmatpush1.msra.mxu0 0.0
      %3625 = vmatprep.subr.mxu0 0.0
      %3626 = vmatpush1.msra.mxu0 0.0
      %3627 = vmatprep.subr.mxu0 0.0
      %3628 = vmatpush1.msra.mxu0 0.0
      %3629 = vmatprep.subr.mxu0 0.0
      %3630 = vmatpush1.msra.mxu0 0.0
      %3631 = vmatprep.subr.mxu0 0.0
      %3632 = vmatpush1.msra.mxu0 0.0
      %3633 = vmatprep.subr.mxu0 0.0
      %3634 = vmatpush1.msra.mxu0 0.0
      %3635 = vmatprep.subr.mxu0 0.0
      %3636 = vmatpush1.msra.mxu0 0.0
      %3637 = vmatprep.subr.mxu0 0.0
      %3638 = vmatpush1.msra.mxu0 0.0
      %3639 = vmatprep.subr.mxu0 0.0
      %3640 = vmatpush1.msra.mxu0 0.0
      %3641 = vmatprep.subr.mxu0 0.0
      %3642 = vmatpush1.msra.mxu0 0.0
      %3643 = vmatprep.subr.mxu0 0.0
      %3644 = vmatpush1.msra.mxu0 0.0
      %3645 = vmatprep.subr.mxu0 0.0
      %3646 = vmatpush1.msra.mxu0 0.0
      %3647 = vmatprep.subr.mxu0 0.0
      %3648 = vmatpush1.msra.mxu0 0.0
      %3649 = vmatprep.subr.mxu0 0.0
      %3650 = vmatpush1.msra.mxu0 0.0
      %3651 = vmatprep.subr.mxu0 0.0
      %3652 = vmatpush1.msra.mxu0 0.0
      %3653 = vmatprep.subr.mxu0 0.0
      %3654 = vmatpush1.msra.mxu0 0.0
      %3655 = vmatprep.subr.mxu0 0.0
      %3656 = vmatpush1.msra.mxu0 0.0
      %3657 = vmatprep.subr.mxu0 0.0
      %3658 = vmatpush1.msra.mxu0 0.0
      %3659 = vmatprep.subr.mxu0 0.0
      %3660 = vmatpush1.msra.mxu0 0.0
      %3661 = vmatprep.subr.mxu0 0.0
      %3662 = vmatpush1.msra.mxu0 0.0
      %3663 = vmatprep.subr.mxu0 0.0
      %3664 = vmatpush1.msra.mxu0 0.0
      %3665 = vmatprep.subr.mxu0 0.0
      %3666 = vmatpush1.msra.mxu0 0.0
      %3667 = vmatprep.subr.mxu0 0.0
      %3668 = vmatpush1.msra.mxu0 0.0
      %3669 = vmatprep.subr.mxu0 0.0
      %3670 = vmatpush1.msra.mxu0 0.0
      %3671 = vmatprep.subr.mxu0 0.0
      %3672 = vmatpush1.msra.mxu0 0.0
      %3673 = vmatprep.mubr.f32.mxu0 0.0
      %3674 = vmatmul.mubr.f32.gmra.mrb[0].mxu0 %v3601
      %v3675 = vpop.f32.mrb[0].mxu0
      %v3676 = vadd.f32 0.0, %v3675
      %v3677 = vpop.f32.mrb[0].mxu0
      %v3678 = vadd.f32 0.0, %v3677
      %3679 = vdwg.mxu0
      %v3681 = vsel %vm793, %v3597, 0
      %v3684 = vsel %vm797, %v3592, 0
      %v3687 = vsel %vm797, %v3594, 0
      %3689 = vmatprep.subr.mxu0 %v3687
      %3690 = vmatpush1.msra.mxu0 %v3684
      %3691 = vmatprep.subr.mxu0 0.0
      %3692 = vmatpush1.msra.mxu0 0.0
      %3693 = vmatprep.subr.mxu0 0.0
      %3694 = vmatpush1.msra.mxu0 0.0
      %3695 = vmatprep.subr.mxu0 0.0
      %3696 = vmatpush1.msra.mxu0 0.0
      %3697 = vmatprep.subr.mxu0 0.0
      %3698 = vmatpush1.msra.mxu0 0.0
      %3699 = vmatprep.subr.mxu0 0.0
      %3700 = vmatpush1.msra.mxu0 0.0
      %3701 = vmatprep.subr.mxu0 0.0
      %3702 = vmatpush1.msra.mxu0 0.0
      %3703 = vmatprep.subr.mxu0 0.0
      %3704 = vmatpush1.msra.mxu0 0.0
      %3705 = vmatprep.subr.mxu0 0.0
      %3706 = vmatpush1.msra.mxu0 0.0
      %3707 = vmatprep.subr.mxu0 0.0
      %3708 = vmatpush1.msra.mxu0 0.0
      %3709 = vmatprep.subr.mxu0 0.0
      %3710 = vmatpush1.msra.mxu0 0.0
      %3711 = vmatprep.subr.mxu0 0.0
      %3712 = vmatpush1.msra.mxu0 0.0
      %3713 = vmatprep.subr.mxu0 0.0
      %3714 = vmatpush1.msra.mxu0 0.0
      %3715 = vmatprep.subr.mxu0 0.0
      %3716 = vmatpush1.msra.mxu0 0.0
      %3717 = vmatprep.subr.mxu0 0.0
      %3718 = vmatpush1.msra.mxu0 0.0
      %3719 = vmatprep.subr.mxu0 0.0
      %3720 = vmatpush1.msra.mxu0 0.0
      %3721 = vmatprep.subr.mxu0 0.0
      %3722 = vmatpush1.msra.mxu0 0.0
      %3723 = vmatprep.subr.mxu0 0.0
      %3724 = vmatpush1.msra.mxu0 0.0
      %3725 = vmatprep.subr.mxu0 0.0
      %3726 = vmatpush1.msra.mxu0 0.0
      %3727 = vmatprep.subr.mxu0 0.0
      %3728 = vmatpush1.msra.mxu0 0.0
      %3729 = vmatprep.subr.mxu0 0.0
      %3730 = vmatpush1.msra.mxu0 0.0
      %3731 = vmatprep.subr.mxu0 0.0
      %3732 = vmatpush1.msra.mxu0 0.0
      %3733 = vmatprep.subr.mxu0 0.0
      %3734 = vmatpush1.msra.mxu0 0.0
      %3735 = vmatprep.subr.mxu0 0.0
      %3736 = vmatpush1.msra.mxu0 0.0
      %3737 = vmatprep.subr.mxu0 0.0
      %3738 = vmatpush1.msra.mxu0 0.0
      %3739 = vmatprep.subr.mxu0 0.0
      %3740 = vmatpush1.msra.mxu0 0.0
      %3741 = vmatprep.subr.mxu0 0.0
      %3742 = vmatpush1.msra.mxu0 0.0
      %3743 = vmatprep.subr.mxu0 0.0
      %3744 = vmatpush1.msra.mxu0 0.0
      %3745 = vmatprep.subr.mxu0 0.0
      %3746 = vmatpush1.msra.mxu0 0.0
      %3747 = vmatprep.subr.mxu0 0.0
      %3748 = vmatpush1.msra.mxu0 0.0
      %3749 = vmatprep.subr.mxu0 0.0
      %3750 = vmatpush1.msra.mxu0 0.0
      %3751 = vmatprep.subr.mxu0 0.0
      %3752 = vmatpush1.msra.mxu0 0.0
      %3753 = vmatprep.mubr.f32.mxu0 0.0
      %3754 = vmatmul.mubr.f32.gmra.mrb[0].mxu0 %v3681
      %v3755 = vpop.f32.mrb[0].mxu0
      %v3756 = vadd.f32 %v3676, %v3755
      %v3757 = vpop.f32.mrb[0].mxu0
      %v3758 = vadd.f32 %v3678, %v3757
      %3759 = vdwg.mxu0
      %v3760 = vmax.f32 %v3756, 0.0
      %v3761 = vmax.f32 %v3758, 0.0
      %s3762 = scalar_lea.vmem %s12, 24
      %v3763 = vld [vmem:[%s3762] sm:$0xff]
      %v3765 = vsel %vm958, %v3763, 0
      %3767 = vmatprep.subr.mxu0 %v3761
      %3768 = vmatpush1.msra.mxu0 %v3760
      %3769 = vmatprep.subr.mxu0 0.0
      %3770 = vmatpush1.msra.mxu0 0.0
      %3771 = vmatprep.subr.mxu0 0.0
      %3772 = vmatpush1.msra.mxu0 0.0
      %3773 = vmatprep.subr.mxu0 0.0
      %3774 = vmatpush1.msra.mxu0 0.0
      %3775 = vmatprep.subr.mxu0 0.0
      %3776 = vmatpush1.msra.mxu0 0.0
      %3777 = vmatprep.subr.mxu0 0.0
      %3778 = vmatpush1.msra.mxu0 0.0
      %3779 = vmatprep.subr.mxu0 0.0
      %3780 = vmatpush1.msra.mxu0 0.0
      %3781 = vmatprep.subr.mxu0 0.0
      %3782 = vmatpush1.msra.mxu0 0.0
      %3783 = vmatprep.subr.mxu0 0.0
      %3784 = vmatpush1.msra.mxu0 0.0
      %3785 = vmatprep.subr.mxu0 0.0
      %3786 = vmatpush1.msra.mxu0 0.0
      %3787 = vmatprep.subr.mxu0 0.0
      %3788 = vmatpush1.msra.mxu0 0.0
      %3789 = vmatprep.subr.mxu0 0.0
      %3790 = vmatpush1.msra.mxu0 0.0
      %3791 = vmatprep.subr.mxu0 0.0
      %3792 = vmatpush1.msra.mxu0 0.0
      %3793 = vmatprep.subr.mxu0 0.0
      %3794 = vmatpush1.msra.mxu0 0.0
      %3795 = vmatprep.subr.mxu0 0.0
      %3796 = vmatpush1.msra.mxu0 0.0
      %3797 = vmatprep.subr.mxu0 0.0
      %3798 = vmatpush1.msra.mxu0 0.0
      %3799 = vmatprep.subr.mxu0 0.0
      %3800 = vmatpush1.msra.mxu0 0.0
      %3801 = vmatprep.subr.mxu0 0.0
      %3802 = vmatpush1.msra.mxu0 0.0
      %3803 = vmatprep.subr.mxu0 0.0
      %3804 = vmatpush1.msra.mxu0 0.0
      %3805 = vmatprep.subr.mxu0 0.0
      %3806 = vmatpush1.msra.mxu0 0.0
      %3807 = vmatprep.subr.mxu0 0.0
      %3808 = vmatpush1.msra.mxu0 0.0
      %3809 = vmatprep.subr.mxu0 0.0
      %3810 = vmatpush1.msra.mxu0 0.0
      %3811 = vmatprep.subr.mxu0 0.0
      %3812 = vmatpush1.msra.mxu0 0.0
      %3813 = vmatprep.subr.mxu0 0.0
      %3814 = vmatpush1.msra.mxu0 0.0
      %3815 = vmatprep.subr.mxu0 0.0
      %3816 = vmatpush1.msra.mxu0 0.0
      %3817 = vmatprep.subr.mxu0 0.0
      %3818 = vmatpush1.msra.mxu0 0.0
      %3819 = vmatprep.subr.mxu0 0.0
      %3820 = vmatpush1.msra.mxu0 0.0
      %3821 = vmatprep.subr.mxu0 0.0
      %3822 = vmatpush1.msra.mxu0 0.0
      %3823 = vmatprep.subr.mxu0 0.0
      %3824 = vmatpush1.msra.mxu0 0.0
      %3825 = vmatprep.subr.mxu0 0.0
      %3826 = vmatpush1.msra.mxu0 0.0
      %3827 = vmatprep.subr.mxu0 0.0
      %3828 = vmatpush1.msra.mxu0 0.0
      %3829 = vmatprep.subr.mxu0 0.0
      %3830 = vmatpush1.msra.mxu0 0.0
      %3831 = vmatprep.mubr.f32.mxu0 0.0
      %3832 = vmatmul.mubr.f32.gmra.mrb[0].mxu0 %v3765
      %v3833 = vpop.f32.mrb[0].mxu0
      %v3834 = vadd.f32 0.0, %v3833
      %v3835 = vpop.f32.mrb[0].mxu0
      %v3836 = vadd.f32 0.0, %v3835
      %3837 = vdwg.mxu0
      %v3840 = vrot.slane %v3834, 4
      %v3841 = vrot.slane %v3836, 4
      %v3843 = vsel %vm1038, %v3841, 0
      %3845 = vmatprep.subr.mxu0 %v607
      %3846 = vmatpush1.msra.mxu0 %v606
      %3847 = vmatprep.subr.mxu0 %v609
      %3848 = vmatpush1.msra.mxu0 %v608
      %3849 = vmatprep.subr.mxu0 %v611
      %3850 = vmatpush1.msra.mxu0 %v610
      %3851 = vmatprep.subr.mxu0 %v613
      %3852 = vmatpush1.msra.mxu0 %v612
      %3853 = vmatprep.subr.mxu0 %v615
      %3854 = vmatpush1.msra.mxu0 %v614
      %3855 = vmatprep.subr.mxu0 %v617
      %3856 = vmatpush1.msra.mxu0 %v616
      %3857 = vmatprep.subr.mxu0 %v619
      %3858 = vmatpush1.msra.mxu0 %v618
      %3859 = vmatprep.subr.mxu0 %v621
      %3860 = vmatpush1.msra.mxu0 %v620
      %3861 = vmatprep.subr.mxu0 %v623
      %3862 = vmatpush1.msra.mxu0 %v622
      %3863 = vmatprep.subr.mxu0 %v625
      %3864 = vmatpush1.msra.mxu0 %v624
      %3865 = vmatprep.subr.mxu0 %v627
      %3866 = vmatpush1.msra.mxu0 %v626
      %3867 = vmatprep.subr.mxu0 %v629
      %3868 = vmatpush1.msra.mxu0 %v628
      %3869 = vmatprep.subr.mxu0 %v631
      %3870 = vmatpush1.msra.mxu0 %v630
      %3871 = vmatprep.subr.mxu0 %v633
      %3872 = vmatpush1.msra.mxu0 %v632
      %3873 = vmatprep.subr.mxu0 %v635
      %3874 = vmatpush1.msra.mxu0 %v634
      %3875 = vmatprep.subr.mxu0 %v637
      %3876 = vmatpush1.msra.mxu0 %v636
      %3877 = vmatprep.subr.mxu0 %v639
      %3878 = vmatpush1.msra.mxu0 %v638
      %3879 = vmatprep.subr.mxu0 %v641
      %3880 = vmatpush1.msra.mxu0 %v640
      %3881 = vmatprep.subr.mxu0 0.0
      %3882 = vmatpush1.msra.mxu0 0.0
      %3883 = vmatprep.subr.mxu0 0.0
      %3884 = vmatpush1.msra.mxu0 0.0
      %3885 = vmatprep.subr.mxu0 0.0
      %3886 = vmatpush1.msra.mxu0 0.0
      %3887 = vmatprep.subr.mxu0 0.0
      %3888 = vmatpush1.msra.mxu0 0.0
      %3889 = vmatprep.subr.mxu0 0.0
      %3890 = vmatpush1.msra.mxu0 0.0
      %3891 = vmatprep.subr.mxu0 0.0
      %3892 = vmatpush1.msra.mxu0 0.0
      %3893 = vmatprep.subr.mxu0 0.0
      %3894 = vmatpush1.msra.mxu0 0.0
      %3895 = vmatprep.subr.mxu0 0.0
      %3896 = vmatpush1.msra.mxu0 0.0
      %3897 = vmatprep.subr.mxu0 0.0
      %3898 = vmatpush1.msra.mxu0 0.0
      %3899 = vmatprep.subr.mxu0 0.0
      %3900 = vmatpush1.msra.mxu0 0.0
      %3901 = vmatprep.subr.mxu0 0.0
      %3902 = vmatpush1.msra.mxu0 0.0
      %3903 = vmatprep.subr.mxu0 0.0
      %3904 = vmatpush1.msra.mxu0 0.0
      %3905 = vmatprep.subr.mxu0 0.0
      %3906 = vmatpush1.msra.mxu0 0.0
      %3907 = vmatprep.subr.mxu0 0.0
      %3908 = vmatpush1.msra.mxu0 0.0
      %3909 = vmatprep.mubr.f32.mxu0 %v3843
      %3910 = vmatmul.mubr.f32.gmra.mrb[0].mxu0 %v3840
      %v3911 = vpop.f32.mrb[0].mxu0
      %v3912 = vadd.f32 0.0, %v3911
      %v3913 = vpop.f32.mrb[0].mxu0
      %v3914 = vadd.f32 0.0, %v3913
      %3915 = vdwg.mxu0
      %v3916 = vsel %vm1038, %v3836, 0
      %3918 = vmatprep.subr.mxu0 %v571
      %3919 = vmatpush1.msra.mxu0 %v570
      %3920 = vmatprep.subr.mxu0 %v573
      %3921 = vmatpush1.msra.mxu0 %v572
      %3922 = vmatprep.subr.mxu0 %v575
      %3923 = vmatpush1.msra.mxu0 %v574
      %3924 = vmatprep.subr.mxu0 %v577
      %3925 = vmatpush1.msra.mxu0 %v576
      %3926 = vmatprep.subr.mxu0 %v579
      %3927 = vmatpush1.msra.mxu0 %v578
      %3928 = vmatprep.subr.mxu0 %v581
      %3929 = vmatpush1.msra.mxu0 %v580
      %3930 = vmatprep.subr.mxu0 %v583
      %3931 = vmatpush1.msra.mxu0 %v582
      %3932 = vmatprep.subr.mxu0 %v585
      %3933 = vmatpush1.msra.mxu0 %v584
      %3934 = vmatprep.subr.mxu0 %v587
      %3935 = vmatpush1.msra.mxu0 %v586
      %3936 = vmatprep.subr.mxu0 %v589
      %3937 = vmatpush1.msra.mxu0 %v588
      %3938 = vmatprep.subr.mxu0 %v591
      %3939 = vmatpush1.msra.mxu0 %v590
      %3940 = vmatprep.subr.mxu0 %v593
      %3941 = vmatpush1.msra.mxu0 %v592
      %3942 = vmatprep.subr.mxu0 %v595
      %3943 = vmatpush1.msra.mxu0 %v594
      %3944 = vmatprep.subr.mxu0 %v597
      %3945 = vmatpush1.msra.mxu0 %v596
      %3946 = vmatprep.subr.mxu0 %v599
      %3947 = vmatpush1.msra.mxu0 %v598
      %3948 = vmatprep.subr.mxu0 %v601
      %3949 = vmatpush1.msra.mxu0 %v600
      %3950 = vmatprep.subr.mxu0 %v603
      %3951 = vmatpush1.msra.mxu0 %v602
      %3952 = vmatprep.subr.mxu0 %v605
      %3953 = vmatpush1.msra.mxu0 %v604
      %3954 = vmatprep.subr.mxu0 0.0
      %3955 = vmatpush1.msra.mxu0 0.0
      %3956 = vmatprep.subr.mxu0 0.0
      %3957 = vmatpush1.msra.mxu0 0.0
      %3958 = vmatprep.subr.mxu0 0.0
      %3959 = vmatpush1.msra.mxu0 0.0
      %3960 = vmatprep.subr.mxu0 0.0
      %3961 = vmatpush1.msra.mxu0 0.0
      %3962 = vmatprep.subr.mxu0 0.0
      %3963 = vmatpush1.msra.mxu0 0.0
      %3964 = vmatprep.subr.mxu0 0.0
      %3965 = vmatpush1.msra.mxu0 0.0
      %3966 = vmatprep.subr.mxu0 0.0
      %3967 = vmatpush1.msra.mxu0 0.0
      %3968 = vmatprep.subr.mxu0 0.0
      %3969 = vmatpush1.msra.mxu0 0.0
      %3970 = vmatprep.subr.mxu0 0.0
      %3971 = vmatpush1.msra.mxu0 0.0
      %3972 = vmatprep.subr.mxu0 0.0
      %3973 = vmatpush1.msra.mxu0 0.0
      %3974 = vmatprep.subr.mxu0 0.0
      %3975 = vmatpush1.msra.mxu0 0.0
      %3976 = vmatprep.subr.mxu0 0.0
      %3977 = vmatpush1.msra.mxu0 0.0
      %3978 = vmatprep.subr.mxu0 0.0
      %3979 = vmatpush1.msra.mxu0 0.0
      %3980 = vmatprep.subr.mxu0 0.0
      %3981 = vmatpush1.msra.mxu0 0.0
      %3982 = vmatprep.mubr.f32.mxu0 %v3916
      %3983 = vmatmul.mubr.f32.gmra.mrb[0].mxu0 %v3834
      %v3984 = vpop.f32.mrb[0].mxu0
      %v3985 = vadd.f32 %v3912, %v3984
      %v3986 = vpop.f32.mrb[0].mxu0
      %v3987 = vadd.f32 %v3914, %v3986
      %3988 = vdwg.mxu0
      %s3989 = scalar_lea.vmem %s6, 12
      %v3990 = vld [vmem:[%s3989] sm:$0xf]
      %3991 = vrot.lane.b32.xlu0 %v3452, 17
      %v3992 = vpop.permute.xlu0 %3991
      %3993 = vrot.lane.b32.xlu0 %v3453, 17
      %v3994 = vpop.permute.xlu0 %3993
      %v3995 = vsel %vm1192, %v3992, %v3994
      %v3996 = vsel %vm1192, %v3994, %v3992
      %v3997 = vmul.f32 %v3996, %v1198
      %v3998 = vmul.f32 %v3995, %v1202
      %3999 = vrot.lane.b32.xlu0 %v3452, 16
      %v4000 = vpop.permute.xlu0 %3999
      %4001 = vrot.lane.b32.xlu0 %v3453, 16
      %v4002 = vpop.permute.xlu0 %4001
      %v4003 = vsel %vm1209, %v4000, %v4002
      %v4004 = vsel %vm1209, %v4002, %v4000
      %v4005 = vmul.f32 %v4004, %v1215
      %v4006 = vmul.f32 %v4003, %v1219
      %4007 = vrot.lane.b32.xlu0 %v3452, 15
      %v4008 = vpop.permute.xlu0 %4007
      %4009 = vrot.lane.b32.xlu0 %v3453, 15
      %v4010 = vpop.permute.xlu0 %4009
      %v4011 = vsel %vm1226, %v4008, %v4010
      %v4012 = vsel %vm1226, %v4010, %v4008
      %v4013 = vmul.f32 %v4012, %v1232
      %v4014 = vmul.f32 %v4011, %v1236
      %4015 = vrot.lane.b32.xlu0 %v3452, 1
      %v4016 = vpop.permute.xlu0 %4015
      %4017 = vrot.lane.b32.xlu0 %v3453, 1
      %v4018 = vpop.permute.xlu0 %4017
      %v4019 = vsel %vm1243, %v4016, %v4018
      %v4020 = vsel %vm1243, %v4018, %v4016
      %v4021 = vmul.f32 %v4020, %v1249
      %v4022 = vmul.f32 %v4019, %v1253
      %4023 = vrot.lane.b32.xlu0 %v3452, 127
      %v4024 = vpop.permute.xlu0 %4023
      %4025 = vrot.lane.b32.xlu0 %v3453, 127
      %v4026 = vpop.permute.xlu0 %4025
      %v4027 = vsel %vm1260, %v4024, %v4026
      %v4028 = vsel %vm1260, %v4026, %v4024
      %v4029 = vmul.f32 %v4027, %v1266
      %v4030 = vmul.f32 %v4028, %v1270
      %4031 = vrot.lane.b32.xlu0 %v3452, 113
      %v4032 = vpop.permute.xlu0 %4031
      %4033 = vrot.lane.b32.xlu0 %v3453, 113
      %v4034 = vpop.permute.xlu0 %4033
      %v4035 = vsel %vm1277, %v4032, %v4034
      %v4036 = vsel %vm1277, %v4034, %v4032
      %v4037 = vmul.f32 %v4035, %v1283
      %v4038 = vmul.f32 %v4036, %v1287
      %4039 = vrot.lane.b32.xlu0 %v3452, 112
      %v4040 = vpop.permute.xlu0 %4039
      %4041 = vrot.lane.b32.xlu0 %v3453, 112
      %v4042 = vpop.permute.xlu0 %4041
      %v4043 = vsel %vm1294, %v4040, %v4042
      %v4044 = vsel %vm1294, %v4042, %v4040
      %v4045 = vmul.f32 %v4043, %v1300
      %v4046 = vmul.f32 %v4044, %v1304
      %4047 = vrot.lane.b32.xlu0 %v3452, 111
      %v4048 = vpop.permute.xlu0 %4047
      %4049 = vrot.lane.b32.xlu0 %v3453, 111
      %v4050 = vpop.permute.xlu0 %4049
      %v4051 = vsel %vm1311, %v4048, %v4050
      %v4052 = vsel %vm1311, %v4050, %v4048
      %v4053 = vmul.f32 %v4051, %v1317
      %v4054 = vmul.f32 %v4052, %v1321
      %v4057 = vrot.slane %v4005, 4
      %v4058 = vrot.slane %v4006, 4
      %v4063 = vrot.slane %v4021, 4
      %v4064 = vrot.slane %v4022, 4
      %v4069 = vrot.slane %v4029, 4
      %v4070 = vrot.slane %v4030, 4
      %v4075 = vrot.slane %v4045, 4
      %v4076 = vrot.slane %v4046, 4
      %v4079 = vsel %vm797, %v3997, %v4057
      %v4080 = vsel %vm797, %v3998, %v4058
      %v4081 = vsel %vm797, %v4013, %v4063
      %v4082 = vsel %vm797, %v4014, %v4064
      %v4083 = vsel %vm797, %v3452, %v4069
      %v4084 = vsel %vm797, %v3453, %v4070
      %v4085 = vsel %vm797, %v4037, %v4075
      %v4086 = vsel %vm797, %v4038, %v4076
      %s4087 = scalar_lea.vmem %s7, 12
      %v4088 = vld [vmem:[%s4087] sm:$0xf]
      %4090 = vset.pattern.permute.xlu0 0
      %4091 = vperm.xlu0 %4090, %v4088
      %v4092 = vpop.permute.xlu0 %4091
      %v4095 = vsel %vm1362, %v3990, 0
      %v4098 = vsel %vm797, %v4053, 0
      %v4101 = vsel %vm797, %v4054, 0
      %4103 = vmatprep.subr.mxu0 %v4080
      %4104 = vmatpush1.msra.mxu0 %v4079
      %4105 = vmatprep.subr.mxu0 %v4082
      %4106 = vmatpush1.msra.mxu0 %v4081
      %4107 = vmatprep.subr.mxu0 %v4084
      %4108 = vmatpush1.msra.mxu0 %v4083
      %4109 = vmatprep.subr.mxu0 %v4086
      %4110 = vmatpush1.msra.mxu0 %v4085
      %4111 = vmatprep.subr.mxu0 %v4101
      %4112 = vmatpush1.msra.mxu0 %v4098
      %4113 = vmatprep.subr.mxu0 0.0
      %4114 = vmatpush1.msra.mxu0 0.0
      %4115 = vmatprep.subr.mxu0 0.0
      %4116 = vmatpush1.msra.mxu0 0.0
      %4117 = vmatprep.subr.mxu0 0.0
      %4118 = vmatpush1.msra.mxu0 0.0
      %4119 = vmatprep.subr.mxu0 0.0
      %4120 = vmatpush1.msra.mxu0 0.0
      %4121 = vmatprep.subr.mxu0 0.0
      %4122 = vmatpush1.msra.mxu0 0.0
      %4123 = vmatprep.subr.mxu0 0.0
      %4124 = vmatpush1.msra.mxu0 0.0
      %4125 = vmatprep.subr.mxu0 0.0
      %4126 = vmatpush1.msra.mxu0 0.0
      %4127 = vmatprep.subr.mxu0 0.0
      %4128 = vmatpush1.msra.mxu0 0.0
      %4129 = vmatprep.subr.mxu0 0.0
      %4130 = vmatpush1.msra.mxu0 0.0
      %4131 = vmatprep.subr.mxu0 0.0
      %4132 = vmatpush1.msra.mxu0 0.0
      %4133 = vmatprep.subr.mxu0 0.0
      %4134 = vmatpush1.msra.mxu0 0.0
      %4135 = vmatprep.subr.mxu0 0.0
      %4136 = vmatpush1.msra.mxu0 0.0
      %4137 = vmatprep.subr.mxu0 0.0
      %4138 = vmatpush1.msra.mxu0 0.0
      %4139 = vmatprep.subr.mxu0 0.0
      %4140 = vmatpush1.msra.mxu0 0.0
      %4141 = vmatprep.subr.mxu0 0.0
      %4142 = vmatpush1.msra.mxu0 0.0
      %4143 = vmatprep.subr.mxu0 0.0
      %4144 = vmatpush1.msra.mxu0 0.0
      %4145 = vmatprep.subr.mxu0 0.0
      %4146 = vmatpush1.msra.mxu0 0.0
      %4147 = vmatprep.subr.mxu0 0.0
      %4148 = vmatpush1.msra.mxu0 0.0
      %4149 = vmatprep.subr.mxu0 0.0
      %4150 = vmatpush1.msra.mxu0 0.0
      %4151 = vmatprep.subr.mxu0 0.0
      %4152 = vmatpush1.msra.mxu0 0.0
      %4153 = vmatprep.subr.mxu0 0.0
      %4154 = vmatpush1.msra.mxu0 0.0
      %4155 = vmatprep.subr.mxu0 0.0
      %4156 = vmatpush1.msra.mxu0 0.0
      %4157 = vmatprep.subr.mxu0 0.0
      %4158 = vmatpush1.msra.mxu0 0.0
      %4159 = vmatprep.subr.mxu0 0.0
      %4160 = vmatpush1.msra.mxu0 0.0
      %4161 = vmatprep.subr.mxu0 0.0
      %4162 = vmatpush1.msra.mxu0 0.0
      %4163 = vmatprep.subr.mxu0 0.0
      %4164 = vmatpush1.msra.mxu0 0.0
      %4165 = vmatprep.subr.mxu0 0.0
      %4166 = vmatpush1.msra.mxu0 0.0
      %4167 = vmatprep.mubr.f32.mxu0 0.0
      %4168 = vmatmul.mubr.f32.gmra.mrb[0].mxu0 %v4095
      %v4169 = vpop.f32.mrb[0].mxu0
      %v4170 = vadd.f32 %v4092, %v4169
      %v4171 = vpop.f32.mrb[0].mxu0
      %v4172 = vadd.f32 %v4092, %v4171
      %4173 = vdwg.mxu0
      %v4174 = vmax.f32 %v4170, 0.0
      %v4175 = vmax.f32 %v4172, 0.0
      %s4176 = scalar_lea.vmem %s8, 12
      %v4177 = vld [vmem:[%s4176] sm:$0xf]
      %4178 = vrot.lane.b32.xlu0 %v4174, 17
      %v4179 = vpop.permute.xlu0 %4178
      %4180 = vrot.lane.b32.xlu0 %v4175, 17
      %v4181 = vpop.permute.xlu0 %4180
      %v4182 = vsel %vm1192, %v4179, %v4181
      %v4183 = vsel %vm1192, %v4181, %v4179
      %v4184 = vmul.f32 %v4183, %v1198
      %v4185 = vmul.f32 %v4182, %v1202
      %4186 = vrot.lane.b32.xlu0 %v4174, 16
      %v4187 = vpop.permute.xlu0 %4186
      %4188 = vrot.lane.b32.xlu0 %v4175, 16
      %v4189 = vpop.permute.xlu0 %4188
      %v4190 = vsel %vm1209, %v4187, %v4189
      %v4191 = vsel %vm1209, %v4189, %v4187
      %v4192 = vmul.f32 %v4191, %v1215
      %v4193 = vmul.f32 %v4190, %v1219
      %4194 = vrot.lane.b32.xlu0 %v4174, 15
      %v4195 = vpop.permute.xlu0 %4194
      %4196 = vrot.lane.b32.xlu0 %v4175, 15
      %v4197 = vpop.permute.xlu0 %4196
      %v4198 = vsel %vm1226, %v4195, %v4197
      %v4199 = vsel %vm1226, %v4197, %v4195
      %v4200 = vmul.f32 %v4199, %v1232
      %v4201 = vmul.f32 %v4198, %v1236
      %4202 = vrot.lane.b32.xlu0 %v4174, 1
      %v4203 = vpop.permute.xlu0 %4202
      %4204 = vrot.lane.b32.xlu0 %v4175, 1
      %v4205 = vpop.permute.xlu0 %4204
      %v4206 = vsel %vm1243, %v4203, %v4205
      %v4207 = vsel %vm1243, %v4205, %v4203
      %v4208 = vmul.f32 %v4207, %v1249
      %v4209 = vmul.f32 %v4206, %v1253
      %4210 = vrot.lane.b32.xlu0 %v4174, 127
      %v4211 = vpop.permute.xlu0 %4210
      %4212 = vrot.lane.b32.xlu0 %v4175, 127
      %v4213 = vpop.permute.xlu0 %4212
      %v4214 = vsel %vm1260, %v4211, %v4213
      %v4215 = vsel %vm1260, %v4213, %v4211
      %v4216 = vmul.f32 %v4214, %v1266
      %v4217 = vmul.f32 %v4215, %v1270
      %4218 = vrot.lane.b32.xlu0 %v4174, 113
      %v4219 = vpop.permute.xlu0 %4218
      %4220 = vrot.lane.b32.xlu0 %v4175, 113
      %v4221 = vpop.permute.xlu0 %4220
      %v4222 = vsel %vm1277, %v4219, %v4221
      %v4223 = vsel %vm1277, %v4221, %v4219
      %v4224 = vmul.f32 %v4222, %v1283
      %v4225 = vmul.f32 %v4223, %v1287
      %4226 = vrot.lane.b32.xlu0 %v4174, 112
      %v4227 = vpop.permute.xlu0 %4226
      %4228 = vrot.lane.b32.xlu0 %v4175, 112
      %v4229 = vpop.permute.xlu0 %4228
      %v4230 = vsel %vm1294, %v4227, %v4229
      %v4231 = vsel %vm1294, %v4229, %v4227
      %v4232 = vmul.f32 %v4230, %v1300
      %v4233 = vmul.f32 %v4231, %v1304
      %4234 = vrot.lane.b32.xlu0 %v4174, 111
      %v4235 = vpop.permute.xlu0 %4234
      %4236 = vrot.lane.b32.xlu0 %v4175, 111
      %v4237 = vpop.permute.xlu0 %4236
      %v4238 = vsel %vm1311, %v4235, %v4237
      %v4239 = vsel %vm1311, %v4237, %v4235
      %v4240 = vmul.f32 %v4238, %v1317
      %v4241 = vmul.f32 %v4239, %v1321
      %v4244 = vrot.slane %v4192, 4
      %v4245 = vrot.slane %v4193, 4
      %v4250 = vrot.slane %v4208, 4
      %v4251 = vrot.slane %v4209, 4
      %v4256 = vrot.slane %v4216, 4
      %v4257 = vrot.slane %v4217, 4
      %v4262 = vrot.slane %v4232, 4
      %v4263 = vrot.slane %v4233, 4
      %v4266 = vsel %vm797, %v4184, %v4244
      %v4267 = vsel %vm797, %v4185, %v4245
      %v4268 = vsel %vm797, %v4200, %v4250
      %v4269 = vsel %vm797, %v4201, %v4251
      %v4270 = vsel %vm797, %v4174, %v4256
      %v4271 = vsel %vm797, %v4175, %v4257
      %v4272 = vsel %vm797, %v4224, %v4262
      %v4273 = vsel %vm797, %v4225, %v4263
      %s4274 = scalar_lea.vmem %s9, 12
      %v4275 = vld [vmem:[%s4274] sm:$0xf]
      %4277 = vset.pattern.permute.xlu0 0
      %4278 = vperm.xlu0 %4277, %v4275
      %v4279 = vpop.permute.xlu0 %4278
      %v4282 = vsel %vm1362, %v4177, 0
      %v4285 = vsel %vm797, %v4240, 0
      %v4288 = vsel %vm797, %v4241, 0
      %4290 = vmatprep.subr.mxu0 %v4267
      %4291 = vmatpush1.msra.mxu0 %v4266
      %4292 = vmatprep.subr.mxu0 %v4269
      %4293 = vmatpush1.msra.mxu0 %v4268
      %4294 = vmatprep.subr.mxu0 %v4271
      %4295 = vmatpush1.msra.mxu0 %v4270
      %4296 = vmatprep.subr.mxu0 %v4273
      %4297 = vmatpush1.msra.mxu0 %v4272
      %4298 = vmatprep.subr.mxu0 %v4288
      %4299 = vmatpush1.msra.mxu0 %v4285
      %4300 = vmatprep.subr.mxu0 0.0
      %4301 = vmatpush1.msra.mxu0 0.0
      %4302 = vmatprep.subr.mxu0 0.0
      %4303 = vmatpush1.msra.mxu0 0.0
      %4304 = vmatprep.subr.mxu0 0.0
      %4305 = vmatpush1.msra.mxu0 0.0
      %4306 = vmatprep.subr.mxu0 0.0
      %4307 = vmatpush1.msra.mxu0 0.0
      %4308 = vmatprep.subr.mxu0 0.0
      %4309 = vmatpush1.msra.mxu0 0.0
      %4310 = vmatprep.subr.mxu0 0.0
      %4311 = vmatpush1.msra.mxu0 0.0
      %4312 = vmatprep.subr.mxu0 0.0
      %4313 = vmatpush1.msra.mxu0 0.0
      %4314 = vmatprep.subr.mxu0 0.0
      %4315 = vmatpush1.msra.mxu0 0.0
      %4316 = vmatprep.subr.mxu0 0.0
      %4317 = vmatpush1.msra.mxu0 0.0
      %4318 = vmatprep.subr.mxu0 0.0
      %4319 = vmatpush1.msra.mxu0 0.0
      %4320 = vmatprep.subr.mxu0 0.0
      %4321 = vmatpush1.msra.mxu0 0.0
      %4322 = vmatprep.subr.mxu0 0.0
      %4323 = vmatpush1.msra.mxu0 0.0
      %4324 = vmatprep.subr.mxu0 0.0
      %4325 = vmatpush1.msra.mxu0 0.0
      %4326 = vmatprep.subr.mxu0 0.0
      %4327 = vmatpush1.msra.mxu0 0.0
      %4328 = vmatprep.subr.mxu0 0.0
      %4329 = vmatpush1.msra.mxu0 0.0
      %4330 = vmatprep.subr.mxu0 0.0
      %4331 = vmatpush1.msra.mxu0 0.0
      %4332 = vmatprep.subr.mxu0 0.0
      %4333 = vmatpush1.msra.mxu0 0.0
      %4334 = vmatprep.subr.mxu0 0.0
      %4335 = vmatpush1.msra.mxu0 0.0
      %4336 = vmatprep.subr.mxu0 0.0
      %4337 = vmatpush1.msra.mxu0 0.0
      %4338 = vmatprep.subr.mxu0 0.0
      %4339 = vmatpush1.msra.mxu0 0.0
      %4340 = vmatprep.subr.mxu0 0.0
      %4341 = vmatpush1.msra.mxu0 0.0
      %4342 = vmatprep.subr.mxu0 0.0
      %4343 = vmatpush1.msra.mxu0 0.0
      %4344 = vmatprep.subr.mxu0 0.0
      %4345 = vmatpush1.msra.mxu0 0.0
      %4346 = vmatprep.subr.mxu0 0.0
      %4347 = vmatpush1.msra.mxu0 0.0
      %4348 = vmatprep.subr.mxu0 0.0
      %4349 = vmatpush1.msra.mxu0 0.0
      %4350 = vmatprep.subr.mxu0 0.0
      %4351 = vmatpush1.msra.mxu0 0.0
      %4352 = vmatprep.subr.mxu0 0.0
      %4353 = vmatpush1.msra.mxu0 0.0
      %4354 = vmatprep.mubr.f32.mxu0 0.0
      %4355 = vmatmul.mubr.f32.gmra.mrb[0].mxu0 %v4282
      %v4356 = vpop.f32.mrb[0].mxu0
      %v4357 = vadd.f32 %v4279, %v4356
      %v4358 = vpop.f32.mrb[0].mxu0
      %v4359 = vadd.f32 %v4279, %v4358
      %4360 = vdwg.mxu0
      %v4361 = vadd.f32 %v4357, %v3985
      %v4362 = vadd.f32 %v4359, %v3987
      %v4363 = vadd.f32 %v4361, %v3452
      %v4364 = vadd.f32 %v4362, %v3453
      %4365 = vmatprep.subr.mxu0 %v443
      %4366 = vmatpush1.msra.mxu0 %v442
      %4367 = vmatprep.subr.mxu0 %v445
      %4368 = vmatpush1.msra.mxu0 %v444
      %4369 = vmatprep.subr.mxu0 %v447
      %4370 = vmatpush1.msra.mxu0 %v446
      %4371 = vmatprep.subr.mxu0 %v449
      %4372 = vmatpush1.msra.mxu0 %v448
      %4373 = vmatprep.subr.mxu0 %v451
      %4374 = vmatpush1.msra.mxu0 %v450
      %4375 = vmatprep.subr.mxu0 %v453
      %4376 = vmatpush1.msra.mxu0 %v452
      %4377 = vmatprep.subr.mxu0 %v455
      %4378 = vmatpush1.msra.mxu0 %v454
      %4379 = vmatprep.subr.mxu0 %v457
      %4380 = vmatpush1.msra.mxu0 %v456
      %4381 = vmatprep.subr.mxu0 %v459
      %4382 = vmatpush1.msra.mxu0 %v458
      %4383 = vmatprep.subr.mxu0 %v461
      %4384 = vmatpush1.msra.mxu0 %v460
      %4385 = vmatprep.subr.mxu0 %v463
      %4386 = vmatpush1.msra.mxu0 %v462
      %4387 = vmatprep.subr.mxu0 %v465
      %4388 = vmatpush1.msra.mxu0 %v464
      %4389 = vmatprep.subr.mxu0 %v467
      %4390 = vmatpush1.msra.mxu0 %v466
      %4391 = vmatprep.subr.mxu0 %v469
      %4392 = vmatpush1.msra.mxu0 %v468
      %4393 = vmatprep.subr.mxu0 %v471
      %4394 = vmatpush1.msra.mxu0 %v470
      %4395 = vmatprep.subr.mxu0 %v473
      %4396 = vmatpush1.msra.mxu0 %v472
      %4397 = vmatprep.subr.mxu0 %v475
      %4398 = vmatpush1.msra.mxu0 %v474
      %4399 = vmatprep.subr.mxu0 %v477
      %4400 = vmatpush1.msra.mxu0 %v476
      %4401 = vmatprep.subr.mxu0 %v479
      %4402 = vmatpush1.msra.mxu0 %v478
      %4403 = vmatprep.subr.mxu0 %v481
      %4404 = vmatpush1.msra.mxu0 %v480
      %4405 = vmatprep.subr.mxu0 %v483
      %4406 = vmatpush1.msra.mxu0 %v482
      %4407 = vmatprep.subr.mxu0 %v485
      %4408 = vmatpush1.msra.mxu0 %v484
      %4409 = vmatprep.subr.mxu0 %v487
      %4410 = vmatpush1.msra.mxu0 %v486
      %4411 = vmatprep.subr.mxu0 %v489
      %4412 = vmatpush1.msra.mxu0 %v488
      %4413 = vmatprep.subr.mxu0 %v491
      %4414 = vmatpush1.msra.mxu0 %v490
      %4415 = vmatprep.subr.mxu0 %v493
      %4416 = vmatpush1.msra.mxu0 %v492
      %4417 = vmatprep.subr.mxu0 %v495
      %4418 = vmatpush1.msra.mxu0 %v494
      %4419 = vmatprep.subr.mxu0 %v497
      %4420 = vmatpush1.msra.mxu0 %v496
      %4421 = vmatprep.subr.mxu0 %v499
      %4422 = vmatpush1.msra.mxu0 %v498
      %4423 = vmatprep.subr.mxu0 %v501
      %4424 = vmatpush1.msra.mxu0 %v500
      %4425 = vmatprep.subr.mxu0 %v503
      %4426 = vmatpush1.msra.mxu0 %v502
      %4427 = vmatprep.subr.mxu0 %v505
      %4428 = vmatpush1.msra.mxu0 %v504
      %4429 = vmatprep.mubr.f32.mxu0 %v4364
      %4430 = vmatmul.mubr.f32.gmra.mrb[0].mxu0 %v4363
      %v4431 = vpop.f32.mrb[0].mxu0
      %v4432 = vadd.f32 0.0, %v4431
      %v4433 = vpop.f32.mrb[0].mxu0
      %v4434 = vadd.f32 0.0, %v4433
      %4435 = vdwg.mxu0
      %4436 = vmatprep.subr.mxu0 %v507
      %4437 = vmatpush1.msra.mxu0 %v506
      %4438 = vmatprep.subr.mxu0 %v509
      %4439 = vmatpush1.msra.mxu0 %v508
      %4440 = vmatprep.subr.mxu0 %v511
      %4441 = vmatpush1.msra.mxu0 %v510
      %4442 = vmatprep.subr.mxu0 %v513
      %4443 = vmatpush1.msra.mxu0 %v512
      %4444 = vmatprep.subr.mxu0 %v515
      %4445 = vmatpush1.msra.mxu0 %v514
      %4446 = vmatprep.subr.mxu0 %v517
      %4447 = vmatpush1.msra.mxu0 %v516
      %4448 = vmatprep.subr.mxu0 %v519
      %4449 = vmatpush1.msra.mxu0 %v518
      %4450 = vmatprep.subr.mxu0 %v521
      %4451 = vmatpush1.msra.mxu0 %v520
      %4452 = vmatprep.subr.mxu0 %v523
      %4453 = vmatpush1.msra.mxu0 %v522
      %4454 = vmatprep.subr.mxu0 %v525
      %4455 = vmatpush1.msra.mxu0 %v524
      %4456 = vmatprep.subr.mxu0 %v527
      %4457 = vmatpush1.msra.mxu0 %v526
      %4458 = vmatprep.subr.mxu0 %v529
      %4459 = vmatpush1.msra.mxu0 %v528
      %4460 = vmatprep.subr.mxu0 %v531
      %4461 = vmatpush1.msra.mxu0 %v530
      %4462 = vmatprep.subr.mxu0 %v533
      %4463 = vmatpush1.msra.mxu0 %v532
      %4464 = vmatprep.subr.mxu0 %v535
      %4465 = vmatpush1.msra.mxu0 %v534
      %4466 = vmatprep.subr.mxu0 %v537
      %4467 = vmatpush1.msra.mxu0 %v536
      %4468 = vmatprep.subr.mxu0 %v539
      %4469 = vmatpush1.msra.mxu0 %v538
      %4470 = vmatprep.subr.mxu0 %v541
      %4471 = vmatpush1.msra.mxu0 %v540
      %4472 = vmatprep.subr.mxu0 %v543
      %4473 = vmatpush1.msra.mxu0 %v542
      %4474 = vmatprep.subr.mxu0 %v545
      %4475 = vmatpush1.msra.mxu0 %v544
      %4476 = vmatprep.subr.mxu0 %v547
      %4477 = vmatpush1.msra.mxu0 %v546
      %4478 = vmatprep.subr.mxu0 %v549
      %4479 = vmatpush1.msra.mxu0 %v548
      %4480 = vmatprep.subr.mxu0 %v551
      %4481 = vmatpush1.msra.mxu0 %v550
      %4482 = vmatprep.subr.mxu0 %v553
      %4483 = vmatpush1.msra.mxu0 %v552
      %4484 = vmatprep.subr.mxu0 %v555
      %4485 = vmatpush1.msra.mxu0 %v554
      %4486 = vmatprep.subr.mxu0 %v557
      %4487 = vmatpush1.msra.mxu0 %v556
      %4488 = vmatprep.subr.mxu0 %v559
      %4489 = vmatpush1.msra.mxu0 %v558
      %4490 = vmatprep.subr.mxu0 %v561
      %4491 = vmatpush1.msra.mxu0 %v560
      %4492 = vmatprep.subr.mxu0 %v563
      %4493 = vmatpush1.msra.mxu0 %v562
      %4494 = vmatprep.subr.mxu0 %v565
      %4495 = vmatpush1.msra.mxu0 %v564
      %4496 = vmatprep.subr.mxu0 %v567
      %4497 = vmatpush1.msra.mxu0 %v566
      %4498 = vmatprep.subr.mxu0 %v569
      %4499 = vmatpush1.msra.mxu0 %v568
      %4500 = vmatprep.mubr.f32.mxu0 %v4364
      %4501 = vmatmul.mubr.f32.gmra.mrb[0].mxu0 %v4363
      %v4502 = vpop.f32.mrb[0].mxu0
      %v4503 = vadd.f32 0.0, %v4502
      %v4504 = vpop.f32.mrb[0].mxu0
      %v4505 = vadd.f32 0.0, %v4504
      %4506 = vdwg.mxu0
      %s4507 = scalar_lea.vmem %s10, 32
      %v4508 = vld [vmem:[%s4507] sm:$0xff]
      %s4509 = scalar_lea.vmem %s11, 32
      %v4510 = vld [vmem:[%s4509] sm:$0xff]
      %v4512 = vsel %vm793, %v4510, 0
      %v4515 = vsel %vm797, %v4432, 0
      %v4518 = vsel %vm797, %v4434, 0
      %4520 = vmatprep.subr.mxu0 %v4518
      %4521 = vmatpush1.msra.mxu0 %v4515
      %4522 = vmatprep.subr.mxu0 0.0
      %4523 = vmatpush1.msra.mxu0 0.0
      %4524 = vmatprep.subr.mxu0 0.0
      %4525 = vmatpush1.msra.mxu0 0.0
      %4526 = vmatprep.subr.mxu0 0.0
      %4527 = vmatpush1.msra.mxu0 0.0
      %4528 = vmatprep.subr.mxu0 0.0
      %4529 = vmatpush1.msra.mxu0 0.0
      %4530 = vmatprep.subr.mxu0 0.0
      %4531 = vmatpush1.msra.mxu0 0.0
      %4532 = vmatprep.subr.mxu0 0.0
      %4533 = vmatpush1.msra.mxu0 0.0
      %4534 = vmatprep.subr.mxu0 0.0
      %4535 = vmatpush1.msra.mxu0 0.0
      %4536 = vmatprep.subr.mxu0 0.0
      %4537 = vmatpush1.msra.mxu0 0.0
      %4538 = vmatprep.subr.mxu0 0.0
      %4539 = vmatpush1.msra.mxu0 0.0
      %4540 = vmatprep.subr.mxu0 0.0
      %4541 = vmatpush1.msra.mxu0 0.0
      %4542 = vmatprep.subr.mxu0 0.0
      %4543 = vmatpush1.msra.mxu0 0.0
      %4544 = vmatprep.subr.mxu0 0.0
      %4545 = vmatpush1.msra.mxu0 0.0
      %4546 = vmatprep.subr.mxu0 0.0
      %4547 = vmatpush1.msra.mxu0 0.0
      %4548 = vmatprep.subr.mxu0 0.0
      %4549 = vmatpush1.msra.mxu0 0.0
      %4550 = vmatprep.subr.mxu0 0.0
      %4551 = vmatpush1.msra.mxu0 0.0
      %4552 = vmatprep.subr.mxu0 0.0
      %4553 = vmatpush1.msra.mxu0 0.0
      %4554 = vmatprep.subr.mxu0 0.0
      %4555 = vmatpush1.msra.mxu0 0.0
      %4556 = vmatprep.subr.mxu0 0.0
      %4557 = vmatpush1.msra.mxu0 0.0
      %4558 = vmatprep.subr.mxu0 0.0
      %4559 = vmatpush1.msra.mxu0 0.0
      %4560 = vmatprep.subr.mxu0 0.0
      %4561 = vmatpush1.msra.mxu0 0.0
      %4562 = vmatprep.subr.mxu0 0.0
      %4563 = vmatpush1.msra.mxu0 0.0
      %4564 = vmatprep.subr.mxu0 0.0
      %4565 = vmatpush1.msra.mxu0 0.0
      %4566 = vmatprep.subr.mxu0 0.0
      %4567 = vmatpush1.msra.mxu0 0.0
      %4568 = vmatprep.subr.mxu0 0.0
      %4569 = vmatpush1.msra.mxu0 0.0
      %4570 = vmatprep.subr.mxu0 0.0
      %4571 = vmatpush1.msra.mxu0 0.0
      %4572 = vmatprep.subr.mxu0 0.0
      %4573 = vmatpush1.msra.mxu0 0.0
      %4574 = vmatprep.subr.mxu0 0.0
      %4575 = vmatpush1.msra.mxu0 0.0
      %4576 = vmatprep.subr.mxu0 0.0
      %4577 = vmatpush1.msra.mxu0 0.0
      %4578 = vmatprep.subr.mxu0 0.0
      %4579 = vmatpush1.msra.mxu0 0.0
      %4580 = vmatprep.subr.mxu0 0.0
      %4581 = vmatpush1.msra.mxu0 0.0
      %4582 = vmatprep.subr.mxu0 0.0
      %4583 = vmatpush1.msra.mxu0 0.0
      %4584 = vmatprep.mubr.f32.mxu0 0.0
      %4585 = vmatmul.mubr.f32.gmra.mrb[0].mxu0 %v4512
      %v4586 = vpop.f32.mrb[0].mxu0
      %v4587 = vadd.f32 0.0, %v4586
      %v4588 = vpop.f32.mrb[0].mxu0
      %v4589 = vadd.f32 0.0, %v4588
      %4590 = vdwg.mxu0
      %v4592 = vsel %vm793, %v4508, 0
      %v4595 = vsel %vm797, %v4503, 0
      %v4598 = vsel %vm797, %v4505, 0
      %4600 = vmatprep.subr.mxu0 %v4598
      %4601 = vmatpush1.msra.mxu0 %v4595
      %4602 = vmatprep.subr.mxu0 0.0
      %4603 = vmatpush1.msra.mxu0 0.0
      %4604 = vmatprep.subr.mxu0 0.0
      %4605 = vmatpush1.msra.mxu0 0.0
      %4606 = vmatprep.subr.mxu0 0.0
      %4607 = vmatpush1.msra.mxu0 0.0
      %4608 = vmatprep.subr.mxu0 0.0
      %4609 = vmatpush1.msra.mxu0 0.0
      %4610 = vmatprep.subr.mxu0 0.0
      %4611 = vmatpush1.msra.mxu0 0.0
      %4612 = vmatprep.subr.mxu0 0.0
      %4613 = vmatpush1.msra.mxu0 0.0
      %4614 = vmatprep.subr.mxu0 0.0
      %4615 = vmatpush1.msra.mxu0 0.0
      %4616 = vmatprep.subr.mxu0 0.0
      %4617 = vmatpush1.msra.mxu0 0.0
      %4618 = vmatprep.subr.mxu0 0.0
      %4619 = vmatpush1.msra.mxu0 0.0
      %4620 = vmatprep.subr.mxu0 0.0
      %4621 = vmatpush1.msra.mxu0 0.0
      %4622 = vmatprep.subr.mxu0 0.0
      %4623 = vmatpush1.msra.mxu0 0.0
      %4624 = vmatprep.subr.mxu0 0.0
      %4625 = vmatpush1.msra.mxu0 0.0
      %4626 = vmatprep.subr.mxu0 0.0
      %4627 = vmatpush1.msra.mxu0 0.0
      %4628 = vmatprep.subr.mxu0 0.0
      %4629 = vmatpush1.msra.mxu0 0.0
      %4630 = vmatprep.subr.mxu0 0.0
      %4631 = vmatpush1.msra.mxu0 0.0
      %4632 = vmatprep.subr.mxu0 0.0
      %4633 = vmatpush1.msra.mxu0 0.0
      %4634 = vmatprep.subr.mxu0 0.0
      %4635 = vmatpush1.msra.mxu0 0.0
      %4636 = vmatprep.subr.mxu0 0.0
      %4637 = vmatpush1.msra.mxu0 0.0
      %4638 = vmatprep.subr.mxu0 0.0
      %4639 = vmatpush1.msra.mxu0 0.0
      %4640 = vmatprep.subr.mxu0 0.0
      %4641 = vmatpush1.msra.mxu0 0.0
      %4642 = vmatprep.subr.mxu0 0.0
      %4643 = vmatpush1.msra.mxu0 0.0
      %4644 = vmatprep.subr.mxu0 0.0
      %4645 = vmatpush1.msra.mxu0 0.0
      %4646 = vmatprep.subr.mxu0 0.0
      %4647 = vmatpush1.msra.mxu0 0.0
      %4648 = vmatprep.subr.mxu0 0.0
      %4649 = vmatpush1.msra.mxu0 0.0
      %4650 = vmatprep.subr.mxu0 0.0
      %4651 = vmatpush1.msra.mxu0 0.0
      %4652 = vmatprep.subr.mxu0 0.0
      %4653 = vmatpush1.msra.mxu0 0.0
      %4654 = vmatprep.subr.mxu0 0.0
      %4655 = vmatpush1.msra.mxu0 0.0
      %4656 = vmatprep.subr.mxu0 0.0
      %4657 = vmatpush1.msra.mxu0 0.0
      %4658 = vmatprep.subr.mxu0 0.0
      %4659 = vmatpush1.msra.mxu0 0.0
      %4660 = vmatprep.subr.mxu0 0.0
      %4661 = vmatpush1.msra.mxu0 0.0
      %4662 = vmatprep.subr.mxu0 0.0
      %4663 = vmatpush1.msra.mxu0 0.0
      %4664 = vmatprep.mubr.f32.mxu0 0.0
      %4665 = vmatmul.mubr.f32.gmra.mrb[0].mxu0 %v4592
      %v4666 = vpop.f32.mrb[0].mxu0
      %v4667 = vadd.f32 %v4587, %v4666
      %v4668 = vpop.f32.mrb[0].mxu0
      %v4669 = vadd.f32 %v4589, %v4668
      %4670 = vdwg.mxu0
      %v4671 = vmax.f32 %v4667, 0.0
      %v4672 = vmax.f32 %v4669, 0.0
      %s4673 = scalar_lea.vmem %s12, 32
      %v4674 = vld [vmem:[%s4673] sm:$0xff]
      %v4676 = vsel %vm958, %v4674, 0
      %4678 = vmatprep.subr.mxu0 %v4672
      %4679 = vmatpush1.msra.mxu0 %v4671
      %4680 = vmatprep.subr.mxu0 0.0
      %4681 = vmatpush1.msra.mxu0 0.0
      %4682 = vmatprep.subr.mxu0 0.0
      %4683 = vmatpush1.msra.mxu0 0.0
      %4684 = vmatprep.subr.mxu0 0.0
      %4685 = vmatpush1.msra.mxu0 0.0
      %4686 = vmatprep.subr.mxu0 0.0
      %4687 = vmatpush1.msra.mxu0 0.0
      %4688 = vmatprep.subr.mxu0 0.0
      %4689 = vmatpush1.msra.mxu0 0.0
      %4690 = vmatprep.subr.mxu0 0.0
      %4691 = vmatpush1.msra.mxu0 0.0
      %4692 = vmatprep.subr.mxu0 0.0
      %4693 = vmatpush1.msra.mxu0 0.0
      %4694 = vmatprep.subr.mxu0 0.0
      %4695 = vmatpush1.msra.mxu0 0.0
      %4696 = vmatprep.subr.mxu0 0.0
      %4697 = vmatpush1.msra.mxu0 0.0
      %4698 = vmatprep.subr.mxu0 0.0
      %4699 = vmatpush1.msra.mxu0 0.0
      %4700 = vmatprep.subr.mxu0 0.0
      %4701 = vmatpush1.msra.mxu0 0.0
      %4702 = vmatprep.subr.mxu0 0.0
      %4703 = vmatpush1.msra.mxu0 0.0
      %4704 = vmatprep.subr.mxu0 0.0
      %4705 = vmatpush1.msra.mxu0 0.0
      %4706 = vmatprep.subr.mxu0 0.0
      %4707 = vmatpush1.msra.mxu0 0.0
      %4708 = vmatprep.subr.mxu0 0.0
      %4709 = vmatpush1.msra.mxu0 0.0
      %4710 = vmatprep.subr.mxu0 0.0
      %4711 = vmatpush1.msra.mxu0 0.0
      %4712 = vmatprep.subr.mxu0 0.0
      %4713 = vmatpush1.msra.mxu0 0.0
      %4714 = vmatprep.subr.mxu0 0.0
      %4715 = vmatpush1.msra.mxu0 0.0
      %4716 = vmatprep.subr.mxu0 0.0
      %4717 = vmatpush1.msra.mxu0 0.0
      %4718 = vmatprep.subr.mxu0 0.0
      %4719 = vmatpush1.msra.mxu0 0.0
      %4720 = vmatprep.subr.mxu0 0.0
      %4721 = vmatpush1.msra.mxu0 0.0
      %4722 = vmatprep.subr.mxu0 0.0
      %4723 = vmatpush1.msra.mxu0 0.0
      %4724 = vmatprep.subr.mxu0 0.0
      %4725 = vmatpush1.msra.mxu0 0.0
      %4726 = vmatprep.subr.mxu0 0.0
      %4727 = vmatpush1.msra.mxu0 0.0
      %4728 = vmatprep.subr.mxu0 0.0
      %4729 = vmatpush1.msra.mxu0 0.0
      %4730 = vmatprep.subr.mxu0 0.0
      %4731 = vmatpush1.msra.mxu0 0.0
      %4732 = vmatprep.subr.mxu0 0.0
      %4733 = vmatpush1.msra.mxu0 0.0
      %4734 = vmatprep.subr.mxu0 0.0
      %4735 = vmatpush1.msra.mxu0 0.0
      %4736 = vmatprep.subr.mxu0 0.0
      %4737 = vmatpush1.msra.mxu0 0.0
      %4738 = vmatprep.subr.mxu0 0.0
      %4739 = vmatpush1.msra.mxu0 0.0
      %4740 = vmatprep.subr.mxu0 0.0
      %4741 = vmatpush1.msra.mxu0 0.0
      %4742 = vmatprep.mubr.f32.mxu0 0.0
      %4743 = vmatmul.mubr.f32.gmra.mrb[0].mxu0 %v4676
      %v4744 = vpop.f32.mrb[0].mxu0
      %v4745 = vadd.f32 0.0, %v4744
      %v4746 = vpop.f32.mrb[0].mxu0
      %v4747 = vadd.f32 0.0, %v4746
      %4748 = vdwg.mxu0
      %v4751 = vrot.slane %v4745, 4
      %v4752 = vrot.slane %v4747, 4
      %v4754 = vsel %vm1038, %v4752, 0
      %4756 = vmatprep.subr.mxu0 %v607
      %4757 = vmatpush1.msra.mxu0 %v606
      %4758 = vmatprep.subr.mxu0 %v609
      %4759 = vmatpush1.msra.mxu0 %v608
      %4760 = vmatprep.subr.mxu0 %v611
      %4761 = vmatpush1.msra.mxu0 %v610
      %4762 = vmatprep.subr.mxu0 %v613
      %4763 = vmatpush1.msra.mxu0 %v612
      %4764 = vmatprep.subr.mxu0 %v615
      %4765 = vmatpush1.msra.mxu0 %v614
      %4766 = vmatprep.subr.mxu0 %v617
      %4767 = vmatpush1.msra.mxu0 %v616
      %4768 = vmatprep.subr.mxu0 %v619
      %4769 = vmatpush1.msra.mxu0 %v618
      %4770 = vmatprep.subr.mxu0 %v621
      %4771 = vmatpush1.msra.mxu0 %v620
      %4772 = vmatprep.subr.mxu0 %v623
      %4773 = vmatpush1.msra.mxu0 %v622
      %4774 = vmatprep.subr.mxu0 %v625
      %4775 = vmatpush1.msra.mxu0 %v624
      %4776 = vmatprep.subr.mxu0 %v627
      %4777 = vmatpush1.msra.mxu0 %v626
      %4778 = vmatprep.subr.mxu0 %v629
      %4779 = vmatpush1.msra.mxu0 %v628
      %4780 = vmatprep.subr.mxu0 %v631
      %4781 = vmatpush1.msra.mxu0 %v630
      %4782 = vmatprep.subr.mxu0 %v633
      %4783 = vmatpush1.msra.mxu0 %v632
      %4784 = vmatprep.subr.mxu0 %v635
      %4785 = vmatpush1.msra.mxu0 %v634
      %4786 = vmatprep.subr.mxu0 %v637
      %4787 = vmatpush1.msra.mxu0 %v636
      %4788 = vmatprep.subr.mxu0 %v639
      %4789 = vmatpush1.msra.mxu0 %v638
      %4790 = vmatprep.subr.mxu0 %v641
      %4791 = vmatpush1.msra.mxu0 %v640
      %4792 = vmatprep.subr.mxu0 0.0
      %4793 = vmatpush1.msra.mxu0 0.0
      %4794 = vmatprep.subr.mxu0 0.0
      %4795 = vmatpush1.msra.mxu0 0.0
      %4796 = vmatprep.subr.mxu0 0.0
      %4797 = vmatpush1.msra.mxu0 0.0
      %4798 = vmatprep.subr.mxu0 0.0
      %4799 = vmatpush1.msra.mxu0 0.0
      %4800 = vmatprep.subr.mxu0 0.0
      %4801 = vmatpush1.msra.mxu0 0.0
      %4802 = vmatprep.subr.mxu0 0.0
      %4803 = vmatpush1.msra.mxu0 0.0
      %4804 = vmatprep.subr.mxu0 0.0
      %4805 = vmatpush1.msra.mxu0 0.0
      %4806 = vmatprep.subr.mxu0 0.0
      %4807 = vmatpush1.msra.mxu0 0.0
      %4808 = vmatprep.subr.mxu0 0.0
      %4809 = vmatpush1.msra.mxu0 0.0
      %4810 = vmatprep.subr.mxu0 0.0
      %4811 = vmatpush1.msra.mxu0 0.0
      %4812 = vmatprep.subr.mxu0 0.0
      %4813 = vmatpush1.msra.mxu0 0.0
      %4814 = vmatprep.subr.mxu0 0.0
      %4815 = vmatpush1.msra.mxu0 0.0
      %4816 = vmatprep.subr.mxu0 0.0
      %4817 = vmatpush1.msra.mxu0 0.0
      %4818 = vmatprep.subr.mxu0 0.0
      %4819 = vmatpush1.msra.mxu0 0.0
      %4820 = vmatprep.mubr.f32.mxu0 %v4754
      %4821 = vmatmul.mubr.f32.gmra.mrb[0].mxu0 %v4751
      %v4822 = vpop.f32.mrb[0].mxu0
      %v4823 = vadd.f32 0.0, %v4822
      %v4824 = vpop.f32.mrb[0].mxu0
      %v4825 = vadd.f32 0.0, %v4824
      %4826 = vdwg.mxu0
      %v4827 = vsel %vm1038, %v4747, 0
      %4829 = vmatprep.subr.mxu0 %v571
      %4830 = vmatpush1.msra.mxu0 %v570
      %4831 = vmatprep.subr.mxu0 %v573
      %4832 = vmatpush1.msra.mxu0 %v572
      %4833 = vmatprep.subr.mxu0 %v575
      %4834 = vmatpush1.msra.mxu0 %v574
      %4835 = vmatprep.subr.mxu0 %v577
      %4836 = vmatpush1.msra.mxu0 %v576
      %4837 = vmatprep.subr.mxu0 %v579
      %4838 = vmatpush1.msra.mxu0 %v578
      %4839 = vmatprep.subr.mxu0 %v581
      %4840 = vmatpush1.msra.mxu0 %v580
      %4841 = vmatprep.subr.mxu0 %v583
      %4842 = vmatpush1.msra.mxu0 %v582
      %4843 = vmatprep.subr.mxu0 %v585
      %4844 = vmatpush1.msra.mxu0 %v584
      %4845 = vmatprep.subr.mxu0 %v587
      %4846 = vmatpush1.msra.mxu0 %v586
      %4847 = vmatprep.subr.mxu0 %v589
      %4848 = vmatpush1.msra.mxu0 %v588
      %4849 = vmatprep.subr.mxu0 %v591
      %4850 = vmatpush1.msra.mxu0 %v590
      %4851 = vmatprep.subr.mxu0 %v593
      %4852 = vmatpush1.msra.mxu0 %v592
      %4853 = vmatprep.subr.mxu0 %v595
      %4854 = vmatpush1.msra.mxu0 %v594
      %4855 = vmatprep.subr.mxu0 %v597
      %4856 = vmatpush1.msra.mxu0 %v596
      %4857 = vmatprep.subr.mxu0 %v599
      %4858 = vmatpush1.msra.mxu0 %v598
      %4859 = vmatprep.subr.mxu0 %v601
      %4860 = vmatpush1.msra.mxu0 %v600
      %4861 = vmatprep.subr.mxu0 %v603
      %4862 = vmatpush1.msra.mxu0 %v602
      %4863 = vmatprep.subr.mxu0 %v605
      %4864 = vmatpush1.msra.mxu0 %v604
      %4865 = vmatprep.subr.mxu0 0.0
      %4866 = vmatpush1.msra.mxu0 0.0
      %4867 = vmatprep.subr.mxu0 0.0
      %4868 = vmatpush1.msra.mxu0 0.0
      %4869 = vmatprep.subr.mxu0 0.0
      %4870 = vmatpush1.msra.mxu0 0.0
      %4871 = vmatprep.subr.mxu0 0.0
      %4872 = vmatpush1.msra.mxu0 0.0
      %4873 = vmatprep.subr.mxu0 0.0
      %4874 = vmatpush1.msra.mxu0 0.0
      %4875 = vmatprep.subr.mxu0 0.0
      %4876 = vmatpush1.msra.mxu0 0.0
      %4877 = vmatprep.subr.mxu0 0.0
      %4878 = vmatpush1.msra.mxu0 0.0
      %4879 = vmatprep.subr.mxu0 0.0
      %4880 = vmatpush1.msra.mxu0 0.0
      %4881 = vmatprep.subr.mxu0 0.0
      %4882 = vmatpush1.msra.mxu0 0.0
      %4883 = vmatprep.subr.mxu0 0.0
      %4884 = vmatpush1.msra.mxu0 0.0
      %4885 = vmatprep.subr.mxu0 0.0
      %4886 = vmatpush1.msra.mxu0 0.0
      %4887 = vmatprep.subr.mxu0 0.0
      %4888 = vmatpush1.msra.mxu0 0.0
      %4889 = vmatprep.subr.mxu0 0.0
      %4890 = vmatpush1.msra.mxu0 0.0
      %4891 = vmatprep.subr.mxu0 0.0
      %4892 = vmatpush1.msra.mxu0 0.0
      %4893 = vmatprep.mubr.f32.mxu0 %v4827
      %4894 = vmatmul.mubr.f32.gmra.mrb[0].mxu0 %v4745
      %v4895 = vpop.f32.mrb[0].mxu0
      %v4896 = vadd.f32 %v4823, %v4895
      %v4897 = vpop.f32.mrb[0].mxu0
      %v4898 = vadd.f32 %v4825, %v4897
      %4899 = vdwg.mxu0
      %s4900 = scalar_lea.vmem %s6, 16
      %v4901 = vld [vmem:[%s4900] sm:$0xf]
      %4902 = vrot.lane.b32.xlu0 %v4363, 17
      %v4903 = vpop.permute.xlu0 %4902
      %4904 = vrot.lane.b32.xlu0 %v4364, 17
      %v4905 = vpop.permute.xlu0 %4904
      %v4906 = vsel %vm1192, %v4903, %v4905
      %v4907 = vsel %vm1192, %v4905, %v4903
      %v4908 = vmul.f32 %v4907, %v1198
      %v4909 = vmul.f32 %v4906, %v1202
      %4910 = vrot.lane.b32.xlu0 %v4363, 16
      %v4911 = vpop.permute.xlu0 %4910
      %4912 = vrot.lane.b32.xlu0 %v4364, 16
      %v4913 = vpop.permute.xlu0 %4912
      %v4914 = vsel %vm1209, %v4911, %v4913
      %v4915 = vsel %vm1209, %v4913, %v4911
      %v4916 = vmul.f32 %v4915, %v1215
      %v4917 = vmul.f32 %v4914, %v1219
      %4918 = vrot.lane.b32.xlu0 %v4363, 15
      %v4919 = vpop.permute.xlu0 %4918
      %4920 = vrot.lane.b32.xlu0 %v4364, 15
      %v4921 = vpop.permute.xlu0 %4920
      %v4922 = vsel %vm1226, %v4919, %v4921
      %v4923 = vsel %vm1226, %v4921, %v4919
      %v4924 = vmul.f32 %v4923, %v1232
      %v4925 = vmul.f32 %v4922, %v1236
      %4926 = vrot.lane.b32.xlu0 %v4363, 1
      %v4927 = vpop.permute.xlu0 %4926
      %4928 = vrot.lane.b32.xlu0 %v4364, 1
      %v4929 = vpop.permute.xlu0 %4928
      %v4930 = vsel %vm1243, %v4927, %v4929
      %v4931 = vsel %vm1243, %v4929, %v4927
      %v4932 = vmul.f32 %v4931, %v1249
      %v4933 = vmul.f32 %v4930, %v1253
      %4934 = vrot.lane.b32.xlu0 %v4363, 127
      %v4935 = vpop.permute.xlu0 %4934
      %4936 = vrot.lane.b32.xlu0 %v4364, 127
      %v4937 = vpop.permute.xlu0 %4936
      %v4938 = vsel %vm1260, %v4935, %v4937
      %v4939 = vsel %vm1260, %v4937, %v4935
      %v4940 = vmul.f32 %v4938, %v1266
      %v4941 = vmul.f32 %v4939, %v1270
      %4942 = vrot.lane.b32.xlu0 %v4363, 113
      %v4943 = vpop.permute.xlu0 %4942
      %4944 = vrot.lane.b32.xlu0 %v4364, 113
      %v4945 = vpop.permute.xlu0 %4944
      %v4946 = vsel %vm1277, %v4943, %v4945
      %v4947 = vsel %vm1277, %v4945, %v4943
      %v4948 = vmul.f32 %v4946, %v1283
      %v4949 = vmul.f32 %v4947, %v1287
      %4950 = vrot.lane.b32.xlu0 %v4363, 112
      %v4951 = vpop.permute.xlu0 %4950
      %4952 = vrot.lane.b32.xlu0 %v4364, 112
      %v4953 = vpop.permute.xlu0 %4952
      %v4954 = vsel %vm1294, %v4951, %v4953
      %v4955 = vsel %vm1294, %v4953, %v4951
      %v4956 = vmul.f32 %v4954, %v1300
      %v4957 = vmul.f32 %v4955, %v1304
      %4958 = vrot.lane.b32.xlu0 %v4363, 111
      %v4959 = vpop.permute.xlu0 %4958
      %4960 = vrot.lane.b32.xlu0 %v4364, 111
      %v4961 = vpop.permute.xlu0 %4960
      %v4962 = vsel %vm1311, %v4959, %v4961
      %v4963 = vsel %vm1311, %v4961, %v4959
      %v4964 = vmul.f32 %v4962, %v1317
      %v4965 = vmul.f32 %v4963, %v1321
      %v4968 = vrot.slane %v4916, 4
      %v4969 = vrot.slane %v4917, 4
      %v4974 = vrot.slane %v4932, 4
      %v4975 = vrot.slane %v4933, 4
      %v4980 = vrot.slane %v4940, 4
      %v4981 = vrot.slane %v4941, 4
      %v4986 = vrot.slane %v4956, 4
      %v4987 = vrot.slane %v4957, 4
      %v4990 = vsel %vm797, %v4908, %v4968
      %v4991 = vsel %vm797, %v4909, %v4969
      %v4992 = vsel %vm797, %v4924, %v4974
      %v4993 = vsel %vm797, %v4925, %v4975
      %v4994 = vsel %vm797, %v4363, %v4980
      %v4995 = vsel %vm797, %v4364, %v4981
      %v4996 = vsel %vm797, %v4948, %v4986
      %v4997 = vsel %vm797, %v4949, %v4987
      %s4998 = scalar_lea.vmem %s7, 16
      %v4999 = vld [vmem:[%s4998] sm:$0xf]
      %5001 = vset.pattern.permute.xlu0 0
      %5002 = vperm.xlu0 %5001, %v4999
      %v5003 = vpop.permute.xlu0 %5002
      %v5006 = vsel %vm1362, %v4901, 0
      %v5009 = vsel %vm797, %v4964, 0
      %v5012 = vsel %vm797, %v4965, 0
      %5014 = vmatprep.subr.mxu0 %v4991
      %5015 = vmatpush1.msra.mxu0 %v4990
      %5016 = vmatprep.subr.mxu0 %v4993
      %5017 = vmatpush1.msra.mxu0 %v4992
      %5018 = vmatprep.subr.mxu0 %v4995
      %5019 = vmatpush1.msra.mxu0 %v4994
      %5020 = vmatprep.subr.mxu0 %v4997
      %5021 = vmatpush1.msra.mxu0 %v4996
      %5022 = vmatprep.subr.mxu0 %v5012
      %5023 = vmatpush1.msra.mxu0 %v5009
      %5024 = vmatprep.subr.mxu0 0.0
      %5025 = vmatpush1.msra.mxu0 0.0
      %5026 = vmatprep.subr.mxu0 0.0
      %5027 = vmatpush1.msra.mxu0 0.0
      %5028 = vmatprep.subr.mxu0 0.0
      %5029 = vmatpush1.msra.mxu0 0.0
      %5030 = vmatprep.subr.mxu0 0.0
      %5031 = vmatpush1.msra.mxu0 0.0
      %5032 = vmatprep.subr.mxu0 0.0
      %5033 = vmatpush1.msra.mxu0 0.0
      %5034 = vmatprep.subr.mxu0 0.0
      %5035 = vmatpush1.msra.mxu0 0.0
      %5036 = vmatprep.subr.mxu0 0.0
      %5037 = vmatpush1.msra.mxu0 0.0
      %5038 = vmatprep.subr.mxu0 0.0
      %5039 = vmatpush1.msra.mxu0 0.0
      %5040 = vmatprep.subr.mxu0 0.0
      %5041 = vmatpush1.msra.mxu0 0.0
      %5042 = vmatprep.subr.mxu0 0.0
      %5043 = vmatpush1.msra.mxu0 0.0
      %5044 = vmatprep.subr.mxu0 0.0
      %5045 = vmatpush1.msra.mxu0 0.0
      %5046 = vmatprep.subr.mxu0 0.0
      %5047 = vmatpush1.msra.mxu0 0.0
      %5048 = vmatprep.subr.mxu0 0.0
      %5049 = vmatpush1.msra.mxu0 0.0
      %5050 = vmatprep.subr.mxu0 0.0
      %5051 = vmatpush1.msra.mxu0 0.0
      %5052 = vmatprep.subr.mxu0 0.0
      %5053 = vmatpush1.msra.mxu0 0.0
      %5054 = vmatprep.subr.mxu0 0.0
      %5055 = vmatpush1.msra.mxu0 0.0
      %5056 = vmatprep.subr.mxu0 0.0
      %5057 = vmatpush1.msra.mxu0 0.0
      %5058 = vmatprep.subr.mxu0 0.0
      %5059 = vmatpush1.msra.mxu0 0.0
      %5060 = vmatprep.subr.mxu0 0.0
      %5061 = vmatpush1.msra.mxu0 0.0
      %5062 = vmatprep.subr.mxu0 0.0
      %5063 = vmatpush1.msra.mxu0 0.0
      %5064 = vmatprep.subr.mxu0 0.0
      %5065 = vmatpush1.msra.mxu0 0.0
      %5066 = vmatprep.subr.mxu0 0.0
      %5067 = vmatpush1.msra.mxu0 0.0
      %5068 = vmatprep.subr.mxu0 0.0
      %5069 = vmatpush1.msra.mxu0 0.0
      %5070 = vmatprep.subr.mxu0 0.0
      %5071 = vmatpush1.msra.mxu0 0.0
      %5072 = vmatprep.subr.mxu0 0.0
      %5073 = vmatpush1.msra.mxu0 0.0
      %5074 = vmatprep.subr.mxu0 0.0
      %5075 = vmatpush1.msra.mxu0 0.0
      %5076 = vmatprep.subr.mxu0 0.0
      %5077 = vmatpush1.msra.mxu0 0.0
      %5078 = vmatprep.mubr.f32.mxu0 0.0
      %5079 = vmatmul.mubr.f32.gmra.mrb[0].mxu0 %v5006
      %v5080 = vpop.f32.mrb[0].mxu0
      %v5081 = vadd.f32 %v5003, %v5080
      %v5082 = vpop.f32.mrb[0].mxu0
      %v5083 = vadd.f32 %v5003, %v5082
      %5084 = vdwg.mxu0
      %v5085 = vmax.f32 %v5081, 0.0
      %v5086 = vmax.f32 %v5083, 0.0
      %s5087 = scalar_lea.vmem %s8, 16
      %v5088 = vld [vmem:[%s5087] sm:$0xf]
      %5089 = vrot.lane.b32.xlu0 %v5085, 17
      %v5090 = vpop.permute.xlu0 %5089
      %5091 = vrot.lane.b32.xlu0 %v5086, 17
      %v5092 = vpop.permute.xlu0 %5091
      %v5093 = vsel %vm1192, %v5090, %v5092
      %v5094 = vsel %vm1192, %v5092, %v5090
      %v5095 = vmul.f32 %v5094, %v1198
      %v5096 = vmul.f32 %v5093, %v1202
      %5097 = vrot.lane.b32.xlu0 %v5085, 16
      %v5098 = vpop.permute.xlu0 %5097
      %5099 = vrot.lane.b32.xlu0 %v5086, 16
      %v5100 = vpop.permute.xlu0 %5099
      %v5101 = vsel %vm1209, %v5098, %v5100
      %v5102 = vsel %vm1209, %v5100, %v5098
      %v5103 = vmul.f32 %v5102, %v1215
      %v5104 = vmul.f32 %v5101, %v1219
      %5105 = vrot.lane.b32.xlu0 %v5085, 15
      %v5106 = vpop.permute.xlu0 %5105
      %5107 = vrot.lane.b32.xlu0 %v5086, 15
      %v5108 = vpop.permute.xlu0 %5107
      %v5109 = vsel %vm1226, %v5106, %v5108
      %v5110 = vsel %vm1226, %v5108, %v5106
      %v5111 = vmul.f32 %v5110, %v1232
      %v5112 = vmul.f32 %v5109, %v1236
      %5113 = vrot.lane.b32.xlu0 %v5085, 1
      %v5114 = vpop.permute.xlu0 %5113
      %5115 = vrot.lane.b32.xlu0 %v5086, 1
      %v5116 = vpop.permute.xlu0 %5115
      %v5117 = vsel %vm1243, %v5114, %v5116
      %v5118 = vsel %vm1243, %v5116, %v5114
      %v5119 = vmul.f32 %v5118, %v1249
      %v5120 = vmul.f32 %v5117, %v1253
      %5121 = vrot.lane.b32.xlu0 %v5085, 127
      %v5122 = vpop.permute.xlu0 %5121
      %5123 = vrot.lane.b32.xlu0 %v5086, 127
      %v5124 = vpop.permute.xlu0 %5123
      %v5125 = vsel %vm1260, %v5122, %v5124
      %v5126 = vsel %vm1260, %v5124, %v5122
      %v5127 = vmul.f32 %v5125, %v1266
      %v5128 = vmul.f32 %v5126, %v1270
      %5129 = vrot.lane.b32.xlu0 %v5085, 113
      %v5130 = vpop.permute.xlu0 %5129
      %5131 = vrot.lane.b32.xlu0 %v5086, 113
      %v5132 = vpop.permute.xlu0 %5131
      %v5133 = vsel %vm1277, %v5130, %v5132
      %v5134 = vsel %vm1277, %v5132, %v5130
      %v5135 = vmul.f32 %v5133, %v1283
      %v5136 = vmul.f32 %v5134, %v1287
      %5137 = vrot.lane.b32.xlu0 %v5085, 112
      %v5138 = vpop.permute.xlu0 %5137
      %5139 = vrot.lane.b32.xlu0 %v5086, 112
      %v5140 = vpop.permute.xlu0 %5139
      %v5141 = vsel %vm1294, %v5138, %v5140
      %v5142 = vsel %vm1294, %v5140, %v5138
      %v5143 = vmul.f32 %v5141, %v1300
      %v5144 = vmul.f32 %v5142, %v1304
      %5145 = vrot.lane.b32.xlu0 %v5085, 111
      %v5146 = vpop.permute.xlu0 %5145
      %5147 = vrot.lane.b32.xlu0 %v5086, 111
      %v5148 = vpop.permute.xlu0 %5147
      %v5149 = vsel %vm1311, %v5146, %v5148
      %v5150 = vsel %vm1311, %v5148, %v5146
      %v5151 = vmul.f32 %v5149, %v1317
      %v5152 = vmul.f32 %v5150, %v1321
      %v5155 = vrot.slane %v5103, 4
      %v5156 = vrot.slane %v5104, 4
      %v5161 = vrot.slane %v5119, 4
      %v5162 = vrot.slane %v5120, 4
      %v5167 = vrot.slane %v5127, 4
      %v5168 = vrot.slane %v5128, 4
      %v5173 = vrot.slane %v5143, 4
      %v5174 = vrot.slane %v5144, 4
      %v5177 = vsel %vm797, %v5095, %v5155
      %v5178 = vsel %vm797, %v5096, %v5156
      %v5179 = vsel %vm797, %v5111, %v5161
      %v5180 = vsel %vm797, %v5112, %v5162
      %v5181 = vsel %vm797, %v5085, %v5167
      %v5182 = vsel %vm797, %v5086, %v5168
      %v5183 = vsel %vm797, %v5135, %v5173
      %v5184 = vsel %vm797, %v5136, %v5174
      %s5185 = scalar_lea.vmem %s9, 16
      %v5186 = vld [vmem:[%s5185] sm:$0xf]
      %5188 = vset.pattern.permute.xlu0 0
      %5189 = vperm.xlu0 %5188, %v5186
      %v5190 = vpop.permute.xlu0 %5189
      %v5193 = vsel %vm1362, %v5088, 0
      %v5196 = vsel %vm797, %v5151, 0
      %v5199 = vsel %vm797, %v5152, 0
      %5201 = vmatprep.subr.mxu0 %v5178
      %5202 = vmatpush1.msra.mxu0 %v5177
      %5203 = vmatprep.subr.mxu0 %v5180
      %5204 = vmatpush1.msra.mxu0 %v5179
      %5205 = vmatprep.subr.mxu0 %v5182
      %5206 = vmatpush1.msra.mxu0 %v5181
      %5207 = vmatprep.subr.mxu0 %v5184
      %5208 = vmatpush1.msra.mxu0 %v5183
      %5209 = vmatprep.subr.mxu0 %v5199
      %5210 = vmatpush1.msra.mxu0 %v5196
      %5211 = vmatprep.subr.mxu0 0.0
      %5212 = vmatpush1.msra.mxu0 0.0
      %5213 = vmatprep.subr.mxu0 0.0
      %5214 = vmatpush1.msra.mxu0 0.0
      %5215 = vmatprep.subr.mxu0 0.0
      %5216 = vmatpush1.msra.mxu0 0.0
      %5217 = vmatprep.subr.mxu0 0.0
      %5218 = vmatpush1.msra.mxu0 0.0
      %5219 = vmatprep.subr.mxu0 0.0
      %5220 = vmatpush1.msra.mxu0 0.0
      %5221 = vmatprep.subr.mxu0 0.0
      %5222 = vmatpush1.msra.mxu0 0.0
      %5223 = vmatprep.subr.mxu0 0.0
      %5224 = vmatpush1.msra.mxu0 0.0
      %5225 = vmatprep.subr.mxu0 0.0
      %5226 = vmatpush1.msra.mxu0 0.0
      %5227 = vmatprep.subr.mxu0 0.0
      %5228 = vmatpush1.msra.mxu0 0.0
      %5229 = vmatprep.subr.mxu0 0.0
      %5230 = vmatpush1.msra.mxu0 0.0
      %5231 = vmatprep.subr.mxu0 0.0
      %5232 = vmatpush1.msra.mxu0 0.0
      %5233 = vmatprep.subr.mxu0 0.0
      %5234 = vmatpush1.msra.mxu0 0.0
      %5235 = vmatprep.subr.mxu0 0.0
      %5236 = vmatpush1.msra.mxu0 0.0
      %5237 = vmatprep.subr.mxu0 0.0
      %5238 = vmatpush1.msra.mxu0 0.0
      %5239 = vmatprep.subr.mxu0 0.0
      %5240 = vmatpush1.msra.mxu0 0.0
      %5241 = vmatprep.subr.mxu0 0.0
      %5242 = vmatpush1.msra.mxu0 0.0
      %5243 = vmatprep.subr.mxu0 0.0
      %5244 = vmatpush1.msra.mxu0 0.0
      %5245 = vmatprep.subr.mxu0 0.0
      %5246 = vmatpush1.msra.mxu0 0.0
      %5247 = vmatprep.subr.mxu0 0.0
      %5248 = vmatpush1.msra.mxu0 0.0
      %5249 = vmatprep.subr.mxu0 0.0
      %5250 = vmatpush1.msra.mxu0 0.0
      %5251 = vmatprep.subr.mxu0 0.0
      %5252 = vmatpush1.msra.mxu0 0.0
      %5253 = vmatprep.subr.mxu0 0.0
      %5254 = vmatpush1.msra.mxu0 0.0
      %5255 = vmatprep.subr.mxu0 0.0
      %5256 = vmatpush1.msra.mxu0 0.0
      %5257 = vmatprep.subr.mxu0 0.0
      %5258 = vmatpush1.msra.mxu0 0.0
      %5259 = vmatprep.subr.mxu0 0.0
      %5260 = vmatpush1.msra.mxu0 0.0
      %5261 = vmatprep.subr.mxu0 0.0
      %5262 = vmatpush1.msra.mxu0 0.0
      %5263 = vmatprep.subr.mxu0 0.0
      %5264 = vmatpush1.msra.mxu0 0.0
      %5265 = vmatprep.mubr.f32.mxu0 0.0
      %5266 = vmatmul.mubr.f32.gmra.mrb[0].mxu0 %v5193
      %v5267 = vpop.f32.mrb[0].mxu0
      %v5268 = vadd.f32 %v5190, %v5267
      %v5269 = vpop.f32.mrb[0].mxu0
      %v5270 = vadd.f32 %v5190, %v5269
      %5271 = vdwg.mxu0
      %v5272 = vadd.f32 %v5268, %v4896
      %v5273 = vadd.f32 %v5270, %v4898
      %v5274 = vadd.f32 %v5272, %v4363
      %v5275 = vadd.f32 %v5273, %v4364
      %v5278 = vcombine.low %v5274, %v5275
      %5280 = vst [vmem:[%s440] sm:$0xff] %v5278
      %p5281 = scmp.lt.s32.totalorder %s24, 1
      %s5282 = scalar_select %p5281, %s24, 1
      %s5283 = smul.addr %s5282, 2
      %s5284 = smul.addr %s5283, 4
      %s5285 = scalar_lea.vmem %s13, %s5284
      // Predicated region
      $region73: #{eblock_forward.1} parent=71 // pred_check
        %p5286 = pneg %p320
      $region74: #{eblock_forward.1} parent=71 // pred_check_branch
        %5288 = sbr.rel (%p5286) target = $region76
      $region75: #{eblock_forward.1} parent=71 // pred_region
        _
      $region76: #{eblock_forward.1} parent=71 // pred_fallthru
        _
    $region72: #{eblock_forward.1} parent=5 // pred_fallthru
      _
    %p5289 = scmp.le.s32.totalorder 2, %s19
    // Predicated region
    $region77: #{eblock_forward.1} parent=5 // pred_check
      %p5290 = pneg %p5289
    $region78: #{eblock_forward.1} parent=5 // pred_check_branch
      %5292 = sbr.rel (%p5290) target = $region80
    $region79: #{eblock_forward.1} parent=5 // pred_region
      %s5293 = ssub.s32 %s19, 2
      // Predicated region
      $region81: #{eblock_forward.1} parent=79 // pred_check
        %p5294 = pneg %p326
      $region82: #{eblock_forward.1} parent=79 // pred_check_branch
        %5296 = sbr.rel (%p5294) target = $region84
      $region83: #{eblock_forward.1} parent=79 // pred_region
        %p5297 = scmp.lt.s32.totalorder %s25, 1
        %s5298 = scalar_select %p5297, %s25, 1
        %s5299 = smul.addr %s5298, 2
        %s5300 = smul.addr %s5299, 4
        %s5301 = scalar_lea.vmem %s13, %s5300
      $region84: #{eblock_forward.1} parent=79 // pred_fallthru
        _
    $region80: #{eblock_forward.1} parent=5 // pred_fallthru
      _
  $region6: #{eblock_forward.1} parent=0 // loop_footer
    %s23 = sadd.s32 1, %s19
  $region7: #{eblock_forward.1} parent=0 // loop_footer_branch
    %18 = sbr.rel target = $region3
  $region8: #{eblock_forward.1} parent=0 // loop_exit
    _

</llo_original>
